<compile_context>
chip_gen: v7x
topology: tpu7x:2x2x1
jax: 0.10.0
libtpu: 0.0.40
codegen_flags: <defaults>
</compile_context>

<pallas_src>
import functools
import math

import jax
import jax.numpy as jnp
import numpy as np
from jax.experimental import pallas as pl
from jax.experimental.pallas import tpu as pltpu


# ---------------------------------------------------------------------------
# Fused Pallas kernel: whole ConvEnergy trunk for one batch element
# ---------------------------------------------------------------------------
def _conv_energy_kernel(x_ref, cond_ref, mask_ref, pre_w_ref, pre_b_ref,
                        conv_w_ref, conv_b_ref, cond_w_ref, cond_b_ref,
                        post_w_ref, post_b_ref, pred_w_ref, pred_b_ref,
                        out_ref, *, depth, channels, hw, flat, shifts):
    c = channels
    inv_hw = jnp.float32(1.0 / hw)
    mask = mask_ref[...]                                   # (1, flat) : 1 at interior pixels
    x_row = x_ref[0]                                       # (1, flat) : zero-padded input image
    cond_row = cond_ref[0]                                 # (1, n_cls)

    # preprocess: 1x1 conv (Cin=1 -> C) as a VPU broadcast multiply-add (no MXU, no K padding)
    act = (pre_w_ref[...] * x_row + pre_b_ref[...]) * mask  # (c, flat), halo kept at exactly zero

    for blk in range(depth):
        # --- conditional affine params (scale / mean_scale / bias) from VMEM-resident cond ---
        base = blk * 3 * c

        def _affine(off, _base=base):
            wrows = cond_w_ref[pl.ds(_base + off, c), :]    # (c, n_cls)
            brows = cond_b_ref[pl.ds(_base + off, c), :]    # (c, 1)
            return jnp.sum(wrows * cond_row, axis=1, keepdims=True) + brows

        sc = _affine(0)
        ms = _affine(c)
        bs = _affine(2 * c)

        # --- 3x3 conv (padding=1): 9 lane-rolls of the padded activation + bf16 MXU matmuls ---
        acc = jnp.zeros((c, flat), jnp.float32)
        for tap, s in enumerate(shifts):
            w_tap = conv_w_ref[blk * 9 + tap]               # (c, c) bf16
            shifted = act if s == 0 else pltpu.roll(act, shift=(-s) % flat, axis=1)
            acc = acc + jnp.dot(w_tap, shifted.astype(jnp.bfloat16),
                                preferred_element_type=jnp.float32)
        b_blk = conv_b_ref[pl.ds(blk * c, c), :]            # (c, 1)

        # --- residual add (project == identity at 32ch) + AdaptiveInstanceNorm++ + ELU ---
        z = acc + b_blk + act                               # halo columns hold garbage; masked below
        mu = jnp.sum(z * mask, axis=1, keepdims=True) * inv_hw          # (c,1) interior mean
        diff = (z - mu) * mask
        var = jnp.sum(diff * diff, axis=1, keepdims=True) * inv_hw      # biased, like instance_norm
        h_n = (z - mu) * jax.lax.rsqrt(var + 1e-5)
        mu_mean = jnp.mean(mu, axis=0, keepdims=True)                   # (1,1)
        mu_var = jnp.sum((mu - mu_mean) ** 2, axis=0, keepdims=True) / (c - 1)   # unbiased (torch.std)
        mu_norm = (mu - mu_mean) / (jnp.sqrt(mu_var) + 1e-6)
        o = sc * h_n + ms * mu_norm + bs
        neg = jnp.where(o > 0, 0.0, o)                                  # safe ELU (alpha=1)
        act = jnp.where(o > 0, o, jnp.exp(neg) - 1.0) * mask            # re-zero the halo

    # --- GAP folded before the linear postprocess conv: mean(xW+b) == mean(x)W+b ---
    pooled = jnp.sum(act, axis=1, keepdims=True) * inv_hw               # (c, 1)
    hidden = jnp.dot(post_w_ref[...], pooled,
                     preferred_element_type=jnp.float32) + post_b_ref[...]   # (128, 1)
    logits = jnp.dot(pred_w_ref[...], hidden,
                     preferred_element_type=jnp.float32) + pred_b_ref[...]   # (n_cls, 1)
    out_ref[0] = logits


def _make_mask(h, w, flat):
    m = np.zeros((h + 2, w + 2), np.float32)
    m[1:h + 1, 1:w + 1] = 1.0
    out = np.zeros((1, flat), np.float32)
    out[0, :(h + 2) * (w + 2)] = m.reshape(-1)
    return jnp.asarray(out)


def _forward_pallas(x_nchw, cond, pk):
    n, _, h, w = x_nchw.shape
    c = pk["pre_w"].shape[0]
    depth = pk["conv_w"].shape[0] // 9
    if depth >= 5:
        raise NotImplementedError("avg_pool2d branch (depth >= 5) not implemented")
    n_cls = pk["pred_w"].shape[0]
    post_dim = pk["post_w"].shape[0]
    ph, pw = h + 2, w + 2
    flat = ((ph * pw + 127) // 128) * 128
    shifts = tuple((dy - 1) * pw + (dx - 1) for dy in range(3) for dx in range(3))
    mask = _make_mask(h, w, flat)

    x_img = x_nchw[:, 0].astype(jnp.float32)
    x_padflat = jnp.pad(x_img, ((0, 0), (1, 1), (1, 1))).reshape(n, ph * pw)
    x_padflat = jnp.pad(x_padflat, ((0, 0), (0, flat - ph * pw))).reshape(n, 1, flat)
    cond3 = cond.astype(jnp.float32).reshape(n, 1, n_cls)

    kern = functools.partial(_conv_energy_kernel, depth=depth, channels=c,
                             hw=h * w, flat=flat, shifts=shifts)
    out = pl.pallas_call(
        kern,
        out_shape=jax.ShapeDtypeStruct((n, n_cls, 1), jnp.float32),
        grid=(n,),
        in_specs=[
            pl.BlockSpec((1, 1, flat), lambda b: (b, 0, 0)),            # x (padded, lane-flattened)
            pl.BlockSpec((1, 1, n_cls), lambda b: (b, 0, 0)),           # cond one-hot
            pl.BlockSpec((1, flat), lambda b: (0, 0)),                  # interior mask
            pl.BlockSpec((c, 1), lambda b: (0, 0)),                     # pre_w
            pl.BlockSpec((c, 1), lambda b: (0, 0)),                     # pre_b
            pl.BlockSpec((9 * depth, c, c), lambda b: (0, 0, 0)),       # conv taps (bf16)
            pl.BlockSpec((depth * c, 1), lambda b: (0, 0)),             # conv biases
            pl.BlockSpec((depth * 3 * c, n_cls), lambda b: (0, 0)),     # cond linear weights
            pl.BlockSpec((depth * 3 * c, 1), lambda b: (0, 0)),         # cond linear biases
            pl.BlockSpec((post_dim, c), lambda b: (0, 0)),              # post_w
            pl.BlockSpec((post_dim, 1), lambda b: (0, 0)),              # post_b
            pl.BlockSpec((n_cls, post_dim), lambda b: (0, 0)),          # pred_w
            pl.BlockSpec((n_cls, 1), lambda b: (0, 0)),                 # pred_b
        ],
        out_specs=pl.BlockSpec((1, n_cls, 1), lambda b: (b, 0, 0)),
        compiler_params=pltpu.CompilerParams(dimension_semantics=("parallel",)),
    )(x_padflat, cond3, mask, pk["pre_w"], pk["pre_b"], pk["conv_w"], pk["conv_b"],
      pk["cond_w"], pk["cond_b"], pk["post_w"], pk["post_b"], pk["pred_w"], pk["pred_b"])
    return out[:, :, 0]


# ---------------------------------------------------------------------------
# Pure-JAX reference forward (same math; used only for the autograd/VJP of the score)
# ---------------------------------------------------------------------------
def _forward_ref(x_nchw, cond, pk):
    n, _, h, w = x_nchw.shape
    c = pk["pre_w"].shape[0]
    depth = pk["conv_w"].shape[0] // 9
    ph, pw = h + 2, w + 2
    flat = ((ph * pw + 127) // 128) * 128
    hw = h * w
    shifts = tuple((dy - 1) * pw + (dx - 1) for dy in range(3) for dx in range(3))
    mask = _make_mask(h, w, flat)[None]                                  # (1, 1, flat)

    x_img = x_nchw[:, 0].astype(jnp.float32)
    x_padflat = jnp.pad(x_img, ((0, 0), (1, 1), (1, 1))).reshape(n, 1, ph * pw)
    x_padflat = jnp.pad(x_padflat, ((0, 0), (0, 0), (0, flat - ph * pw)))
    cond = cond.astype(jnp.float32)

    act = (pk["pre_w"][None] * x_padflat + pk["pre_b"][None]) * mask     # (n, c, flat)
    aff = jnp.einsum("kj,nj->nk", pk["cond_w"], cond) + pk["cond_b"][:, 0][None]
    conv_w = pk["conv_w"].astype(jnp.float32)
    for blk in range(depth):
        acc = jnp.zeros_like(act)
        for tap, s in enumerate(shifts):
            shifted = jnp.roll(act, (-s) % flat, axis=-1)
            acc = acc + jnp.einsum("oc,ncq->noq", conv_w[blk * 9 + tap], shifted)
        z = acc + pk["conv_b"][blk * c:(blk + 1) * c, 0][None, :, None] + act
        mu = jnp.sum(z * mask, axis=-1, keepdims=True) / hw
        var = jnp.sum(((z - mu) * mask) ** 2, axis=-1, keepdims=True) / hw
        h_n = (z - mu) * jax.lax.rsqrt(var + 1e-5)
        mu_mean = jnp.mean(mu, axis=1, keepdims=True)
        mu_var = jnp.sum((mu - mu_mean) ** 2, axis=1, keepdims=True) / (c - 1)
        mu_norm = (mu - mu_mean) / (jnp.sqrt(mu_var) + 1e-6)
        base = blk * 3 * c
        sc = aff[:, base:base + c, None]
        ms = aff[:, base + c:base + 2 * c, None]
        bs = aff[:, base + 2 * c:base + 3 * c, None]
        o = sc * h_n + ms * mu_norm + bs
        neg = jnp.where(o > 0, 0.0, o)
        act = jnp.where(o > 0, o, jnp.exp(neg) - 1.0) * mask
    pooled = jnp.sum(act, axis=-1) / hw                                  # (n, c)
    hidden = pooled @ pk["post_w"].T + pk["post_b"][:, 0][None]
    logits = hidden @ pk["pred_w"].T + pk["pred_b"][:, 0][None]
    return logits


# ---------------------------------------------------------------------------
# custom_vjp wiring: Pallas forward, pure-JAX reference backward
# ---------------------------------------------------------------------------
@jax.custom_vjp
def model_logits(x, cond, pk):
    return _forward_pallas(x, cond, pk)


def _model_fwd(x, cond, pk):
    return _forward_pallas(x, cond, pk), (x, cond, pk)


def _model_bwd(res, g):
    x, cond, pk = res
    _, vjp = jax.vjp(_forward_ref, x, cond, pk)
    return vjp(g)


model_logits.defvjp(_model_fwd, _model_bwd)


# ---------------------------------------------------------------------------
# ConvEnergy.forward equivalent (single forward -> score + logits via has_aux)
# ---------------------------------------------------------------------------
def conv_energy_forward(inputs_nchw, noise, packed):
    n = inputs_nchw.shape[0]
    n_cls = packed["pred_w"].shape[0]
    offset = jnp.round(jnp.log(noise.reshape(n)) / jnp.log(jnp.float32(0.6))).astype(jnp.int32)
    cond = jax.nn.one_hot(offset, n_cls, dtype=jnp.float32)

    def energy_sum(x):
        lg = model_logits(x, cond, packed)
        return (-jax.nn.logsumexp(lg, axis=1)).sum(), lg

    grads, logits = jax.grad(energy_sum, has_aux=True)(inputs_nchw)
    return -grads, logits


# ---------------------------------------------------------------------------
# Parameter init (PyTorch layouts) and packing into kernel-ready layout
# ---------------------------------------------------------------------------
def _conv_init(key, cout, cin, k):
    kw, kb = jax.random.split(key)
    fan = cin * k * k
    w = jax.random.normal(kw, (cout, cin, k, k), jnp.float32) / math.sqrt(fan)
    b = 0.01 * jax.random.normal(kb, (cout,), jnp.float32)
    return w, b


def _dense_init(key, out_dim, in_dim, bias_init=0.0):
    kw, kb = jax.random.split(key)
    w = jax.random.normal(kw, (out_dim, in_dim), jnp.float32) / math.sqrt(in_dim)
    b = bias_init + 0.01 * jax.random.normal(kb, (out_dim,), jnp.float32)
    return w, b


def init_params(key, depth=4):
    c, cls, post = 32, 10, 128
    k_pre, k_post, k_pred, k_rest = jax.random.split(key, 4)
    params = {}
    params["pre_w"], params["pre_b"] = _conv_init(k_pre, c, 1, 1)
    params["post_w"], params["post_b"] = _conv_init(k_post, post, c, 1)
    params["pred_w"], params["pred_b"] = _dense_init(k_pred, cls, post)
    blocks, bns = [], []
    for bk in jax.random.split(k_rest, depth):
        k1, k2, k3, k4 = jax.random.split(bk, 4)
        w, b = _conv_init(k1, c, c, 3)
        blocks.append({"w": w, "b": b})
        sw, sb = _dense_init(k2, c, cls, bias_init=1.0)   # scale ~ 1 at init
        mw, mb = _dense_init(k3, c, cls)
        bw, bb = _dense_init(k4, c, cls)
        bns.append({"scale_w": sw, "scale_b": sb,
                    "mean_scale_w": mw, "mean_scale_b": mb,
                    "bias_w": bw, "bias_b": bb})
    params["blocks"] = blocks
    params["bn"] = bns
    return params


def pack_params(params):
    """Repack torch-layout params into the fused kernel's layout (done once, outside jit)."""
    c = params["pre_w"].shape[0]
    depth = len(params["blocks"])
    # conv taps in (dy*3+dx, Cout, Cin) order, bf16 MXU operands
    conv_w = jnp.concatenate(
        [jnp.transpose(blk["w"], (2, 3, 0, 1)).reshape(9, c, c) for blk in params["blocks"]],
        axis=0).astype(jnp.bfloat16)
    conv_b = jnp.concatenate([blk["b"] for blk in params["blocks"]]).reshape(depth * c, 1)
    cond_w = jnp.concatenate(
        [jnp.concatenate([bn["scale_w"], bn["mean_scale_w"], bn["bias_w"]], axis=0)
         for bn in params["bn"]], axis=0)                                 # (depth*3c, 10)
    cond_b = jnp.concatenate(
        [jnp.concatenate([bn["scale_b"], bn["mean_scale_b"], bn["bias_b"]], axis=0)
         for bn in params["bn"]], axis=0).reshape(depth * 3 * c, 1)
    return dict(
        pre_w=params["pre_w"].reshape(c, 1).astype(jnp.float32),
        pre_b=params["pre_b"].reshape(c, 1).astype(jnp.float32),
        conv_w=conv_w,
        conv_b=conv_b.astype(jnp.float32),
        cond_w=cond_w.astype(jnp.float32),
        cond_b=cond_b.astype(jnp.float32),
        post_w=params["post_w"].reshape(params["post_w"].shape[0], c).astype(jnp.float32),
        post_b=params["post_b"].reshape(-1, 1).astype(jnp.float32),
        pred_w=params["pred_w"].astype(jnp.float32),
        pred_b=params["pred_b"].reshape(-1, 1).astype(jnp.float32),
    )


if __name__ == "__main__":
    key = jax.random.PRNGKey(0)
    kx, kn, kp = jax.random.split(key, 3)

    N, H, W = 2, 16, 16
    inputs = jax.random.normal(kx, (N, 1, H, W), jnp.float32)           # NCHW like PyTorch
    noise = 0.6 ** jax.random.randint(kn, (N,), 0, 10).astype(jnp.float32)
    params = init_params(kp, depth=4)
    packed = pack_params(params)

    fwd = jax.jit(conv_energy_forward)
    score, logits = fwd(inputs, noise, packed)
    jax.block_until_ready((score, logits))

    assert score.shape == inputs.shape and score.dtype == jnp.float32
    assert logits.shape == (N, 10) and logits.dtype == jnp.float32
    assert bool(jnp.all(jnp.isfinite(score))) and bool(jnp.all(jnp.isfinite(logits)))
    print("KERNEL_OK")
</pallas_src>

<mosaic_0001>
module attributes {stable_mosaic.version = 11 : i64} {
  func.func @_conv_energy_kernel(%arg0: i32, %arg1: memref<1x1x384xf32, #tpu.memory_space<vmem>>, %arg2: memref<1x1x10xf32, #tpu.memory_space<vmem>>, %arg3: memref<1x384xf32, #tpu.memory_space<vmem>>, %arg4: memref<32x1xf32, #tpu.memory_space<vmem>>, %arg5: memref<32x1xf32, #tpu.memory_space<vmem>>, %arg6: memref<36x32x32xbf16, #tpu.memory_space<vmem>>, %arg7: memref<128x1xf32, #tpu.memory_space<vmem>>, %arg8: memref<384x10xf32, #tpu.memory_space<vmem>>, %arg9: memref<384x1xf32, #tpu.memory_space<vmem>>, %arg10: memref<128x32xf32, #tpu.memory_space<vmem>>, %arg11: memref<128x1xf32, #tpu.memory_space<vmem>>, %arg12: memref<10x128xf32, #tpu.memory_space<vmem>>, %arg13: memref<10x1xf32, #tpu.memory_space<vmem>>, %arg14: memref<1x10x1xf32, #tpu.memory_space<vmem>>) attributes {dimension_semantics = [#tpu.dimension_semantics<parallel>], iteration_bounds = array<i64: 2>, scalar_prefetch = 0 : i64, scratch_operands = 0 : i64, tpu.core_type = #tpu.core_type<tc>, window_params = [{transform_indices = @transform_0, window_bounds = array<i64: 1, 1, 384>}, {transform_indices = @transform_1, window_bounds = array<i64: 1, 1, 10>}, {pipeline_mode = #tpu.pipeline_mode<synchronous>, transform_indices = @transform_2, window_bounds = array<i64: 1, 384>}, {pipeline_mode = #tpu.pipeline_mode<synchronous>, transform_indices = @transform_3, window_bounds = array<i64: 32, 1>}, {pipeline_mode = #tpu.pipeline_mode<synchronous>, transform_indices = @transform_4, window_bounds = array<i64: 32, 1>}, {pipeline_mode = #tpu.pipeline_mode<synchronous>, transform_indices = @transform_5, window_bounds = array<i64: 36, 32, 32>}, {pipeline_mode = #tpu.pipeline_mode<synchronous>, transform_indices = @transform_6, window_bounds = array<i64: 128, 1>}, {pipeline_mode = #tpu.pipeline_mode<synchronous>, transform_indices = @transform_7, window_bounds = array<i64: 384, 10>}, {pipeline_mode = #tpu.pipeline_mode<synchronous>, transform_indices = @transform_8, window_bounds = array<i64: 384, 1>}, {pipeline_mode = #tpu.pipeline_mode<synchronous>, transform_indices = @transform_9, window_bounds = array<i64: 128, 32>}, {pipeline_mode = #tpu.pipeline_mode<synchronous>, transform_indices = @transform_10, window_bounds = array<i64: 128, 1>}, {pipeline_mode = #tpu.pipeline_mode<synchronous>, transform_indices = @transform_11, window_bounds = array<i64: 10, 128>}, {pipeline_mode = #tpu.pipeline_mode<synchronous>, transform_indices = @transform_12, window_bounds = array<i64: 10, 1>}, {transform_indices = @transform_13, window_bounds = array<i64: 1, 10, 1>}]} {
    %c0 = arith.constant 0 : index
    %c0_0 = arith.constant 0 : index
    %0 = vector.load %arg3[%c0, %c0_0] : memref<1x384xf32, #tpu.memory_space<vmem>>, vector<1x384xf32>
    %c0_1 = arith.constant 0 : index
    %c0_2 = arith.constant 0 : index
    %c0_3 = arith.constant 0 : index
    %1 = vector.load %arg1[%c0_1, %c0_2, %c0_3] : memref<1x1x384xf32, #tpu.memory_space<vmem>>, vector<1x1x384xf32>
    %2 = vector.shape_cast %1 : vector<1x1x384xf32> to vector<1x384xf32>
    %c0_4 = arith.constant 0 : index
    %c0_5 = arith.constant 0 : index
    %c0_6 = arith.constant 0 : index
    %3 = vector.load %arg2[%c0_4, %c0_5, %c0_6] : memref<1x1x10xf32, #tpu.memory_space<vmem>>, vector<1x1x10xf32>
    %4 = vector.shape_cast %3 : vector<1x1x10xf32> to vector<1x10xf32>
    %c0_7 = arith.constant 0 : index
    %c0_8 = arith.constant 0 : index
    %5 = vector.load %arg4[%c0_7, %c0_8] : memref<32x1xf32, #tpu.memory_space<vmem>>, vector<32x1xf32>
    %6 = vector.broadcast %5 : vector<32x1xf32> to vector<32x384xf32>
    %7 = vector.broadcast %2 : vector<1x384xf32> to vector<32x384xf32>
    %8 = arith.mulf %6, %7 : vector<32x384xf32>
    %c0_9 = arith.constant 0 : index
    %c0_10 = arith.constant 0 : index
    %9 = vector.load %arg5[%c0_9, %c0_10] : memref<32x1xf32, #tpu.memory_space<vmem>>, vector<32x1xf32>
    %10 = vector.broadcast %9 : vector<32x1xf32> to vector<32x384xf32>
    %11 = arith.addf %8, %10 : vector<32x384xf32>
    %12 = vector.broadcast %0 : vector<1x384xf32> to vector<32x384xf32>
    %13 = arith.mulf %11, %12 : vector<32x384xf32>
    %c0_11 = arith.constant 0 : index
    %c0_12 = arith.constant 0 : index
    %14 = vector.load %arg8[%c0_11, %c0_12] : memref<384x10xf32, #tpu.memory_space<vmem>>, vector<32x10xf32>
    %c0_13 = arith.constant 0 : index
    %c0_14 = arith.constant 0 : index
    %15 = vector.load %arg9[%c0_13, %c0_14] : memref<384x1xf32, #tpu.memory_space<vmem>>, vector<32x1xf32>
    %16 = vector.broadcast %4 : vector<1x10xf32> to vector<32x10xf32>
    %17 = arith.mulf %14, %16 : vector<32x10xf32>
    %cst = arith.constant dense<0.000000e+00> : vector<32xf32>
    %18 = vector.multi_reduction <add>, %17, %cst [1] : vector<32x10xf32> to vector<32xf32>
    %19 = vector.shape_cast %18 : vector<32xf32> to vector<32x1xf32>
    %20 = arith.addf %19, %15 : vector<32x1xf32>
    %c32 = arith.constant 32 : index
    %c0_15 = arith.constant 0 : index
    %21 = vector.load %arg8[%c32, %c0_15] : memref<384x10xf32, #tpu.memory_space<vmem>>, vector<32x10xf32>
    %c32_16 = arith.constant 32 : index
    %c0_17 = arith.constant 0 : index
    %22 = vector.load %arg9[%c32_16, %c0_17] : memref<384x1xf32, #tpu.memory_space<vmem>>, vector<32x1xf32>
    %23 = vector.broadcast %4 : vector<1x10xf32> to vector<32x10xf32>
    %24 = arith.mulf %21, %23 : vector<32x10xf32>
    %cst_18 = arith.constant dense<0.000000e+00> : vector<32xf32>
    %25 = vector.multi_reduction <add>, %24, %cst_18 [1] : vector<32x10xf32> to vector<32xf32>
    %26 = vector.shape_cast %25 : vector<32xf32> to vector<32x1xf32>
    %27 = arith.addf %26, %22 : vector<32x1xf32>
    %c64 = arith.constant 64 : index
    %c0_19 = arith.constant 0 : index
    %28 = vector.load %arg8[%c64, %c0_19] : memref<384x10xf32, #tpu.memory_space<vmem>>, vector<32x10xf32>
    %c64_20 = arith.constant 64 : index
    %c0_21 = arith.constant 0 : index
    %29 = vector.load %arg9[%c64_20, %c0_21] : memref<384x1xf32, #tpu.memory_space<vmem>>, vector<32x1xf32>
    %30 = vector.broadcast %4 : vector<1x10xf32> to vector<32x10xf32>
    %31 = arith.mulf %28, %30 : vector<32x10xf32>
    %cst_22 = arith.constant dense<0.000000e+00> : vector<32xf32>
    %32 = vector.multi_reduction <add>, %31, %cst_22 [1] : vector<32x10xf32> to vector<32xf32>
    %33 = vector.shape_cast %32 : vector<32xf32> to vector<32x1xf32>
    %34 = arith.addf %33, %29 : vector<32x1xf32>
    %cst_23 = arith.constant 0.000000e+00 : f32
    %35 = vector.broadcast %cst_23 : f32 to vector<32x384xf32>
    %c0_24 = arith.constant 0 : index
    %c0_25 = arith.constant 0 : index
    %c0_26 = arith.constant 0 : index
    %36 = vector.load %arg6[%c0_24, %c0_25, %c0_26] : memref<36x32x32xbf16, #tpu.memory_space<vmem>>, vector<1x32x32xbf16>
    %37 = vector.shape_cast %36 : vector<1x32x32xbf16> to vector<32x32xbf16>
    %c19_i32 = arith.constant 19 : i32
    %38 = tpu.dynamic_rotate %13 by %c19_i32 dim 1 : vector<32x384xf32>, i32 -> vector<32x384xf32>
    %39 = arith.truncf %38 : vector<32x384xf32> to vector<32x384xbf16>
    %cst_27 = arith.constant dense<0.000000e+00> : vector<32x384xf32>
    %40 = tpu.matmul %37, %39, %cst_27 {dimension_numbers = #tpu.dot_dimension_numbers<[1], [0], [0], [1], [0, 0, 1, 1], [], []>} : vector<32x32xbf16>, vector<32x384xbf16>, vector<32x384xf32> -> vector<32x384xf32>
    %41 = arith.addf %35, %40 : vector<32x384xf32>
    %c1 = arith.constant 1 : index
    %c0_28 = arith.constant 0 : index
    %c0_29 = arith.constant 0 : index
    %42 = vector.load %arg6[%c1, %c0_28, %c0_29] : memref<36x32x32xbf16, #tpu.memory_space<vmem>>, vector<1x32x32xbf16>
    %43 = vector.shape_cast %42 : vector<1x32x32xbf16> to vector<32x32xbf16>
    %c18_i32 = arith.constant 18 : i32
    %44 = tpu.dynamic_rotate %13 by %c18_i32 dim 1 : vector<32x384xf32>, i32 -> vector<32x384xf32>
    %45 = arith.truncf %44 : vector<32x384xf32> to vector<32x384xbf16>
    %cst_30 = arith.constant dense<0.000000e+00> : vector<32x384xf32>
    %46 = tpu.matmul %43, %45, %cst_30 {dimension_numbers = #tpu.dot_dimension_numbers<[1], [0], [0], [1], [0, 0, 1, 1], [], []>} : vector<32x32xbf16>, vector<32x384xbf16>, vector<32x384xf32> -> vector<32x384xf32>
    %47 = arith.addf %41, %46 : vector<32x384xf32>
    %c2 = arith.constant 2 : index
    %c0_31 = arith.constant 0 : index
    %c0_32 = arith.constant 0 : index
    %48 = vector.load %arg6[%c2, %c0_31, %c0_32] : memref<36x32x32xbf16, #tpu.memory_space<vmem>>, vector<1x32x32xbf16>
    %49 = vector.shape_cast %48 : vector<1x32x32xbf16> to vector<32x32xbf16>
    %c17_i32 = arith.constant 17 : i32
    %50 = tpu.dynamic_rotate %13 by %c17_i32 dim 1 : vector<32x384xf32>, i32 -> vector<32x384xf32>
    %51 = arith.truncf %50 : vector<32x384xf32> to vector<32x384xbf16>
    %cst_33 = arith.constant dense<0.000000e+00> : vector<32x384xf32>
    %52 = tpu.matmul %49, %51, %cst_33 {dimension_numbers = #tpu.dot_dimension_numbers<[1], [0], [0], [1], [0, 0, 1, 1], [], []>} : vector<32x32xbf16>, vector<32x384xbf16>, vector<32x384xf32> -> vector<32x384xf32>
    %53 = arith.addf %47, %52 : vector<32x384xf32>
    %c3 = arith.constant 3 : index
    %c0_34 = arith.constant 0 : index
    %c0_35 = arith.constant 0 : index
    %54 = vector.load %arg6[%c3, %c0_34, %c0_35] : memref<36x32x32xbf16, #tpu.memory_space<vmem>>, vector<1x32x32xbf16>
    %55 = vector.shape_cast %54 : vector<1x32x32xbf16> to vector<32x32xbf16>
    %c1_i32 = arith.constant 1 : i32
    %56 = tpu.dynamic_rotate %13 by %c1_i32 dim 1 : vector<32x384xf32>, i32 -> vector<32x384xf32>
    %57 = arith.truncf %56 : vector<32x384xf32> to vector<32x384xbf16>
    %cst_36 = arith.constant dense<0.000000e+00> : vector<32x384xf32>
    %58 = tpu.matmul %55, %57, %cst_36 {dimension_numbers = #tpu.dot_dimension_numbers<[1], [0], [0], [1], [0, 0, 1, 1], [], []>} : vector<32x32xbf16>, vector<32x384xbf16>, vector<32x384xf32> -> vector<32x384xf32>
    %59 = arith.addf %53, %58 : vector<32x384xf32>
    %c4 = arith.constant 4 : index
    %c0_37 = arith.constant 0 : index
    %c0_38 = arith.constant 0 : index
    %60 = vector.load %arg6[%c4, %c0_37, %c0_38] : memref<36x32x32xbf16, #tpu.memory_space<vmem>>, vector<1x32x32xbf16>
    %61 = vector.shape_cast %60 : vector<1x32x32xbf16> to vector<32x32xbf16>
    %62 = arith.truncf %13 : vector<32x384xf32> to vector<32x384xbf16>
    %cst_39 = arith.constant dense<0.000000e+00> : vector<32x384xf32>
    %63 = tpu.matmul %61, %62, %cst_39 {dimension_numbers = #tpu.dot_dimension_numbers<[1], [0], [0], [1], [0, 0, 1, 1], [], []>} : vector<32x32xbf16>, vector<32x384xbf16>, vector<32x384xf32> -> vector<32x384xf32>
    %64 = arith.addf %59, %63 : vector<32x384xf32>
    %c5 = arith.constant 5 : index
    %c0_40 = arith.constant 0 : index
    %c0_41 = arith.constant 0 : index
    %65 = vector.load %arg6[%c5, %c0_40, %c0_41] : memref<36x32x32xbf16, #tpu.memory_space<vmem>>, vector<1x32x32xbf16>
    %66 = vector.shape_cast %65 : vector<1x32x32xbf16> to vector<32x32xbf16>
    %c383_i32 = arith.constant 383 : i32
    %67 = tpu.dynamic_rotate %13 by %c383_i32 dim 1 : vector<32x384xf32>, i32 -> vector<32x384xf32>
    %68 = arith.truncf %67 : vector<32x384xf32> to vector<32x384xbf16>
    %cst_42 = arith.constant dense<0.000000e+00> : vector<32x384xf32>
    %69 = tpu.matmul %66, %68, %cst_42 {dimension_numbers = #tpu.dot_dimension_numbers<[1], [0], [0], [1], [0, 0, 1, 1], [], []>} : vector<32x32xbf16>, vector<32x384xbf16>, vector<32x384xf32> -> vector<32x384xf32>
    %70 = arith.addf %64, %69 : vector<32x384xf32>
    %c6 = arith.constant 6 : index
    %c0_43 = arith.constant 0 : index
    %c0_44 = arith.constant 0 : index
    %71 = vector.load %arg6[%c6, %c0_43, %c0_44] : memref<36x32x32xbf16, #tpu.memory_space<vmem>>, vector<1x32x32xbf16>
    %72 = vector.shape_cast %71 : vector<1x32x32xbf16> to vector<32x32xbf16>
    %c367_i32 = arith.constant 367 : i32
    %73 = tpu.dynamic_rotate %13 by %c367_i32 dim 1 : vector<32x384xf32>, i32 -> vector<32x384xf32>
    %74 = arith.truncf %73 : vector<32x384xf32> to vector<32x384xbf16>
    %cst_45 = arith.constant dense<0.000000e+00> : vector<32x384xf32>
    %75 = tpu.matmul %72, %74, %cst_45 {dimension_numbers = #tpu.dot_dimension_numbers<[1], [0], [0], [1], [0, 0, 1, 1], [], []>} : vector<32x32xbf16>, vector<32x384xbf16>, vector<32x384xf32> -> vector<32x384xf32>
    %76 = arith.addf %70, %75 : vector<32x384xf32>
    %c7 = arith.constant 7 : index
    %c0_46 = arith.constant 0 : index
    %c0_47 = arith.constant 0 : index
    %77 = vector.load %arg6[%c7, %c0_46, %c0_47] : memref<36x32x32xbf16, #tpu.memory_space<vmem>>, vector<1x32x32xbf16>
    %78 = vector.shape_cast %77 : vector<1x32x32xbf16> to vector<32x32xbf16>
    %c366_i32 = arith.constant 366 : i32
    %79 = tpu.dynamic_rotate %13 by %c366_i32 dim 1 : vector<32x384xf32>, i32 -> vector<32x384xf32>
    %80 = arith.truncf %79 : vector<32x384xf32> to vector<32x384xbf16>
    %cst_48 = arith.constant dense<0.000000e+00> : vector<32x384xf32>
    %81 = tpu.matmul %78, %80, %cst_48 {dimension_numbers = #tpu.dot_dimension_numbers<[1], [0], [0], [1], [0, 0, 1, 1], [], []>} : vector<32x32xbf16>, vector<32x384xbf16>, vector<32x384xf32> -> vector<32x384xf32>
    %82 = arith.addf %76, %81 : vector<32x384xf32>
    %c8 = arith.constant 8 : index
    %c0_49 = arith.constant 0 : index
    %c0_50 = arith.constant 0 : index
    %83 = vector.load %arg6[%c8, %c0_49, %c0_50] : memref<36x32x32xbf16, #tpu.memory_space<vmem>>, vector<1x32x32xbf16>
    %84 = vector.shape_cast %83 : vector<1x32x32xbf16> to vector<32x32xbf16>
    %c365_i32 = arith.constant 365 : i32
    %85 = tpu.dynamic_rotate %13 by %c365_i32 dim 1 : vector<32x384xf32>, i32 -> vector<32x384xf32>
    %86 = arith.truncf %85 : vector<32x384xf32> to vector<32x384xbf16>
    %cst_51 = arith.constant dense<0.000000e+00> : vector<32x384xf32>
    %87 = tpu.matmul %84, %86, %cst_51 {dimension_numbers = #tpu.dot_dimension_numbers<[1], [0], [0], [1], [0, 0, 1, 1], [], []>} : vector<32x32xbf16>, vector<32x384xbf16>, vector<32x384xf32> -> vector<32x384xf32>
    %88 = arith.addf %82, %87 : vector<32x384xf32>
    %c0_52 = arith.constant 0 : index
    %c0_53 = arith.constant 0 : index
    %89 = vector.load %arg7[%c0_52, %c0_53] : memref<128x1xf32, #tpu.memory_space<vmem>>, vector<32x1xf32>
    %90 = vector.broadcast %89 : vector<32x1xf32> to vector<32x384xf32>
    %91 = arith.addf %88, %90 : vector<32x384xf32>
    %92 = arith.addf %91, %13 : vector<32x384xf32>
    %93 = vector.broadcast %0 : vector<1x384xf32> to vector<32x384xf32>
    %94 = arith.mulf %92, %93 : vector<32x384xf32>
    %cst_54 = arith.constant dense<0.000000e+00> : vector<32xf32>
    %95 = vector.multi_reduction <add>, %94, %cst_54 [1] : vector<32x384xf32> to vector<32xf32>
    %96 = vector.shape_cast %95 : vector<32xf32> to vector<32x1xf32>
    %cst_55 = arith.constant 3.906250e-03 : f32
    %97 = vector.broadcast %cst_55 : f32 to vector<32x1xf32>
    %98 = arith.mulf %96, %97 : vector<32x1xf32>
    %99 = vector.broadcast %98 : vector<32x1xf32> to vector<32x384xf32>
    %100 = arith.subf %92, %99 : vector<32x384xf32>
    %101 = vector.broadcast %0 : vector<1x384xf32> to vector<32x384xf32>
    %102 = arith.mulf %100, %101 : vector<32x384xf32>
    %103 = arith.mulf %102, %102 : vector<32x384xf32>
    %cst_56 = arith.constant dense<0.000000e+00> : vector<32xf32>
    %104 = vector.multi_reduction <add>, %103, %cst_56 [1] : vector<32x384xf32> to vector<32xf32>
    %105 = vector.shape_cast %104 : vector<32xf32> to vector<32x1xf32>
    %cst_57 = arith.constant 3.906250e-03 : f32
    %106 = vector.broadcast %cst_57 : f32 to vector<32x1xf32>
    %107 = arith.mulf %105, %106 : vector<32x1xf32>
    %108 = vector.broadcast %98 : vector<32x1xf32> to vector<32x384xf32>
    %109 = arith.subf %92, %108 : vector<32x384xf32>
    %cst_58 = arith.constant 9.99999974E-6 : f32
    %110 = vector.broadcast %cst_58 : f32 to vector<32x1xf32>
    %111 = arith.addf %107, %110 : vector<32x1xf32>
    %112 = math.rsqrt %111 : vector<32x1xf32>
    %113 = vector.broadcast %112 : vector<32x1xf32> to vector<32x384xf32>
    %114 = arith.mulf %109, %113 : vector<32x384xf32>
    %cst_59 = arith.constant dense<0.000000e+00> : vector<1xf32>
    %115 = vector.multi_reduction <add>, %98, %cst_59 [0] : vector<32x1xf32> to vector<1xf32>
    %116 = vector.shape_cast %115 : vector<1xf32> to vector<1x1xf32>
    %cst_60 = arith.constant 3.200000e+01 : f32
    %117 = vector.broadcast %cst_60 : f32 to vector<1x1xf32>
    %118 = arith.divf %116, %117 : vector<1x1xf32>
    %119 = vector.broadcast %118 : vector<1x1xf32> to vector<32x1xf32>
    %120 = arith.subf %98, %119 : vector<32x1xf32>
    %121 = arith.mulf %120, %120 : vector<32x1xf32>
    %cst_61 = arith.constant dense<0.000000e+00> : vector<1xf32>
    %122 = vector.multi_reduction <add>, %121, %cst_61 [0] : vector<32x1xf32> to vector<1xf32>
    %123 = vector.shape_cast %122 : vector<1xf32> to vector<1x1xf32>
    %cst_62 = arith.constant 3.100000e+01 : f32
    %124 = vector.broadcast %cst_62 : f32 to vector<1x1xf32>
    %125 = arith.divf %123, %124 : vector<1x1xf32>
    %126 = vector.broadcast %118 : vector<1x1xf32> to vector<32x1xf32>
    %127 = arith.subf %98, %126 : vector<32x1xf32>
    %128 = math.sqrt %125 : vector<1x1xf32>
    %cst_63 = arith.constant 9.99999997E-7 : f32
    %129 = vector.broadcast %cst_63 : f32 to vector<1x1xf32>
    %130 = arith.addf %128, %129 : vector<1x1xf32>
    %131 = vector.broadcast %130 : vector<1x1xf32> to vector<32x1xf32>
    %132 = arith.divf %127, %131 : vector<32x1xf32>
    %133 = vector.broadcast %20 : vector<32x1xf32> to vector<32x384xf32>
    %134 = arith.mulf %133, %114 : vector<32x384xf32>
    %135 = arith.mulf %27, %132 : vector<32x1xf32>
    %136 = vector.broadcast %135 : vector<32x1xf32> to vector<32x384xf32>
    %137 = arith.addf %134, %136 : vector<32x384xf32>
    %138 = vector.broadcast %34 : vector<32x1xf32> to vector<32x384xf32>
    %139 = arith.addf %137, %138 : vector<32x384xf32>
    %cst_64 = arith.constant 0.000000e+00 : f32
    %140 = vector.broadcast %cst_64 : f32 to vector<32x384xf32>
    %141 = arith.cmpf ogt, %139, %140 : vector<32x384xf32>
    %cst_65 = arith.constant 0.000000e+00 : f32
    %142 = vector.broadcast %cst_65 : f32 to vector<32x384xf32>
    %143 = arith.select %141, %142, %139 : vector<32x384xi1>, vector<32x384xf32>
    %cst_66 = arith.constant 0.000000e+00 : f32
    %144 = vector.broadcast %cst_66 : f32 to vector<32x384xf32>
    %145 = arith.cmpf ogt, %139, %144 : vector<32x384xf32>
    %146 = math.exp %143 : vector<32x384xf32>
    %cst_67 = arith.constant 1.000000e+00 : f32
    %147 = vector.broadcast %cst_67 : f32 to vector<32x384xf32>
    %148 = arith.subf %146, %147 : vector<32x384xf32>
    %149 = arith.select %145, %139, %148 : vector<32x384xi1>, vector<32x384xf32>
    %150 = vector.broadcast %0 : vector<1x384xf32> to vector<32x384xf32>
    %151 = arith.mulf %149, %150 : vector<32x384xf32>
    %c96 = arith.constant 96 : index
    %c0_68 = arith.constant 0 : index
    %152 = vector.load %arg8[%c96, %c0_68] : memref<384x10xf32, #tpu.memory_space<vmem>>, vector<32x10xf32>
    %c96_69 = arith.constant 96 : index
    %c0_70 = arith.constant 0 : index
    %153 = vector.load %arg9[%c96_69, %c0_70] : memref<384x1xf32, #tpu.memory_space<vmem>>, vector<32x1xf32>
    %154 = vector.broadcast %4 : vector<1x10xf32> to vector<32x10xf32>
    %155 = arith.mulf %152, %154 : vector<32x10xf32>
    %cst_71 = arith.constant dense<0.000000e+00> : vector<32xf32>
    %156 = vector.multi_reduction <add>, %155, %cst_71 [1] : vector<32x10xf32> to vector<32xf32>
    %157 = vector.shape_cast %156 : vector<32xf32> to vector<32x1xf32>
    %158 = arith.addf %157, %153 : vector<32x1xf32>
    %c128 = arith.constant 128 : index
    %c0_72 = arith.constant 0 : index
    %159 = vector.load %arg8[%c128, %c0_72] : memref<384x10xf32, #tpu.memory_space<vmem>>, vector<32x10xf32>
    %c128_73 = arith.constant 128 : index
    %c0_74 = arith.constant 0 : index
    %160 = vector.load %arg9[%c128_73, %c0_74] : memref<384x1xf32, #tpu.memory_space<vmem>>, vector<32x1xf32>
    %161 = vector.broadcast %4 : vector<1x10xf32> to vector<32x10xf32>
    %162 = arith.mulf %159, %161 : vector<32x10xf32>
    %cst_75 = arith.constant dense<0.000000e+00> : vector<32xf32>
    %163 = vector.multi_reduction <add>, %162, %cst_75 [1] : vector<32x10xf32> to vector<32xf32>
    %164 = vector.shape_cast %163 : vector<32xf32> to vector<32x1xf32>
    %165 = arith.addf %164, %160 : vector<32x1xf32>
    %c160 = arith.constant 160 : index
    %c0_76 = arith.constant 0 : index
    %166 = vector.load %arg8[%c160, %c0_76] : memref<384x10xf32, #tpu.memory_space<vmem>>, vector<32x10xf32>
    %c160_77 = arith.constant 160 : index
    %c0_78 = arith.constant 0 : index
    %167 = vector.load %arg9[%c160_77, %c0_78] : memref<384x1xf32, #tpu.memory_space<vmem>>, vector<32x1xf32>
    %168 = vector.broadcast %4 : vector<1x10xf32> to vector<32x10xf32>
    %169 = arith.mulf %166, %168 : vector<32x10xf32>
    %cst_79 = arith.constant dense<0.000000e+00> : vector<32xf32>
    %170 = vector.multi_reduction <add>, %169, %cst_79 [1] : vector<32x10xf32> to vector<32xf32>
    %171 = vector.shape_cast %170 : vector<32xf32> to vector<32x1xf32>
    %172 = arith.addf %171, %167 : vector<32x1xf32>
    %cst_80 = arith.constant 0.000000e+00 : f32
    %173 = vector.broadcast %cst_80 : f32 to vector<32x384xf32>
    %c9 = arith.constant 9 : index
    %c0_81 = arith.constant 0 : index
    %c0_82 = arith.constant 0 : index
    %174 = vector.load %arg6[%c9, %c0_81, %c0_82] : memref<36x32x32xbf16, #tpu.memory_space<vmem>>, vector<1x32x32xbf16>
    %175 = vector.shape_cast %174 : vector<1x32x32xbf16> to vector<32x32xbf16>
    %c19_i32_83 = arith.constant 19 : i32
    %176 = tpu.dynamic_rotate %151 by %c19_i32_83 dim 1 : vector<32x384xf32>, i32 -> vector<32x384xf32>
    %177 = arith.truncf %176 : vector<32x384xf32> to vector<32x384xbf16>
    %cst_84 = arith.constant dense<0.000000e+00> : vector<32x384xf32>
    %178 = tpu.matmul %175, %177, %cst_84 {dimension_numbers = #tpu.dot_dimension_numbers<[1], [0], [0], [1], [0, 0, 1, 1], [], []>} : vector<32x32xbf16>, vector<32x384xbf16>, vector<32x384xf32> -> vector<32x384xf32>
    %179 = arith.addf %173, %178 : vector<32x384xf32>
    %c10 = arith.constant 10 : index
    %c0_85 = arith.constant 0 : index
    %c0_86 = arith.constant 0 : index
    %180 = vector.load %arg6[%c10, %c0_85, %c0_86] : memref<36x32x32xbf16, #tpu.memory_space<vmem>>, vector<1x32x32xbf16>
    %181 = vector.shape_cast %180 : vector<1x32x32xbf16> to vector<32x32xbf16>
    %c18_i32_87 = arith.constant 18 : i32
    %182 = tpu.dynamic_rotate %151 by %c18_i32_87 dim 1 : vector<32x384xf32>, i32 -> vector<32x384xf32>
    %183 = arith.truncf %182 : vector<32x384xf32> to vector<32x384xbf16>
    %cst_88 = arith.constant dense<0.000000e+00> : vector<32x384xf32>
    %184 = tpu.matmul %181, %183, %cst_88 {dimension_numbers = #tpu.dot_dimension_numbers<[1], [0], [0], [1], [0, 0, 1, 1], [], []>} : vector<32x32xbf16>, vector<32x384xbf16>, vector<32x384xf32> -> vector<32x384xf32>
    %185 = arith.addf %179, %184 : vector<32x384xf32>
    %c11 = arith.constant 11 : index
    %c0_89 = arith.constant 0 : index
    %c0_90 = arith.constant 0 : index
    %186 = vector.load %arg6[%c11, %c0_89, %c0_90] : memref<36x32x32xbf16, #tpu.memory_space<vmem>>, vector<1x32x32xbf16>
    %187 = vector.shape_cast %186 : vector<1x32x32xbf16> to vector<32x32xbf16>
    %c17_i32_91 = arith.constant 17 : i32
    %188 = tpu.dynamic_rotate %151 by %c17_i32_91 dim 1 : vector<32x384xf32>, i32 -> vector<32x384xf32>
    %189 = arith.truncf %188 : vector<32x384xf32> to vector<32x384xbf16>
    %cst_92 = arith.constant dense<0.000000e+00> : vector<32x384xf32>
    %190 = tpu.matmul %187, %189, %cst_92 {dimension_numbers = #tpu.dot_dimension_numbers<[1], [0], [0], [1], [0, 0, 1, 1], [], []>} : vector<32x32xbf16>, vector<32x384xbf16>, vector<32x384xf32> -> vector<32x384xf32>
    %191 = arith.addf %185, %190 : vector<32x384xf32>
    %c12 = arith.constant 12 : index
    %c0_93 = arith.constant 0 : index
    %c0_94 = arith.constant 0 : index
    %192 = vector.load %arg6[%c12, %c0_93, %c0_94] : memref<36x32x32xbf16, #tpu.memory_space<vmem>>, vector<1x32x32xbf16>
    %193 = vector.shape_cast %192 : vector<1x32x32xbf16> to vector<32x32xbf16>
    %c1_i32_95 = arith.constant 1 : i32
    %194 = tpu.dynamic_rotate %151 by %c1_i32_95 dim 1 : vector<32x384xf32>, i32 -> vector<32x384xf32>
    %195 = arith.truncf %194 : vector<32x384xf32> to vector<32x384xbf16>
    %cst_96 = arith.constant dense<0.000000e+00> : vector<32x384xf32>
    %196 = tpu.matmul %193, %195, %cst_96 {dimension_numbers = #tpu.dot_dimension_numbers<[1], [0], [0], [1], [0, 0, 1, 1], [], []>} : vector<32x32xbf16>, vector<32x384xbf16>, vector<32x384xf32> -> vector<32x384xf32>
    %197 = arith.addf %191, %196 : vector<32x384xf32>
    %c13 = arith.constant 13 : index
    %c0_97 = arith.constant 0 : index
    %c0_98 = arith.constant 0 : index
    %198 = vector.load %arg6[%c13, %c0_97, %c0_98] : memref<36x32x32xbf16, #tpu.memory_space<vmem>>, vector<1x32x32xbf16>
    %199 = vector.shape_cast %198 : vector<1x32x32xbf16> to vector<32x32xbf16>
    %200 = arith.truncf %151 : vector<32x384xf32> to vector<32x384xbf16>
    %cst_99 = arith.constant dense<0.000000e+00> : vector<32x384xf32>
    %201 = tpu.matmul %199, %200, %cst_99 {dimension_numbers = #tpu.dot_dimension_numbers<[1], [0], [0], [1], [0, 0, 1, 1], [], []>} : vector<32x32xbf16>, vector<32x384xbf16>, vector<32x384xf32> -> vector<32x384xf32>
    %202 = arith.addf %197, %201 : vector<32x384xf32>
    %c14 = arith.constant 14 : index
    %c0_100 = arith.constant 0 : index
    %c0_101 = arith.constant 0 : index
    %203 = vector.load %arg6[%c14, %c0_100, %c0_101] : memref<36x32x32xbf16, #tpu.memory_space<vmem>>, vector<1x32x32xbf16>
    %204 = vector.shape_cast %203 : vector<1x32x32xbf16> to vector<32x32xbf16>
    %c383_i32_102 = arith.constant 383 : i32
    %205 = tpu.dynamic_rotate %151 by %c383_i32_102 dim 1 : vector<32x384xf32>, i32 -> vector<32x384xf32>
    %206 = arith.truncf %205 : vector<32x384xf32> to vector<32x384xbf16>
    %cst_103 = arith.constant dense<0.000000e+00> : vector<32x384xf32>
    %207 = tpu.matmul %204, %206, %cst_103 {dimension_numbers = #tpu.dot_dimension_numbers<[1], [0], [0], [1], [0, 0, 1, 1], [], []>} : vector<32x32xbf16>, vector<32x384xbf16>, vector<32x384xf32> -> vector<32x384xf32>
    %208 = arith.addf %202, %207 : vector<32x384xf32>
    %c15 = arith.constant 15 : index
    %c0_104 = arith.constant 0 : index
    %c0_105 = arith.constant 0 : index
    %209 = vector.load %arg6[%c15, %c0_104, %c0_105] : memref<36x32x32xbf16, #tpu.memory_space<vmem>>, vector<1x32x32xbf16>
    %210 = vector.shape_cast %209 : vector<1x32x32xbf16> to vector<32x32xbf16>
    %c367_i32_106 = arith.constant 367 : i32
    %211 = tpu.dynamic_rotate %151 by %c367_i32_106 dim 1 : vector<32x384xf32>, i32 -> vector<32x384xf32>
    %212 = arith.truncf %211 : vector<32x384xf32> to vector<32x384xbf16>
    %cst_107 = arith.constant dense<0.000000e+00> : vector<32x384xf32>
    %213 = tpu.matmul %210, %212, %cst_107 {dimension_numbers = #tpu.dot_dimension_numbers<[1], [0], [0], [1], [0, 0, 1, 1], [], []>} : vector<32x32xbf16>, vector<32x384xbf16>, vector<32x384xf32> -> vector<32x384xf32>
    %214 = arith.addf %208, %213 : vector<32x384xf32>
    %c16 = arith.constant 16 : index
    %c0_108 = arith.constant 0 : index
    %c0_109 = arith.constant 0 : index
    %215 = vector.load %arg6[%c16, %c0_108, %c0_109] : memref<36x32x32xbf16, #tpu.memory_space<vmem>>, vector<1x32x32xbf16>
    %216 = vector.shape_cast %215 : vector<1x32x32xbf16> to vector<32x32xbf16>
    %c366_i32_110 = arith.constant 366 : i32
    %217 = tpu.dynamic_rotate %151 by %c366_i32_110 dim 1 : vector<32x384xf32>, i32 -> vector<32x384xf32>
    %218 = arith.truncf %217 : vector<32x384xf32> to vector<32x384xbf16>
    %cst_111 = arith.constant dense<0.000000e+00> : vector<32x384xf32>
    %219 = tpu.matmul %216, %218, %cst_111 {dimension_numbers = #tpu.dot_dimension_numbers<[1], [0], [0], [1], [0, 0, 1, 1], [], []>} : vector<32x32xbf16>, vector<32x384xbf16>, vector<32x384xf32> -> vector<32x384xf32>
    %220 = arith.addf %214, %219 : vector<32x384xf32>
    %c17 = arith.constant 17 : index
    %c0_112 = arith.constant 0 : index
    %c0_113 = arith.constant 0 : index
    %221 = vector.load %arg6[%c17, %c0_112, %c0_113] : memref<36x32x32xbf16, #tpu.memory_space<vmem>>, vector<1x32x32xbf16>
    %222 = vector.shape_cast %221 : vector<1x32x32xbf16> to vector<32x32xbf16>
    %c365_i32_114 = arith.constant 365 : i32
    %223 = tpu.dynamic_rotate %151 by %c365_i32_114 dim 1 : vector<32x384xf32>, i32 -> vector<32x384xf32>
    %224 = arith.truncf %223 : vector<32x384xf32> to vector<32x384xbf16>
    %cst_115 = arith.constant dense<0.000000e+00> : vector<32x384xf32>
    %225 = tpu.matmul %222, %224, %cst_115 {dimension_numbers = #tpu.dot_dimension_numbers<[1], [0], [0], [1], [0, 0, 1, 1], [], []>} : vector<32x32xbf16>, vector<32x384xbf16>, vector<32x384xf32> -> vector<32x384xf32>
    %226 = arith.addf %220, %225 : vector<32x384xf32>
    %c32_116 = arith.constant 32 : index
    %c0_117 = arith.constant 0 : index
    %227 = vector.load %arg7[%c32_116, %c0_117] : memref<128x1xf32, #tpu.memory_space<vmem>>, vector<32x1xf32>
    %228 = vector.broadcast %227 : vector<32x1xf32> to vector<32x384xf32>
    %229 = arith.addf %226, %228 : vector<32x384xf32>
    %230 = arith.addf %229, %151 : vector<32x384xf32>
    %231 = vector.broadcast %0 : vector<1x384xf32> to vector<32x384xf32>
    %232 = arith.mulf %230, %231 : vector<32x384xf32>
    %cst_118 = arith.constant dense<0.000000e+00> : vector<32xf32>
    %233 = vector.multi_reduction <add>, %232, %cst_118 [1] : vector<32x384xf32> to vector<32xf32>
    %234 = vector.shape_cast %233 : vector<32xf32> to vector<32x1xf32>
    %cst_119 = arith.constant 3.906250e-03 : f32
    %235 = vector.broadcast %cst_119 : f32 to vector<32x1xf32>
    %236 = arith.mulf %234, %235 : vector<32x1xf32>
    %237 = vector.broadcast %236 : vector<32x1xf32> to vector<32x384xf32>
    %238 = arith.subf %230, %237 : vector<32x384xf32>
    %239 = vector.broadcast %0 : vector<1x384xf32> to vector<32x384xf32>
    %240 = arith.mulf %238, %239 : vector<32x384xf32>
    %241 = arith.mulf %240, %240 : vector<32x384xf32>
    %cst_120 = arith.constant dense<0.000000e+00> : vector<32xf32>
    %242 = vector.multi_reduction <add>, %241, %cst_120 [1] : vector<32x384xf32> to vector<32xf32>
    %243 = vector.shape_cast %242 : vector<32xf32> to vector<32x1xf32>
    %cst_121 = arith.constant 3.906250e-03 : f32
    %244 = vector.broadcast %cst_121 : f32 to vector<32x1xf32>
    %245 = arith.mulf %243, %244 : vector<32x1xf32>
    %246 = vector.broadcast %236 : vector<32x1xf32> to vector<32x384xf32>
    %247 = arith.subf %230, %246 : vector<32x384xf32>
    %cst_122 = arith.constant 9.99999974E-6 : f32
    %248 = vector.broadcast %cst_122 : f32 to vector<32x1xf32>
    %249 = arith.addf %245, %248 : vector<32x1xf32>
    %250 = math.rsqrt %249 : vector<32x1xf32>
    %251 = vector.broadcast %250 : vector<32x1xf32> to vector<32x384xf32>
    %252 = arith.mulf %247, %251 : vector<32x384xf32>
    %cst_123 = arith.constant dense<0.000000e+00> : vector<1xf32>
    %253 = vector.multi_reduction <add>, %236, %cst_123 [0] : vector<32x1xf32> to vector<1xf32>
    %254 = vector.shape_cast %253 : vector<1xf32> to vector<1x1xf32>
    %cst_124 = arith.constant 3.200000e+01 : f32
    %255 = vector.broadcast %cst_124 : f32 to vector<1x1xf32>
    %256 = arith.divf %254, %255 : vector<1x1xf32>
    %257 = vector.broadcast %256 : vector<1x1xf32> to vector<32x1xf32>
    %258 = arith.subf %236, %257 : vector<32x1xf32>
    %259 = arith.mulf %258, %258 : vector<32x1xf32>
    %cst_125 = arith.constant dense<0.000000e+00> : vector<1xf32>
    %260 = vector.multi_reduction <add>, %259, %cst_125 [0] : vector<32x1xf32> to vector<1xf32>
    %261 = vector.shape_cast %260 : vector<1xf32> to vector<1x1xf32>
    %cst_126 = arith.constant 3.100000e+01 : f32
    %262 = vector.broadcast %cst_126 : f32 to vector<1x1xf32>
    %263 = arith.divf %261, %262 : vector<1x1xf32>
    %264 = vector.broadcast %256 : vector<1x1xf32> to vector<32x1xf32>
    %265 = arith.subf %236, %264 : vector<32x1xf32>
    %266 = math.sqrt %263 : vector<1x1xf32>
    %cst_127 = arith.constant 9.99999997E-7 : f32
    %267 = vector.broadcast %cst_127 : f32 to vector<1x1xf32>
    %268 = arith.addf %266, %267 : vector<1x1xf32>
    %269 = vector.broadcast %268 : vector<1x1xf32> to vector<32x1xf32>
    %270 = arith.divf %265, %269 : vector<32x1xf32>
    %271 = vector.broadcast %158 : vector<32x1xf32> to vector<32x384xf32>
    %272 = arith.mulf %271, %252 : vector<32x384xf32>
    %273 = arith.mulf %165, %270 : vector<32x1xf32>
    %274 = vector.broadcast %273 : vector<32x1xf32> to vector<32x384xf32>
    %275 = arith.addf %272, %274 : vector<32x384xf32>
    %276 = vector.broadcast %172 : vector<32x1xf32> to vector<32x384xf32>
    %277 = arith.addf %275, %276 : vector<32x384xf32>
    %cst_128 = arith.constant 0.000000e+00 : f32
    %278 = vector.broadcast %cst_128 : f32 to vector<32x384xf32>
    %279 = arith.cmpf ogt, %277, %278 : vector<32x384xf32>
    %cst_129 = arith.constant 0.000000e+00 : f32
    %280 = vector.broadcast %cst_129 : f32 to vector<32x384xf32>
    %281 = arith.select %279, %280, %277 : vector<32x384xi1>, vector<32x384xf32>
    %cst_130 = arith.constant 0.000000e+00 : f32
    %282 = vector.broadcast %cst_130 : f32 to vector<32x384xf32>
    %283 = arith.cmpf ogt, %277, %282 : vector<32x384xf32>
    %284 = math.exp %281 : vector<32x384xf32>
    %cst_131 = arith.constant 1.000000e+00 : f32
    %285 = vector.broadcast %cst_131 : f32 to vector<32x384xf32>
    %286 = arith.subf %284, %285 : vector<32x384xf32>
    %287 = arith.select %283, %277, %286 : vector<32x384xi1>, vector<32x384xf32>
    %288 = vector.broadcast %0 : vector<1x384xf32> to vector<32x384xf32>
    %289 = arith.mulf %287, %288 : vector<32x384xf32>
    %c192 = arith.constant 192 : index
    %c0_132 = arith.constant 0 : index
    %290 = vector.load %arg8[%c192, %c0_132] : memref<384x10xf32, #tpu.memory_space<vmem>>, vector<32x10xf32>
    %c192_133 = arith.constant 192 : index
    %c0_134 = arith.constant 0 : index
    %291 = vector.load %arg9[%c192_133, %c0_134] : memref<384x1xf32, #tpu.memory_space<vmem>>, vector<32x1xf32>
    %292 = vector.broadcast %4 : vector<1x10xf32> to vector<32x10xf32>
    %293 = arith.mulf %290, %292 : vector<32x10xf32>
    %cst_135 = arith.constant dense<0.000000e+00> : vector<32xf32>
    %294 = vector.multi_reduction <add>, %293, %cst_135 [1] : vector<32x10xf32> to vector<32xf32>
    %295 = vector.shape_cast %294 : vector<32xf32> to vector<32x1xf32>
    %296 = arith.addf %295, %291 : vector<32x1xf32>
    %c224 = arith.constant 224 : index
    %c0_136 = arith.constant 0 : index
    %297 = vector.load %arg8[%c224, %c0_136] : memref<384x10xf32, #tpu.memory_space<vmem>>, vector<32x10xf32>
    %c224_137 = arith.constant 224 : index
    %c0_138 = arith.constant 0 : index
    %298 = vector.load %arg9[%c224_137, %c0_138] : memref<384x1xf32, #tpu.memory_space<vmem>>, vector<32x1xf32>
    %299 = vector.broadcast %4 : vector<1x10xf32> to vector<32x10xf32>
    %300 = arith.mulf %297, %299 : vector<32x10xf32>
    %cst_139 = arith.constant dense<0.000000e+00> : vector<32xf32>
    %301 = vector.multi_reduction <add>, %300, %cst_139 [1] : vector<32x10xf32> to vector<32xf32>
    %302 = vector.shape_cast %301 : vector<32xf32> to vector<32x1xf32>
    %303 = arith.addf %302, %298 : vector<32x1xf32>
    %c256 = arith.constant 256 : index
    %c0_140 = arith.constant 0 : index
    %304 = vector.load %arg8[%c256, %c0_140] : memref<384x10xf32, #tpu.memory_space<vmem>>, vector<32x10xf32>
    %c256_141 = arith.constant 256 : index
    %c0_142 = arith.constant 0 : index
    %305 = vector.load %arg9[%c256_141, %c0_142] : memref<384x1xf32, #tpu.memory_space<vmem>>, vector<32x1xf32>
    %306 = vector.broadcast %4 : vector<1x10xf32> to vector<32x10xf32>
    %307 = arith.mulf %304, %306 : vector<32x10xf32>
    %cst_143 = arith.constant dense<0.000000e+00> : vector<32xf32>
    %308 = vector.multi_reduction <add>, %307, %cst_143 [1] : vector<32x10xf32> to vector<32xf32>
    %309 = vector.shape_cast %308 : vector<32xf32> to vector<32x1xf32>
    %310 = arith.addf %309, %305 : vector<32x1xf32>
    %cst_144 = arith.constant 0.000000e+00 : f32
    %311 = vector.broadcast %cst_144 : f32 to vector<32x384xf32>
    %c18 = arith.constant 18 : index
    %c0_145 = arith.constant 0 : index
    %c0_146 = arith.constant 0 : index
    %312 = vector.load %arg6[%c18, %c0_145, %c0_146] : memref<36x32x32xbf16, #tpu.memory_space<vmem>>, vector<1x32x32xbf16>
    %313 = vector.shape_cast %312 : vector<1x32x32xbf16> to vector<32x32xbf16>
    %c19_i32_147 = arith.constant 19 : i32
    %314 = tpu.dynamic_rotate %289 by %c19_i32_147 dim 1 : vector<32x384xf32>, i32 -> vector<32x384xf32>
    %315 = arith.truncf %314 : vector<32x384xf32> to vector<32x384xbf16>
    %cst_148 = arith.constant dense<0.000000e+00> : vector<32x384xf32>
    %316 = tpu.matmul %313, %315, %cst_148 {dimension_numbers = #tpu.dot_dimension_numbers<[1], [0], [0], [1], [0, 0, 1, 1], [], []>} : vector<32x32xbf16>, vector<32x384xbf16>, vector<32x384xf32> -> vector<32x384xf32>
    %317 = arith.addf %311, %316 : vector<32x384xf32>
    %c19 = arith.constant 19 : index
    %c0_149 = arith.constant 0 : index
    %c0_150 = arith.constant 0 : index
    %318 = vector.load %arg6[%c19, %c0_149, %c0_150] : memref<36x32x32xbf16, #tpu.memory_space<vmem>>, vector<1x32x32xbf16>
    %319 = vector.shape_cast %318 : vector<1x32x32xbf16> to vector<32x32xbf16>
    %c18_i32_151 = arith.constant 18 : i32
    %320 = tpu.dynamic_rotate %289 by %c18_i32_151 dim 1 : vector<32x384xf32>, i32 -> vector<32x384xf32>
    %321 = arith.truncf %320 : vector<32x384xf32> to vector<32x384xbf16>
    %cst_152 = arith.constant dense<0.000000e+00> : vector<32x384xf32>
    %322 = tpu.matmul %319, %321, %cst_152 {dimension_numbers = #tpu.dot_dimension_numbers<[1], [0], [0], [1], [0, 0, 1, 1], [], []>} : vector<32x32xbf16>, vector<32x384xbf16>, vector<32x384xf32> -> vector<32x384xf32>
    %323 = arith.addf %317, %322 : vector<32x384xf32>
    %c20 = arith.constant 20 : index
    %c0_153 = arith.constant 0 : index
    %c0_154 = arith.constant 0 : index
    %324 = vector.load %arg6[%c20, %c0_153, %c0_154] : memref<36x32x32xbf16, #tpu.memory_space<vmem>>, vector<1x32x32xbf16>
    %325 = vector.shape_cast %324 : vector<1x32x32xbf16> to vector<32x32xbf16>
    %c17_i32_155 = arith.constant 17 : i32
    %326 = tpu.dynamic_rotate %289 by %c17_i32_155 dim 1 : vector<32x384xf32>, i32 -> vector<32x384xf32>
    %327 = arith.truncf %326 : vector<32x384xf32> to vector<32x384xbf16>
    %cst_156 = arith.constant dense<0.000000e+00> : vector<32x384xf32>
    %328 = tpu.matmul %325, %327, %cst_156 {dimension_numbers = #tpu.dot_dimension_numbers<[1], [0], [0], [1], [0, 0, 1, 1], [], []>} : vector<32x32xbf16>, vector<32x384xbf16>, vector<32x384xf32> -> vector<32x384xf32>
    %329 = arith.addf %323, %328 : vector<32x384xf32>
    %c21 = arith.constant 21 : index
    %c0_157 = arith.constant 0 : index
    %c0_158 = arith.constant 0 : index
    %330 = vector.load %arg6[%c21, %c0_157, %c0_158] : memref<36x32x32xbf16, #tpu.memory_space<vmem>>, vector<1x32x32xbf16>
    %331 = vector.shape_cast %330 : vector<1x32x32xbf16> to vector<32x32xbf16>
    %c1_i32_159 = arith.constant 1 : i32
    %332 = tpu.dynamic_rotate %289 by %c1_i32_159 dim 1 : vector<32x384xf32>, i32 -> vector<32x384xf32>
    %333 = arith.truncf %332 : vector<32x384xf32> to vector<32x384xbf16>
    %cst_160 = arith.constant dense<0.000000e+00> : vector<32x384xf32>
    %334 = tpu.matmul %331, %333, %cst_160 {dimension_numbers = #tpu.dot_dimension_numbers<[1], [0], [0], [1], [0, 0, 1, 1], [], []>} : vector<32x32xbf16>, vector<32x384xbf16>, vector<32x384xf32> -> vector<32x384xf32>
    %335 = arith.addf %329, %334 : vector<32x384xf32>
    %c22 = arith.constant 22 : index
    %c0_161 = arith.constant 0 : index
    %c0_162 = arith.constant 0 : index
    %336 = vector.load %arg6[%c22, %c0_161, %c0_162] : memref<36x32x32xbf16, #tpu.memory_space<vmem>>, vector<1x32x32xbf16>
    %337 = vector.shape_cast %336 : vector<1x32x32xbf16> to vector<32x32xbf16>
    %338 = arith.truncf %289 : vector<32x384xf32> to vector<32x384xbf16>
    %cst_163 = arith.constant dense<0.000000e+00> : vector<32x384xf32>
    %339 = tpu.matmul %337, %338, %cst_163 {dimension_numbers = #tpu.dot_dimension_numbers<[1], [0], [0], [1], [0, 0, 1, 1], [], []>} : vector<32x32xbf16>, vector<32x384xbf16>, vector<32x384xf32> -> vector<32x384xf32>
    %340 = arith.addf %335, %339 : vector<32x384xf32>
    %c23 = arith.constant 23 : index
    %c0_164 = arith.constant 0 : index
    %c0_165 = arith.constant 0 : index
    %341 = vector.load %arg6[%c23, %c0_164, %c0_165] : memref<36x32x32xbf16, #tpu.memory_space<vmem>>, vector<1x32x32xbf16>
    %342 = vector.shape_cast %341 : vector<1x32x32xbf16> to vector<32x32xbf16>
    %c383_i32_166 = arith.constant 383 : i32
    %343 = tpu.dynamic_rotate %289 by %c383_i32_166 dim 1 : vector<32x384xf32>, i32 -> vector<32x384xf32>
    %344 = arith.truncf %343 : vector<32x384xf32> to vector<32x384xbf16>
    %cst_167 = arith.constant dense<0.000000e+00> : vector<32x384xf32>
    %345 = tpu.matmul %342, %344, %cst_167 {dimension_numbers = #tpu.dot_dimension_numbers<[1], [0], [0], [1], [0, 0, 1, 1], [], []>} : vector<32x32xbf16>, vector<32x384xbf16>, vector<32x384xf32> -> vector<32x384xf32>
    %346 = arith.addf %340, %345 : vector<32x384xf32>
    %c24 = arith.constant 24 : index
    %c0_168 = arith.constant 0 : index
    %c0_169 = arith.constant 0 : index
    %347 = vector.load %arg6[%c24, %c0_168, %c0_169] : memref<36x32x32xbf16, #tpu.memory_space<vmem>>, vector<1x32x32xbf16>
    %348 = vector.shape_cast %347 : vector<1x32x32xbf16> to vector<32x32xbf16>
    %c367_i32_170 = arith.constant 367 : i32
    %349 = tpu.dynamic_rotate %289 by %c367_i32_170 dim 1 : vector<32x384xf32>, i32 -> vector<32x384xf32>
    %350 = arith.truncf %349 : vector<32x384xf32> to vector<32x384xbf16>
    %cst_171 = arith.constant dense<0.000000e+00> : vector<32x384xf32>
    %351 = tpu.matmul %348, %350, %cst_171 {dimension_numbers = #tpu.dot_dimension_numbers<[1], [0], [0], [1], [0, 0, 1, 1], [], []>} : vector<32x32xbf16>, vector<32x384xbf16>, vector<32x384xf32> -> vector<32x384xf32>
    %352 = arith.addf %346, %351 : vector<32x384xf32>
    %c25 = arith.constant 25 : index
    %c0_172 = arith.constant 0 : index
    %c0_173 = arith.constant 0 : index
    %353 = vector.load %arg6[%c25, %c0_172, %c0_173] : memref<36x32x32xbf16, #tpu.memory_space<vmem>>, vector<1x32x32xbf16>
    %354 = vector.shape_cast %353 : vector<1x32x32xbf16> to vector<32x32xbf16>
    %c366_i32_174 = arith.constant 366 : i32
    %355 = tpu.dynamic_rotate %289 by %c366_i32_174 dim 1 : vector<32x384xf32>, i32 -> vector<32x384xf32>
    %356 = arith.truncf %355 : vector<32x384xf32> to vector<32x384xbf16>
    %cst_175 = arith.constant dense<0.000000e+00> : vector<32x384xf32>
    %357 = tpu.matmul %354, %356, %cst_175 {dimension_numbers = #tpu.dot_dimension_numbers<[1], [0], [0], [1], [0, 0, 1, 1], [], []>} : vector<32x32xbf16>, vector<32x384xbf16>, vector<32x384xf32> -> vector<32x384xf32>
    %358 = arith.addf %352, %357 : vector<32x384xf32>
    %c26 = arith.constant 26 : index
    %c0_176 = arith.constant 0 : index
    %c0_177 = arith.constant 0 : index
    %359 = vector.load %arg6[%c26, %c0_176, %c0_177] : memref<36x32x32xbf16, #tpu.memory_space<vmem>>, vector<1x32x32xbf16>
    %360 = vector.shape_cast %359 : vector<1x32x32xbf16> to vector<32x32xbf16>
    %c365_i32_178 = arith.constant 365 : i32
    %361 = tpu.dynamic_rotate %289 by %c365_i32_178 dim 1 : vector<32x384xf32>, i32 -> vector<32x384xf32>
    %362 = arith.truncf %361 : vector<32x384xf32> to vector<32x384xbf16>
    %cst_179 = arith.constant dense<0.000000e+00> : vector<32x384xf32>
    %363 = tpu.matmul %360, %362, %cst_179 {dimension_numbers = #tpu.dot_dimension_numbers<[1], [0], [0], [1], [0, 0, 1, 1], [], []>} : vector<32x32xbf16>, vector<32x384xbf16>, vector<32x384xf32> -> vector<32x384xf32>
    %364 = arith.addf %358, %363 : vector<32x384xf32>
    %c64_180 = arith.constant 64 : index
    %c0_181 = arith.constant 0 : index
    %365 = vector.load %arg7[%c64_180, %c0_181] : memref<128x1xf32, #tpu.memory_space<vmem>>, vector<32x1xf32>
    %366 = vector.broadcast %365 : vector<32x1xf32> to vector<32x384xf32>
    %367 = arith.addf %364, %366 : vector<32x384xf32>
    %368 = arith.addf %367, %289 : vector<32x384xf32>
    %369 = vector.broadcast %0 : vector<1x384xf32> to vector<32x384xf32>
    %370 = arith.mulf %368, %369 : vector<32x384xf32>
    %cst_182 = arith.constant dense<0.000000e+00> : vector<32xf32>
    %371 = vector.multi_reduction <add>, %370, %cst_182 [1] : vector<32x384xf32> to vector<32xf32>
    %372 = vector.shape_cast %371 : vector<32xf32> to vector<32x1xf32>
    %cst_183 = arith.constant 3.906250e-03 : f32
    %373 = vector.broadcast %cst_183 : f32 to vector<32x1xf32>
    %374 = arith.mulf %372, %373 : vector<32x1xf32>
    %375 = vector.broadcast %374 : vector<32x1xf32> to vector<32x384xf32>
    %376 = arith.subf %368, %375 : vector<32x384xf32>
    %377 = vector.broadcast %0 : vector<1x384xf32> to vector<32x384xf32>
    %378 = arith.mulf %376, %377 : vector<32x384xf32>
    %379 = arith.mulf %378, %378 : vector<32x384xf32>
    %cst_184 = arith.constant dense<0.000000e+00> : vector<32xf32>
    %380 = vector.multi_reduction <add>, %379, %cst_184 [1] : vector<32x384xf32> to vector<32xf32>
    %381 = vector.shape_cast %380 : vector<32xf32> to vector<32x1xf32>
    %cst_185 = arith.constant 3.906250e-03 : f32
    %382 = vector.broadcast %cst_185 : f32 to vector<32x1xf32>
    %383 = arith.mulf %381, %382 : vector<32x1xf32>
    %384 = vector.broadcast %374 : vector<32x1xf32> to vector<32x384xf32>
    %385 = arith.subf %368, %384 : vector<32x384xf32>
    %cst_186 = arith.constant 9.99999974E-6 : f32
    %386 = vector.broadcast %cst_186 : f32 to vector<32x1xf32>
    %387 = arith.addf %383, %386 : vector<32x1xf32>
    %388 = math.rsqrt %387 : vector<32x1xf32>
    %389 = vector.broadcast %388 : vector<32x1xf32> to vector<32x384xf32>
    %390 = arith.mulf %385, %389 : vector<32x384xf32>
    %cst_187 = arith.constant dense<0.000000e+00> : vector<1xf32>
    %391 = vector.multi_reduction <add>, %374, %cst_187 [0] : vector<32x1xf32> to vector<1xf32>
    %392 = vector.shape_cast %391 : vector<1xf32> to vector<1x1xf32>
    %cst_188 = arith.constant 3.200000e+01 : f32
    %393 = vector.broadcast %cst_188 : f32 to vector<1x1xf32>
    %394 = arith.divf %392, %393 : vector<1x1xf32>
    %395 = vector.broadcast %394 : vector<1x1xf32> to vector<32x1xf32>
    %396 = arith.subf %374, %395 : vector<32x1xf32>
    %397 = arith.mulf %396, %396 : vector<32x1xf32>
    %cst_189 = arith.constant dense<0.000000e+00> : vector<1xf32>
    %398 = vector.multi_reduction <add>, %397, %cst_189 [0] : vector<32x1xf32> to vector<1xf32>
    %399 = vector.shape_cast %398 : vector<1xf32> to vector<1x1xf32>
    %cst_190 = arith.constant 3.100000e+01 : f32
    %400 = vector.broadcast %cst_190 : f32 to vector<1x1xf32>
    %401 = arith.divf %399, %400 : vector<1x1xf32>
    %402 = vector.broadcast %394 : vector<1x1xf32> to vector<32x1xf32>
    %403 = arith.subf %374, %402 : vector<32x1xf32>
    %404 = math.sqrt %401 : vector<1x1xf32>
    %cst_191 = arith.constant 9.99999997E-7 : f32
    %405 = vector.broadcast %cst_191 : f32 to vector<1x1xf32>
    %406 = arith.addf %404, %405 : vector<1x1xf32>
    %407 = vector.broadcast %406 : vector<1x1xf32> to vector<32x1xf32>
    %408 = arith.divf %403, %407 : vector<32x1xf32>
    %409 = vector.broadcast %296 : vector<32x1xf32> to vector<32x384xf32>
    %410 = arith.mulf %409, %390 : vector<32x384xf32>
    %411 = arith.mulf %303, %408 : vector<32x1xf32>
    %412 = vector.broadcast %411 : vector<32x1xf32> to vector<32x384xf32>
    %413 = arith.addf %410, %412 : vector<32x384xf32>
    %414 = vector.broadcast %310 : vector<32x1xf32> to vector<32x384xf32>
    %415 = arith.addf %413, %414 : vector<32x384xf32>
    %cst_192 = arith.constant 0.000000e+00 : f32
    %416 = vector.broadcast %cst_192 : f32 to vector<32x384xf32>
    %417 = arith.cmpf ogt, %415, %416 : vector<32x384xf32>
    %cst_193 = arith.constant 0.000000e+00 : f32
    %418 = vector.broadcast %cst_193 : f32 to vector<32x384xf32>
    %419 = arith.select %417, %418, %415 : vector<32x384xi1>, vector<32x384xf32>
    %cst_194 = arith.constant 0.000000e+00 : f32
    %420 = vector.broadcast %cst_194 : f32 to vector<32x384xf32>
    %421 = arith.cmpf ogt, %415, %420 : vector<32x384xf32>
    %422 = math.exp %419 : vector<32x384xf32>
    %cst_195 = arith.constant 1.000000e+00 : f32
    %423 = vector.broadcast %cst_195 : f32 to vector<32x384xf32>
    %424 = arith.subf %422, %423 : vector<32x384xf32>
    %425 = arith.select %421, %415, %424 : vector<32x384xi1>, vector<32x384xf32>
    %426 = vector.broadcast %0 : vector<1x384xf32> to vector<32x384xf32>
    %427 = arith.mulf %425, %426 : vector<32x384xf32>
    %c288 = arith.constant 288 : index
    %c0_196 = arith.constant 0 : index
    %428 = vector.load %arg8[%c288, %c0_196] : memref<384x10xf32, #tpu.memory_space<vmem>>, vector<32x10xf32>
    %c288_197 = arith.constant 288 : index
    %c0_198 = arith.constant 0 : index
    %429 = vector.load %arg9[%c288_197, %c0_198] : memref<384x1xf32, #tpu.memory_space<vmem>>, vector<32x1xf32>
    %430 = vector.broadcast %4 : vector<1x10xf32> to vector<32x10xf32>
    %431 = arith.mulf %428, %430 : vector<32x10xf32>
    %cst_199 = arith.constant dense<0.000000e+00> : vector<32xf32>
    %432 = vector.multi_reduction <add>, %431, %cst_199 [1] : vector<32x10xf32> to vector<32xf32>
    %433 = vector.shape_cast %432 : vector<32xf32> to vector<32x1xf32>
    %434 = arith.addf %433, %429 : vector<32x1xf32>
    %c320 = arith.constant 320 : index
    %c0_200 = arith.constant 0 : index
    %435 = vector.load %arg8[%c320, %c0_200] : memref<384x10xf32, #tpu.memory_space<vmem>>, vector<32x10xf32>
    %c320_201 = arith.constant 320 : index
    %c0_202 = arith.constant 0 : index
    %436 = vector.load %arg9[%c320_201, %c0_202] : memref<384x1xf32, #tpu.memory_space<vmem>>, vector<32x1xf32>
    %437 = vector.broadcast %4 : vector<1x10xf32> to vector<32x10xf32>
    %438 = arith.mulf %435, %437 : vector<32x10xf32>
    %cst_203 = arith.constant dense<0.000000e+00> : vector<32xf32>
    %439 = vector.multi_reduction <add>, %438, %cst_203 [1] : vector<32x10xf32> to vector<32xf32>
    %440 = vector.shape_cast %439 : vector<32xf32> to vector<32x1xf32>
    %441 = arith.addf %440, %436 : vector<32x1xf32>
    %c352 = arith.constant 352 : index
    %c0_204 = arith.constant 0 : index
    %442 = vector.load %arg8[%c352, %c0_204] : memref<384x10xf32, #tpu.memory_space<vmem>>, vector<32x10xf32>
    %c352_205 = arith.constant 352 : index
    %c0_206 = arith.constant 0 : index
    %443 = vector.load %arg9[%c352_205, %c0_206] : memref<384x1xf32, #tpu.memory_space<vmem>>, vector<32x1xf32>
    %444 = vector.broadcast %4 : vector<1x10xf32> to vector<32x10xf32>
    %445 = arith.mulf %442, %444 : vector<32x10xf32>
    %cst_207 = arith.constant dense<0.000000e+00> : vector<32xf32>
    %446 = vector.multi_reduction <add>, %445, %cst_207 [1] : vector<32x10xf32> to vector<32xf32>
    %447 = vector.shape_cast %446 : vector<32xf32> to vector<32x1xf32>
    %448 = arith.addf %447, %443 : vector<32x1xf32>
    %cst_208 = arith.constant 0.000000e+00 : f32
    %449 = vector.broadcast %cst_208 : f32 to vector<32x384xf32>
    %c27 = arith.constant 27 : index
    %c0_209 = arith.constant 0 : index
    %c0_210 = arith.constant 0 : index
    %450 = vector.load %arg6[%c27, %c0_209, %c0_210] : memref<36x32x32xbf16, #tpu.memory_space<vmem>>, vector<1x32x32xbf16>
    %451 = vector.shape_cast %450 : vector<1x32x32xbf16> to vector<32x32xbf16>
    %c19_i32_211 = arith.constant 19 : i32
    %452 = tpu.dynamic_rotate %427 by %c19_i32_211 dim 1 : vector<32x384xf32>, i32 -> vector<32x384xf32>
    %453 = arith.truncf %452 : vector<32x384xf32> to vector<32x384xbf16>
    %cst_212 = arith.constant dense<0.000000e+00> : vector<32x384xf32>
    %454 = tpu.matmul %451, %453, %cst_212 {dimension_numbers = #tpu.dot_dimension_numbers<[1], [0], [0], [1], [0, 0, 1, 1], [], []>} : vector<32x32xbf16>, vector<32x384xbf16>, vector<32x384xf32> -> vector<32x384xf32>
    %455 = arith.addf %449, %454 : vector<32x384xf32>
    %c28 = arith.constant 28 : index
    %c0_213 = arith.constant 0 : index
    %c0_214 = arith.constant 0 : index
    %456 = vector.load %arg6[%c28, %c0_213, %c0_214] : memref<36x32x32xbf16, #tpu.memory_space<vmem>>, vector<1x32x32xbf16>
    %457 = vector.shape_cast %456 : vector<1x32x32xbf16> to vector<32x32xbf16>
    %c18_i32_215 = arith.constant 18 : i32
    %458 = tpu.dynamic_rotate %427 by %c18_i32_215 dim 1 : vector<32x384xf32>, i32 -> vector<32x384xf32>
    %459 = arith.truncf %458 : vector<32x384xf32> to vector<32x384xbf16>
    %cst_216 = arith.constant dense<0.000000e+00> : vector<32x384xf32>
    %460 = tpu.matmul %457, %459, %cst_216 {dimension_numbers = #tpu.dot_dimension_numbers<[1], [0], [0], [1], [0, 0, 1, 1], [], []>} : vector<32x32xbf16>, vector<32x384xbf16>, vector<32x384xf32> -> vector<32x384xf32>
    %461 = arith.addf %455, %460 : vector<32x384xf32>
    %c29 = arith.constant 29 : index
    %c0_217 = arith.constant 0 : index
    %c0_218 = arith.constant 0 : index
    %462 = vector.load %arg6[%c29, %c0_217, %c0_218] : memref<36x32x32xbf16, #tpu.memory_space<vmem>>, vector<1x32x32xbf16>
    %463 = vector.shape_cast %462 : vector<1x32x32xbf16> to vector<32x32xbf16>
    %c17_i32_219 = arith.constant 17 : i32
    %464 = tpu.dynamic_rotate %427 by %c17_i32_219 dim 1 : vector<32x384xf32>, i32 -> vector<32x384xf32>
    %465 = arith.truncf %464 : vector<32x384xf32> to vector<32x384xbf16>
    %cst_220 = arith.constant dense<0.000000e+00> : vector<32x384xf32>
    %466 = tpu.matmul %463, %465, %cst_220 {dimension_numbers = #tpu.dot_dimension_numbers<[1], [0], [0], [1], [0, 0, 1, 1], [], []>} : vector<32x32xbf16>, vector<32x384xbf16>, vector<32x384xf32> -> vector<32x384xf32>
    %467 = arith.addf %461, %466 : vector<32x384xf32>
    %c30 = arith.constant 30 : index
    %c0_221 = arith.constant 0 : index
    %c0_222 = arith.constant 0 : index
    %468 = vector.load %arg6[%c30, %c0_221, %c0_222] : memref<36x32x32xbf16, #tpu.memory_space<vmem>>, vector<1x32x32xbf16>
    %469 = vector.shape_cast %468 : vector<1x32x32xbf16> to vector<32x32xbf16>
    %c1_i32_223 = arith.constant 1 : i32
    %470 = tpu.dynamic_rotate %427 by %c1_i32_223 dim 1 : vector<32x384xf32>, i32 -> vector<32x384xf32>
    %471 = arith.truncf %470 : vector<32x384xf32> to vector<32x384xbf16>
    %cst_224 = arith.constant dense<0.000000e+00> : vector<32x384xf32>
    %472 = tpu.matmul %469, %471, %cst_224 {dimension_numbers = #tpu.dot_dimension_numbers<[1], [0], [0], [1], [0, 0, 1, 1], [], []>} : vector<32x32xbf16>, vector<32x384xbf16>, vector<32x384xf32> -> vector<32x384xf32>
    %473 = arith.addf %467, %472 : vector<32x384xf32>
    %c31 = arith.constant 31 : index
    %c0_225 = arith.constant 0 : index
    %c0_226 = arith.constant 0 : index
    %474 = vector.load %arg6[%c31, %c0_225, %c0_226] : memref<36x32x32xbf16, #tpu.memory_space<vmem>>, vector<1x32x32xbf16>
    %475 = vector.shape_cast %474 : vector<1x32x32xbf16> to vector<32x32xbf16>
    %476 = arith.truncf %427 : vector<32x384xf32> to vector<32x384xbf16>
    %cst_227 = arith.constant dense<0.000000e+00> : vector<32x384xf32>
    %477 = tpu.matmul %475, %476, %cst_227 {dimension_numbers = #tpu.dot_dimension_numbers<[1], [0], [0], [1], [0, 0, 1, 1], [], []>} : vector<32x32xbf16>, vector<32x384xbf16>, vector<32x384xf32> -> vector<32x384xf32>
    %478 = arith.addf %473, %477 : vector<32x384xf32>
    %c32_228 = arith.constant 32 : index
    %c0_229 = arith.constant 0 : index
    %c0_230 = arith.constant 0 : index
    %479 = vector.load %arg6[%c32_228, %c0_229, %c0_230] : memref<36x32x32xbf16, #tpu.memory_space<vmem>>, vector<1x32x32xbf16>
    %480 = vector.shape_cast %479 : vector<1x32x32xbf16> to vector<32x32xbf16>
    %c383_i32_231 = arith.constant 383 : i32
    %481 = tpu.dynamic_rotate %427 by %c383_i32_231 dim 1 : vector<32x384xf32>, i32 -> vector<32x384xf32>
    %482 = arith.truncf %481 : vector<32x384xf32> to vector<32x384xbf16>
    %cst_232 = arith.constant dense<0.000000e+00> : vector<32x384xf32>
    %483 = tpu.matmul %480, %482, %cst_232 {dimension_numbers = #tpu.dot_dimension_numbers<[1], [0], [0], [1], [0, 0, 1, 1], [], []>} : vector<32x32xbf16>, vector<32x384xbf16>, vector<32x384xf32> -> vector<32x384xf32>
    %484 = arith.addf %478, %483 : vector<32x384xf32>
    %c33 = arith.constant 33 : index
    %c0_233 = arith.constant 0 : index
    %c0_234 = arith.constant 0 : index
    %485 = vector.load %arg6[%c33, %c0_233, %c0_234] : memref<36x32x32xbf16, #tpu.memory_space<vmem>>, vector<1x32x32xbf16>
    %486 = vector.shape_cast %485 : vector<1x32x32xbf16> to vector<32x32xbf16>
    %c367_i32_235 = arith.constant 367 : i32
    %487 = tpu.dynamic_rotate %427 by %c367_i32_235 dim 1 : vector<32x384xf32>, i32 -> vector<32x384xf32>
    %488 = arith.truncf %487 : vector<32x384xf32> to vector<32x384xbf16>
    %cst_236 = arith.constant dense<0.000000e+00> : vector<32x384xf32>
    %489 = tpu.matmul %486, %488, %cst_236 {dimension_numbers = #tpu.dot_dimension_numbers<[1], [0], [0], [1], [0, 0, 1, 1], [], []>} : vector<32x32xbf16>, vector<32x384xbf16>, vector<32x384xf32> -> vector<32x384xf32>
    %490 = arith.addf %484, %489 : vector<32x384xf32>
    %c34 = arith.constant 34 : index
    %c0_237 = arith.constant 0 : index
    %c0_238 = arith.constant 0 : index
    %491 = vector.load %arg6[%c34, %c0_237, %c0_238] : memref<36x32x32xbf16, #tpu.memory_space<vmem>>, vector<1x32x32xbf16>
    %492 = vector.shape_cast %491 : vector<1x32x32xbf16> to vector<32x32xbf16>
    %c366_i32_239 = arith.constant 366 : i32
    %493 = tpu.dynamic_rotate %427 by %c366_i32_239 dim 1 : vector<32x384xf32>, i32 -> vector<32x384xf32>
    %494 = arith.truncf %493 : vector<32x384xf32> to vector<32x384xbf16>
    %cst_240 = arith.constant dense<0.000000e+00> : vector<32x384xf32>
    %495 = tpu.matmul %492, %494, %cst_240 {dimension_numbers = #tpu.dot_dimension_numbers<[1], [0], [0], [1], [0, 0, 1, 1], [], []>} : vector<32x32xbf16>, vector<32x384xbf16>, vector<32x384xf32> -> vector<32x384xf32>
    %496 = arith.addf %490, %495 : vector<32x384xf32>
    %c35 = arith.constant 35 : index
    %c0_241 = arith.constant 0 : index
    %c0_242 = arith.constant 0 : index
    %497 = vector.load %arg6[%c35, %c0_241, %c0_242] : memref<36x32x32xbf16, #tpu.memory_space<vmem>>, vector<1x32x32xbf16>
    %498 = vector.shape_cast %497 : vector<1x32x32xbf16> to vector<32x32xbf16>
    %c365_i32_243 = arith.constant 365 : i32
    %499 = tpu.dynamic_rotate %427 by %c365_i32_243 dim 1 : vector<32x384xf32>, i32 -> vector<32x384xf32>
    %500 = arith.truncf %499 : vector<32x384xf32> to vector<32x384xbf16>
    %cst_244 = arith.constant dense<0.000000e+00> : vector<32x384xf32>
    %501 = tpu.matmul %498, %500, %cst_244 {dimension_numbers = #tpu.dot_dimension_numbers<[1], [0], [0], [1], [0, 0, 1, 1], [], []>} : vector<32x32xbf16>, vector<32x384xbf16>, vector<32x384xf32> -> vector<32x384xf32>
    %502 = arith.addf %496, %501 : vector<32x384xf32>
    %c96_245 = arith.constant 96 : index
    %c0_246 = arith.constant 0 : index
    %503 = vector.load %arg7[%c96_245, %c0_246] : memref<128x1xf32, #tpu.memory_space<vmem>>, vector<32x1xf32>
    %504 = vector.broadcast %503 : vector<32x1xf32> to vector<32x384xf32>
    %505 = arith.addf %502, %504 : vector<32x384xf32>
    %506 = arith.addf %505, %427 : vector<32x384xf32>
    %507 = vector.broadcast %0 : vector<1x384xf32> to vector<32x384xf32>
    %508 = arith.mulf %506, %507 : vector<32x384xf32>
    %cst_247 = arith.constant dense<0.000000e+00> : vector<32xf32>
    %509 = vector.multi_reduction <add>, %508, %cst_247 [1] : vector<32x384xf32> to vector<32xf32>
    %510 = vector.shape_cast %509 : vector<32xf32> to vector<32x1xf32>
    %cst_248 = arith.constant 3.906250e-03 : f32
    %511 = vector.broadcast %cst_248 : f32 to vector<32x1xf32>
    %512 = arith.mulf %510, %511 : vector<32x1xf32>
    %513 = vector.broadcast %512 : vector<32x1xf32> to vector<32x384xf32>
    %514 = arith.subf %506, %513 : vector<32x384xf32>
    %515 = vector.broadcast %0 : vector<1x384xf32> to vector<32x384xf32>
    %516 = arith.mulf %514, %515 : vector<32x384xf32>
    %517 = arith.mulf %516, %516 : vector<32x384xf32>
    %cst_249 = arith.constant dense<0.000000e+00> : vector<32xf32>
    %518 = vector.multi_reduction <add>, %517, %cst_249 [1] : vector<32x384xf32> to vector<32xf32>
    %519 = vector.shape_cast %518 : vector<32xf32> to vector<32x1xf32>
    %cst_250 = arith.constant 3.906250e-03 : f32
    %520 = vector.broadcast %cst_250 : f32 to vector<32x1xf32>
    %521 = arith.mulf %519, %520 : vector<32x1xf32>
    %522 = vector.broadcast %512 : vector<32x1xf32> to vector<32x384xf32>
    %523 = arith.subf %506, %522 : vector<32x384xf32>
    %cst_251 = arith.constant 9.99999974E-6 : f32
    %524 = vector.broadcast %cst_251 : f32 to vector<32x1xf32>
    %525 = arith.addf %521, %524 : vector<32x1xf32>
    %526 = math.rsqrt %525 : vector<32x1xf32>
    %527 = vector.broadcast %526 : vector<32x1xf32> to vector<32x384xf32>
    %528 = arith.mulf %523, %527 : vector<32x384xf32>
    %cst_252 = arith.constant dense<0.000000e+00> : vector<1xf32>
    %529 = vector.multi_reduction <add>, %512, %cst_252 [0] : vector<32x1xf32> to vector<1xf32>
    %530 = vector.shape_cast %529 : vector<1xf32> to vector<1x1xf32>
    %cst_253 = arith.constant 3.200000e+01 : f32
    %531 = vector.broadcast %cst_253 : f32 to vector<1x1xf32>
    %532 = arith.divf %530, %531 : vector<1x1xf32>
    %533 = vector.broadcast %532 : vector<1x1xf32> to vector<32x1xf32>
    %534 = arith.subf %512, %533 : vector<32x1xf32>
    %535 = arith.mulf %534, %534 : vector<32x1xf32>
    %cst_254 = arith.constant dense<0.000000e+00> : vector<1xf32>
    %536 = vector.multi_reduction <add>, %535, %cst_254 [0] : vector<32x1xf32> to vector<1xf32>
    %537 = vector.shape_cast %536 : vector<1xf32> to vector<1x1xf32>
    %cst_255 = arith.constant 3.100000e+01 : f32
    %538 = vector.broadcast %cst_255 : f32 to vector<1x1xf32>
    %539 = arith.divf %537, %538 : vector<1x1xf32>
    %540 = vector.broadcast %532 : vector<1x1xf32> to vector<32x1xf32>
    %541 = arith.subf %512, %540 : vector<32x1xf32>
    %542 = math.sqrt %539 : vector<1x1xf32>
    %cst_256 = arith.constant 9.99999997E-7 : f32
    %543 = vector.broadcast %cst_256 : f32 to vector<1x1xf32>
    %544 = arith.addf %542, %543 : vector<1x1xf32>
    %545 = vector.broadcast %544 : vector<1x1xf32> to vector<32x1xf32>
    %546 = arith.divf %541, %545 : vector<32x1xf32>
    %547 = vector.broadcast %434 : vector<32x1xf32> to vector<32x384xf32>
    %548 = arith.mulf %547, %528 : vector<32x384xf32>
    %549 = arith.mulf %441, %546 : vector<32x1xf32>
    %550 = vector.broadcast %549 : vector<32x1xf32> to vector<32x384xf32>
    %551 = arith.addf %548, %550 : vector<32x384xf32>
    %552 = vector.broadcast %448 : vector<32x1xf32> to vector<32x384xf32>
    %553 = arith.addf %551, %552 : vector<32x384xf32>
    %cst_257 = arith.constant 0.000000e+00 : f32
    %554 = vector.broadcast %cst_257 : f32 to vector<32x384xf32>
    %555 = arith.cmpf ogt, %553, %554 : vector<32x384xf32>
    %cst_258 = arith.constant 0.000000e+00 : f32
    %556 = vector.broadcast %cst_258 : f32 to vector<32x384xf32>
    %557 = arith.select %555, %556, %553 : vector<32x384xi1>, vector<32x384xf32>
    %cst_259 = arith.constant 0.000000e+00 : f32
    %558 = vector.broadcast %cst_259 : f32 to vector<32x384xf32>
    %559 = arith.cmpf ogt, %553, %558 : vector<32x384xf32>
    %560 = math.exp %557 : vector<32x384xf32>
    %cst_260 = arith.constant 1.000000e+00 : f32
    %561 = vector.broadcast %cst_260 : f32 to vector<32x384xf32>
    %562 = arith.subf %560, %561 : vector<32x384xf32>
    %563 = arith.select %559, %553, %562 : vector<32x384xi1>, vector<32x384xf32>
    %564 = vector.broadcast %0 : vector<1x384xf32> to vector<32x384xf32>
    %565 = arith.mulf %563, %564 : vector<32x384xf32>
    %cst_261 = arith.constant dense<0.000000e+00> : vector<32xf32>
    %566 = vector.multi_reduction <add>, %565, %cst_261 [1] : vector<32x384xf32> to vector<32xf32>
    %567 = vector.shape_cast %566 : vector<32xf32> to vector<32x1xf32>
    %cst_262 = arith.constant 3.906250e-03 : f32
    %568 = vector.broadcast %cst_262 : f32 to vector<32x1xf32>
    %569 = arith.mulf %567, %568 : vector<32x1xf32>
    %c0_263 = arith.constant 0 : index
    %c0_264 = arith.constant 0 : index
    %570 = vector.load %arg10[%c0_263, %c0_264] : memref<128x32xf32, #tpu.memory_space<vmem>>, vector<128x32xf32>
    %cst_265 = arith.constant dense<0.000000e+00> : vector<128x1xf32>
    %571 = tpu.matmul %570, %569, %cst_265 {dimension_numbers = #tpu.dot_dimension_numbers<[1], [0], [0], [1], [0, 0, 1, 1], [], []>} : vector<128x32xf32>, vector<32x1xf32>, vector<128x1xf32> -> vector<128x1xf32>
    %c0_266 = arith.constant 0 : index
    %c0_267 = arith.constant 0 : index
    %572 = vector.load %arg11[%c0_266, %c0_267] : memref<128x1xf32, #tpu.memory_space<vmem>>, vector<128x1xf32>
    %573 = arith.addf %571, %572 : vector<128x1xf32>
    %c0_268 = arith.constant 0 : index
    %c0_269 = arith.constant 0 : index
    %574 = vector.load %arg12[%c0_268, %c0_269] : memref<10x128xf32, #tpu.memory_space<vmem>>, vector<10x128xf32>
    %cst_270 = arith.constant dense<0.000000e+00> : vector<10x1xf32>
    %575 = tpu.matmul %574, %573, %cst_270 {dimension_numbers = #tpu.dot_dimension_numbers<[1], [0], [0], [1], [0, 0, 1, 1], [], []>} : vector<10x128xf32>, vector<128x1xf32>, vector<10x1xf32> -> vector<10x1xf32>
    %c0_271 = arith.constant 0 : index
    %c0_272 = arith.constant 0 : index
    %576 = vector.load %arg13[%c0_271, %c0_272] : memref<10x1xf32, #tpu.memory_space<vmem>>, vector<10x1xf32>
    %577 = arith.addf %575, %576 : vector<10x1xf32>
    %c0_273 = arith.constant 0 : index
    %c0_274 = arith.constant 0 : index
    %c0_275 = arith.constant 0 : index
    %578 = vector.load %arg14[%c0_273, %c0_274, %c0_275] : memref<1x10x1xf32, #tpu.memory_space<vmem>>, vector<1x10x1xf32>
    %579 = vector.shape_cast %578 : vector<1x10x1xf32> to vector<10x1xf32>
    %580 = vector.shape_cast %577 : vector<10x1xf32> to vector<1x10x1xf32>
    tpu.vector_store %arg14[%c0_273, %c0_274, %c0_275], %580 {strides = array<i32>} : memref<1x10x1xf32, #tpu.memory_space<vmem>>, vector<1x10x1xf32>,
    return
  }
  func.func @transform_0(%arg0: i32) -> (i32, i32, i32) {
    %c0_i32 = arith.constant 0 : i32
    %c0_i32_0 = arith.constant 0 : i32
    %c0_i32_1 = arith.constant 0 : i32
    return %arg0, %c0_i32, %c0_i32_0 : i32, i32, i32
  }
  func.func @transform_1(%arg0: i32) -> (i32, i32, i32) {
    %c0_i32 = arith.constant 0 : i32
    %c0_i32_0 = arith.constant 0 : i32
    %c0_i32_1 = arith.constant 0 : i32
    return %arg0, %c0_i32, %c0_i32_0 : i32, i32, i32
  }
  func.func @transform_2(%arg0: i32) -> (i32, i32) {
    %c0_i32 = arith.constant 0 : i32
    %c0_i32_0 = arith.constant 0 : i32
    %c0_i32_1 = arith.constant 0 : i32
    return %c0_i32, %c0_i32_0 : i32, i32
  }
  func.func @transform_3(%arg0: i32) -> (i32, i32) {
    %c0_i32 = arith.constant 0 : i32
    %c0_i32_0 = arith.constant 0 : i32
    %c0_i32_1 = arith.constant 0 : i32
    return %c0_i32, %c0_i32_0 : i32, i32
  }
  func.func @transform_4(%arg0: i32) -> (i32, i32) {
    %c0_i32 = arith.constant 0 : i32
    %c0_i32_0 = arith.constant 0 : i32
    %c0_i32_1 = arith.constant 0 : i32
    return %c0_i32, %c0_i32_0 : i32, i32
  }
  func.func @transform_5(%arg0: i32) -> (i32, i32, i32) {
    %c0_i32 = arith.constant 0 : i32
    %c0_i32_0 = arith.constant 0 : i32
    %c0_i32_1 = arith.constant 0 : i32
    %c0_i32_2 = arith.constant 0 : i32
    return %c0_i32, %c0_i32_0, %c0_i32_1 : i32, i32, i32
  }
  func.func @transform_6(%arg0: i32) -> (i32, i32) {
    %c0_i32 = arith.constant 0 : i32
    %c0_i32_0 = arith.constant 0 : i32
    %c0_i32_1 = arith.constant 0 : i32
    return %c0_i32, %c0_i32_0 : i32, i32
  }
  func.func @transform_7(%arg0: i32) -> (i32, i32) {
    %c0_i32 = arith.constant 0 : i32
    %c0_i32_0 = arith.constant 0 : i32
    %c0_i32_1 = arith.constant 0 : i32
    return %c0_i32, %c0_i32_0 : i32, i32
  }
  func.func @transform_8(%arg0: i32) -> (i32, i32) {
    %c0_i32 = arith.constant 0 : i32
    %c0_i32_0 = arith.constant 0 : i32
    %c0_i32_1 = arith.constant 0 : i32
    return %c0_i32, %c0_i32_0 : i32, i32
  }
  func.func @transform_9(%arg0: i32) -> (i32, i32) {
    %c0_i32 = arith.constant 0 : i32
    %c0_i32_0 = arith.constant 0 : i32
    %c0_i32_1 = arith.constant 0 : i32
    return %c0_i32, %c0_i32_0 : i32, i32
  }
  func.func @transform_10(%arg0: i32) -> (i32, i32) {
    %c0_i32 = arith.constant 0 : i32
    %c0_i32_0 = arith.constant 0 : i32
    %c0_i32_1 = arith.constant 0 : i32
    return %c0_i32, %c0_i32_0 : i32, i32
  }
  func.func @transform_11(%arg0: i32) -> (i32, i32) {
    %c0_i32 = arith.constant 0 : i32
    %c0_i32_0 = arith.constant 0 : i32
    %c0_i32_1 = arith.constant 0 : i32
    return %c0_i32, %c0_i32_0 : i32, i32
  }
  func.func @transform_12(%arg0: i32) -> (i32, i32) {
    %c0_i32 = arith.constant 0 : i32
    %c0_i32_0 = arith.constant 0 : i32
    %c0_i32_1 = arith.constant 0 : i32
    return %c0_i32, %c0_i32_0 : i32, i32
  }
  func.func @transform_13(%arg0: i32) -> (i32, i32, i32) {
    %c0_i32 = arith.constant 0 : i32
    %c0_i32_0 = arith.constant 0 : i32
    %c0_i32_1 = arith.constant 0 : i32
    return %arg0, %c0_i32, %c0_i32_0 : i32, i32, i32
  }
}

</mosaic_0001>

<llo_original>
// kernel: jvp__.1
$region0: #{jvp__.1}
  #allocation0 [shape = 'u32[]', space=smem, size = 0x4, offset = 0x4, fixed_abs, tag = 'smem constant byte address 0x4 - core index']
  #allocation1 [shape = 'u32[144,128]{1,0:T(1,128)}', space=vmem, size = 0x12000, scoped, tag = 'internal scratch']
  %s0 = inlined_call_operand.vmem [shape: f32[2,1,384], index: 0, kind: input, shape index: {}]
  %s1 = inlined_call_operand.vmem [shape: f32[2,1,10], index: 1, kind: input, shape index: {}]
  %s2 = inlined_call_operand.vmem [shape: f32[1,384], index: 2, kind: input, shape index: {}]
  %s3 = inlined_call_operand.vmem [shape: f32[32,1], index: 3, kind: input, shape index: {}]
  %s4 = inlined_call_operand.vmem [shape: f32[32,1], index: 4, kind: input, shape index: {}]
  %s5 = inlined_call_operand.vmem [shape: bf16[36,32,32], index: 5, kind: input, shape index: {}]
  %s6 = inlined_call_operand.vmem [shape: f32[128,1], index: 6, kind: input, shape index: {}]
  %s7 = inlined_call_operand.vmem [shape: f32[384,10], index: 7, kind: input, shape index: {}]
  %s8 = inlined_call_operand.vmem [shape: f32[384,1], index: 8, kind: input, shape index: {}]
  %s9 = inlined_call_operand.vmem [shape: f32[128,32], index: 9, kind: input, shape index: {}]
  %s10 = inlined_call_operand.vmem [shape: f32[128,1], index: 10, kind: input, shape index: {}]
  %s11 = inlined_call_operand.vmem [shape: f32[10,128], index: 11, kind: input, shape index: {}]
  %s12 = inlined_call_operand.vmem [shape: f32[10,1], index: 12, kind: input, shape index: {}]
  %s13 = inlined_call_operand.vmem [shape: f32[2,10,1], index: 13, kind: output, shape index: {}]
  %s14 = sld [smem:[#allocation0]]
  $region85: #{jvp__.1} parent=0
    _
  %s16 = ssub.s32 1, %s14
  %s17 = scalar_select 0, %s16, %s14
  loop: start=0, step=1, limit=4
  $region2: #{jvp__.1} parent=0 // loop_pre_header
    _
  $region3: #{jvp__.1} parent=0 // loop_header
    %s19 = sphi 0, %s23
    %p20 = scmp.ge.s32.totalorder %s19, 4
    %s29 = sphi 0, %s31
    %s32 = sphi 0, %s29
    %s33 = sphi 0, %s32
    %s49 = sphi 0, %s33
    %s55 = sphi 0, %s57
    %s58 = sphi 0, %s55
    %s59 = sphi 0, %s58
    %s75 = sphi 0, %s59
    %s79 = sphi 0, %s79
    %s81 = sphi 0, %s79
    %s82 = sphi 0, %s81
    %s96 = sphi 0, %s82
    %s100 = sphi 0, %s100
    %s102 = sphi 0, %s100
    %s103 = sphi 0, %s102
    %s117 = sphi 0, %s103
    %s121 = sphi 0, %s121
    %s123 = sphi 0, %s121
    %s124 = sphi 0, %s123
    %s138 = sphi 0, %s124
    %s142 = sphi 0, %s142
    %s144 = sphi 0, %s142
    %s145 = sphi 0, %s144
    %s159 = sphi 0, %s145
    %s163 = sphi 0, %s163
    %s165 = sphi 0, %s163
    %s166 = sphi 0, %s165
    %s180 = sphi 0, %s166
    %s184 = sphi 0, %s184
    %s186 = sphi 0, %s184
    %s187 = sphi 0, %s186
    %s201 = sphi 0, %s187
    %s205 = sphi 0, %s205
    %s207 = sphi 0, %s205
    %s208 = sphi 0, %s207
    %s222 = sphi 0, %s208
    %s226 = sphi 0, %s226
    %s228 = sphi 0, %s226
    %s229 = sphi 0, %s228
    %s243 = sphi 0, %s229
    %s247 = sphi 0, %s247
    %s249 = sphi 0, %s247
    %s250 = sphi 0, %s249
    %s264 = sphi 0, %s250
    %s268 = sphi 0, %s268
    %s270 = sphi 0, %s268
    %s271 = sphi 0, %s270
    %s285 = sphi 0, %s271
    %s289 = sphi 0, %s289
    %s291 = sphi 0, %s289
    %s292 = sphi 0, %s291
    %s306 = sphi 0, %s292
    %s312 = sphi 0, %s314
    %s315 = sphi 0, %s312
    %s316 = sphi 0, %s315
    %s332 = sphi 0, %s316
  $region4: #{jvp__.1} parent=0 // loop_header_branch
    %22 = sbr.rel (%p20) target = $region8
  $region5: #{jvp__.1} parent=0 // loop_body
    %s24 = ssub.s32 %s19, 1
    %s25 = ssub.s32 %s19, 2
    %s26 = sadd.s32 %s19, 1
    %s27 = ssub.s32 %s19, %s26
    %p28 = scmp.eq.s32.totalorder %s27, 0
    %s30 = sadd.s32 %s29, 1
    %s31 = scalar_select %p28, %s29, %s30
    %p34 = pneg %p28
    %p35 = scmp.eq.s32.totalorder %s19, 1
    %p36 = por %p34, %p35
    %p37 = scmp.ne.s32.totalorder %s29, %s32
    %p38 = scmp.eq.s32.totalorder %s19, 0
    %p39 = por %p37, %p38
    %p40 = scmp.ne.s32.totalorder %s29, %s32
    %p41 = scmp.eq.s32.totalorder %s24, 1
    %p42 = por %p40, %p41
    %p43 = scmp.ne.s32.totalorder %s32, %s33
    %p44 = scmp.eq.s32.totalorder %s24, 0
    %p45 = por %p43, %p44
    %p46 = scmp.ne.s32.totalorder %s32, %s33
    %p47 = scmp.eq.s32.totalorder %s25, 1
    %p48 = por %p46, %p47
    %p50 = scmp.ne.s32.totalorder %s33, %s49
    %p51 = scmp.eq.s32.totalorder %s25, 0
    %p52 = por %p50, %p51
    %s53 = ssub.s32 %s19, %s26
    %p54 = scmp.eq.s32.totalorder %s53, 0
    %s56 = sadd.s32 %s55, 1
    %s57 = scalar_select %p54, %s55, %s56
    %p60 = pneg %p54
    %p61 = scmp.eq.s32.totalorder %s19, 1
    %p62 = por %p60, %p61
    %p63 = scmp.ne.s32.totalorder %s55, %s58
    %p64 = scmp.eq.s32.totalorder %s19, 0
    %p65 = por %p63, %p64
    %p66 = scmp.ne.s32.totalorder %s55, %s58
    %p67 = scmp.eq.s32.totalorder %s24, 1
    %p68 = por %p66, %p67
    %p69 = scmp.ne.s32.totalorder %s58, %s59
    %p70 = scmp.eq.s32.totalorder %s24, 0
    %p71 = por %p69, %p70
    %p72 = scmp.ne.s32.totalorder %s58, %s59
    %p73 = scmp.eq.s32.totalorder %s25, 1
    %p74 = por %p72, %p73
    %p76 = scmp.ne.s32.totalorder %s59, %s75
    %p77 = scmp.eq.s32.totalorder %s25, 0
    %p78 = por %p76, %p77
    %s80 = sadd.s32 %s79, 1
    %p83 = scmp.eq.s32.totalorder %s19, 1
    %p84 = scmp.ne.s32.totalorder %s79, %s81
    %p85 = scmp.eq.s32.totalorder %s19, 0
    %p86 = por %p84, %p85
    %p87 = scmp.ne.s32.totalorder %s79, %s81
    %p88 = scmp.eq.s32.totalorder %s24, 1
    %p89 = por %p87, %p88
    %p90 = scmp.ne.s32.totalorder %s81, %s82
    %p91 = scmp.eq.s32.totalorder %s24, 0
    %p92 = por %p90, %p91
    %p93 = scmp.ne.s32.totalorder %s81, %s82
    %p94 = scmp.eq.s32.totalorder %s25, 1
    %p95 = por %p93, %p94
    %p97 = scmp.ne.s32.totalorder %s82, %s96
    %p98 = scmp.eq.s32.totalorder %s25, 0
    %p99 = por %p97, %p98
    %s101 = sadd.s32 %s100, 1
    %p104 = scmp.eq.s32.totalorder %s19, 1
    %p105 = scmp.ne.s32.totalorder %s100, %s102
    %p106 = scmp.eq.s32.totalorder %s19, 0
    %p107 = por %p105, %p106
    %p108 = scmp.ne.s32.totalorder %s100, %s102
    %p109 = scmp.eq.s32.totalorder %s24, 1
    %p110 = por %p108, %p109
    %p111 = scmp.ne.s32.totalorder %s102, %s103
    %p112 = scmp.eq.s32.totalorder %s24, 0
    %p113 = por %p111, %p112
    %p114 = scmp.ne.s32.totalorder %s102, %s103
    %p115 = scmp.eq.s32.totalorder %s25, 1
    %p116 = por %p114, %p115
    %p118 = scmp.ne.s32.totalorder %s103, %s117
    %p119 = scmp.eq.s32.totalorder %s25, 0
    %p120 = por %p118, %p119
    %s122 = sadd.s32 %s121, 1
    %p125 = scmp.eq.s32.totalorder %s19, 1
    %p126 = scmp.ne.s32.totalorder %s121, %s123
    %p127 = scmp.eq.s32.totalorder %s19, 0
    %p128 = por %p126, %p127
    %p129 = scmp.ne.s32.totalorder %s121, %s123
    %p130 = scmp.eq.s32.totalorder %s24, 1
    %p131 = por %p129, %p130
    %p132 = scmp.ne.s32.totalorder %s123, %s124
    %p133 = scmp.eq.s32.totalorder %s24, 0
    %p134 = por %p132, %p133
    %p135 = scmp.ne.s32.totalorder %s123, %s124
    %p136 = scmp.eq.s32.totalorder %s25, 1
    %p137 = por %p135, %p136
    %p139 = scmp.ne.s32.totalorder %s124, %s138
    %p140 = scmp.eq.s32.totalorder %s25, 0
    %p141 = por %p139, %p140
    %s143 = sadd.s32 %s142, 1
    %p146 = scmp.eq.s32.totalorder %s19, 1
    %p147 = scmp.ne.s32.totalorder %s142, %s144
    %p148 = scmp.eq.s32.totalorder %s19, 0
    %p149 = por %p147, %p148
    %p150 = scmp.ne.s32.totalorder %s142, %s144
    %p151 = scmp.eq.s32.totalorder %s24, 1
    %p152 = por %p150, %p151
    %p153 = scmp.ne.s32.totalorder %s144, %s145
    %p154 = scmp.eq.s32.totalorder %s24, 0
    %p155 = por %p153, %p154
    %p156 = scmp.ne.s32.totalorder %s144, %s145
    %p157 = scmp.eq.s32.totalorder %s25, 1
    %p158 = por %p156, %p157
    %p160 = scmp.ne.s32.totalorder %s145, %s159
    %p161 = scmp.eq.s32.totalorder %s25, 0
    %p162 = por %p160, %p161
    %s164 = sadd.s32 %s163, 1
    %p167 = scmp.eq.s32.totalorder %s19, 1
    %p168 = scmp.ne.s32.totalorder %s163, %s165
    %p169 = scmp.eq.s32.totalorder %s19, 0
    %p170 = por %p168, %p169
    %p171 = scmp.ne.s32.totalorder %s163, %s165
    %p172 = scmp.eq.s32.totalorder %s24, 1
    %p173 = por %p171, %p172
    %p174 = scmp.ne.s32.totalorder %s165, %s166
    %p175 = scmp.eq.s32.totalorder %s24, 0
    %p176 = por %p174, %p175
    %p177 = scmp.ne.s32.totalorder %s165, %s166
    %p178 = scmp.eq.s32.totalorder %s25, 1
    %p179 = por %p177, %p178
    %p181 = scmp.ne.s32.totalorder %s166, %s180
    %p182 = scmp.eq.s32.totalorder %s25, 0
    %p183 = por %p181, %p182
    %s185 = sadd.s32 %s184, 1
    %p188 = scmp.eq.s32.totalorder %s19, 1
    %p189 = scmp.ne.s32.totalorder %s184, %s186
    %p190 = scmp.eq.s32.totalorder %s19, 0
    %p191 = por %p189, %p190
    %p192 = scmp.ne.s32.totalorder %s184, %s186
    %p193 = scmp.eq.s32.totalorder %s24, 1
    %p194 = por %p192, %p193
    %p195 = scmp.ne.s32.totalorder %s186, %s187
    %p196 = scmp.eq.s32.totalorder %s24, 0
    %p197 = por %p195, %p196
    %p198 = scmp.ne.s32.totalorder %s186, %s187
    %p199 = scmp.eq.s32.totalorder %s25, 1
    %p200 = por %p198, %p199
    %p202 = scmp.ne.s32.totalorder %s187, %s201
    %p203 = scmp.eq.s32.totalorder %s25, 0
    %p204 = por %p202, %p203
    %s206 = sadd.s32 %s205, 1
    %p209 = scmp.eq.s32.totalorder %s19, 1
    %p210 = scmp.ne.s32.totalorder %s205, %s207
    %p211 = scmp.eq.s32.totalorder %s19, 0
    %p212 = por %p210, %p211
    %p213 = scmp.ne.s32.totalorder %s205, %s207
    %p214 = scmp.eq.s32.totalorder %s24, 1
    %p215 = por %p213, %p214
    %p216 = scmp.ne.s32.totalorder %s207, %s208
    %p217 = scmp.eq.s32.totalorder %s24, 0
    %p218 = por %p216, %p217
    %p219 = scmp.ne.s32.totalorder %s207, %s208
    %p220 = scmp.eq.s32.totalorder %s25, 1
    %p221 = por %p219, %p220
    %p223 = scmp.ne.s32.totalorder %s208, %s222
    %p224 = scmp.eq.s32.totalorder %s25, 0
    %p225 = por %p223, %p224
    %s227 = sadd.s32 %s226, 1
    %p230 = scmp.eq.s32.totalorder %s19, 1
    %p231 = scmp.ne.s32.totalorder %s226, %s228
    %p232 = scmp.eq.s32.totalorder %s19, 0
    %p233 = por %p231, %p232
    %p234 = scmp.ne.s32.totalorder %s226, %s228
    %p235 = scmp.eq.s32.totalorder %s24, 1
    %p236 = por %p234, %p235
    %p237 = scmp.ne.s32.totalorder %s228, %s229
    %p238 = scmp.eq.s32.totalorder %s24, 0
    %p239 = por %p237, %p238
    %p240 = scmp.ne.s32.totalorder %s228, %s229
    %p241 = scmp.eq.s32.totalorder %s25, 1
    %p242 = por %p240, %p241
    %p244 = scmp.ne.s32.totalorder %s229, %s243
    %p245 = scmp.eq.s32.totalorder %s25, 0
    %p246 = por %p244, %p245
    %s248 = sadd.s32 %s247, 1
    %p251 = scmp.eq.s32.totalorder %s19, 1
    %p252 = scmp.ne.s32.totalorder %s247, %s249
    %p253 = scmp.eq.s32.totalorder %s19, 0
    %p254 = por %p252, %p253
    %p255 = scmp.ne.s32.totalorder %s247, %s249
    %p256 = scmp.eq.s32.totalorder %s24, 1
    %p257 = por %p255, %p256
    %p258 = scmp.ne.s32.totalorder %s249, %s250
    %p259 = scmp.eq.s32.totalorder %s24, 0
    %p260 = por %p258, %p259
    %p261 = scmp.ne.s32.totalorder %s249, %s250
    %p262 = scmp.eq.s32.totalorder %s25, 1
    %p263 = por %p261, %p262
    %p265 = scmp.ne.s32.totalorder %s250, %s264
    %p266 = scmp.eq.s32.totalorder %s25, 0
    %p267 = por %p265, %p266
    %s269 = sadd.s32 %s268, 1
    %p272 = scmp.eq.s32.totalorder %s19, 1
    %p273 = scmp.ne.s32.totalorder %s268, %s270
    %p274 = scmp.eq.s32.totalorder %s19, 0
    %p275 = por %p273, %p274
    %p276 = scmp.ne.s32.totalorder %s268, %s270
    %p277 = scmp.eq.s32.totalorder %s24, 1
    %p278 = por %p276, %p277
    %p279 = scmp.ne.s32.totalorder %s270, %s271
    %p280 = scmp.eq.s32.totalorder %s24, 0
    %p281 = por %p279, %p280
    %p282 = scmp.ne.s32.totalorder %s270, %s271
    %p283 = scmp.eq.s32.totalorder %s25, 1
    %p284 = por %p282, %p283
    %p286 = scmp.ne.s32.totalorder %s271, %s285
    %p287 = scmp.eq.s32.totalorder %s25, 0
    %p288 = por %p286, %p287
    %s290 = sadd.s32 %s289, 1
    %p293 = scmp.eq.s32.totalorder %s19, 1
    %p294 = scmp.ne.s32.totalorder %s289, %s291
    %p295 = scmp.eq.s32.totalorder %s19, 0
    %p296 = por %p294, %p295
    %p297 = scmp.ne.s32.totalorder %s289, %s291
    %p298 = scmp.eq.s32.totalorder %s24, 1
    %p299 = por %p297, %p298
    %p300 = scmp.ne.s32.totalorder %s291, %s292
    %p301 = scmp.eq.s32.totalorder %s24, 0
    %p302 = por %p300, %p301
    %p303 = scmp.ne.s32.totalorder %s291, %s292
    %p304 = scmp.eq.s32.totalorder %s25, 1
    %p305 = por %p303, %p304
    %p307 = scmp.ne.s32.totalorder %s292, %s306
    %p308 = scmp.eq.s32.totalorder %s25, 0
    %p309 = por %p307, %p308
    %s310 = ssub.s32 %s19, %s26
    %p311 = scmp.eq.s32.totalorder %s310, 0
    %s313 = sadd.s32 %s312, 1
    %s314 = scalar_select %p311, %s312, %s313
    %p317 = pneg %p311
    %p318 = scmp.eq.s32.totalorder %s19, 1
    %p319 = por %p317, %p318
    %p320 = scmp.ne.s32.totalorder %s312, %s315
    %p321 = scmp.eq.s32.totalorder %s19, 0
    %p322 = por %p320, %p321
    %p323 = scmp.ne.s32.totalorder %s312, %s315
    %p324 = scmp.eq.s32.totalorder %s24, 1
    %p325 = por %p323, %p324
    %p326 = scmp.ne.s32.totalorder %s315, %s316
    %p327 = scmp.eq.s32.totalorder %s24, 0
    %p328 = por %p326, %p327
    %p329 = scmp.ne.s32.totalorder %s315, %s316
    %p330 = scmp.eq.s32.totalorder %s25, 1
    %p331 = por %p329, %p330
    %p333 = scmp.ne.s32.totalorder %s316, %s332
    %p334 = scmp.eq.s32.totalorder %s25, 0
    %p335 = por %p333, %p334
    %p336 = scmp.le.s32.totalorder 1, %s19
    %p337 = scmp.lt.s32.totalorder %s19, 3
    %p338 = pnand %p336, %p337
    %p339 = pneg %p338
    // Predicated region
    $region9: #{jvp__.1} parent=5 // pred_check
      _
    $region10: #{jvp__.1} parent=5 // pred_check_branch
      %341 = sbr.rel (%p338) target = $region12
    $region11: #{jvp__.1} parent=5 // pred_region
      %s342 = ssub.s32 %s19, 1
      // Predicated region
      $region13: #{jvp__.1} parent=11 // pred_check
        %p343 = pneg %p92
      $region14: #{jvp__.1} parent=11 // pred_check_branch
        %345 = sbr.rel (%p343) target = $region16
      $region15: #{jvp__.1} parent=11 // pred_region
        _
      $region16: #{jvp__.1} parent=11 // pred_fallthru
        _
      // Predicated region
      $region17: #{jvp__.1} parent=11 // pred_check
        %p346 = pneg %p113
      $region18: #{jvp__.1} parent=11 // pred_check_branch
        %348 = sbr.rel (%p346) target = $region20
      $region19: #{jvp__.1} parent=11 // pred_region
        _
      $region20: #{jvp__.1} parent=11 // pred_fallthru
        _
      // Predicated region
      $region21: #{jvp__.1} parent=11 // pred_check
        %p349 = pneg %p134
      $region22: #{jvp__.1} parent=11 // pred_check_branch
        %351 = sbr.rel (%p349) target = $region24
      $region23: #{jvp__.1} parent=11 // pred_region
        _
      $region24: #{jvp__.1} parent=11 // pred_fallthru
        _
      // Predicated region
      $region25: #{jvp__.1} parent=11 // pred_check
        %p352 = pneg %p155
      $region26: #{jvp__.1} parent=11 // pred_check_branch
        %354 = sbr.rel (%p352) target = $region28
      $region27: #{jvp__.1} parent=11 // pred_region
        _
      $region28: #{jvp__.1} parent=11 // pred_fallthru
        _
      // Predicated region
      $region29: #{jvp__.1} parent=11 // pred_check
        %p355 = pneg %p176
      $region30: #{jvp__.1} parent=11 // pred_check_branch
        %357 = sbr.rel (%p355) target = $region32
      $region31: #{jvp__.1} parent=11 // pred_region
        _
      $region32: #{jvp__.1} parent=11 // pred_fallthru
        _
      // Predicated region
      $region33: #{jvp__.1} parent=11 // pred_check
        %p358 = pneg %p197
      $region34: #{jvp__.1} parent=11 // pred_check_branch
        %360 = sbr.rel (%p358) target = $region36
      $region35: #{jvp__.1} parent=11 // pred_region
        _
      $region36: #{jvp__.1} parent=11 // pred_fallthru
        _
      // Predicated region
      $region37: #{jvp__.1} parent=11 // pred_check
        %p361 = pneg %p218
      $region38: #{jvp__.1} parent=11 // pred_check_branch
        %363 = sbr.rel (%p361) target = $region40
      $region39: #{jvp__.1} parent=11 // pred_region
        _
      $region40: #{jvp__.1} parent=11 // pred_fallthru
        _
      // Predicated region
      $region41: #{jvp__.1} parent=11 // pred_check
        %p364 = pneg %p239
      $region42: #{jvp__.1} parent=11 // pred_check_branch
        %366 = sbr.rel (%p364) target = $region44
      $region43: #{jvp__.1} parent=11 // pred_region
        _
      $region44: #{jvp__.1} parent=11 // pred_fallthru
        _
      // Predicated region
      $region45: #{jvp__.1} parent=11 // pred_check
        %p367 = pneg %p260
      $region46: #{jvp__.1} parent=11 // pred_check_branch
        %369 = sbr.rel (%p367) target = $region48
      $region47: #{jvp__.1} parent=11 // pred_region
        _
      $region48: #{jvp__.1} parent=11 // pred_fallthru
        _
      // Predicated region
      $region49: #{jvp__.1} parent=11 // pred_check
        %p370 = pneg %p281
      $region50: #{jvp__.1} parent=11 // pred_check_branch
        %372 = sbr.rel (%p370) target = $region52
      $region51: #{jvp__.1} parent=11 // pred_region
        _
      $region52: #{jvp__.1} parent=11 // pred_fallthru
        _
      // Predicated region
      $region53: #{jvp__.1} parent=11 // pred_check
        %p373 = pneg %p302
      $region54: #{jvp__.1} parent=11 // pred_check_branch
        %375 = sbr.rel (%p373) target = $region56
      $region55: #{jvp__.1} parent=11 // pred_region
        _
      $region56: #{jvp__.1} parent=11 // pred_fallthru
        _
    $region12: #{jvp__.1} parent=5 // pred_fallthru
      _
    %p376 = scmp.lt.s32.totalorder %s19, 2
    // Predicated region
    $region57: #{jvp__.1} parent=5 // pred_check
      %p377 = pneg %p376
    $region58: #{jvp__.1} parent=5 // pred_check_branch
      %379 = sbr.rel (%p377) target = $region60
    $region59: #{jvp__.1} parent=5 // pred_region
      // Predicated region
      $region61: #{jvp__.1} parent=59 // pred_check
        %p380 = pneg %p39
      $region62: #{jvp__.1} parent=59 // pred_check_branch
        %382 = sbr.rel (%p380) target = $region64
      $region63: #{jvp__.1} parent=59 // pred_region
        %p383 = scmp.lt.s32.totalorder %s19, 1
        %s384 = scalar_select %p383, %s19, 1
        %s385 = smul.addr %s384, 3
        %s386 = scalar_lea.vmem %s0, %s385
      $region64: #{jvp__.1} parent=59 // pred_fallthru
        _
      // Predicated region
      $region65: #{jvp__.1} parent=59 // pred_check
        %p387 = pneg %p65
      $region66: #{jvp__.1} parent=59 // pred_check_branch
        %389 = sbr.rel (%p387) target = $region68
      $region67: #{jvp__.1} parent=59 // pred_region
        %p390 = scmp.lt.s32.totalorder %s19, 1
        %s391 = scalar_select %p390, %s19, 1
        %s392 = scalar_lea.vmem %s1, %s391
      $region68: #{jvp__.1} parent=59 // pred_fallthru
        _
    $region60: #{jvp__.1} parent=5 // pred_fallthru
      _
    %p393 = scmp.le.s32.totalorder 1, %s19
    %p394 = scmp.lt.s32.totalorder %s19, 3
    %p395 = pnand %p393, %p394
    %p396 = pneg %p395
    // Predicated region
    $region69: #{jvp__.1} parent=5 // pred_check
      _
    $region70: #{jvp__.1} parent=5 // pred_check_branch
      %398 = sbr.rel (%p395) target = $region72
    $region71: #{jvp__.1} parent=5 // pred_region
      %s399 = ssub.s32 %s19, 1
      %p400 = scmp.lt.s32.totalorder %s24, 1
      %s401 = scalar_select %p400, %s24, 1
      %s402 = smul.addr %s401, 3
      %s403 = scalar_lea.vmem %s0, %s402
      %p404 = pneg %p45
      %p405 = pneg %p42
      %p406 = scmp.lt.s32.totalorder %s24, 1
      %s407 = scalar_select %p406, %s24, 1
      %s408 = scalar_lea.vmem %s1, %s407
      %p409 = pneg %p71
      %p410 = pneg %p68
      %p411 = pneg %p92
      %p412 = pneg %p89
      %p413 = pneg %p113
      %p414 = pneg %p110
      %p415 = pneg %p134
      %p416 = pneg %p131
      %p417 = pneg %p155
      %p418 = pneg %p152
      %p419 = pneg %p176
      %p420 = pneg %p173
      %p421 = pneg %p197
      %p422 = pneg %p194
      %p423 = pneg %p218
      %p424 = pneg %p215
      %p425 = pneg %p239
      %p426 = pneg %p236
      %p427 = pneg %p260
      %p428 = pneg %p257
      %p429 = pneg %p281
      %p430 = pneg %p278
      %p431 = pneg %p302
      %p432 = pneg %p299
      %p433 = pneg %p328
      %p434 = pneg %p325
      %p435 = scmp.lt.s32.totalorder %s24, 1
      %s436 = scalar_select %p435, %s24, 1
      %s437 = smul.addr %s436, 2
      %s438 = smul.addr %s437, 8
      %s439 = scalar_lea.vmem %s13, %s438
      %p440 = scmp.lt.s32.totalorder %s24, 1
      %s441 = scalar_select %p440, %s24, 1
      %s442 = smul.addr %s441, 3
      %s443 = scalar_lea.vmem %s0, %s442
      %p444 = scmp.lt.s32.totalorder %s24, 1
      %s445 = scalar_select %p444, %s24, 1
      %s446 = scalar_lea.vmem %s1, %s445
      %p447 = scmp.lt.s32.totalorder %s24, 1
      %s448 = scalar_select %p447, %s24, 1
      %s449 = smul.addr %s448, 2
      %s450 = smul.addr %s449, 8
      %s451 = scalar_lea.vmem %s13, %s450
      %v453 = vld [vmem:[%s2] sm:$0x7]
      %v454 = vld [vmem:[%s443] sm:$0x7]
      %v455 = vld [vmem:[%s446] sm:$0x1]
      %v456 = vld [vmem:[%s3] sm:$0xff]
      %v457 = vld [vmem:[%s3 + $0x8] sm:$0xff]
      %v458 = vld [vmem:[%s3 + $0x10] sm:$0xff]
      %v459 = vld [vmem:[%s3 + $0x18] sm:$0xff]
      %461 = vset.pattern.permute.xlu0 0
      %462 = vperm.xlu0 %461, %v456
      %v463 = vpop.permute.xlu0 %462
      %466 = vset.pattern.permute.xlu0 0
      %467 = vperm.xlu0 %466, %v457
      %v468 = vpop.permute.xlu0 %467
      %471 = vset.pattern.permute.xlu0 0
      %472 = vperm.xlu0 %471, %v458
      %v473 = vpop.permute.xlu0 %472
      %476 = vset.pattern.permute.xlu0 0
      %477 = vperm.xlu0 %476, %v459
      %v478 = vpop.permute.xlu0 %477
      %v481 = vlaneseq
      %v482 = vshrl.u32 %v481, 7
      %v483 = vsub.s32 0, %v482
      %v484 = vrot.slane %v454, %v483
      %v485 = vlaneseq
      %v486 = vshrl.u32 %v485, 7
      %v487 = vsub.s32 1, %v486
      %v488 = vrot.slane %v454, %v487
      %v489 = vlaneseq
      %v490 = vshrl.u32 %v489, 7
      %v491 = vsub.s32 2, %v490
      %v492 = vrot.slane %v454, %v491
      %v496 = vmul.f32 %v463, %v484
      %v497 = vmul.f32 %v463, %v488
      %v498 = vmul.f32 %v463, %v492
      %v499 = vmul.f32 %v468, %v484
      %v500 = vmul.f32 %v468, %v488
      %v501 = vmul.f32 %v468, %v492
      %v502 = vmul.f32 %v473, %v484
      %v503 = vmul.f32 %v473, %v488
      %v504 = vmul.f32 %v473, %v492
      %v505 = vmul.f32 %v478, %v484
      %v506 = vmul.f32 %v478, %v488
      %v507 = vmul.f32 %v478, %v492
      %v508 = vld [vmem:[%s4] sm:$0xff]
      %v509 = vld [vmem:[%s4 + $0x8] sm:$0xff]
      %v510 = vld [vmem:[%s4 + $0x10] sm:$0xff]
      %v511 = vld [vmem:[%s4 + $0x18] sm:$0xff]
      %513 = vset.pattern.permute.xlu0 0
      %514 = vperm.xlu0 %513, %v508
      %v515 = vpop.permute.xlu0 %514
      %518 = vset.pattern.permute.xlu0 0
      %519 = vperm.xlu0 %518, %v509
      %v520 = vpop.permute.xlu0 %519
      %523 = vset.pattern.permute.xlu0 0
      %524 = vperm.xlu0 %523, %v510
      %v525 = vpop.permute.xlu0 %524
      %528 = vset.pattern.permute.xlu0 0
      %529 = vperm.xlu0 %528, %v511
      %v530 = vpop.permute.xlu0 %529
      %v532 = vadd.f32 %v496, %v515
      %v533 = vadd.f32 %v497, %v515
      %v534 = vadd.f32 %v498, %v515
      %v535 = vadd.f32 %v499, %v520
      %v536 = vadd.f32 %v500, %v520
      %v537 = vadd.f32 %v501, %v520
      %v538 = vadd.f32 %v502, %v525
      %v539 = vadd.f32 %v503, %v525
      %v540 = vadd.f32 %v504, %v525
      %v541 = vadd.f32 %v505, %v530
      %v542 = vadd.f32 %v506, %v530
      %v543 = vadd.f32 %v507, %v530
      %v545 = vlaneseq
      %v546 = vshrl.u32 %v545, 7
      %v547 = vsub.s32 0, %v546
      %v548 = vrot.slane %v453, %v547
      %v549 = vlaneseq
      %v550 = vshrl.u32 %v549, 7
      %v551 = vsub.s32 1, %v550
      %v552 = vrot.slane %v453, %v551
      %v553 = vlaneseq
      %v554 = vshrl.u32 %v553, 7
      %v555 = vsub.s32 2, %v554
      %v556 = vrot.slane %v453, %v555
      %v560 = vmul.f32 %v532, %v548
      %v561 = vmul.f32 %v533, %v552
      %v562 = vmul.f32 %v534, %v556
      %v563 = vmul.f32 %v535, %v548
      %v564 = vmul.f32 %v536, %v552
      %v565 = vmul.f32 %v537, %v556
      %v566 = vmul.f32 %v538, %v548
      %v567 = vmul.f32 %v539, %v552
      %v568 = vmul.f32 %v540, %v556
      %v569 = vmul.f32 %v541, %v548
      %v570 = vmul.f32 %v542, %v552
      %v571 = vmul.f32 %v543, %v556
      %v572 = vld [vmem:[%s7] sm:$0xff]
      %v573 = vld [vmem:[%s7 + $0x8] sm:$0xff]
      %v574 = vld [vmem:[%s7 + $0x10] sm:$0xff]
      %v575 = vld [vmem:[%s7 + $0x18] sm:$0xff]
      %v576 = vld [vmem:[%s8] sm:$0xff]
      %v577 = vld [vmem:[%s8 + $0x8] sm:$0xff]
      %v578 = vld [vmem:[%s8 + $0x10] sm:$0xff]
      %v579 = vld [vmem:[%s8 + $0x18] sm:$0xff]
      %v581 = vlaneseq
      %v582 = vshrl.u32 %v581, 7
      %v583 = vsub.s32 0, %v582
      %v584 = vrot.slane %v455, %v583
      %v586 = vmul.f32 %v572, %v584
      %v587 = vmul.f32 %v573, %v584
      %v588 = vmul.f32 %v574, %v584
      %v589 = vmul.f32 %v575, %v584
      %vm590 = vcmask 80896
      %v591 = vsel %vm590, %v586, 0.0
      %592 = vadd.xlane.f32.xlu0 %v591
      %v593 = vpop.xlane.xlu0 %592
      %v594 = vsel %vm590, %v587, 0.0
      %595 = vadd.xlane.f32.xlu0 %v594
      %v596 = vpop.xlane.xlu0 %595
      %v597 = vsel %vm590, %v588, 0.0
      %598 = vadd.xlane.f32.xlu0 %v597
      %v599 = vpop.xlane.xlu0 %598
      %v600 = vsel %vm590, %v589, 0.0
      %601 = vadd.xlane.f32.xlu0 %v600
      %v602 = vpop.xlane.xlu0 %601
      %v603 = vadd.f32 %v593, %v576
      %v604 = vadd.f32 %v596, %v577
      %v605 = vadd.f32 %v599, %v578
      %v606 = vadd.f32 %v602, %v579
      %v607 = vld [vmem:[%s7 + $0x20] sm:$0xff]
      %v608 = vld [vmem:[%s7 + $0x28] sm:$0xff]
      %v609 = vld [vmem:[%s7 + $0x30] sm:$0xff]
      %v610 = vld [vmem:[%s7 + $0x38] sm:$0xff]
      %v611 = vld [vmem:[%s8 + $0x20] sm:$0xff]
      %v612 = vld [vmem:[%s8 + $0x28] sm:$0xff]
      %v613 = vld [vmem:[%s8 + $0x30] sm:$0xff]
      %v614 = vld [vmem:[%s8 + $0x38] sm:$0xff]
      %v615 = vmul.f32 %v607, %v584
      %v616 = vmul.f32 %v608, %v584
      %v617 = vmul.f32 %v609, %v584
      %v618 = vmul.f32 %v610, %v584
      %v619 = vsel %vm590, %v615, 0.0
      %620 = vadd.xlane.f32.xlu0 %v619
      %v621 = vpop.xlane.xlu0 %620
      %v622 = vsel %vm590, %v616, 0.0
      %623 = vadd.xlane.f32.xlu0 %v622
      %v624 = vpop.xlane.xlu0 %623
      %v625 = vsel %vm590, %v617, 0.0
      %626 = vadd.xlane.f32.xlu0 %v625
      %v627 = vpop.xlane.xlu0 %626
      %v628 = vsel %vm590, %v618, 0.0
      %629 = vadd.xlane.f32.xlu0 %v628
      %v630 = vpop.xlane.xlu0 %629
      %v631 = vadd.f32 %v621, %v611
      %v632 = vadd.f32 %v624, %v612
      %v633 = vadd.f32 %v627, %v613
      %v634 = vadd.f32 %v630, %v614
      %v635 = vld [vmem:[%s7 + $0x40] sm:$0xff]
      %v636 = vld [vmem:[%s7 + $0x48] sm:$0xff]
      %v637 = vld [vmem:[%s7 + $0x50] sm:$0xff]
      %v638 = vld [vmem:[%s7 + $0x58] sm:$0xff]
      %v639 = vld [vmem:[%s8 + $0x40] sm:$0xff]
      %v640 = vld [vmem:[%s8 + $0x48] sm:$0xff]
      %v641 = vld [vmem:[%s8 + $0x50] sm:$0xff]
      %v642 = vld [vmem:[%s8 + $0x58] sm:$0xff]
      %v643 = vmul.f32 %v635, %v584
      %v644 = vmul.f32 %v636, %v584
      %v645 = vmul.f32 %v637, %v584
      %v646 = vmul.f32 %v638, %v584
      %v647 = vsel %vm590, %v643, 0.0
      %648 = vadd.xlane.f32.xlu0 %v647
      %v649 = vpop.xlane.xlu0 %648
      %v650 = vsel %vm590, %v644, 0.0
      %651 = vadd.xlane.f32.xlu0 %v650
      %v652 = vpop.xlane.xlu0 %651
      %v653 = vsel %vm590, %v645, 0.0
      %654 = vadd.xlane.f32.xlu0 %v653
      %v655 = vpop.xlane.xlu0 %654
      %v656 = vsel %vm590, %v646, 0.0
      %657 = vadd.xlane.f32.xlu0 %v656
      %v658 = vpop.xlane.xlu0 %657
      %v659 = vadd.f32 %v649, %v639
      %v660 = vadd.f32 %v652, %v640
      %v661 = vadd.f32 %v655, %v641
      %v662 = vadd.f32 %v658, %v642
      %v663 = vld [vmem:[%s5] sm:$0xf]
      %v664 = vld [vmem:[%s5 + $0x4] sm:$0xf]
      %v665 = vld [vmem:[%s5 + $0x8] sm:$0xf]
      %v666 = vld [vmem:[%s5 + $0xc] sm:$0xf]
      %667 = vrot.lane.b32.xlu0 %v560, 19
      %v668 = vpop.permute.xlu0 %667
      %669 = vrot.lane.b32.xlu0 %v563, 19
      %v670 = vpop.permute.xlu0 %669
      %671 = vrot.lane.b32.xlu0 %v566, 19
      %v672 = vpop.permute.xlu0 %671
      %673 = vrot.lane.b32.xlu0 %v569, 19
      %v674 = vpop.permute.xlu0 %673
      %675 = vrot.lane.b32.xlu0 %v561, 19
      %v676 = vpop.permute.xlu0 %675
      %677 = vrot.lane.b32.xlu0 %v564, 19
      %v678 = vpop.permute.xlu0 %677
      %679 = vrot.lane.b32.xlu0 %v567, 19
      %v680 = vpop.permute.xlu0 %679
      %681 = vrot.lane.b32.xlu0 %v570, 19
      %v682 = vpop.permute.xlu0 %681
      %683 = vrot.lane.b32.xlu0 %v562, 19
      %v684 = vpop.permute.xlu0 %683
      %685 = vrot.lane.b32.xlu0 %v565, 19
      %v686 = vpop.permute.xlu0 %685
      %687 = vrot.lane.b32.xlu0 %v568, 19
      %v688 = vpop.permute.xlu0 %687
      %689 = vrot.lane.b32.xlu0 %v571, 19
      %v690 = vpop.permute.xlu0 %689
      %v691 = vlaneseq
      %v692 = vand.u32 %v691, 127
      %vm693 = vcmp.lt.s32.totalorder %v692, 19
      %v694 = vsel %vm693, %v676, %v684
      %v695 = vsel %vm693, %v678, %v686
      %v696 = vsel %vm693, %v680, %v688
      %v697 = vsel %vm693, %v682, %v690
      %v698 = vsel %vm693, %v668, %v676
      %v699 = vsel %vm693, %v670, %v678
      %v700 = vsel %vm693, %v672, %v680
      %v701 = vsel %vm693, %v674, %v682
      %v702 = vsel %vm693, %v684, %v668
      %v703 = vsel %vm693, %v686, %v670
      %v704 = vsel %vm693, %v688, %v672
      %v705 = vsel %vm693, %v690, %v674
      %v706 = vpack.c.bf16 %v703, %v702
      %v707 = vpack.c.bf16 %v699, %v698
      %v708 = vpack.c.bf16 %v695, %v694
      %v709 = vpack.c.bf16 %v705, %v704
      %v710 = vpack.c.bf16 %v701, %v700
      %v711 = vpack.c.bf16 %v697, %v696
      %s712 = scalar_lea.vmem %s5, 16
      %v713 = vld [vmem:[%s712] sm:$0xf]
      %v714 = vld [vmem:[%s712 + $0x4] sm:$0xf]
      %v715 = vld [vmem:[%s712 + $0x8] sm:$0xf]
      %v716 = vld [vmem:[%s712 + $0xc] sm:$0xf]
      %717 = vrot.lane.b32.xlu0 %v560, 18
      %v718 = vpop.permute.xlu0 %717
      %719 = vrot.lane.b32.xlu0 %v563, 18
      %v720 = vpop.permute.xlu0 %719
      %721 = vrot.lane.b32.xlu0 %v566, 18
      %v722 = vpop.permute.xlu0 %721
      %723 = vrot.lane.b32.xlu0 %v569, 18
      %v724 = vpop.permute.xlu0 %723
      %725 = vrot.lane.b32.xlu0 %v561, 18
      %v726 = vpop.permute.xlu0 %725
      %727 = vrot.lane.b32.xlu0 %v564, 18
      %v728 = vpop.permute.xlu0 %727
      %729 = vrot.lane.b32.xlu0 %v567, 18
      %v730 = vpop.permute.xlu0 %729
      %731 = vrot.lane.b32.xlu0 %v570, 18
      %v732 = vpop.permute.xlu0 %731
      %733 = vrot.lane.b32.xlu0 %v562, 18
      %v734 = vpop.permute.xlu0 %733
      %735 = vrot.lane.b32.xlu0 %v565, 18
      %v736 = vpop.permute.xlu0 %735
      %737 = vrot.lane.b32.xlu0 %v568, 18
      %v738 = vpop.permute.xlu0 %737
      %739 = vrot.lane.b32.xlu0 %v571, 18
      %v740 = vpop.permute.xlu0 %739
      %vm741 = vcmp.lt.s32.totalorder %v692, 18
      %v742 = vsel %vm741, %v726, %v734
      %v743 = vsel %vm741, %v728, %v736
      %v744 = vsel %vm741, %v730, %v738
      %v745 = vsel %vm741, %v732, %v740
      %v746 = vsel %vm741, %v718, %v726
      %v747 = vsel %vm741, %v720, %v728
      %v748 = vsel %vm741, %v722, %v730
      %v749 = vsel %vm741, %v724, %v732
      %v750 = vsel %vm741, %v734, %v718
      %v751 = vsel %vm741, %v736, %v720
      %v752 = vsel %vm741, %v738, %v722
      %v753 = vsel %vm741, %v740, %v724
      %v754 = vpack.c.bf16 %v751, %v750
      %v755 = vpack.c.bf16 %v747, %v746
      %v756 = vpack.c.bf16 %v743, %v742
      %v757 = vpack.c.bf16 %v753, %v752
      %v758 = vpack.c.bf16 %v749, %v748
      %v759 = vpack.c.bf16 %v745, %v744
      %v764 = vunpack.c.l.b16 %v713
      %v765 = vunpack.c.l.b16 %v714
      %v766 = vunpack.c.l.b16 %v715
      %v767 = vunpack.c.l.b16 %v716
      %v768 = vpack.c.b16 %v765, %v764
      %v769 = vpack.c.b16 %v767, %v766
      %vm770 = vcmask 261120
      %v772 = vsel %vm770, %v768, 0
      %v775 = vsel %vm770, %v769, 0
      %777 = vmatprep.subr.bf16.mxu0 %v755
      %778 = vmatpush1.bf16.msra.mxu0 %v754
      %779 = vmatprep.subr.bf16.mxu0 %v758
      %780 = vmatpush1.bf16.msra.mxu0 %v757
      %781 = vmatprep.subr.bf16.mxu0 0
      %782 = vmatpush1.bf16.msra.mxu0 0
      %783 = vmatprep.subr.bf16.mxu0 0
      %784 = vmatpush1.bf16.msra.mxu0 0
      %785 = vmatprep.subr.bf16.mxu0 0
      %786 = vmatpush1.bf16.msra.mxu0 0
      %787 = vmatprep.subr.bf16.mxu0 0
      %788 = vmatpush1.bf16.msra.mxu0 0
      %789 = vmatprep.subr.bf16.mxu0 0
      %790 = vmatpush1.bf16.msra.mxu0 0
      %791 = vmatprep.subr.bf16.mxu0 0
      %792 = vmatpush1.bf16.msra.mxu0 0
      %793 = vmatprep.subr.bf16.mxu0 0
      %794 = vmatpush1.bf16.msra.mxu0 0
      %795 = vmatprep.subr.bf16.mxu0 0
      %796 = vmatpush1.bf16.msra.mxu0 0
      %797 = vmatprep.subr.bf16.mxu0 0
      %798 = vmatpush1.bf16.msra.mxu0 0
      %799 = vmatprep.subr.bf16.mxu0 0
      %800 = vmatpush1.bf16.msra.mxu0 0
      %801 = vmatprep.subr.bf16.mxu0 0
      %802 = vmatpush1.bf16.msra.mxu0 0
      %803 = vmatprep.subr.bf16.mxu0 0
      %804 = vmatpush1.bf16.msra.mxu0 0
      %805 = vmatprep.subr.bf16.mxu0 0
      %806 = vmatpush1.bf16.msra.mxu0 0
      %807 = vmatprep.subr.bf16.mxu0 0
      %808 = vmatpush1.bf16.msra.mxu0 0
      %809 = vmatprep.mubr.bf16.mxu0 0
      %810 = vmatmul.mubr.bf16.gmra.mrb[0].mxu0 %v772
      %v811 = vpop.f32.mrb[0].mxu0
      %v812 = vadd.f32 0.0, %v811
      %v813 = vpop.f32.mrb[0].mxu0
      %v814 = vadd.f32 0.0, %v813
      %v815 = vpop.f32.mrb[0].mxu0
      %v816 = vadd.f32 0.0, %v815
      %v817 = vpop.f32.mrb[0].mxu0
      %v818 = vadd.f32 0.0, %v817
      %819 = vmatprep.mubr.bf16.mxu0 0
      %820 = vmatmul.mubr.bf16.gmra.mrb[0].mxu0 %v775
      %v821 = vpop.f32.mrb[0].mxu0
      %v822 = vadd.f32 0.0, %v821
      %v823 = vpop.f32.mrb[0].mxu0
      %v824 = vadd.f32 0.0, %v823
      %v825 = vpop.f32.mrb[0].mxu0
      %v826 = vadd.f32 0.0, %v825
      %v827 = vpop.f32.mrb[0].mxu0
      %v828 = vadd.f32 0.0, %v827
      %829 = vdwg.mxu0
      %830 = vmatprep.subr.bf16.mxu0 0
      %831 = vmatpush1.bf16.msra.mxu0 %v756
      %832 = vmatprep.subr.bf16.mxu0 0
      %833 = vmatpush1.bf16.msra.mxu0 %v759
      %834 = vmatprep.subr.bf16.mxu0 0
      %835 = vmatpush1.bf16.msra.mxu0 0
      %836 = vmatprep.subr.bf16.mxu0 0
      %837 = vmatpush1.bf16.msra.mxu0 0
      %838 = vmatprep.subr.bf16.mxu0 0
      %839 = vmatpush1.bf16.msra.mxu0 0
      %840 = vmatprep.subr.bf16.mxu0 0
      %841 = vmatpush1.bf16.msra.mxu0 0
      %842 = vmatprep.subr.bf16.mxu0 0
      %843 = vmatpush1.bf16.msra.mxu0 0
      %844 = vmatprep.subr.bf16.mxu0 0
      %845 = vmatpush1.bf16.msra.mxu0 0
      %846 = vmatprep.subr.bf16.mxu0 0
      %847 = vmatpush1.bf16.msra.mxu0 0
      %848 = vmatprep.subr.bf16.mxu0 0
      %849 = vmatpush1.bf16.msra.mxu0 0
      %850 = vmatprep.subr.bf16.mxu0 0
      %851 = vmatpush1.bf16.msra.mxu0 0
      %852 = vmatprep.subr.bf16.mxu0 0
      %853 = vmatpush1.bf16.msra.mxu0 0
      %854 = vmatprep.subr.bf16.mxu0 0
      %855 = vmatpush1.bf16.msra.mxu0 0
      %856 = vmatprep.subr.bf16.mxu0 0
      %857 = vmatpush1.bf16.msra.mxu0 0
      %858 = vmatprep.subr.bf16.mxu0 0
      %859 = vmatpush1.bf16.msra.mxu0 0
      %860 = vmatprep.subr.bf16.mxu0 0
      %861 = vmatpush1.bf16.msra.mxu0 0
      %862 = vmatprep.mubr.bf16.mxu0 0
      %863 = vmatmul.mubr.bf16.gmra.mrb[0].mxu0 %v772
      %v864 = vpop.f32.mrb[0].mxu0
      %v865 = vadd.f32 0.0, %v864
      %v866 = vpop.f32.mrb[0].mxu0
      %v867 = vpop.f32.mrb[0].mxu0
      %v868 = vadd.f32 0.0, %v867
      %v869 = vpop.f32.mrb[0].mxu0
      %870 = vmatprep.mubr.bf16.mxu0 0
      %871 = vmatmul.mubr.bf16.gmra.mrb[0].mxu0 %v775
      %v872 = vpop.f32.mrb[0].mxu0
      %v873 = vadd.f32 0.0, %v872
      %v874 = vpop.f32.mrb[0].mxu0
      %v875 = vpop.f32.mrb[0].mxu0
      %v876 = vadd.f32 0.0, %v875
      %v877 = vpop.f32.mrb[0].mxu0
      %878 = vdwg.mxu0
      %v883 = vunpack.c.l.b16 %v663
      %v884 = vunpack.c.l.b16 %v664
      %v885 = vunpack.c.l.b16 %v665
      %v886 = vunpack.c.l.b16 %v666
      %v887 = vpack.c.b16 %v884, %v883
      %v888 = vpack.c.b16 %v886, %v885
      %v890 = vsel %vm770, %v887, 0
      %v893 = vsel %vm770, %v888, 0
      %895 = vmatprep.subr.bf16.mxu0 %v707
      %896 = vmatpush1.bf16.msra.mxu0 %v706
      %897 = vmatprep.subr.bf16.mxu0 %v710
      %898 = vmatpush1.bf16.msra.mxu0 %v709
      %899 = vmatprep.subr.bf16.mxu0 0
      %900 = vmatpush1.bf16.msra.mxu0 0
      %901 = vmatprep.subr.bf16.mxu0 0
      %902 = vmatpush1.bf16.msra.mxu0 0
      %903 = vmatprep.subr.bf16.mxu0 0
      %904 = vmatpush1.bf16.msra.mxu0 0
      %905 = vmatprep.subr.bf16.mxu0 0
      %906 = vmatpush1.bf16.msra.mxu0 0
      %907 = vmatprep.subr.bf16.mxu0 0
      %908 = vmatpush1.bf16.msra.mxu0 0
      %909 = vmatprep.subr.bf16.mxu0 0
      %910 = vmatpush1.bf16.msra.mxu0 0
      %911 = vmatprep.subr.bf16.mxu0 0
      %912 = vmatpush1.bf16.msra.mxu0 0
      %913 = vmatprep.subr.bf16.mxu0 0
      %914 = vmatpush1.bf16.msra.mxu0 0
      %915 = vmatprep.subr.bf16.mxu0 0
      %916 = vmatpush1.bf16.msra.mxu0 0
      %917 = vmatprep.subr.bf16.mxu0 0
      %918 = vmatpush1.bf16.msra.mxu0 0
      %919 = vmatprep.subr.bf16.mxu0 0
      %920 = vmatpush1.bf16.msra.mxu0 0
      %921 = vmatprep.subr.bf16.mxu0 0
      %922 = vmatpush1.bf16.msra.mxu0 0
      %923 = vmatprep.subr.bf16.mxu0 0
      %924 = vmatpush1.bf16.msra.mxu0 0
      %925 = vmatprep.subr.bf16.mxu0 0
      %926 = vmatpush1.bf16.msra.mxu0 0
      %927 = vmatprep.mubr.bf16.mxu0 0
      %928 = vmatmul.mubr.bf16.gmra.mrb[0].mxu0 %v890
      %v929 = vpop.f32.mrb[0].mxu0
      %v930 = vadd.f32 %v812, %v929
      %v931 = vpop.f32.mrb[0].mxu0
      %v932 = vadd.f32 %v814, %v931
      %v933 = vpop.f32.mrb[0].mxu0
      %v934 = vadd.f32 %v816, %v933
      %v935 = vpop.f32.mrb[0].mxu0
      %v936 = vadd.f32 %v818, %v935
      %937 = vmatprep.mubr.bf16.mxu0 0
      %938 = vmatmul.mubr.bf16.gmra.mrb[0].mxu0 %v893
      %v939 = vpop.f32.mrb[0].mxu0
      %v940 = vadd.f32 %v822, %v939
      %v941 = vpop.f32.mrb[0].mxu0
      %v942 = vadd.f32 %v824, %v941
      %v943 = vpop.f32.mrb[0].mxu0
      %v944 = vadd.f32 %v826, %v943
      %v945 = vpop.f32.mrb[0].mxu0
      %v946 = vadd.f32 %v828, %v945
      %947 = vdwg.mxu0
      %948 = vmatprep.subr.bf16.mxu0 0
      %949 = vmatpush1.bf16.msra.mxu0 %v708
      %950 = vmatprep.subr.bf16.mxu0 0
      %951 = vmatpush1.bf16.msra.mxu0 %v711
      %952 = vmatprep.subr.bf16.mxu0 0
      %953 = vmatpush1.bf16.msra.mxu0 0
      %954 = vmatprep.subr.bf16.mxu0 0
      %955 = vmatpush1.bf16.msra.mxu0 0
      %956 = vmatprep.subr.bf16.mxu0 0
      %957 = vmatpush1.bf16.msra.mxu0 0
      %958 = vmatprep.subr.bf16.mxu0 0
      %959 = vmatpush1.bf16.msra.mxu0 0
      %960 = vmatprep.subr.bf16.mxu0 0
      %961 = vmatpush1.bf16.msra.mxu0 0
      %962 = vmatprep.subr.bf16.mxu0 0
      %963 = vmatpush1.bf16.msra.mxu0 0
      %964 = vmatprep.subr.bf16.mxu0 0
      %965 = vmatpush1.bf16.msra.mxu0 0
      %966 = vmatprep.subr.bf16.mxu0 0
      %967 = vmatpush1.bf16.msra.mxu0 0
      %968 = vmatprep.subr.bf16.mxu0 0
      %969 = vmatpush1.bf16.msra.mxu0 0
      %970 = vmatprep.subr.bf16.mxu0 0
      %971 = vmatpush1.bf16.msra.mxu0 0
      %972 = vmatprep.subr.bf16.mxu0 0
      %973 = vmatpush1.bf16.msra.mxu0 0
      %974 = vmatprep.subr.bf16.mxu0 0
      %975 = vmatpush1.bf16.msra.mxu0 0
      %976 = vmatprep.subr.bf16.mxu0 0
      %977 = vmatpush1.bf16.msra.mxu0 0
      %978 = vmatprep.subr.bf16.mxu0 0
      %979 = vmatpush1.bf16.msra.mxu0 0
      %980 = vmatprep.mubr.bf16.mxu0 0
      %981 = vmatmul.mubr.bf16.gmra.mrb[0].mxu0 %v890
      %v982 = vpop.f32.mrb[0].mxu0
      %v983 = vadd.f32 %v865, %v982
      %v984 = vpop.f32.mrb[0].mxu0
      %v985 = vpop.f32.mrb[0].mxu0
      %v986 = vadd.f32 %v868, %v985
      %v987 = vpop.f32.mrb[0].mxu0
      %988 = vmatprep.mubr.bf16.mxu0 0
      %989 = vmatmul.mubr.bf16.gmra.mrb[0].mxu0 %v893
      %v990 = vpop.f32.mrb[0].mxu0
      %v991 = vadd.f32 %v873, %v990
      %v992 = vpop.f32.mrb[0].mxu0
      %v993 = vpop.f32.mrb[0].mxu0
      %v994 = vadd.f32 %v876, %v993
      %v995 = vpop.f32.mrb[0].mxu0
      %996 = vdwg.mxu0
      %s997 = scalar_lea.vmem %s5, 32
      %v998 = vld [vmem:[%s997] sm:$0xf]
      %v999 = vld [vmem:[%s997 + $0x4] sm:$0xf]
      %v1000 = vld [vmem:[%s997 + $0x8] sm:$0xf]
      %v1001 = vld [vmem:[%s997 + $0xc] sm:$0xf]
      %1002 = vrot.lane.b32.xlu0 %v560, 17
      %v1003 = vpop.permute.xlu0 %1002
      %1004 = vrot.lane.b32.xlu0 %v563, 17
      %v1005 = vpop.permute.xlu0 %1004
      %1006 = vrot.lane.b32.xlu0 %v566, 17
      %v1007 = vpop.permute.xlu0 %1006
      %1008 = vrot.lane.b32.xlu0 %v569, 17
      %v1009 = vpop.permute.xlu0 %1008
      %1010 = vrot.lane.b32.xlu0 %v561, 17
      %v1011 = vpop.permute.xlu0 %1010
      %1012 = vrot.lane.b32.xlu0 %v564, 17
      %v1013 = vpop.permute.xlu0 %1012
      %1014 = vrot.lane.b32.xlu0 %v567, 17
      %v1015 = vpop.permute.xlu0 %1014
      %1016 = vrot.lane.b32.xlu0 %v570, 17
      %v1017 = vpop.permute.xlu0 %1016
      %1018 = vrot.lane.b32.xlu0 %v562, 17
      %v1019 = vpop.permute.xlu0 %1018
      %1020 = vrot.lane.b32.xlu0 %v565, 17
      %v1021 = vpop.permute.xlu0 %1020
      %1022 = vrot.lane.b32.xlu0 %v568, 17
      %v1023 = vpop.permute.xlu0 %1022
      %1024 = vrot.lane.b32.xlu0 %v571, 17
      %v1025 = vpop.permute.xlu0 %1024
      %vm1026 = vcmp.lt.s32.totalorder %v692, 17
      %v1027 = vsel %vm1026, %v1011, %v1019
      %v1028 = vsel %vm1026, %v1013, %v1021
      %v1029 = vsel %vm1026, %v1015, %v1023
      %v1030 = vsel %vm1026, %v1017, %v1025
      %v1031 = vsel %vm1026, %v1003, %v1011
      %v1032 = vsel %vm1026, %v1005, %v1013
      %v1033 = vsel %vm1026, %v1007, %v1015
      %v1034 = vsel %vm1026, %v1009, %v1017
      %v1035 = vsel %vm1026, %v1019, %v1003
      %v1036 = vsel %vm1026, %v1021, %v1005
      %v1037 = vsel %vm1026, %v1023, %v1007
      %v1038 = vsel %vm1026, %v1025, %v1009
      %v1039 = vpack.c.bf16 %v1036, %v1035
      %v1040 = vpack.c.bf16 %v1032, %v1031
      %v1041 = vpack.c.bf16 %v1028, %v1027
      %v1042 = vpack.c.bf16 %v1038, %v1037
      %v1043 = vpack.c.bf16 %v1034, %v1033
      %v1044 = vpack.c.bf16 %v1030, %v1029
      %v1049 = vunpack.c.l.b16 %v998
      %v1050 = vunpack.c.l.b16 %v999
      %v1051 = vunpack.c.l.b16 %v1000
      %v1052 = vunpack.c.l.b16 %v1001
      %v1053 = vpack.c.b16 %v1050, %v1049
      %v1054 = vpack.c.b16 %v1052, %v1051
      %v1056 = vsel %vm770, %v1053, 0
      %v1059 = vsel %vm770, %v1054, 0
      %1061 = vmatprep.subr.bf16.mxu0 %v1040
      %1062 = vmatpush1.bf16.msra.mxu0 %v1039
      %1063 = vmatprep.subr.bf16.mxu0 %v1043
      %1064 = vmatpush1.bf16.msra.mxu0 %v1042
      %1065 = vmatprep.subr.bf16.mxu0 0
      %1066 = vmatpush1.bf16.msra.mxu0 0
      %1067 = vmatprep.subr.bf16.mxu0 0
      %1068 = vmatpush1.bf16.msra.mxu0 0
      %1069 = vmatprep.subr.bf16.mxu0 0
      %1070 = vmatpush1.bf16.msra.mxu0 0
      %1071 = vmatprep.subr.bf16.mxu0 0
      %1072 = vmatpush1.bf16.msra.mxu0 0
      %1073 = vmatprep.subr.bf16.mxu0 0
      %1074 = vmatpush1.bf16.msra.mxu0 0
      %1075 = vmatprep.subr.bf16.mxu0 0
      %1076 = vmatpush1.bf16.msra.mxu0 0
      %1077 = vmatprep.subr.bf16.mxu0 0
      %1078 = vmatpush1.bf16.msra.mxu0 0
      %1079 = vmatprep.subr.bf16.mxu0 0
      %1080 = vmatpush1.bf16.msra.mxu0 0
      %1081 = vmatprep.subr.bf16.mxu0 0
      %1082 = vmatpush1.bf16.msra.mxu0 0
      %1083 = vmatprep.subr.bf16.mxu0 0
      %1084 = vmatpush1.bf16.msra.mxu0 0
      %1085 = vmatprep.subr.bf16.mxu0 0
      %1086 = vmatpush1.bf16.msra.mxu0 0
      %1087 = vmatprep.subr.bf16.mxu0 0
      %1088 = vmatpush1.bf16.msra.mxu0 0
      %1089 = vmatprep.subr.bf16.mxu0 0
      %1090 = vmatpush1.bf16.msra.mxu0 0
      %1091 = vmatprep.subr.bf16.mxu0 0
      %1092 = vmatpush1.bf16.msra.mxu0 0
      %1093 = vmatprep.mubr.bf16.mxu0 0
      %1094 = vmatmul.mubr.bf16.gmra.mrb[0].mxu0 %v1056
      %v1095 = vpop.f32.mrb[0].mxu0
      %v1096 = vadd.f32 0.0, %v1095
      %v1097 = vpop.f32.mrb[0].mxu0
      %v1098 = vadd.f32 0.0, %v1097
      %v1099 = vpop.f32.mrb[0].mxu0
      %v1100 = vadd.f32 0.0, %v1099
      %v1101 = vpop.f32.mrb[0].mxu0
      %v1102 = vadd.f32 0.0, %v1101
      %1103 = vmatprep.mubr.bf16.mxu0 0
      %1104 = vmatmul.mubr.bf16.gmra.mrb[0].mxu0 %v1059
      %v1105 = vpop.f32.mrb[0].mxu0
      %v1106 = vadd.f32 0.0, %v1105
      %v1107 = vpop.f32.mrb[0].mxu0
      %v1108 = vadd.f32 0.0, %v1107
      %v1109 = vpop.f32.mrb[0].mxu0
      %v1110 = vadd.f32 0.0, %v1109
      %v1111 = vpop.f32.mrb[0].mxu0
      %v1112 = vadd.f32 0.0, %v1111
      %1113 = vdwg.mxu0
      %1114 = vmatprep.subr.bf16.mxu0 0
      %1115 = vmatpush1.bf16.msra.mxu0 %v1041
      %1116 = vmatprep.subr.bf16.mxu0 0
      %1117 = vmatpush1.bf16.msra.mxu0 %v1044
      %1118 = vmatprep.subr.bf16.mxu0 0
      %1119 = vmatpush1.bf16.msra.mxu0 0
      %1120 = vmatprep.subr.bf16.mxu0 0
      %1121 = vmatpush1.bf16.msra.mxu0 0
      %1122 = vmatprep.subr.bf16.mxu0 0
      %1123 = vmatpush1.bf16.msra.mxu0 0
      %1124 = vmatprep.subr.bf16.mxu0 0
      %1125 = vmatpush1.bf16.msra.mxu0 0
      %1126 = vmatprep.subr.bf16.mxu0 0
      %1127 = vmatpush1.bf16.msra.mxu0 0
      %1128 = vmatprep.subr.bf16.mxu0 0
      %1129 = vmatpush1.bf16.msra.mxu0 0
      %1130 = vmatprep.subr.bf16.mxu0 0
      %1131 = vmatpush1.bf16.msra.mxu0 0
      %1132 = vmatprep.subr.bf16.mxu0 0
      %1133 = vmatpush1.bf16.msra.mxu0 0
      %1134 = vmatprep.subr.bf16.mxu0 0
      %1135 = vmatpush1.bf16.msra.mxu0 0
      %1136 = vmatprep.subr.bf16.mxu0 0
      %1137 = vmatpush1.bf16.msra.mxu0 0
      %1138 = vmatprep.subr.bf16.mxu0 0
      %1139 = vmatpush1.bf16.msra.mxu0 0
      %1140 = vmatprep.subr.bf16.mxu0 0
      %1141 = vmatpush1.bf16.msra.mxu0 0
      %1142 = vmatprep.subr.bf16.mxu0 0
      %1143 = vmatpush1.bf16.msra.mxu0 0
      %1144 = vmatprep.subr.bf16.mxu0 0
      %1145 = vmatpush1.bf16.msra.mxu0 0
      %1146 = vmatprep.mubr.bf16.mxu0 0
      %1147 = vmatmul.mubr.bf16.gmra.mrb[0].mxu0 %v1056
      %v1148 = vpop.f32.mrb[0].mxu0
      %v1149 = vadd.f32 0.0, %v1148
      %v1150 = vpop.f32.mrb[0].mxu0
      %v1151 = vpop.f32.mrb[0].mxu0
      %v1152 = vadd.f32 0.0, %v1151
      %v1153 = vpop.f32.mrb[0].mxu0
      %1154 = vmatprep.mubr.bf16.mxu0 0
      %1155 = vmatmul.mubr.bf16.gmra.mrb[0].mxu0 %v1059
      %v1156 = vpop.f32.mrb[0].mxu0
      %v1157 = vadd.f32 0.0, %v1156
      %v1158 = vpop.f32.mrb[0].mxu0
      %v1159 = vpop.f32.mrb[0].mxu0
      %v1160 = vadd.f32 0.0, %v1159
      %v1161 = vpop.f32.mrb[0].mxu0
      %1162 = vdwg.mxu0
      %v1163 = vadd.f32 %v930, %v1096
      %v1164 = vadd.f32 %v932, %v1098
      %v1165 = vadd.f32 %v983, %v1149
      %v1166 = vadd.f32 %v934, %v1100
      %v1167 = vadd.f32 %v936, %v1102
      %v1168 = vadd.f32 %v986, %v1152
      %v1169 = vadd.f32 %v940, %v1106
      %v1170 = vadd.f32 %v942, %v1108
      %v1171 = vadd.f32 %v991, %v1157
      %v1172 = vadd.f32 %v944, %v1110
      %v1173 = vadd.f32 %v946, %v1112
      %v1174 = vadd.f32 %v994, %v1160
      %s1175 = scalar_lea.vmem %s5, 48
      %v1176 = vld [vmem:[%s1175] sm:$0xf]
      %v1177 = vld [vmem:[%s1175 + $0x4] sm:$0xf]
      %v1178 = vld [vmem:[%s1175 + $0x8] sm:$0xf]
      %v1179 = vld [vmem:[%s1175 + $0xc] sm:$0xf]
      %1180 = vrot.lane.b32.xlu0 %v560, 1
      %v1181 = vpop.permute.xlu0 %1180
      %1182 = vrot.lane.b32.xlu0 %v563, 1
      %v1183 = vpop.permute.xlu0 %1182
      %1184 = vrot.lane.b32.xlu0 %v566, 1
      %v1185 = vpop.permute.xlu0 %1184
      %1186 = vrot.lane.b32.xlu0 %v569, 1
      %v1187 = vpop.permute.xlu0 %1186
      %1188 = vrot.lane.b32.xlu0 %v561, 1
      %v1189 = vpop.permute.xlu0 %1188
      %1190 = vrot.lane.b32.xlu0 %v564, 1
      %v1191 = vpop.permute.xlu0 %1190
      %1192 = vrot.lane.b32.xlu0 %v567, 1
      %v1193 = vpop.permute.xlu0 %1192
      %1194 = vrot.lane.b32.xlu0 %v570, 1
      %v1195 = vpop.permute.xlu0 %1194
      %1196 = vrot.lane.b32.xlu0 %v562, 1
      %v1197 = vpop.permute.xlu0 %1196
      %1198 = vrot.lane.b32.xlu0 %v565, 1
      %v1199 = vpop.permute.xlu0 %1198
      %1200 = vrot.lane.b32.xlu0 %v568, 1
      %v1201 = vpop.permute.xlu0 %1200
      %1202 = vrot.lane.b32.xlu0 %v571, 1
      %v1203 = vpop.permute.xlu0 %1202
      %vm1204 = vcmp.lt.s32.totalorder %v692, 1
      %v1205 = vsel %vm1204, %v1189, %v1197
      %v1206 = vsel %vm1204, %v1191, %v1199
      %v1207 = vsel %vm1204, %v1193, %v1201
      %v1208 = vsel %vm1204, %v1195, %v1203
      %v1209 = vsel %vm1204, %v1181, %v1189
      %v1210 = vsel %vm1204, %v1183, %v1191
      %v1211 = vsel %vm1204, %v1185, %v1193
      %v1212 = vsel %vm1204, %v1187, %v1195
      %v1213 = vsel %vm1204, %v1197, %v1181
      %v1214 = vsel %vm1204, %v1199, %v1183
      %v1215 = vsel %vm1204, %v1201, %v1185
      %v1216 = vsel %vm1204, %v1203, %v1187
      %v1217 = vpack.c.bf16 %v1214, %v1213
      %v1218 = vpack.c.bf16 %v1210, %v1209
      %v1219 = vpack.c.bf16 %v1206, %v1205
      %v1220 = vpack.c.bf16 %v1216, %v1215
      %v1221 = vpack.c.bf16 %v1212, %v1211
      %v1222 = vpack.c.bf16 %v1208, %v1207
      %v1227 = vunpack.c.l.b16 %v1176
      %v1228 = vunpack.c.l.b16 %v1177
      %v1229 = vunpack.c.l.b16 %v1178
      %v1230 = vunpack.c.l.b16 %v1179
      %v1231 = vpack.c.b16 %v1228, %v1227
      %v1232 = vpack.c.b16 %v1230, %v1229
      %v1234 = vsel %vm770, %v1231, 0
      %v1237 = vsel %vm770, %v1232, 0
      %1239 = vmatprep.subr.bf16.mxu0 %v1218
      %1240 = vmatpush1.bf16.msra.mxu0 %v1217
      %1241 = vmatprep.subr.bf16.mxu0 %v1221
      %1242 = vmatpush1.bf16.msra.mxu0 %v1220
      %1243 = vmatprep.subr.bf16.mxu0 0
      %1244 = vmatpush1.bf16.msra.mxu0 0
      %1245 = vmatprep.subr.bf16.mxu0 0
      %1246 = vmatpush1.bf16.msra.mxu0 0
      %1247 = vmatprep.subr.bf16.mxu0 0
      %1248 = vmatpush1.bf16.msra.mxu0 0
      %1249 = vmatprep.subr.bf16.mxu0 0
      %1250 = vmatpush1.bf16.msra.mxu0 0
      %1251 = vmatprep.subr.bf16.mxu0 0
      %1252 = vmatpush1.bf16.msra.mxu0 0
      %1253 = vmatprep.subr.bf16.mxu0 0
      %1254 = vmatpush1.bf16.msra.mxu0 0
      %1255 = vmatprep.subr.bf16.mxu0 0
      %1256 = vmatpush1.bf16.msra.mxu0 0
      %1257 = vmatprep.subr.bf16.mxu0 0
      %1258 = vmatpush1.bf16.msra.mxu0 0
      %1259 = vmatprep.subr.bf16.mxu0 0
      %1260 = vmatpush1.bf16.msra.mxu0 0
      %1261 = vmatprep.subr.bf16.mxu0 0
      %1262 = vmatpush1.bf16.msra.mxu0 0
      %1263 = vmatprep.subr.bf16.mxu0 0
      %1264 = vmatpush1.bf16.msra.mxu0 0
      %1265 = vmatprep.subr.bf16.mxu0 0
      %1266 = vmatpush1.bf16.msra.mxu0 0
      %1267 = vmatprep.subr.bf16.mxu0 0
      %1268 = vmatpush1.bf16.msra.mxu0 0
      %1269 = vmatprep.subr.bf16.mxu0 0
      %1270 = vmatpush1.bf16.msra.mxu0 0
      %1271 = vmatprep.mubr.bf16.mxu0 0
      %1272 = vmatmul.mubr.bf16.gmra.mrb[0].mxu0 %v1234
      %v1273 = vpop.f32.mrb[0].mxu0
      %v1274 = vadd.f32 0.0, %v1273
      %v1275 = vpop.f32.mrb[0].mxu0
      %v1276 = vadd.f32 0.0, %v1275
      %v1277 = vpop.f32.mrb[0].mxu0
      %v1278 = vadd.f32 0.0, %v1277
      %v1279 = vpop.f32.mrb[0].mxu0
      %v1280 = vadd.f32 0.0, %v1279
      %1281 = vmatprep.mubr.bf16.mxu0 0
      %1282 = vmatmul.mubr.bf16.gmra.mrb[0].mxu0 %v1237
      %v1283 = vpop.f32.mrb[0].mxu0
      %v1284 = vadd.f32 0.0, %v1283
      %v1285 = vpop.f32.mrb[0].mxu0
      %v1286 = vadd.f32 0.0, %v1285
      %v1287 = vpop.f32.mrb[0].mxu0
      %v1288 = vadd.f32 0.0, %v1287
      %v1289 = vpop.f32.mrb[0].mxu0
      %v1290 = vadd.f32 0.0, %v1289
      %1291 = vdwg.mxu0
      %1292 = vmatprep.subr.bf16.mxu0 0
      %1293 = vmatpush1.bf16.msra.mxu0 %v1219
      %1294 = vmatprep.subr.bf16.mxu0 0
      %1295 = vmatpush1.bf16.msra.mxu0 %v1222
      %1296 = vmatprep.subr.bf16.mxu0 0
      %1297 = vmatpush1.bf16.msra.mxu0 0
      %1298 = vmatprep.subr.bf16.mxu0 0
      %1299 = vmatpush1.bf16.msra.mxu0 0
      %1300 = vmatprep.subr.bf16.mxu0 0
      %1301 = vmatpush1.bf16.msra.mxu0 0
      %1302 = vmatprep.subr.bf16.mxu0 0
      %1303 = vmatpush1.bf16.msra.mxu0 0
      %1304 = vmatprep.subr.bf16.mxu0 0
      %1305 = vmatpush1.bf16.msra.mxu0 0
      %1306 = vmatprep.subr.bf16.mxu0 0
      %1307 = vmatpush1.bf16.msra.mxu0 0
      %1308 = vmatprep.subr.bf16.mxu0 0
      %1309 = vmatpush1.bf16.msra.mxu0 0
      %1310 = vmatprep.subr.bf16.mxu0 0
      %1311 = vmatpush1.bf16.msra.mxu0 0
      %1312 = vmatprep.subr.bf16.mxu0 0
      %1313 = vmatpush1.bf16.msra.mxu0 0
      %1314 = vmatprep.subr.bf16.mxu0 0
      %1315 = vmatpush1.bf16.msra.mxu0 0
      %1316 = vmatprep.subr.bf16.mxu0 0
      %1317 = vmatpush1.bf16.msra.mxu0 0
      %1318 = vmatprep.subr.bf16.mxu0 0
      %1319 = vmatpush1.bf16.msra.mxu0 0
      %1320 = vmatprep.subr.bf16.mxu0 0
      %1321 = vmatpush1.bf16.msra.mxu0 0
      %1322 = vmatprep.subr.bf16.mxu0 0
      %1323 = vmatpush1.bf16.msra.mxu0 0
      %1324 = vmatprep.mubr.bf16.mxu0 0
      %1325 = vmatmul.mubr.bf16.gmra.mrb[0].mxu0 %v1234
      %v1326 = vpop.f32.mrb[0].mxu0
      %v1327 = vadd.f32 0.0, %v1326
      %v1328 = vpop.f32.mrb[0].mxu0
      %v1329 = vpop.f32.mrb[0].mxu0
      %v1330 = vadd.f32 0.0, %v1329
      %v1331 = vpop.f32.mrb[0].mxu0
      %1332 = vmatprep.mubr.bf16.mxu0 0
      %1333 = vmatmul.mubr.bf16.gmra.mrb[0].mxu0 %v1237
      %v1334 = vpop.f32.mrb[0].mxu0
      %v1335 = vadd.f32 0.0, %v1334
      %v1336 = vpop.f32.mrb[0].mxu0
      %v1337 = vpop.f32.mrb[0].mxu0
      %v1338 = vadd.f32 0.0, %v1337
      %v1339 = vpop.f32.mrb[0].mxu0
      %1340 = vdwg.mxu0
      %v1341 = vadd.f32 %v1163, %v1274
      %v1342 = vadd.f32 %v1164, %v1276
      %v1343 = vadd.f32 %v1165, %v1327
      %v1344 = vadd.f32 %v1166, %v1278
      %v1345 = vadd.f32 %v1167, %v1280
      %v1346 = vadd.f32 %v1168, %v1330
      %v1347 = vadd.f32 %v1169, %v1284
      %v1348 = vadd.f32 %v1170, %v1286
      %v1349 = vadd.f32 %v1171, %v1335
      %v1350 = vadd.f32 %v1172, %v1288
      %v1351 = vadd.f32 %v1173, %v1290
      %v1352 = vadd.f32 %v1174, %v1338
      %s1353 = scalar_lea.vmem %s5, 64
      %v1354 = vld [vmem:[%s1353] sm:$0xf]
      %v1355 = vld [vmem:[%s1353 + $0x4] sm:$0xf]
      %v1356 = vld [vmem:[%s1353 + $0x8] sm:$0xf]
      %v1357 = vld [vmem:[%s1353 + $0xc] sm:$0xf]
      %v1358 = vpack.c.bf16 %v563, %v560
      %v1359 = vpack.c.bf16 %v564, %v561
      %v1360 = vpack.c.bf16 %v565, %v562
      %v1361 = vpack.c.bf16 %v569, %v566
      %v1362 = vpack.c.bf16 %v570, %v567
      %v1363 = vpack.c.bf16 %v571, %v568
      %v1368 = vunpack.c.l.b16 %v1354
      %v1369 = vunpack.c.l.b16 %v1355
      %v1370 = vunpack.c.l.b16 %v1356
      %v1371 = vunpack.c.l.b16 %v1357
      %v1372 = vpack.c.b16 %v1369, %v1368
      %v1373 = vpack.c.b16 %v1371, %v1370
      %v1375 = vsel %vm770, %v1372, 0
      %v1378 = vsel %vm770, %v1373, 0
      %1380 = vmatprep.subr.bf16.mxu0 %v1359
      %1381 = vmatpush1.bf16.msra.mxu0 %v1358
      %1382 = vmatprep.subr.bf16.mxu0 %v1362
      %1383 = vmatpush1.bf16.msra.mxu0 %v1361
      %1384 = vmatprep.subr.bf16.mxu0 0
      %1385 = vmatpush1.bf16.msra.mxu0 0
      %1386 = vmatprep.subr.bf16.mxu0 0
      %1387 = vmatpush1.bf16.msra.mxu0 0
      %1388 = vmatprep.subr.bf16.mxu0 0
      %1389 = vmatpush1.bf16.msra.mxu0 0
      %1390 = vmatprep.subr.bf16.mxu0 0
      %1391 = vmatpush1.bf16.msra.mxu0 0
      %1392 = vmatprep.subr.bf16.mxu0 0
      %1393 = vmatpush1.bf16.msra.mxu0 0
      %1394 = vmatprep.subr.bf16.mxu0 0
      %1395 = vmatpush1.bf16.msra.mxu0 0
      %1396 = vmatprep.subr.bf16.mxu0 0
      %1397 = vmatpush1.bf16.msra.mxu0 0
      %1398 = vmatprep.subr.bf16.mxu0 0
      %1399 = vmatpush1.bf16.msra.mxu0 0
      %1400 = vmatprep.subr.bf16.mxu0 0
      %1401 = vmatpush1.bf16.msra.mxu0 0
      %1402 = vmatprep.subr.bf16.mxu0 0
      %1403 = vmatpush1.bf16.msra.mxu0 0
      %1404 = vmatprep.subr.bf16.mxu0 0
      %1405 = vmatpush1.bf16.msra.mxu0 0
      %1406 = vmatprep.subr.bf16.mxu0 0
      %1407 = vmatpush1.bf16.msra.mxu0 0
      %1408 = vmatprep.subr.bf16.mxu0 0
      %1409 = vmatpush1.bf16.msra.mxu0 0
      %1410 = vmatprep.subr.bf16.mxu0 0
      %1411 = vmatpush1.bf16.msra.mxu0 0
      %1412 = vmatprep.mubr.bf16.mxu0 0
      %1413 = vmatmul.mubr.bf16.gmra.mrb[0].mxu0 %v1375
      %v1414 = vpop.f32.mrb[0].mxu0
      %v1415 = vadd.f32 0.0, %v1414
      %v1416 = vpop.f32.mrb[0].mxu0
      %v1417 = vadd.f32 0.0, %v1416
      %v1418 = vpop.f32.mrb[0].mxu0
      %v1419 = vadd.f32 0.0, %v1418
      %v1420 = vpop.f32.mrb[0].mxu0
      %v1421 = vadd.f32 0.0, %v1420
      %1422 = vmatprep.mubr.bf16.mxu0 0
      %1423 = vmatmul.mubr.bf16.gmra.mrb[0].mxu0 %v1378
      %v1424 = vpop.f32.mrb[0].mxu0
      %v1425 = vadd.f32 0.0, %v1424
      %v1426 = vpop.f32.mrb[0].mxu0
      %v1427 = vadd.f32 0.0, %v1426
      %v1428 = vpop.f32.mrb[0].mxu0
      %v1429 = vadd.f32 0.0, %v1428
      %v1430 = vpop.f32.mrb[0].mxu0
      %v1431 = vadd.f32 0.0, %v1430
      %1432 = vdwg.mxu0
      %1433 = vmatprep.subr.bf16.mxu0 0
      %1434 = vmatpush1.bf16.msra.mxu0 %v1360
      %1435 = vmatprep.subr.bf16.mxu0 0
      %1436 = vmatpush1.bf16.msra.mxu0 %v1363
      %1437 = vmatprep.subr.bf16.mxu0 0
      %1438 = vmatpush1.bf16.msra.mxu0 0
      %1439 = vmatprep.subr.bf16.mxu0 0
      %1440 = vmatpush1.bf16.msra.mxu0 0
      %1441 = vmatprep.subr.bf16.mxu0 0
      %1442 = vmatpush1.bf16.msra.mxu0 0
      %1443 = vmatprep.subr.bf16.mxu0 0
      %1444 = vmatpush1.bf16.msra.mxu0 0
      %1445 = vmatprep.subr.bf16.mxu0 0
      %1446 = vmatpush1.bf16.msra.mxu0 0
      %1447 = vmatprep.subr.bf16.mxu0 0
      %1448 = vmatpush1.bf16.msra.mxu0 0
      %1449 = vmatprep.subr.bf16.mxu0 0
      %1450 = vmatpush1.bf16.msra.mxu0 0
      %1451 = vmatprep.subr.bf16.mxu0 0
      %1452 = vmatpush1.bf16.msra.mxu0 0
      %1453 = vmatprep.subr.bf16.mxu0 0
      %1454 = vmatpush1.bf16.msra.mxu0 0
      %1455 = vmatprep.subr.bf16.mxu0 0
      %1456 = vmatpush1.bf16.msra.mxu0 0
      %1457 = vmatprep.subr.bf16.mxu0 0
      %1458 = vmatpush1.bf16.msra.mxu0 0
      %1459 = vmatprep.subr.bf16.mxu0 0
      %1460 = vmatpush1.bf16.msra.mxu0 0
      %1461 = vmatprep.subr.bf16.mxu0 0
      %1462 = vmatpush1.bf16.msra.mxu0 0
      %1463 = vmatprep.subr.bf16.mxu0 0
      %1464 = vmatpush1.bf16.msra.mxu0 0
      %1465 = vmatprep.mubr.bf16.mxu0 0
      %1466 = vmatmul.mubr.bf16.gmra.mrb[0].mxu0 %v1375
      %v1467 = vpop.f32.mrb[0].mxu0
      %v1468 = vadd.f32 0.0, %v1467
      %v1469 = vpop.f32.mrb[0].mxu0
      %v1470 = vpop.f32.mrb[0].mxu0
      %v1471 = vadd.f32 0.0, %v1470
      %v1472 = vpop.f32.mrb[0].mxu0
      %1473 = vmatprep.mubr.bf16.mxu0 0
      %1474 = vmatmul.mubr.bf16.gmra.mrb[0].mxu0 %v1378
      %v1475 = vpop.f32.mrb[0].mxu0
      %v1476 = vadd.f32 0.0, %v1475
      %v1477 = vpop.f32.mrb[0].mxu0
      %v1478 = vpop.f32.mrb[0].mxu0
      %v1479 = vadd.f32 0.0, %v1478
      %v1480 = vpop.f32.mrb[0].mxu0
      %1481 = vdwg.mxu0
      %v1482 = vadd.f32 %v1341, %v1415
      %v1483 = vadd.f32 %v1342, %v1417
      %v1484 = vadd.f32 %v1343, %v1468
      %v1485 = vadd.f32 %v1344, %v1419
      %v1486 = vadd.f32 %v1345, %v1421
      %v1487 = vadd.f32 %v1346, %v1471
      %v1488 = vadd.f32 %v1347, %v1425
      %v1489 = vadd.f32 %v1348, %v1427
      %v1490 = vadd.f32 %v1349, %v1476
      %v1491 = vadd.f32 %v1350, %v1429
      %v1492 = vadd.f32 %v1351, %v1431
      %v1493 = vadd.f32 %v1352, %v1479
      %s1494 = scalar_lea.vmem %s5, 80
      %v1495 = vld [vmem:[%s1494] sm:$0xf]
      %v1496 = vld [vmem:[%s1494 + $0x4] sm:$0xf]
      %v1497 = vld [vmem:[%s1494 + $0x8] sm:$0xf]
      %v1498 = vld [vmem:[%s1494 + $0xc] sm:$0xf]
      %1499 = vrot.lane.b32.xlu0 %v560, 127
      %v1500 = vpop.permute.xlu0 %1499
      %1501 = vrot.lane.b32.xlu0 %v563, 127
      %v1502 = vpop.permute.xlu0 %1501
      %1503 = vrot.lane.b32.xlu0 %v566, 127
      %v1504 = vpop.permute.xlu0 %1503
      %1505 = vrot.lane.b32.xlu0 %v569, 127
      %v1506 = vpop.permute.xlu0 %1505
      %1507 = vrot.lane.b32.xlu0 %v561, 127
      %v1508 = vpop.permute.xlu0 %1507
      %1509 = vrot.lane.b32.xlu0 %v564, 127
      %v1510 = vpop.permute.xlu0 %1509
      %1511 = vrot.lane.b32.xlu0 %v567, 127
      %v1512 = vpop.permute.xlu0 %1511
      %1513 = vrot.lane.b32.xlu0 %v570, 127
      %v1514 = vpop.permute.xlu0 %1513
      %1515 = vrot.lane.b32.xlu0 %v562, 127
      %v1516 = vpop.permute.xlu0 %1515
      %1517 = vrot.lane.b32.xlu0 %v565, 127
      %v1518 = vpop.permute.xlu0 %1517
      %1519 = vrot.lane.b32.xlu0 %v568, 127
      %v1520 = vpop.permute.xlu0 %1519
      %1521 = vrot.lane.b32.xlu0 %v571, 127
      %v1522 = vpop.permute.xlu0 %1521
      %vm1523 = vcmp.lt.s32.totalorder %v692, 127
      %v1524 = vsel %vm1523, %v1508, %v1516
      %v1525 = vsel %vm1523, %v1510, %v1518
      %v1526 = vsel %vm1523, %v1512, %v1520
      %v1527 = vsel %vm1523, %v1514, %v1522
      %v1528 = vsel %vm1523, %v1500, %v1508
      %v1529 = vsel %vm1523, %v1502, %v1510
      %v1530 = vsel %vm1523, %v1504, %v1512
      %v1531 = vsel %vm1523, %v1506, %v1514
      %v1532 = vsel %vm1523, %v1516, %v1500
      %v1533 = vsel %vm1523, %v1518, %v1502
      %v1534 = vsel %vm1523, %v1520, %v1504
      %v1535 = vsel %vm1523, %v1522, %v1506
      %v1536 = vpack.c.bf16 %v1529, %v1528
      %v1537 = vpack.c.bf16 %v1525, %v1524
      %v1538 = vpack.c.bf16 %v1533, %v1532
      %v1539 = vpack.c.bf16 %v1531, %v1530
      %v1540 = vpack.c.bf16 %v1527, %v1526
      %v1541 = vpack.c.bf16 %v1535, %v1534
      %v1546 = vunpack.c.l.b16 %v1495
      %v1547 = vunpack.c.l.b16 %v1496
      %v1548 = vunpack.c.l.b16 %v1497
      %v1549 = vunpack.c.l.b16 %v1498
      %v1550 = vpack.c.b16 %v1547, %v1546
      %v1551 = vpack.c.b16 %v1549, %v1548
      %v1553 = vsel %vm770, %v1550, 0
      %v1556 = vsel %vm770, %v1551, 0
      %1558 = vmatprep.subr.bf16.mxu0 %v1537
      %1559 = vmatpush1.bf16.msra.mxu0 %v1536
      %1560 = vmatprep.subr.bf16.mxu0 %v1540
      %1561 = vmatpush1.bf16.msra.mxu0 %v1539
      %1562 = vmatprep.subr.bf16.mxu0 0
      %1563 = vmatpush1.bf16.msra.mxu0 0
      %1564 = vmatprep.subr.bf16.mxu0 0
      %1565 = vmatpush1.bf16.msra.mxu0 0
      %1566 = vmatprep.subr.bf16.mxu0 0
      %1567 = vmatpush1.bf16.msra.mxu0 0
      %1568 = vmatprep.subr.bf16.mxu0 0
      %1569 = vmatpush1.bf16.msra.mxu0 0
      %1570 = vmatprep.subr.bf16.mxu0 0
      %1571 = vmatpush1.bf16.msra.mxu0 0
      %1572 = vmatprep.subr.bf16.mxu0 0
      %1573 = vmatpush1.bf16.msra.mxu0 0
      %1574 = vmatprep.subr.bf16.mxu0 0
      %1575 = vmatpush1.bf16.msra.mxu0 0
      %1576 = vmatprep.subr.bf16.mxu0 0
      %1577 = vmatpush1.bf16.msra.mxu0 0
      %1578 = vmatprep.subr.bf16.mxu0 0
      %1579 = vmatpush1.bf16.msra.mxu0 0
      %1580 = vmatprep.subr.bf16.mxu0 0
      %1581 = vmatpush1.bf16.msra.mxu0 0
      %1582 = vmatprep.subr.bf16.mxu0 0
      %1583 = vmatpush1.bf16.msra.mxu0 0
      %1584 = vmatprep.subr.bf16.mxu0 0
      %1585 = vmatpush1.bf16.msra.mxu0 0
      %1586 = vmatprep.subr.bf16.mxu0 0
      %1587 = vmatpush1.bf16.msra.mxu0 0
      %1588 = vmatprep.subr.bf16.mxu0 0
      %1589 = vmatpush1.bf16.msra.mxu0 0
      %1590 = vmatprep.mubr.bf16.mxu0 0
      %1591 = vmatmul.mubr.bf16.gmra.mrb[0].mxu0 %v1553
      %v1592 = vpop.f32.mrb[0].mxu0
      %v1593 = vadd.f32 0.0, %v1592
      %v1594 = vpop.f32.mrb[0].mxu0
      %v1595 = vadd.f32 0.0, %v1594
      %v1596 = vpop.f32.mrb[0].mxu0
      %v1597 = vadd.f32 0.0, %v1596
      %v1598 = vpop.f32.mrb[0].mxu0
      %v1599 = vadd.f32 0.0, %v1598
      %1600 = vmatprep.mubr.bf16.mxu0 0
      %1601 = vmatmul.mubr.bf16.gmra.mrb[0].mxu0 %v1556
      %v1602 = vpop.f32.mrb[0].mxu0
      %v1603 = vadd.f32 0.0, %v1602
      %v1604 = vpop.f32.mrb[0].mxu0
      %v1605 = vadd.f32 0.0, %v1604
      %v1606 = vpop.f32.mrb[0].mxu0
      %v1607 = vadd.f32 0.0, %v1606
      %v1608 = vpop.f32.mrb[0].mxu0
      %v1609 = vadd.f32 0.0, %v1608
      %1610 = vdwg.mxu0
      %1611 = vmatprep.subr.bf16.mxu0 0
      %1612 = vmatpush1.bf16.msra.mxu0 %v1538
      %1613 = vmatprep.subr.bf16.mxu0 0
      %1614 = vmatpush1.bf16.msra.mxu0 %v1541
      %1615 = vmatprep.subr.bf16.mxu0 0
      %1616 = vmatpush1.bf16.msra.mxu0 0
      %1617 = vmatprep.subr.bf16.mxu0 0
      %1618 = vmatpush1.bf16.msra.mxu0 0
      %1619 = vmatprep.subr.bf16.mxu0 0
      %1620 = vmatpush1.bf16.msra.mxu0 0
      %1621 = vmatprep.subr.bf16.mxu0 0
      %1622 = vmatpush1.bf16.msra.mxu0 0
      %1623 = vmatprep.subr.bf16.mxu0 0
      %1624 = vmatpush1.bf16.msra.mxu0 0
      %1625 = vmatprep.subr.bf16.mxu0 0
      %1626 = vmatpush1.bf16.msra.mxu0 0
      %1627 = vmatprep.subr.bf16.mxu0 0
      %1628 = vmatpush1.bf16.msra.mxu0 0
      %1629 = vmatprep.subr.bf16.mxu0 0
      %1630 = vmatpush1.bf16.msra.mxu0 0
      %1631 = vmatprep.subr.bf16.mxu0 0
      %1632 = vmatpush1.bf16.msra.mxu0 0
      %1633 = vmatprep.subr.bf16.mxu0 0
      %1634 = vmatpush1.bf16.msra.mxu0 0
      %1635 = vmatprep.subr.bf16.mxu0 0
      %1636 = vmatpush1.bf16.msra.mxu0 0
      %1637 = vmatprep.subr.bf16.mxu0 0
      %1638 = vmatpush1.bf16.msra.mxu0 0
      %1639 = vmatprep.subr.bf16.mxu0 0
      %1640 = vmatpush1.bf16.msra.mxu0 0
      %1641 = vmatprep.subr.bf16.mxu0 0
      %1642 = vmatpush1.bf16.msra.mxu0 0
      %1643 = vmatprep.mubr.bf16.mxu0 0
      %1644 = vmatmul.mubr.bf16.gmra.mrb[0].mxu0 %v1553
      %v1645 = vpop.f32.mrb[0].mxu0
      %v1646 = vadd.f32 0.0, %v1645
      %v1647 = vpop.f32.mrb[0].mxu0
      %v1648 = vpop.f32.mrb[0].mxu0
      %v1649 = vadd.f32 0.0, %v1648
      %v1650 = vpop.f32.mrb[0].mxu0
      %1651 = vmatprep.mubr.bf16.mxu0 0
      %1652 = vmatmul.mubr.bf16.gmra.mrb[0].mxu0 %v1556
      %v1653 = vpop.f32.mrb[0].mxu0
      %v1654 = vadd.f32 0.0, %v1653
      %v1655 = vpop.f32.mrb[0].mxu0
      %v1656 = vpop.f32.mrb[0].mxu0
      %v1657 = vadd.f32 0.0, %v1656
      %v1658 = vpop.f32.mrb[0].mxu0
      %1659 = vdwg.mxu0
      %v1660 = vadd.f32 %v1482, %v1593
      %v1661 = vadd.f32 %v1483, %v1595
      %v1662 = vadd.f32 %v1484, %v1646
      %v1663 = vadd.f32 %v1485, %v1597
      %v1664 = vadd.f32 %v1486, %v1599
      %v1665 = vadd.f32 %v1487, %v1649
      %v1666 = vadd.f32 %v1488, %v1603
      %v1667 = vadd.f32 %v1489, %v1605
      %v1668 = vadd.f32 %v1490, %v1654
      %v1669 = vadd.f32 %v1491, %v1607
      %v1670 = vadd.f32 %v1492, %v1609
      %v1671 = vadd.f32 %v1493, %v1657
      %s1672 = scalar_lea.vmem %s5, 96
      %v1673 = vld [vmem:[%s1672] sm:$0xf]
      %v1674 = vld [vmem:[%s1672 + $0x4] sm:$0xf]
      %v1675 = vld [vmem:[%s1672 + $0x8] sm:$0xf]
      %v1676 = vld [vmem:[%s1672 + $0xc] sm:$0xf]
      %1677 = vrot.lane.b32.xlu0 %v560, 111
      %v1678 = vpop.permute.xlu0 %1677
      %1679 = vrot.lane.b32.xlu0 %v563, 111
      %v1680 = vpop.permute.xlu0 %1679
      %1681 = vrot.lane.b32.xlu0 %v566, 111
      %v1682 = vpop.permute.xlu0 %1681
      %1683 = vrot.lane.b32.xlu0 %v569, 111
      %v1684 = vpop.permute.xlu0 %1683
      %1685 = vrot.lane.b32.xlu0 %v561, 111
      %v1686 = vpop.permute.xlu0 %1685
      %1687 = vrot.lane.b32.xlu0 %v564, 111
      %v1688 = vpop.permute.xlu0 %1687
      %1689 = vrot.lane.b32.xlu0 %v567, 111
      %v1690 = vpop.permute.xlu0 %1689
      %1691 = vrot.lane.b32.xlu0 %v570, 111
      %v1692 = vpop.permute.xlu0 %1691
      %1693 = vrot.lane.b32.xlu0 %v562, 111
      %v1694 = vpop.permute.xlu0 %1693
      %1695 = vrot.lane.b32.xlu0 %v565, 111
      %v1696 = vpop.permute.xlu0 %1695
      %1697 = vrot.lane.b32.xlu0 %v568, 111
      %v1698 = vpop.permute.xlu0 %1697
      %1699 = vrot.lane.b32.xlu0 %v571, 111
      %v1700 = vpop.permute.xlu0 %1699
      %vm1701 = vcmp.lt.s32.totalorder %v692, 111
      %v1702 = vsel %vm1701, %v1686, %v1694
      %v1703 = vsel %vm1701, %v1688, %v1696
      %v1704 = vsel %vm1701, %v1690, %v1698
      %v1705 = vsel %vm1701, %v1692, %v1700
      %v1706 = vsel %vm1701, %v1678, %v1686
      %v1707 = vsel %vm1701, %v1680, %v1688
      %v1708 = vsel %vm1701, %v1682, %v1690
      %v1709 = vsel %vm1701, %v1684, %v1692
      %v1710 = vsel %vm1701, %v1694, %v1678
      %v1711 = vsel %vm1701, %v1696, %v1680
      %v1712 = vsel %vm1701, %v1698, %v1682
      %v1713 = vsel %vm1701, %v1700, %v1684
      %v1714 = vpack.c.bf16 %v1707, %v1706
      %v1715 = vpack.c.bf16 %v1703, %v1702
      %v1716 = vpack.c.bf16 %v1711, %v1710
      %v1717 = vpack.c.bf16 %v1709, %v1708
      %v1718 = vpack.c.bf16 %v1705, %v1704
      %v1719 = vpack.c.bf16 %v1713, %v1712
      %v1724 = vunpack.c.l.b16 %v1673
      %v1725 = vunpack.c.l.b16 %v1674
      %v1726 = vunpack.c.l.b16 %v1675
      %v1727 = vunpack.c.l.b16 %v1676
      %v1728 = vpack.c.b16 %v1725, %v1724
      %v1729 = vpack.c.b16 %v1727, %v1726
      %v1731 = vsel %vm770, %v1728, 0
      %v1734 = vsel %vm770, %v1729, 0
      %1736 = vmatprep.subr.bf16.mxu0 %v1715
      %1737 = vmatpush1.bf16.msra.mxu0 %v1714
      %1738 = vmatprep.subr.bf16.mxu0 %v1718
      %1739 = vmatpush1.bf16.msra.mxu0 %v1717
      %1740 = vmatprep.subr.bf16.mxu0 0
      %1741 = vmatpush1.bf16.msra.mxu0 0
      %1742 = vmatprep.subr.bf16.mxu0 0
      %1743 = vmatpush1.bf16.msra.mxu0 0
      %1744 = vmatprep.subr.bf16.mxu0 0
      %1745 = vmatpush1.bf16.msra.mxu0 0
      %1746 = vmatprep.subr.bf16.mxu0 0
      %1747 = vmatpush1.bf16.msra.mxu0 0
      %1748 = vmatprep.subr.bf16.mxu0 0
      %1749 = vmatpush1.bf16.msra.mxu0 0
      %1750 = vmatprep.subr.bf16.mxu0 0
      %1751 = vmatpush1.bf16.msra.mxu0 0
      %1752 = vmatprep.subr.bf16.mxu0 0
      %1753 = vmatpush1.bf16.msra.mxu0 0
      %1754 = vmatprep.subr.bf16.mxu0 0
      %1755 = vmatpush1.bf16.msra.mxu0 0
      %1756 = vmatprep.subr.bf16.mxu0 0
      %1757 = vmatpush1.bf16.msra.mxu0 0
      %1758 = vmatprep.subr.bf16.mxu0 0
      %1759 = vmatpush1.bf16.msra.mxu0 0
      %1760 = vmatprep.subr.bf16.mxu0 0
      %1761 = vmatpush1.bf16.msra.mxu0 0
      %1762 = vmatprep.subr.bf16.mxu0 0
      %1763 = vmatpush1.bf16.msra.mxu0 0
      %1764 = vmatprep.subr.bf16.mxu0 0
      %1765 = vmatpush1.bf16.msra.mxu0 0
      %1766 = vmatprep.subr.bf16.mxu0 0
      %1767 = vmatpush1.bf16.msra.mxu0 0
      %1768 = vmatprep.mubr.bf16.mxu0 0
      %1769 = vmatmul.mubr.bf16.gmra.mrb[0].mxu0 %v1731
      %v1770 = vpop.f32.mrb[0].mxu0
      %v1771 = vadd.f32 0.0, %v1770
      %v1772 = vpop.f32.mrb[0].mxu0
      %v1773 = vadd.f32 0.0, %v1772
      %v1774 = vpop.f32.mrb[0].mxu0
      %v1775 = vadd.f32 0.0, %v1774
      %v1776 = vpop.f32.mrb[0].mxu0
      %v1777 = vadd.f32 0.0, %v1776
      %1778 = vmatprep.mubr.bf16.mxu0 0
      %1779 = vmatmul.mubr.bf16.gmra.mrb[0].mxu0 %v1734
      %v1780 = vpop.f32.mrb[0].mxu0
      %v1781 = vadd.f32 0.0, %v1780
      %v1782 = vpop.f32.mrb[0].mxu0
      %v1783 = vadd.f32 0.0, %v1782
      %v1784 = vpop.f32.mrb[0].mxu0
      %v1785 = vadd.f32 0.0, %v1784
      %v1786 = vpop.f32.mrb[0].mxu0
      %v1787 = vadd.f32 0.0, %v1786
      %1788 = vdwg.mxu0
      %1789 = vmatprep.subr.bf16.mxu0 0
      %1790 = vmatpush1.bf16.msra.mxu0 %v1716
      %1791 = vmatprep.subr.bf16.mxu0 0
      %1792 = vmatpush1.bf16.msra.mxu0 %v1719
      %1793 = vmatprep.subr.bf16.mxu0 0
      %1794 = vmatpush1.bf16.msra.mxu0 0
      %1795 = vmatprep.subr.bf16.mxu0 0
      %1796 = vmatpush1.bf16.msra.mxu0 0
      %1797 = vmatprep.subr.bf16.mxu0 0
      %1798 = vmatpush1.bf16.msra.mxu0 0
      %1799 = vmatprep.subr.bf16.mxu0 0
      %1800 = vmatpush1.bf16.msra.mxu0 0
      %1801 = vmatprep.subr.bf16.mxu0 0
      %1802 = vmatpush1.bf16.msra.mxu0 0
      %1803 = vmatprep.subr.bf16.mxu0 0
      %1804 = vmatpush1.bf16.msra.mxu0 0
      %1805 = vmatprep.subr.bf16.mxu0 0
      %1806 = vmatpush1.bf16.msra.mxu0 0
      %1807 = vmatprep.subr.bf16.mxu0 0
      %1808 = vmatpush1.bf16.msra.mxu0 0
      %1809 = vmatprep.subr.bf16.mxu0 0
      %1810 = vmatpush1.bf16.msra.mxu0 0
      %1811 = vmatprep.subr.bf16.mxu0 0
      %1812 = vmatpush1.bf16.msra.mxu0 0
      %1813 = vmatprep.subr.bf16.mxu0 0
      %1814 = vmatpush1.bf16.msra.mxu0 0
      %1815 = vmatprep.subr.bf16.mxu0 0
      %1816 = vmatpush1.bf16.msra.mxu0 0
      %1817 = vmatprep.subr.bf16.mxu0 0
      %1818 = vmatpush1.bf16.msra.mxu0 0
      %1819 = vmatprep.subr.bf16.mxu0 0
      %1820 = vmatpush1.bf16.msra.mxu0 0
      %1821 = vmatprep.mubr.bf16.mxu0 0
      %1822 = vmatmul.mubr.bf16.gmra.mrb[0].mxu0 %v1731
      %v1823 = vpop.f32.mrb[0].mxu0
      %v1824 = vadd.f32 0.0, %v1823
      %v1825 = vpop.f32.mrb[0].mxu0
      %v1826 = vpop.f32.mrb[0].mxu0
      %v1827 = vadd.f32 0.0, %v1826
      %v1828 = vpop.f32.mrb[0].mxu0
      %1829 = vmatprep.mubr.bf16.mxu0 0
      %1830 = vmatmul.mubr.bf16.gmra.mrb[0].mxu0 %v1734
      %v1831 = vpop.f32.mrb[0].mxu0
      %v1832 = vadd.f32 0.0, %v1831
      %v1833 = vpop.f32.mrb[0].mxu0
      %v1834 = vpop.f32.mrb[0].mxu0
      %v1835 = vadd.f32 0.0, %v1834
      %v1836 = vpop.f32.mrb[0].mxu0
      %1837 = vdwg.mxu0
      %v1838 = vadd.f32 %v1660, %v1771
      %v1839 = vadd.f32 %v1661, %v1773
      %v1840 = vadd.f32 %v1662, %v1824
      %v1841 = vadd.f32 %v1663, %v1775
      %v1842 = vadd.f32 %v1664, %v1777
      %v1843 = vadd.f32 %v1665, %v1827
      %v1844 = vadd.f32 %v1666, %v1781
      %v1845 = vadd.f32 %v1667, %v1783
      %v1846 = vadd.f32 %v1668, %v1832
      %v1847 = vadd.f32 %v1669, %v1785
      %v1848 = vadd.f32 %v1670, %v1787
      %v1849 = vadd.f32 %v1671, %v1835
      %s1850 = scalar_lea.vmem %s5, 112
      %v1851 = vld [vmem:[%s1850] sm:$0xf]
      %v1852 = vld [vmem:[%s1850 + $0x4] sm:$0xf]
      %v1853 = vld [vmem:[%s1850 + $0x8] sm:$0xf]
      %v1854 = vld [vmem:[%s1850 + $0xc] sm:$0xf]
      %1855 = vrot.lane.b32.xlu0 %v560, 110
      %v1856 = vpop.permute.xlu0 %1855
      %1857 = vrot.lane.b32.xlu0 %v563, 110
      %v1858 = vpop.permute.xlu0 %1857
      %1859 = vrot.lane.b32.xlu0 %v566, 110
      %v1860 = vpop.permute.xlu0 %1859
      %1861 = vrot.lane.b32.xlu0 %v569, 110
      %v1862 = vpop.permute.xlu0 %1861
      %1863 = vrot.lane.b32.xlu0 %v561, 110
      %v1864 = vpop.permute.xlu0 %1863
      %1865 = vrot.lane.b32.xlu0 %v564, 110
      %v1866 = vpop.permute.xlu0 %1865
      %1867 = vrot.lane.b32.xlu0 %v567, 110
      %v1868 = vpop.permute.xlu0 %1867
      %1869 = vrot.lane.b32.xlu0 %v570, 110
      %v1870 = vpop.permute.xlu0 %1869
      %1871 = vrot.lane.b32.xlu0 %v562, 110
      %v1872 = vpop.permute.xlu0 %1871
      %1873 = vrot.lane.b32.xlu0 %v565, 110
      %v1874 = vpop.permute.xlu0 %1873
      %1875 = vrot.lane.b32.xlu0 %v568, 110
      %v1876 = vpop.permute.xlu0 %1875
      %1877 = vrot.lane.b32.xlu0 %v571, 110
      %v1878 = vpop.permute.xlu0 %1877
      %vm1879 = vcmp.lt.s32.totalorder %v692, 110
      %v1880 = vsel %vm1879, %v1864, %v1872
      %v1881 = vsel %vm1879, %v1866, %v1874
      %v1882 = vsel %vm1879, %v1868, %v1876
      %v1883 = vsel %vm1879, %v1870, %v1878
      %v1884 = vsel %vm1879, %v1856, %v1864
      %v1885 = vsel %vm1879, %v1858, %v1866
      %v1886 = vsel %vm1879, %v1860, %v1868
      %v1887 = vsel %vm1879, %v1862, %v1870
      %v1888 = vsel %vm1879, %v1872, %v1856
      %v1889 = vsel %vm1879, %v1874, %v1858
      %v1890 = vsel %vm1879, %v1876, %v1860
      %v1891 = vsel %vm1879, %v1878, %v1862
      %v1892 = vpack.c.bf16 %v1885, %v1884
      %v1893 = vpack.c.bf16 %v1881, %v1880
      %v1894 = vpack.c.bf16 %v1889, %v1888
      %v1895 = vpack.c.bf16 %v1887, %v1886
      %v1896 = vpack.c.bf16 %v1883, %v1882
      %v1897 = vpack.c.bf16 %v1891, %v1890
      %v1902 = vunpack.c.l.b16 %v1851
      %v1903 = vunpack.c.l.b16 %v1852
      %v1904 = vunpack.c.l.b16 %v1853
      %v1905 = vunpack.c.l.b16 %v1854
      %v1906 = vpack.c.b16 %v1903, %v1902
      %v1907 = vpack.c.b16 %v1905, %v1904
      %v1909 = vsel %vm770, %v1906, 0
      %v1912 = vsel %vm770, %v1907, 0
      %1914 = vmatprep.subr.bf16.mxu0 %v1893
      %1915 = vmatpush1.bf16.msra.mxu0 %v1892
      %1916 = vmatprep.subr.bf16.mxu0 %v1896
      %1917 = vmatpush1.bf16.msra.mxu0 %v1895
      %1918 = vmatprep.subr.bf16.mxu0 0
      %1919 = vmatpush1.bf16.msra.mxu0 0
      %1920 = vmatprep.subr.bf16.mxu0 0
      %1921 = vmatpush1.bf16.msra.mxu0 0
      %1922 = vmatprep.subr.bf16.mxu0 0
      %1923 = vmatpush1.bf16.msra.mxu0 0
      %1924 = vmatprep.subr.bf16.mxu0 0
      %1925 = vmatpush1.bf16.msra.mxu0 0
      %1926 = vmatprep.subr.bf16.mxu0 0
      %1927 = vmatpush1.bf16.msra.mxu0 0
      %1928 = vmatprep.subr.bf16.mxu0 0
      %1929 = vmatpush1.bf16.msra.mxu0 0
      %1930 = vmatprep.subr.bf16.mxu0 0
      %1931 = vmatpush1.bf16.msra.mxu0 0
      %1932 = vmatprep.subr.bf16.mxu0 0
      %1933 = vmatpush1.bf16.msra.mxu0 0
      %1934 = vmatprep.subr.bf16.mxu0 0
      %1935 = vmatpush1.bf16.msra.mxu0 0
      %1936 = vmatprep.subr.bf16.mxu0 0
      %1937 = vmatpush1.bf16.msra.mxu0 0
      %1938 = vmatprep.subr.bf16.mxu0 0
      %1939 = vmatpush1.bf16.msra.mxu0 0
      %1940 = vmatprep.subr.bf16.mxu0 0
      %1941 = vmatpush1.bf16.msra.mxu0 0
      %1942 = vmatprep.subr.bf16.mxu0 0
      %1943 = vmatpush1.bf16.msra.mxu0 0
      %1944 = vmatprep.subr.bf16.mxu0 0
      %1945 = vmatpush1.bf16.msra.mxu0 0
      %1946 = vmatprep.mubr.bf16.mxu0 0
      %1947 = vmatmul.mubr.bf16.gmra.mrb[0].mxu0 %v1909
      %v1948 = vpop.f32.mrb[0].mxu0
      %v1949 = vadd.f32 0.0, %v1948
      %v1950 = vpop.f32.mrb[0].mxu0
      %v1951 = vadd.f32 0.0, %v1950
      %v1952 = vpop.f32.mrb[0].mxu0
      %v1953 = vadd.f32 0.0, %v1952
      %v1954 = vpop.f32.mrb[0].mxu0
      %v1955 = vadd.f32 0.0, %v1954
      %1956 = vmatprep.mubr.bf16.mxu0 0
      %1957 = vmatmul.mubr.bf16.gmra.mrb[0].mxu0 %v1912
      %v1958 = vpop.f32.mrb[0].mxu0
      %v1959 = vadd.f32 0.0, %v1958
      %v1960 = vpop.f32.mrb[0].mxu0
      %v1961 = vadd.f32 0.0, %v1960
      %v1962 = vpop.f32.mrb[0].mxu0
      %v1963 = vadd.f32 0.0, %v1962
      %v1964 = vpop.f32.mrb[0].mxu0
      %v1965 = vadd.f32 0.0, %v1964
      %1966 = vdwg.mxu0
      %1967 = vmatprep.subr.bf16.mxu0 0
      %1968 = vmatpush1.bf16.msra.mxu0 %v1894
      %1969 = vmatprep.subr.bf16.mxu0 0
      %1970 = vmatpush1.bf16.msra.mxu0 %v1897
      %1971 = vmatprep.subr.bf16.mxu0 0
      %1972 = vmatpush1.bf16.msra.mxu0 0
      %1973 = vmatprep.subr.bf16.mxu0 0
      %1974 = vmatpush1.bf16.msra.mxu0 0
      %1975 = vmatprep.subr.bf16.mxu0 0
      %1976 = vmatpush1.bf16.msra.mxu0 0
      %1977 = vmatprep.subr.bf16.mxu0 0
      %1978 = vmatpush1.bf16.msra.mxu0 0
      %1979 = vmatprep.subr.bf16.mxu0 0
      %1980 = vmatpush1.bf16.msra.mxu0 0
      %1981 = vmatprep.subr.bf16.mxu0 0
      %1982 = vmatpush1.bf16.msra.mxu0 0
      %1983 = vmatprep.subr.bf16.mxu0 0
      %1984 = vmatpush1.bf16.msra.mxu0 0
      %1985 = vmatprep.subr.bf16.mxu0 0
      %1986 = vmatpush1.bf16.msra.mxu0 0
      %1987 = vmatprep.subr.bf16.mxu0 0
      %1988 = vmatpush1.bf16.msra.mxu0 0
      %1989 = vmatprep.subr.bf16.mxu0 0
      %1990 = vmatpush1.bf16.msra.mxu0 0
      %1991 = vmatprep.subr.bf16.mxu0 0
      %1992 = vmatpush1.bf16.msra.mxu0 0
      %1993 = vmatprep.subr.bf16.mxu0 0
      %1994 = vmatpush1.bf16.msra.mxu0 0
      %1995 = vmatprep.subr.bf16.mxu0 0
      %1996 = vmatpush1.bf16.msra.mxu0 0
      %1997 = vmatprep.subr.bf16.mxu0 0
      %1998 = vmatpush1.bf16.msra.mxu0 0
      %1999 = vmatprep.mubr.bf16.mxu0 0
      %2000 = vmatmul.mubr.bf16.gmra.mrb[0].mxu0 %v1909
      %v2001 = vpop.f32.mrb[0].mxu0
      %v2002 = vadd.f32 0.0, %v2001
      %v2003 = vpop.f32.mrb[0].mxu0
      %v2004 = vpop.f32.mrb[0].mxu0
      %v2005 = vadd.f32 0.0, %v2004
      %v2006 = vpop.f32.mrb[0].mxu0
      %2007 = vmatprep.mubr.bf16.mxu0 0
      %2008 = vmatmul.mubr.bf16.gmra.mrb[0].mxu0 %v1912
      %v2009 = vpop.f32.mrb[0].mxu0
      %v2010 = vadd.f32 0.0, %v2009
      %v2011 = vpop.f32.mrb[0].mxu0
      %v2012 = vpop.f32.mrb[0].mxu0
      %v2013 = vadd.f32 0.0, %v2012
      %v2014 = vpop.f32.mrb[0].mxu0
      %2015 = vdwg.mxu0
      %v2016 = vadd.f32 %v1838, %v1949
      %v2017 = vadd.f32 %v1839, %v1951
      %v2018 = vadd.f32 %v1840, %v2002
      %v2019 = vadd.f32 %v1841, %v1953
      %v2020 = vadd.f32 %v1842, %v1955
      %v2021 = vadd.f32 %v1843, %v2005
      %v2022 = vadd.f32 %v1844, %v1959
      %v2023 = vadd.f32 %v1845, %v1961
      %v2024 = vadd.f32 %v1846, %v2010
      %v2025 = vadd.f32 %v1847, %v1963
      %v2026 = vadd.f32 %v1848, %v1965
      %v2027 = vadd.f32 %v1849, %v2013
      %s2028 = scalar_lea.vmem %s5, 128
      %v2029 = vld [vmem:[%s2028] sm:$0xf]
      %v2030 = vld [vmem:[%s2028 + $0x4] sm:$0xf]
      %v2031 = vld [vmem:[%s2028 + $0x8] sm:$0xf]
      %v2032 = vld [vmem:[%s2028 + $0xc] sm:$0xf]
      %2033 = vrot.lane.b32.xlu0 %v560, 109
      %v2034 = vpop.permute.xlu0 %2033
      %2035 = vrot.lane.b32.xlu0 %v563, 109
      %v2036 = vpop.permute.xlu0 %2035
      %2037 = vrot.lane.b32.xlu0 %v566, 109
      %v2038 = vpop.permute.xlu0 %2037
      %2039 = vrot.lane.b32.xlu0 %v569, 109
      %v2040 = vpop.permute.xlu0 %2039
      %2041 = vrot.lane.b32.xlu0 %v561, 109
      %v2042 = vpop.permute.xlu0 %2041
      %2043 = vrot.lane.b32.xlu0 %v564, 109
      %v2044 = vpop.permute.xlu0 %2043
      %2045 = vrot.lane.b32.xlu0 %v567, 109
      %v2046 = vpop.permute.xlu0 %2045
      %2047 = vrot.lane.b32.xlu0 %v570, 109
      %v2048 = vpop.permute.xlu0 %2047
      %2049 = vrot.lane.b32.xlu0 %v562, 109
      %v2050 = vpop.permute.xlu0 %2049
      %2051 = vrot.lane.b32.xlu0 %v565, 109
      %v2052 = vpop.permute.xlu0 %2051
      %2053 = vrot.lane.b32.xlu0 %v568, 109
      %v2054 = vpop.permute.xlu0 %2053
      %2055 = vrot.lane.b32.xlu0 %v571, 109
      %v2056 = vpop.permute.xlu0 %2055
      %vm2057 = vcmp.lt.s32.totalorder %v692, 109
      %v2058 = vsel %vm2057, %v2042, %v2050
      %v2059 = vsel %vm2057, %v2044, %v2052
      %v2060 = vsel %vm2057, %v2046, %v2054
      %v2061 = vsel %vm2057, %v2048, %v2056
      %v2062 = vsel %vm2057, %v2034, %v2042
      %v2063 = vsel %vm2057, %v2036, %v2044
      %v2064 = vsel %vm2057, %v2038, %v2046
      %v2065 = vsel %vm2057, %v2040, %v2048
      %v2066 = vsel %vm2057, %v2050, %v2034
      %v2067 = vsel %vm2057, %v2052, %v2036
      %v2068 = vsel %vm2057, %v2054, %v2038
      %v2069 = vsel %vm2057, %v2056, %v2040
      %v2070 = vpack.c.bf16 %v2063, %v2062
      %v2071 = vpack.c.bf16 %v2059, %v2058
      %v2072 = vpack.c.bf16 %v2067, %v2066
      %v2073 = vpack.c.bf16 %v2065, %v2064
      %v2074 = vpack.c.bf16 %v2061, %v2060
      %v2075 = vpack.c.bf16 %v2069, %v2068
      %v2080 = vunpack.c.l.b16 %v2029
      %v2081 = vunpack.c.l.b16 %v2030
      %v2082 = vunpack.c.l.b16 %v2031
      %v2083 = vunpack.c.l.b16 %v2032
      %v2084 = vpack.c.b16 %v2081, %v2080
      %v2085 = vpack.c.b16 %v2083, %v2082
      %v2087 = vsel %vm770, %v2084, 0
      %v2090 = vsel %vm770, %v2085, 0
      %2092 = vmatprep.subr.bf16.mxu0 %v2071
      %2093 = vmatpush1.bf16.msra.mxu0 %v2070
      %2094 = vmatprep.subr.bf16.mxu0 %v2074
      %2095 = vmatpush1.bf16.msra.mxu0 %v2073
      %2096 = vmatprep.subr.bf16.mxu0 0
      %2097 = vmatpush1.bf16.msra.mxu0 0
      %2098 = vmatprep.subr.bf16.mxu0 0
      %2099 = vmatpush1.bf16.msra.mxu0 0
      %2100 = vmatprep.subr.bf16.mxu0 0
      %2101 = vmatpush1.bf16.msra.mxu0 0
      %2102 = vmatprep.subr.bf16.mxu0 0
      %2103 = vmatpush1.bf16.msra.mxu0 0
      %2104 = vmatprep.subr.bf16.mxu0 0
      %2105 = vmatpush1.bf16.msra.mxu0 0
      %2106 = vmatprep.subr.bf16.mxu0 0
      %2107 = vmatpush1.bf16.msra.mxu0 0
      %2108 = vmatprep.subr.bf16.mxu0 0
      %2109 = vmatpush1.bf16.msra.mxu0 0
      %2110 = vmatprep.subr.bf16.mxu0 0
      %2111 = vmatpush1.bf16.msra.mxu0 0
      %2112 = vmatprep.subr.bf16.mxu0 0
      %2113 = vmatpush1.bf16.msra.mxu0 0
      %2114 = vmatprep.subr.bf16.mxu0 0
      %2115 = vmatpush1.bf16.msra.mxu0 0
      %2116 = vmatprep.subr.bf16.mxu0 0
      %2117 = vmatpush1.bf16.msra.mxu0 0
      %2118 = vmatprep.subr.bf16.mxu0 0
      %2119 = vmatpush1.bf16.msra.mxu0 0
      %2120 = vmatprep.subr.bf16.mxu0 0
      %2121 = vmatpush1.bf16.msra.mxu0 0
      %2122 = vmatprep.subr.bf16.mxu0 0
      %2123 = vmatpush1.bf16.msra.mxu0 0
      %2124 = vmatprep.mubr.bf16.mxu0 0
      %2125 = vmatmul.mubr.bf16.gmra.mrb[0].mxu0 %v2087
      %v2126 = vpop.f32.mrb[0].mxu0
      %v2127 = vadd.f32 0.0, %v2126
      %v2128 = vpop.f32.mrb[0].mxu0
      %v2129 = vadd.f32 0.0, %v2128
      %v2130 = vpop.f32.mrb[0].mxu0
      %v2131 = vadd.f32 0.0, %v2130
      %v2132 = vpop.f32.mrb[0].mxu0
      %v2133 = vadd.f32 0.0, %v2132
      %2134 = vmatprep.mubr.bf16.mxu0 0
      %2135 = vmatmul.mubr.bf16.gmra.mrb[0].mxu0 %v2090
      %v2136 = vpop.f32.mrb[0].mxu0
      %v2137 = vadd.f32 0.0, %v2136
      %v2138 = vpop.f32.mrb[0].mxu0
      %v2139 = vadd.f32 0.0, %v2138
      %v2140 = vpop.f32.mrb[0].mxu0
      %v2141 = vadd.f32 0.0, %v2140
      %v2142 = vpop.f32.mrb[0].mxu0
      %v2143 = vadd.f32 0.0, %v2142
      %2144 = vdwg.mxu0
      %2145 = vmatprep.subr.bf16.mxu0 0
      %2146 = vmatpush1.bf16.msra.mxu0 %v2072
      %2147 = vmatprep.subr.bf16.mxu0 0
      %2148 = vmatpush1.bf16.msra.mxu0 %v2075
      %2149 = vmatprep.subr.bf16.mxu0 0
      %2150 = vmatpush1.bf16.msra.mxu0 0
      %2151 = vmatprep.subr.bf16.mxu0 0
      %2152 = vmatpush1.bf16.msra.mxu0 0
      %2153 = vmatprep.subr.bf16.mxu0 0
      %2154 = vmatpush1.bf16.msra.mxu0 0
      %2155 = vmatprep.subr.bf16.mxu0 0
      %2156 = vmatpush1.bf16.msra.mxu0 0
      %2157 = vmatprep.subr.bf16.mxu0 0
      %2158 = vmatpush1.bf16.msra.mxu0 0
      %2159 = vmatprep.subr.bf16.mxu0 0
      %2160 = vmatpush1.bf16.msra.mxu0 0
      %2161 = vmatprep.subr.bf16.mxu0 0
      %2162 = vmatpush1.bf16.msra.mxu0 0
      %2163 = vmatprep.subr.bf16.mxu0 0
      %2164 = vmatpush1.bf16.msra.mxu0 0
      %2165 = vmatprep.subr.bf16.mxu0 0
      %2166 = vmatpush1.bf16.msra.mxu0 0
      %2167 = vmatprep.subr.bf16.mxu0 0
      %2168 = vmatpush1.bf16.msra.mxu0 0
      %2169 = vmatprep.subr.bf16.mxu0 0
      %2170 = vmatpush1.bf16.msra.mxu0 0
      %2171 = vmatprep.subr.bf16.mxu0 0
      %2172 = vmatpush1.bf16.msra.mxu0 0
      %2173 = vmatprep.subr.bf16.mxu0 0
      %2174 = vmatpush1.bf16.msra.mxu0 0
      %2175 = vmatprep.subr.bf16.mxu0 0
      %2176 = vmatpush1.bf16.msra.mxu0 0
      %2177 = vmatprep.mubr.bf16.mxu0 0
      %2178 = vmatmul.mubr.bf16.gmra.mrb[0].mxu0 %v2087
      %v2179 = vpop.f32.mrb[0].mxu0
      %v2180 = vadd.f32 0.0, %v2179
      %v2181 = vpop.f32.mrb[0].mxu0
      %v2182 = vpop.f32.mrb[0].mxu0
      %v2183 = vadd.f32 0.0, %v2182
      %v2184 = vpop.f32.mrb[0].mxu0
      %2185 = vmatprep.mubr.bf16.mxu0 0
      %2186 = vmatmul.mubr.bf16.gmra.mrb[0].mxu0 %v2090
      %v2187 = vpop.f32.mrb[0].mxu0
      %v2188 = vadd.f32 0.0, %v2187
      %v2189 = vpop.f32.mrb[0].mxu0
      %v2190 = vpop.f32.mrb[0].mxu0
      %v2191 = vadd.f32 0.0, %v2190
      %v2192 = vpop.f32.mrb[0].mxu0
      %2193 = vdwg.mxu0
      %v2194 = vadd.f32 %v2016, %v2127
      %v2195 = vadd.f32 %v2017, %v2129
      %v2196 = vadd.f32 %v2018, %v2180
      %v2197 = vadd.f32 %v2019, %v2131
      %v2198 = vadd.f32 %v2020, %v2133
      %v2199 = vadd.f32 %v2021, %v2183
      %v2200 = vadd.f32 %v2022, %v2137
      %v2201 = vadd.f32 %v2023, %v2139
      %v2202 = vadd.f32 %v2024, %v2188
      %v2203 = vadd.f32 %v2025, %v2141
      %v2204 = vadd.f32 %v2026, %v2143
      %v2205 = vadd.f32 %v2027, %v2191
      %v2206 = vld [vmem:[%s6] sm:$0xff]
      %v2207 = vld [vmem:[%s6 + $0x8] sm:$0xff]
      %v2208 = vld [vmem:[%s6 + $0x10] sm:$0xff]
      %v2209 = vld [vmem:[%s6 + $0x18] sm:$0xff]
      %2211 = vset.pattern.permute.xlu0 0
      %2212 = vperm.xlu0 %2211, %v2206
      %v2213 = vpop.permute.xlu0 %2212
      %2216 = vset.pattern.permute.xlu0 0
      %2217 = vperm.xlu0 %2216, %v2207
      %v2218 = vpop.permute.xlu0 %2217
      %2221 = vset.pattern.permute.xlu0 0
      %2222 = vperm.xlu0 %2221, %v2208
      %v2223 = vpop.permute.xlu0 %2222
      %2226 = vset.pattern.permute.xlu0 0
      %2227 = vperm.xlu0 %2226, %v2209
      %v2228 = vpop.permute.xlu0 %2227
      %v2230 = vadd.f32 %v2194, %v2213
      %v2231 = vadd.f32 %v2195, %v2213
      %v2232 = vadd.f32 %v2196, %v2213
      %v2233 = vadd.f32 %v2197, %v2218
      %v2234 = vadd.f32 %v2198, %v2218
      %v2235 = vadd.f32 %v2199, %v2218
      %v2236 = vadd.f32 %v2200, %v2223
      %v2237 = vadd.f32 %v2201, %v2223
      %v2238 = vadd.f32 %v2202, %v2223
      %v2239 = vadd.f32 %v2203, %v2228
      %v2240 = vadd.f32 %v2204, %v2228
      %v2241 = vadd.f32 %v2205, %v2228
      %v2242 = vadd.f32 %v2230, %v560
      %v2243 = vadd.f32 %v2231, %v561
      %v2244 = vadd.f32 %v2232, %v562
      %v2245 = vadd.f32 %v2233, %v563
      %v2246 = vadd.f32 %v2234, %v564
      %v2247 = vadd.f32 %v2235, %v565
      %v2248 = vadd.f32 %v2236, %v566
      %v2249 = vadd.f32 %v2237, %v567
      %v2250 = vadd.f32 %v2238, %v568
      %v2251 = vadd.f32 %v2239, %v569
      %v2252 = vadd.f32 %v2240, %v570
      %v2253 = vadd.f32 %v2241, %v571
      %v2254 = vmul.f32 %v2242, %v548
      %v2255 = vmul.f32 %v2243, %v552
      %v2256 = vmul.f32 %v2244, %v556
      %v2257 = vmul.f32 %v2245, %v548
      %v2258 = vmul.f32 %v2246, %v552
      %v2259 = vmul.f32 %v2247, %v556
      %v2260 = vmul.f32 %v2248, %v548
      %v2261 = vmul.f32 %v2249, %v552
      %v2262 = vmul.f32 %v2250, %v556
      %v2263 = vmul.f32 %v2251, %v548
      %v2264 = vmul.f32 %v2252, %v552
      %v2265 = vmul.f32 %v2253, %v556
      %v2266 = vadd.f32 %v2254, %v2255
      %v2267 = vadd.f32 %v2266, %v2256
      %2268 = vadd.xlane.f32.xlu0 %v2267
      %v2269 = vpop.xlane.xlu0 %2268
      %v2270 = vadd.f32 %v2257, %v2258
      %v2271 = vadd.f32 %v2270, %v2259
      %2272 = vadd.xlane.f32.xlu0 %v2271
      %v2273 = vpop.xlane.xlu0 %2272
      %v2274 = vadd.f32 %v2260, %v2261
      %v2275 = vadd.f32 %v2274, %v2262
      %2276 = vadd.xlane.f32.xlu0 %v2275
      %v2277 = vpop.xlane.xlu0 %2276
      %v2278 = vadd.f32 %v2263, %v2264
      %v2279 = vadd.f32 %v2278, %v2265
      %2280 = vadd.xlane.f32.xlu0 %v2279
      %v2281 = vpop.xlane.xlu0 %2280
      %v2282 = vmul.f32 %v2269, 0.00390625
      %v2283 = vmul.f32 %v2273, 0.00390625
      %v2284 = vmul.f32 %v2277, 0.00390625
      %v2285 = vmul.f32 %v2281, 0.00390625
      %v2286 = vsub.f32 %v2242, %v2282
      %v2287 = vsub.f32 %v2243, %v2282
      %v2288 = vsub.f32 %v2244, %v2282
      %v2289 = vsub.f32 %v2245, %v2283
      %v2290 = vsub.f32 %v2246, %v2283
      %v2291 = vsub.f32 %v2247, %v2283
      %v2292 = vsub.f32 %v2248, %v2284
      %v2293 = vsub.f32 %v2249, %v2284
      %v2294 = vsub.f32 %v2250, %v2284
      %v2295 = vsub.f32 %v2251, %v2285
      %v2296 = vsub.f32 %v2252, %v2285
      %v2297 = vsub.f32 %v2253, %v2285
      %v2298 = vmul.f32 %v2286, %v548
      %v2299 = vmul.f32 %v2287, %v552
      %v2300 = vmul.f32 %v2288, %v556
      %v2301 = vmul.f32 %v2289, %v548
      %v2302 = vmul.f32 %v2290, %v552
      %v2303 = vmul.f32 %v2291, %v556
      %v2304 = vmul.f32 %v2292, %v548
      %v2305 = vmul.f32 %v2293, %v552
      %v2306 = vmul.f32 %v2294, %v556
      %v2307 = vmul.f32 %v2295, %v548
      %v2308 = vmul.f32 %v2296, %v552
      %v2309 = vmul.f32 %v2297, %v556
      %v2310 = vmul.f32 %v2298, %v2298
      %v2311 = vmul.f32 %v2299, %v2299
      %v2312 = vmul.f32 %v2300, %v2300
      %v2313 = vmul.f32 %v2301, %v2301
      %v2314 = vmul.f32 %v2302, %v2302
      %v2315 = vmul.f32 %v2303, %v2303
      %v2316 = vmul.f32 %v2304, %v2304
      %v2317 = vmul.f32 %v2305, %v2305
      %v2318 = vmul.f32 %v2306, %v2306
      %v2319 = vmul.f32 %v2307, %v2307
      %v2320 = vmul.f32 %v2308, %v2308
      %v2321 = vmul.f32 %v2309, %v2309
      %v2322 = vadd.f32 %v2310, %v2311
      %v2323 = vadd.f32 %v2322, %v2312
      %2324 = vadd.xlane.f32.xlu0 %v2323
      %v2325 = vpop.xlane.xlu0 %2324
      %v2326 = vadd.f32 %v2313, %v2314
      %v2327 = vadd.f32 %v2326, %v2315
      %2328 = vadd.xlane.f32.xlu0 %v2327
      %v2329 = vpop.xlane.xlu0 %2328
      %v2330 = vadd.f32 %v2316, %v2317
      %v2331 = vadd.f32 %v2330, %v2318
      %2332 = vadd.xlane.f32.xlu0 %v2331
      %v2333 = vpop.xlane.xlu0 %2332
      %v2334 = vadd.f32 %v2319, %v2320
      %v2335 = vadd.f32 %v2334, %v2321
      %2336 = vadd.xlane.f32.xlu0 %v2335
      %v2337 = vpop.xlane.xlu0 %2336
      %v2338 = vmul.f32 %v2325, 0.00390625
      %v2339 = vmul.f32 %v2329, 0.00390625
      %v2340 = vmul.f32 %v2333, 0.00390625
      %v2341 = vmul.f32 %v2337, 0.00390625
      %v2342 = vadd.f32 %v2338, 1e-05
      %v2343 = vadd.f32 %v2339, 1e-05
      %v2344 = vadd.f32 %v2340, 1e-05
      %v2345 = vadd.f32 %v2341, 1e-05
      %v2346 = vrsqrt.pop %v2342
      %v2347 = vrsqrt.pop %v2343
      %v2348 = vrsqrt.pop %v2344
      %v2349 = vrsqrt.pop %v2345
      %v2350 = vmul.f32 %v2286, %v2346
      %v2351 = vmul.f32 %v2287, %v2346
      %v2352 = vmul.f32 %v2288, %v2346
      %v2353 = vmul.f32 %v2289, %v2347
      %v2354 = vmul.f32 %v2290, %v2347
      %v2355 = vmul.f32 %v2291, %v2347
      %v2356 = vmul.f32 %v2292, %v2348
      %v2357 = vmul.f32 %v2293, %v2348
      %v2358 = vmul.f32 %v2294, %v2348
      %v2359 = vmul.f32 %v2295, %v2349
      %v2360 = vmul.f32 %v2296, %v2349
      %v2361 = vmul.f32 %v2297, %v2349
      %v2362 = vadd.f32 %v2282, %v2283
      %v2363 = vadd.f32 %v2362, %v2284
      %v2364 = vadd.f32 %v2363, %v2285
      %v2365 = vrot.slane %v2364, 4
      %v2366 = vadd.f32 %v2364, %v2365
      %v2367 = vrot.slane %v2366, 2
      %v2368 = vadd.f32 %v2366, %v2367
      %v2369 = vrot.slane %v2368, 1
      %v2370 = vadd.f32 %v2368, %v2369
      %v2371 = vrcp.pop 32.0
      %v2372 = vmul.f32 %v2370, %v2371
      %v2373 = vsub.f32 %v2282, %v2372
      %v2374 = vsub.f32 %v2283, %v2372
      %v2375 = vsub.f32 %v2284, %v2372
      %v2376 = vsub.f32 %v2285, %v2372
      %v2377 = vmul.f32 %v2373, %v2373
      %v2378 = vmul.f32 %v2374, %v2374
      %v2379 = vmul.f32 %v2375, %v2375
      %v2380 = vmul.f32 %v2376, %v2376
      %v2381 = vadd.f32 %v2377, %v2378
      %v2382 = vadd.f32 %v2381, %v2379
      %v2383 = vadd.f32 %v2382, %v2380
      %v2384 = vrot.slane %v2383, 4
      %v2385 = vadd.f32 %v2383, %v2384
      %v2386 = vrot.slane %v2385, 2
      %v2387 = vadd.f32 %v2385, %v2386
      %v2388 = vrot.slane %v2387, 1
      %v2389 = vadd.f32 %v2387, %v2388
      %v2390 = vrcp.pop 31.0
      %v2391 = vmul.f32 %v2389, %v2390
      %v2392 = vrsqrt.pop %v2391
      %v2393 = vmul.f32 %v2391, %v2392
      %vm2394 = vcmp.eq.f32.partialorder %v2391, inf
      %v2395 = vsel %vm2394, %v2391, %v2393
      %vm2396 = vcmp.eq.f32.partialorder %v2391, 0.0
      %v2397 = vand.u32 %v2391, 2147483648
      %v2398 = vsel %vm2396, %v2397, %v2395
      %v2399 = vadd.f32 %v2398, 1e-06
      %v2400 = vrcp.pop %v2399
      %v2401 = vmul.f32 %v2373, %v2400
      %v2402 = vmul.f32 %v2374, %v2400
      %v2403 = vmul.f32 %v2375, %v2400
      %v2404 = vmul.f32 %v2376, %v2400
      %2406 = vset.pattern.permute.xlu0 0
      %2407 = vperm.xlu0 %2406, %v603
      %v2408 = vpop.permute.xlu0 %2407
      %2411 = vset.pattern.permute.xlu0 0
      %2412 = vperm.xlu0 %2411, %v604
      %v2413 = vpop.permute.xlu0 %2412
      %2416 = vset.pattern.permute.xlu0 0
      %2417 = vperm.xlu0 %2416, %v605
      %v2418 = vpop.permute.xlu0 %2417
      %2421 = vset.pattern.permute.xlu0 0
      %2422 = vperm.xlu0 %2421, %v606
      %v2423 = vpop.permute.xlu0 %2422
      %v2425 = vmul.f32 %v2408, %v2350
      %v2426 = vmul.f32 %v2408, %v2351
      %v2427 = vmul.f32 %v2408, %v2352
      %v2428 = vmul.f32 %v2413, %v2353
      %v2429 = vmul.f32 %v2413, %v2354
      %v2430 = vmul.f32 %v2413, %v2355
      %v2431 = vmul.f32 %v2418, %v2356
      %v2432 = vmul.f32 %v2418, %v2357
      %v2433 = vmul.f32 %v2418, %v2358
      %v2434 = vmul.f32 %v2423, %v2359
      %v2435 = vmul.f32 %v2423, %v2360
      %v2436 = vmul.f32 %v2423, %v2361
      %v2437 = vmul.f32 %v631, %v2401
      %v2438 = vmul.f32 %v632, %v2402
      %v2439 = vmul.f32 %v633, %v2403
      %v2440 = vmul.f32 %v634, %v2404
      %2442 = vset.pattern.permute.xlu0 0
      %2443 = vperm.xlu0 %2442, %v2437
      %v2444 = vpop.permute.xlu0 %2443
      %2447 = vset.pattern.permute.xlu0 0
      %2448 = vperm.xlu0 %2447, %v2438
      %v2449 = vpop.permute.xlu0 %2448
      %2452 = vset.pattern.permute.xlu0 0
      %2453 = vperm.xlu0 %2452, %v2439
      %v2454 = vpop.permute.xlu0 %2453
      %2457 = vset.pattern.permute.xlu0 0
      %2458 = vperm.xlu0 %2457, %v2440
      %v2459 = vpop.permute.xlu0 %2458
      %v2461 = vadd.f32 %v2425, %v2444
      %v2462 = vadd.f32 %v2426, %v2444
      %v2463 = vadd.f32 %v2427, %v2444
      %v2464 = vadd.f32 %v2428, %v2449
      %v2465 = vadd.f32 %v2429, %v2449
      %v2466 = vadd.f32 %v2430, %v2449
      %v2467 = vadd.f32 %v2431, %v2454
      %v2468 = vadd.f32 %v2432, %v2454
      %v2469 = vadd.f32 %v2433, %v2454
      %v2470 = vadd.f32 %v2434, %v2459
      %v2471 = vadd.f32 %v2435, %v2459
      %v2472 = vadd.f32 %v2436, %v2459
      %2474 = vset.pattern.permute.xlu0 0
      %2475 = vperm.xlu0 %2474, %v659
      %v2476 = vpop.permute.xlu0 %2475
      %2479 = vset.pattern.permute.xlu0 0
      %2480 = vperm.xlu0 %2479, %v660
      %v2481 = vpop.permute.xlu0 %2480
      %2484 = vset.pattern.permute.xlu0 0
      %2485 = vperm.xlu0 %2484, %v661
      %v2486 = vpop.permute.xlu0 %2485
      %2489 = vset.pattern.permute.xlu0 0
      %2490 = vperm.xlu0 %2489, %v662
      %v2491 = vpop.permute.xlu0 %2490
      %v2493 = vadd.f32 %v2461, %v2476
      %v2494 = vadd.f32 %v2462, %v2476
      %v2495 = vadd.f32 %v2463, %v2476
      %v2496 = vadd.f32 %v2464, %v2481
      %v2497 = vadd.f32 %v2465, %v2481
      %v2498 = vadd.f32 %v2466, %v2481
      %v2499 = vadd.f32 %v2467, %v2486
      %v2500 = vadd.f32 %v2468, %v2486
      %v2501 = vadd.f32 %v2469, %v2486
      %v2502 = vadd.f32 %v2470, %v2491
      %v2503 = vadd.f32 %v2471, %v2491
      %v2504 = vadd.f32 %v2472, %v2491
      %vm2505 = vcmp.gt.f32.partialorder %v2493, 0.0
      %vm2506 = vcmp.gt.f32.partialorder %v2494, 0.0
      %vm2507 = vcmp.gt.f32.partialorder %v2495, 0.0
      %vm2508 = vcmp.gt.f32.partialorder %v2496, 0.0
      %vm2509 = vcmp.gt.f32.partialorder %v2497, 0.0
      %vm2510 = vcmp.gt.f32.partialorder %v2498, 0.0
      %vm2511 = vcmp.gt.f32.partialorder %v2499, 0.0
      %vm2512 = vcmp.gt.f32.partialorder %v2500, 0.0
      %vm2513 = vcmp.gt.f32.partialorder %v2501, 0.0
      %vm2514 = vcmp.gt.f32.partialorder %v2502, 0.0
      %vm2515 = vcmp.gt.f32.partialorder %v2503, 0.0
      %vm2516 = vcmp.gt.f32.partialorder %v2504, 0.0
      %v2517 = vsel %vm2505, 0.0, %v2493
      %v2518 = vsel %vm2506, 0.0, %v2494
      %v2519 = vsel %vm2507, 0.0, %v2495
      %v2520 = vsel %vm2508, 0.0, %v2496
      %v2521 = vsel %vm2509, 0.0, %v2497
      %v2522 = vsel %vm2510, 0.0, %v2498
      %v2523 = vsel %vm2511, 0.0, %v2499
      %v2524 = vsel %vm2512, 0.0, %v2500
      %v2525 = vsel %vm2513, 0.0, %v2501
      %v2526 = vsel %vm2514, 0.0, %v2502
      %v2527 = vsel %vm2515, 0.0, %v2503
      %v2528 = vsel %vm2516, 0.0, %v2504
      %v2529 = vmul.f32 %v2517, 1.442695
      %v2530 = vpow.pop %v2529
      %v2531 = vmul.f32 %v2518, 1.442695
      %v2532 = vpow.pop %v2531
      %v2533 = vmul.f32 %v2519, 1.442695
      %v2534 = vpow.pop %v2533
      %v2535 = vmul.f32 %v2520, 1.442695
      %v2536 = vpow.pop %v2535
      %v2537 = vmul.f32 %v2521, 1.442695
      %v2538 = vpow.pop %v2537
      %v2539 = vmul.f32 %v2522, 1.442695
      %v2540 = vpow.pop %v2539
      %v2541 = vmul.f32 %v2523, 1.442695
      %v2542 = vpow.pop %v2541
      %v2543 = vmul.f32 %v2524, 1.442695
      %v2544 = vpow.pop %v2543
      %v2545 = vmul.f32 %v2525, 1.442695
      %v2546 = vpow.pop %v2545
      %v2547 = vmul.f32 %v2526, 1.442695
      %v2548 = vpow.pop %v2547
      %v2549 = vmul.f32 %v2527, 1.442695
      %v2550 = vpow.pop %v2549
      %v2551 = vmul.f32 %v2528, 1.442695
      %v2552 = vpow.pop %v2551
      %v2553 = vsub.f32 %v2530, 1.0
      %v2554 = vsub.f32 %v2532, 1.0
      %v2555 = vsub.f32 %v2534, 1.0
      %v2556 = vsub.f32 %v2536, 1.0
      %v2557 = vsub.f32 %v2538, 1.0
      %v2558 = vsub.f32 %v2540, 1.0
      %v2559 = vsub.f32 %v2542, 1.0
      %v2560 = vsub.f32 %v2544, 1.0
      %v2561 = vsub.f32 %v2546, 1.0
      %v2562 = vsub.f32 %v2548, 1.0
      %v2563 = vsub.f32 %v2550, 1.0
      %v2564 = vsub.f32 %v2552, 1.0
      %v2565 = vsel %vm2505, %v2493, %v2553
      %v2566 = vsel %vm2506, %v2494, %v2554
      %v2567 = vsel %vm2507, %v2495, %v2555
      %v2568 = vsel %vm2508, %v2496, %v2556
      %v2569 = vsel %vm2509, %v2497, %v2557
      %v2570 = vsel %vm2510, %v2498, %v2558
      %v2571 = vsel %vm2511, %v2499, %v2559
      %v2572 = vsel %vm2512, %v2500, %v2560
      %v2573 = vsel %vm2513, %v2501, %v2561
      %v2574 = vsel %vm2514, %v2502, %v2562
      %v2575 = vsel %vm2515, %v2503, %v2563
      %v2576 = vsel %vm2516, %v2504, %v2564
      %v2577 = vmul.f32 %v2565, %v548
      %v2578 = vmul.f32 %v2566, %v552
      %v2579 = vmul.f32 %v2567, %v556
      %v2580 = vmul.f32 %v2568, %v548
      %v2581 = vmul.f32 %v2569, %v552
      %v2582 = vmul.f32 %v2570, %v556
      %v2583 = vmul.f32 %v2571, %v548
      %v2584 = vmul.f32 %v2572, %v552
      %v2585 = vmul.f32 %v2573, %v556
      %v2586 = vmul.f32 %v2574, %v548
      %v2587 = vmul.f32 %v2575, %v552
      %v2588 = vmul.f32 %v2576, %v556
      %v2589 = vld [vmem:[%s7 + $0x60] sm:$0xff]
      %v2590 = vld [vmem:[%s7 + $0x68] sm:$0xff]
      %v2591 = vld [vmem:[%s7 + $0x70] sm:$0xff]
      %v2592 = vld [vmem:[%s7 + $0x78] sm:$0xff]
      %v2593 = vld [vmem:[%s8 + $0x60] sm:$0xff]
      %v2594 = vld [vmem:[%s8 + $0x68] sm:$0xff]
      %v2595 = vld [vmem:[%s8 + $0x70] sm:$0xff]
      %v2596 = vld [vmem:[%s8 + $0x78] sm:$0xff]
      %v2597 = vmul.f32 %v2589, %v584
      %v2598 = vmul.f32 %v2590, %v584
      %v2599 = vmul.f32 %v2591, %v584
      %v2600 = vmul.f32 %v2592, %v584
      %v2601 = vsel %vm590, %v2597, 0.0
      %2602 = vadd.xlane.f32.xlu0 %v2601
      %v2603 = vpop.xlane.xlu0 %2602
      %v2604 = vsel %vm590, %v2598, 0.0
      %2605 = vadd.xlane.f32.xlu0 %v2604
      %v2606 = vpop.xlane.xlu0 %2605
      %v2607 = vsel %vm590, %v2599, 0.0
      %2608 = vadd.xlane.f32.xlu0 %v2607
      %v2609 = vpop.xlane.xlu0 %2608
      %v2610 = vsel %vm590, %v2600, 0.0
      %2611 = vadd.xlane.f32.xlu0 %v2610
      %v2612 = vpop.xlane.xlu0 %2611
      %v2613 = vadd.f32 %v2603, %v2593
      %v2614 = vadd.f32 %v2606, %v2594
      %v2615 = vadd.f32 %v2609, %v2595
      %v2616 = vadd.f32 %v2612, %v2596
      %v2617 = vld [vmem:[%s7 + $0x80] sm:$0xff]
      %v2618 = vld [vmem:[%s7 + $0x88] sm:$0xff]
      %v2619 = vld [vmem:[%s7 + $0x90] sm:$0xff]
      %v2620 = vld [vmem:[%s7 + $0x98] sm:$0xff]
      %v2621 = vld [vmem:[%s8 + $0x80] sm:$0xff]
      %v2622 = vld [vmem:[%s8 + $0x88] sm:$0xff]
      %v2623 = vld [vmem:[%s8 + $0x90] sm:$0xff]
      %v2624 = vld [vmem:[%s8 + $0x98] sm:$0xff]
      %v2625 = vmul.f32 %v2617, %v584
      %v2626 = vmul.f32 %v2618, %v584
      %v2627 = vmul.f32 %v2619, %v584
      %v2628 = vmul.f32 %v2620, %v584
      %v2629 = vsel %vm590, %v2625, 0.0
      %2630 = vadd.xlane.f32.xlu0 %v2629
      %v2631 = vpop.xlane.xlu0 %2630
      %v2632 = vsel %vm590, %v2626, 0.0
      %2633 = vadd.xlane.f32.xlu0 %v2632
      %v2634 = vpop.xlane.xlu0 %2633
      %v2635 = vsel %vm590, %v2627, 0.0
      %2636 = vadd.xlane.f32.xlu0 %v2635
      %v2637 = vpop.xlane.xlu0 %2636
      %v2638 = vsel %vm590, %v2628, 0.0
      %2639 = vadd.xlane.f32.xlu0 %v2638
      %v2640 = vpop.xlane.xlu0 %2639
      %v2641 = vadd.f32 %v2631, %v2621
      %v2642 = vadd.f32 %v2634, %v2622
      %v2643 = vadd.f32 %v2637, %v2623
      %v2644 = vadd.f32 %v2640, %v2624
      %v2645 = vld [vmem:[%s7 + $0xa0] sm:$0xff]
      %v2646 = vld [vmem:[%s7 + $0xa8] sm:$0xff]
      %v2647 = vld [vmem:[%s7 + $0xb0] sm:$0xff]
      %v2648 = vld [vmem:[%s7 + $0xb8] sm:$0xff]
      %v2649 = vld [vmem:[%s8 + $0xa0] sm:$0xff]
      %v2650 = vld [vmem:[%s8 + $0xa8] sm:$0xff]
      %v2651 = vld [vmem:[%s8 + $0xb0] sm:$0xff]
      %v2652 = vld [vmem:[%s8 + $0xb8] sm:$0xff]
      %v2653 = vmul.f32 %v2645, %v584
      %v2654 = vmul.f32 %v2646, %v584
      %v2655 = vmul.f32 %v2647, %v584
      %v2656 = vmul.f32 %v2648, %v584
      %v2657 = vsel %vm590, %v2653, 0.0
      %2658 = vadd.xlane.f32.xlu0 %v2657
      %v2659 = vpop.xlane.xlu0 %2658
      %v2660 = vsel %vm590, %v2654, 0.0
      %2661 = vadd.xlane.f32.xlu0 %v2660
      %v2662 = vpop.xlane.xlu0 %2661
      %v2663 = vsel %vm590, %v2655, 0.0
      %2664 = vadd.xlane.f32.xlu0 %v2663
      %v2665 = vpop.xlane.xlu0 %2664
      %v2666 = vsel %vm590, %v2656, 0.0
      %2667 = vadd.xlane.f32.xlu0 %v2666
      %v2668 = vpop.xlane.xlu0 %2667
      %v2669 = vadd.f32 %v2659, %v2649
      %v2670 = vadd.f32 %v2662, %v2650
      %v2671 = vadd.f32 %v2665, %v2651
      %v2672 = vadd.f32 %v2668, %v2652
      %s2673 = scalar_lea.vmem %s5, 144
      %v2674 = vld [vmem:[%s2673] sm:$0xf]
      %v2675 = vld [vmem:[%s2673 + $0x4] sm:$0xf]
      %v2676 = vld [vmem:[%s2673 + $0x8] sm:$0xf]
      %v2677 = vld [vmem:[%s2673 + $0xc] sm:$0xf]
      %2678 = vrot.lane.b32.xlu0 %v2577, 19
      %v2679 = vpop.permute.xlu0 %2678
      %2680 = vrot.lane.b32.xlu0 %v2580, 19
      %v2681 = vpop.permute.xlu0 %2680
      %2682 = vrot.lane.b32.xlu0 %v2583, 19
      %v2683 = vpop.permute.xlu0 %2682
      %2684 = vrot.lane.b32.xlu0 %v2586, 19
      %v2685 = vpop.permute.xlu0 %2684
      %2686 = vrot.lane.b32.xlu0 %v2578, 19
      %v2687 = vpop.permute.xlu0 %2686
      %2688 = vrot.lane.b32.xlu0 %v2581, 19
      %v2689 = vpop.permute.xlu0 %2688
      %2690 = vrot.lane.b32.xlu0 %v2584, 19
      %v2691 = vpop.permute.xlu0 %2690
      %2692 = vrot.lane.b32.xlu0 %v2587, 19
      %v2693 = vpop.permute.xlu0 %2692
      %2694 = vrot.lane.b32.xlu0 %v2579, 19
      %v2695 = vpop.permute.xlu0 %2694
      %2696 = vrot.lane.b32.xlu0 %v2582, 19
      %v2697 = vpop.permute.xlu0 %2696
      %2698 = vrot.lane.b32.xlu0 %v2585, 19
      %v2699 = vpop.permute.xlu0 %2698
      %2700 = vrot.lane.b32.xlu0 %v2588, 19
      %v2701 = vpop.permute.xlu0 %2700
      %v2702 = vsel %vm693, %v2687, %v2695
      %v2703 = vsel %vm693, %v2689, %v2697
      %v2704 = vsel %vm693, %v2691, %v2699
      %v2705 = vsel %vm693, %v2693, %v2701
      %v2706 = vsel %vm693, %v2679, %v2687
      %v2707 = vsel %vm693, %v2681, %v2689
      %v2708 = vsel %vm693, %v2683, %v2691
      %v2709 = vsel %vm693, %v2685, %v2693
      %v2710 = vsel %vm693, %v2695, %v2679
      %v2711 = vsel %vm693, %v2697, %v2681
      %v2712 = vsel %vm693, %v2699, %v2683
      %v2713 = vsel %vm693, %v2701, %v2685
      %v2714 = vpack.c.bf16 %v2711, %v2710
      %v2715 = vpack.c.bf16 %v2707, %v2706
      %v2716 = vpack.c.bf16 %v2703, %v2702
      %v2717 = vpack.c.bf16 %v2713, %v2712
      %v2718 = vpack.c.bf16 %v2709, %v2708
      %v2719 = vpack.c.bf16 %v2705, %v2704
      %s2720 = scalar_lea.vmem %s5, 160
      %v2721 = vld [vmem:[%s2720] sm:$0xf]
      %v2722 = vld [vmem:[%s2720 + $0x4] sm:$0xf]
      %v2723 = vld [vmem:[%s2720 + $0x8] sm:$0xf]
      %v2724 = vld [vmem:[%s2720 + $0xc] sm:$0xf]
      %2725 = vrot.lane.b32.xlu0 %v2577, 18
      %v2726 = vpop.permute.xlu0 %2725
      %2727 = vrot.lane.b32.xlu0 %v2580, 18
      %v2728 = vpop.permute.xlu0 %2727
      %2729 = vrot.lane.b32.xlu0 %v2583, 18
      %v2730 = vpop.permute.xlu0 %2729
      %2731 = vrot.lane.b32.xlu0 %v2586, 18
      %v2732 = vpop.permute.xlu0 %2731
      %2733 = vrot.lane.b32.xlu0 %v2578, 18
      %v2734 = vpop.permute.xlu0 %2733
      %2735 = vrot.lane.b32.xlu0 %v2581, 18
      %v2736 = vpop.permute.xlu0 %2735
      %2737 = vrot.lane.b32.xlu0 %v2584, 18
      %v2738 = vpop.permute.xlu0 %2737
      %2739 = vrot.lane.b32.xlu0 %v2587, 18
      %v2740 = vpop.permute.xlu0 %2739
      %2741 = vrot.lane.b32.xlu0 %v2579, 18
      %v2742 = vpop.permute.xlu0 %2741
      %2743 = vrot.lane.b32.xlu0 %v2582, 18
      %v2744 = vpop.permute.xlu0 %2743
      %2745 = vrot.lane.b32.xlu0 %v2585, 18
      %v2746 = vpop.permute.xlu0 %2745
      %2747 = vrot.lane.b32.xlu0 %v2588, 18
      %v2748 = vpop.permute.xlu0 %2747
      %v2749 = vsel %vm741, %v2734, %v2742
      %v2750 = vsel %vm741, %v2736, %v2744
      %v2751 = vsel %vm741, %v2738, %v2746
      %v2752 = vsel %vm741, %v2740, %v2748
      %v2753 = vsel %vm741, %v2726, %v2734
      %v2754 = vsel %vm741, %v2728, %v2736
      %v2755 = vsel %vm741, %v2730, %v2738
      %v2756 = vsel %vm741, %v2732, %v2740
      %v2757 = vsel %vm741, %v2742, %v2726
      %v2758 = vsel %vm741, %v2744, %v2728
      %v2759 = vsel %vm741, %v2746, %v2730
      %v2760 = vsel %vm741, %v2748, %v2732
      %v2761 = vpack.c.bf16 %v2758, %v2757
      %v2762 = vpack.c.bf16 %v2754, %v2753
      %v2763 = vpack.c.bf16 %v2750, %v2749
      %v2764 = vpack.c.bf16 %v2760, %v2759
      %v2765 = vpack.c.bf16 %v2756, %v2755
      %v2766 = vpack.c.bf16 %v2752, %v2751
      %v2771 = vunpack.c.l.b16 %v2721
      %v2772 = vunpack.c.l.b16 %v2722
      %v2773 = vunpack.c.l.b16 %v2723
      %v2774 = vunpack.c.l.b16 %v2724
      %v2775 = vpack.c.b16 %v2772, %v2771
      %v2776 = vpack.c.b16 %v2774, %v2773
      %v2778 = vsel %vm770, %v2775, 0
      %v2781 = vsel %vm770, %v2776, 0
      %2783 = vmatprep.subr.bf16.mxu0 %v2762
      %2784 = vmatpush1.bf16.msra.mxu0 %v2761
      %2785 = vmatprep.subr.bf16.mxu0 %v2765
      %2786 = vmatpush1.bf16.msra.mxu0 %v2764
      %2787 = vmatprep.subr.bf16.mxu0 0
      %2788 = vmatpush1.bf16.msra.mxu0 0
      %2789 = vmatprep.subr.bf16.mxu0 0
      %2790 = vmatpush1.bf16.msra.mxu0 0
      %2791 = vmatprep.subr.bf16.mxu0 0
      %2792 = vmatpush1.bf16.msra.mxu0 0
      %2793 = vmatprep.subr.bf16.mxu0 0
      %2794 = vmatpush1.bf16.msra.mxu0 0
      %2795 = vmatprep.subr.bf16.mxu0 0
      %2796 = vmatpush1.bf16.msra.mxu0 0
      %2797 = vmatprep.subr.bf16.mxu0 0
      %2798 = vmatpush1.bf16.msra.mxu0 0
      %2799 = vmatprep.subr.bf16.mxu0 0
      %2800 = vmatpush1.bf16.msra.mxu0 0
      %2801 = vmatprep.subr.bf16.mxu0 0
      %2802 = vmatpush1.bf16.msra.mxu0 0
      %2803 = vmatprep.subr.bf16.mxu0 0
      %2804 = vmatpush1.bf16.msra.mxu0 0
      %2805 = vmatprep.subr.bf16.mxu0 0
      %2806 = vmatpush1.bf16.msra.mxu0 0
      %2807 = vmatprep.subr.bf16.mxu0 0
      %2808 = vmatpush1.bf16.msra.mxu0 0
      %2809 = vmatprep.subr.bf16.mxu0 0
      %2810 = vmatpush1.bf16.msra.mxu0 0
      %2811 = vmatprep.subr.bf16.mxu0 0
      %2812 = vmatpush1.bf16.msra.mxu0 0
      %2813 = vmatprep.subr.bf16.mxu0 0
      %2814 = vmatpush1.bf16.msra.mxu0 0
      %2815 = vmatprep.mubr.bf16.mxu0 0
      %2816 = vmatmul.mubr.bf16.gmra.mrb[0].mxu0 %v2778
      %v2817 = vpop.f32.mrb[0].mxu0
      %v2818 = vadd.f32 0.0, %v2817
      %v2819 = vpop.f32.mrb[0].mxu0
      %v2820 = vadd.f32 0.0, %v2819
      %v2821 = vpop.f32.mrb[0].mxu0
      %v2822 = vadd.f32 0.0, %v2821
      %v2823 = vpop.f32.mrb[0].mxu0
      %v2824 = vadd.f32 0.0, %v2823
      %2825 = vmatprep.mubr.bf16.mxu0 0
      %2826 = vmatmul.mubr.bf16.gmra.mrb[0].mxu0 %v2781
      %v2827 = vpop.f32.mrb[0].mxu0
      %v2828 = vadd.f32 0.0, %v2827
      %v2829 = vpop.f32.mrb[0].mxu0
      %v2830 = vadd.f32 0.0, %v2829
      %v2831 = vpop.f32.mrb[0].mxu0
      %v2832 = vadd.f32 0.0, %v2831
      %v2833 = vpop.f32.mrb[0].mxu0
      %v2834 = vadd.f32 0.0, %v2833
      %2835 = vdwg.mxu0
      %2836 = vmatprep.subr.bf16.mxu0 0
      %2837 = vmatpush1.bf16.msra.mxu0 %v2763
      %2838 = vmatprep.subr.bf16.mxu0 0
      %2839 = vmatpush1.bf16.msra.mxu0 %v2766
      %2840 = vmatprep.subr.bf16.mxu0 0
      %2841 = vmatpush1.bf16.msra.mxu0 0
      %2842 = vmatprep.subr.bf16.mxu0 0
      %2843 = vmatpush1.bf16.msra.mxu0 0
      %2844 = vmatprep.subr.bf16.mxu0 0
      %2845 = vmatpush1.bf16.msra.mxu0 0
      %2846 = vmatprep.subr.bf16.mxu0 0
      %2847 = vmatpush1.bf16.msra.mxu0 0
      %2848 = vmatprep.subr.bf16.mxu0 0
      %2849 = vmatpush1.bf16.msra.mxu0 0
      %2850 = vmatprep.subr.bf16.mxu0 0
      %2851 = vmatpush1.bf16.msra.mxu0 0
      %2852 = vmatprep.subr.bf16.mxu0 0
      %2853 = vmatpush1.bf16.msra.mxu0 0
      %2854 = vmatprep.subr.bf16.mxu0 0
      %2855 = vmatpush1.bf16.msra.mxu0 0
      %2856 = vmatprep.subr.bf16.mxu0 0
      %2857 = vmatpush1.bf16.msra.mxu0 0
      %2858 = vmatprep.subr.bf16.mxu0 0
      %2859 = vmatpush1.bf16.msra.mxu0 0
      %2860 = vmatprep.subr.bf16.mxu0 0
      %2861 = vmatpush1.bf16.msra.mxu0 0
      %2862 = vmatprep.subr.bf16.mxu0 0
      %2863 = vmatpush1.bf16.msra.mxu0 0
      %2864 = vmatprep.subr.bf16.mxu0 0
      %2865 = vmatpush1.bf16.msra.mxu0 0
      %2866 = vmatprep.subr.bf16.mxu0 0
      %2867 = vmatpush1.bf16.msra.mxu0 0
      %2868 = vmatprep.mubr.bf16.mxu0 0
      %2869 = vmatmul.mubr.bf16.gmra.mrb[0].mxu0 %v2778
      %v2870 = vpop.f32.mrb[0].mxu0
      %v2871 = vadd.f32 0.0, %v2870
      %v2872 = vpop.f32.mrb[0].mxu0
      %v2873 = vpop.f32.mrb[0].mxu0
      %v2874 = vadd.f32 0.0, %v2873
      %v2875 = vpop.f32.mrb[0].mxu0
      %2876 = vmatprep.mubr.bf16.mxu0 0
      %2877 = vmatmul.mubr.bf16.gmra.mrb[0].mxu0 %v2781
      %v2878 = vpop.f32.mrb[0].mxu0
      %v2879 = vadd.f32 0.0, %v2878
      %v2880 = vpop.f32.mrb[0].mxu0
      %v2881 = vpop.f32.mrb[0].mxu0
      %v2882 = vadd.f32 0.0, %v2881
      %v2883 = vpop.f32.mrb[0].mxu0
      %2884 = vdwg.mxu0
      %v2889 = vunpack.c.l.b16 %v2674
      %v2890 = vunpack.c.l.b16 %v2675
      %v2891 = vunpack.c.l.b16 %v2676
      %v2892 = vunpack.c.l.b16 %v2677
      %v2893 = vpack.c.b16 %v2890, %v2889
      %v2894 = vpack.c.b16 %v2892, %v2891
      %v2896 = vsel %vm770, %v2893, 0
      %v2899 = vsel %vm770, %v2894, 0
      %2901 = vmatprep.subr.bf16.mxu0 %v2715
      %2902 = vmatpush1.bf16.msra.mxu0 %v2714
      %2903 = vmatprep.subr.bf16.mxu0 %v2718
      %2904 = vmatpush1.bf16.msra.mxu0 %v2717
      %2905 = vmatprep.subr.bf16.mxu0 0
      %2906 = vmatpush1.bf16.msra.mxu0 0
      %2907 = vmatprep.subr.bf16.mxu0 0
      %2908 = vmatpush1.bf16.msra.mxu0 0
      %2909 = vmatprep.subr.bf16.mxu0 0
      %2910 = vmatpush1.bf16.msra.mxu0 0
      %2911 = vmatprep.subr.bf16.mxu0 0
      %2912 = vmatpush1.bf16.msra.mxu0 0
      %2913 = vmatprep.subr.bf16.mxu0 0
      %2914 = vmatpush1.bf16.msra.mxu0 0
      %2915 = vmatprep.subr.bf16.mxu0 0
      %2916 = vmatpush1.bf16.msra.mxu0 0
      %2917 = vmatprep.subr.bf16.mxu0 0
      %2918 = vmatpush1.bf16.msra.mxu0 0
      %2919 = vmatprep.subr.bf16.mxu0 0
      %2920 = vmatpush1.bf16.msra.mxu0 0
      %2921 = vmatprep.subr.bf16.mxu0 0
      %2922 = vmatpush1.bf16.msra.mxu0 0
      %2923 = vmatprep.subr.bf16.mxu0 0
      %2924 = vmatpush1.bf16.msra.mxu0 0
      %2925 = vmatprep.subr.bf16.mxu0 0
      %2926 = vmatpush1.bf16.msra.mxu0 0
      %2927 = vmatprep.subr.bf16.mxu0 0
      %2928 = vmatpush1.bf16.msra.mxu0 0
      %2929 = vmatprep.subr.bf16.mxu0 0
      %2930 = vmatpush1.bf16.msra.mxu0 0
      %2931 = vmatprep.subr.bf16.mxu0 0
      %2932 = vmatpush1.bf16.msra.mxu0 0
      %2933 = vmatprep.mubr.bf16.mxu0 0
      %2934 = vmatmul.mubr.bf16.gmra.mrb[0].mxu0 %v2896
      %v2935 = vpop.f32.mrb[0].mxu0
      %v2936 = vadd.f32 %v2818, %v2935
      %v2937 = vpop.f32.mrb[0].mxu0
      %v2938 = vadd.f32 %v2820, %v2937
      %v2939 = vpop.f32.mrb[0].mxu0
      %v2940 = vadd.f32 %v2822, %v2939
      %v2941 = vpop.f32.mrb[0].mxu0
      %v2942 = vadd.f32 %v2824, %v2941
      %2943 = vmatprep.mubr.bf16.mxu0 0
      %2944 = vmatmul.mubr.bf16.gmra.mrb[0].mxu0 %v2899
      %v2945 = vpop.f32.mrb[0].mxu0
      %v2946 = vadd.f32 %v2828, %v2945
      %v2947 = vpop.f32.mrb[0].mxu0
      %v2948 = vadd.f32 %v2830, %v2947
      %v2949 = vpop.f32.mrb[0].mxu0
      %v2950 = vadd.f32 %v2832, %v2949
      %v2951 = vpop.f32.mrb[0].mxu0
      %v2952 = vadd.f32 %v2834, %v2951
      %2953 = vdwg.mxu0
      %2954 = vmatprep.subr.bf16.mxu0 0
      %2955 = vmatpush1.bf16.msra.mxu0 %v2716
      %2956 = vmatprep.subr.bf16.mxu0 0
      %2957 = vmatpush1.bf16.msra.mxu0 %v2719
      %2958 = vmatprep.subr.bf16.mxu0 0
      %2959 = vmatpush1.bf16.msra.mxu0 0
      %2960 = vmatprep.subr.bf16.mxu0 0
      %2961 = vmatpush1.bf16.msra.mxu0 0
      %2962 = vmatprep.subr.bf16.mxu0 0
      %2963 = vmatpush1.bf16.msra.mxu0 0
      %2964 = vmatprep.subr.bf16.mxu0 0
      %2965 = vmatpush1.bf16.msra.mxu0 0
      %2966 = vmatprep.subr.bf16.mxu0 0
      %2967 = vmatpush1.bf16.msra.mxu0 0
      %2968 = vmatprep.subr.bf16.mxu0 0
      %2969 = vmatpush1.bf16.msra.mxu0 0
      %2970 = vmatprep.subr.bf16.mxu0 0
      %2971 = vmatpush1.bf16.msra.mxu0 0
      %2972 = vmatprep.subr.bf16.mxu0 0
      %2973 = vmatpush1.bf16.msra.mxu0 0
      %2974 = vmatprep.subr.bf16.mxu0 0
      %2975 = vmatpush1.bf16.msra.mxu0 0
      %2976 = vmatprep.subr.bf16.mxu0 0
      %2977 = vmatpush1.bf16.msra.mxu0 0
      %2978 = vmatprep.subr.bf16.mxu0 0
      %2979 = vmatpush1.bf16.msra.mxu0 0
      %2980 = vmatprep.subr.bf16.mxu0 0
      %2981 = vmatpush1.bf16.msra.mxu0 0
      %2982 = vmatprep.subr.bf16.mxu0 0
      %2983 = vmatpush1.bf16.msra.mxu0 0
      %2984 = vmatprep.subr.bf16.mxu0 0
      %2985 = vmatpush1.bf16.msra.mxu0 0
      %2986 = vmatprep.mubr.bf16.mxu0 0
      %2987 = vmatmul.mubr.bf16.gmra.mrb[0].mxu0 %v2896
      %v2988 = vpop.f32.mrb[0].mxu0
      %v2989 = vadd.f32 %v2871, %v2988
      %v2990 = vpop.f32.mrb[0].mxu0
      %v2991 = vpop.f32.mrb[0].mxu0
      %v2992 = vadd.f32 %v2874, %v2991
      %v2993 = vpop.f32.mrb[0].mxu0
      %2994 = vmatprep.mubr.bf16.mxu0 0
      %2995 = vmatmul.mubr.bf16.gmra.mrb[0].mxu0 %v2899
      %v2996 = vpop.f32.mrb[0].mxu0
      %v2997 = vadd.f32 %v2879, %v2996
      %v2998 = vpop.f32.mrb[0].mxu0
      %v2999 = vpop.f32.mrb[0].mxu0
      %v3000 = vadd.f32 %v2882, %v2999
      %v3001 = vpop.f32.mrb[0].mxu0
      %3002 = vdwg.mxu0
      %s3003 = scalar_lea.vmem %s5, 176
      %v3004 = vld [vmem:[%s3003] sm:$0xf]
      %v3005 = vld [vmem:[%s3003 + $0x4] sm:$0xf]
      %v3006 = vld [vmem:[%s3003 + $0x8] sm:$0xf]
      %v3007 = vld [vmem:[%s3003 + $0xc] sm:$0xf]
      %3008 = vrot.lane.b32.xlu0 %v2577, 17
      %v3009 = vpop.permute.xlu0 %3008
      %3010 = vrot.lane.b32.xlu0 %v2580, 17
      %v3011 = vpop.permute.xlu0 %3010
      %3012 = vrot.lane.b32.xlu0 %v2583, 17
      %v3013 = vpop.permute.xlu0 %3012
      %3014 = vrot.lane.b32.xlu0 %v2586, 17
      %v3015 = vpop.permute.xlu0 %3014
      %3016 = vrot.lane.b32.xlu0 %v2578, 17
      %v3017 = vpop.permute.xlu0 %3016
      %3018 = vrot.lane.b32.xlu0 %v2581, 17
      %v3019 = vpop.permute.xlu0 %3018
      %3020 = vrot.lane.b32.xlu0 %v2584, 17
      %v3021 = vpop.permute.xlu0 %3020
      %3022 = vrot.lane.b32.xlu0 %v2587, 17
      %v3023 = vpop.permute.xlu0 %3022
      %3024 = vrot.lane.b32.xlu0 %v2579, 17
      %v3025 = vpop.permute.xlu0 %3024
      %3026 = vrot.lane.b32.xlu0 %v2582, 17
      %v3027 = vpop.permute.xlu0 %3026
      %3028 = vrot.lane.b32.xlu0 %v2585, 17
      %v3029 = vpop.permute.xlu0 %3028
      %3030 = vrot.lane.b32.xlu0 %v2588, 17
      %v3031 = vpop.permute.xlu0 %3030
      %v3032 = vsel %vm1026, %v3017, %v3025
      %v3033 = vsel %vm1026, %v3019, %v3027
      %v3034 = vsel %vm1026, %v3021, %v3029
      %v3035 = vsel %vm1026, %v3023, %v3031
      %v3036 = vsel %vm1026, %v3009, %v3017
      %v3037 = vsel %vm1026, %v3011, %v3019
      %v3038 = vsel %vm1026, %v3013, %v3021
      %v3039 = vsel %vm1026, %v3015, %v3023
      %v3040 = vsel %vm1026, %v3025, %v3009
      %v3041 = vsel %vm1026, %v3027, %v3011
      %v3042 = vsel %vm1026, %v3029, %v3013
      %v3043 = vsel %vm1026, %v3031, %v3015
      %v3044 = vpack.c.bf16 %v3041, %v3040
      %v3045 = vpack.c.bf16 %v3037, %v3036
      %v3046 = vpack.c.bf16 %v3033, %v3032
      %v3047 = vpack.c.bf16 %v3043, %v3042
      %v3048 = vpack.c.bf16 %v3039, %v3038
      %v3049 = vpack.c.bf16 %v3035, %v3034
      %v3054 = vunpack.c.l.b16 %v3004
      %v3055 = vunpack.c.l.b16 %v3005
      %v3056 = vunpack.c.l.b16 %v3006
      %v3057 = vunpack.c.l.b16 %v3007
      %v3058 = vpack.c.b16 %v3055, %v3054
      %v3059 = vpack.c.b16 %v3057, %v3056
      %v3061 = vsel %vm770, %v3058, 0
      %v3064 = vsel %vm770, %v3059, 0
      %3066 = vmatprep.subr.bf16.mxu0 %v3045
      %3067 = vmatpush1.bf16.msra.mxu0 %v3044
      %3068 = vmatprep.subr.bf16.mxu0 %v3048
      %3069 = vmatpush1.bf16.msra.mxu0 %v3047
      %3070 = vmatprep.subr.bf16.mxu0 0
      %3071 = vmatpush1.bf16.msra.mxu0 0
      %3072 = vmatprep.subr.bf16.mxu0 0
      %3073 = vmatpush1.bf16.msra.mxu0 0
      %3074 = vmatprep.subr.bf16.mxu0 0
      %3075 = vmatpush1.bf16.msra.mxu0 0
      %3076 = vmatprep.subr.bf16.mxu0 0
      %3077 = vmatpush1.bf16.msra.mxu0 0
      %3078 = vmatprep.subr.bf16.mxu0 0
      %3079 = vmatpush1.bf16.msra.mxu0 0
      %3080 = vmatprep.subr.bf16.mxu0 0
      %3081 = vmatpush1.bf16.msra.mxu0 0
      %3082 = vmatprep.subr.bf16.mxu0 0
      %3083 = vmatpush1.bf16.msra.mxu0 0
      %3084 = vmatprep.subr.bf16.mxu0 0
      %3085 = vmatpush1.bf16.msra.mxu0 0
      %3086 = vmatprep.subr.bf16.mxu0 0
      %3087 = vmatpush1.bf16.msra.mxu0 0
      %3088 = vmatprep.subr.bf16.mxu0 0
      %3089 = vmatpush1.bf16.msra.mxu0 0
      %3090 = vmatprep.subr.bf16.mxu0 0
      %3091 = vmatpush1.bf16.msra.mxu0 0
      %3092 = vmatprep.subr.bf16.mxu0 0
      %3093 = vmatpush1.bf16.msra.mxu0 0
      %3094 = vmatprep.subr.bf16.mxu0 0
      %3095 = vmatpush1.bf16.msra.mxu0 0
      %3096 = vmatprep.subr.bf16.mxu0 0
      %3097 = vmatpush1.bf16.msra.mxu0 0
      %3098 = vmatprep.mubr.bf16.mxu0 0
      %3099 = vmatmul.mubr.bf16.gmra.mrb[0].mxu0 %v3061
      %v3100 = vpop.f32.mrb[0].mxu0
      %v3101 = vadd.f32 0.0, %v3100
      %v3102 = vpop.f32.mrb[0].mxu0
      %v3103 = vadd.f32 0.0, %v3102
      %v3104 = vpop.f32.mrb[0].mxu0
      %v3105 = vadd.f32 0.0, %v3104
      %v3106 = vpop.f32.mrb[0].mxu0
      %v3107 = vadd.f32 0.0, %v3106
      %3108 = vmatprep.mubr.bf16.mxu0 0
      %3109 = vmatmul.mubr.bf16.gmra.mrb[0].mxu0 %v3064
      %v3110 = vpop.f32.mrb[0].mxu0
      %v3111 = vadd.f32 0.0, %v3110
      %v3112 = vpop.f32.mrb[0].mxu0
      %v3113 = vadd.f32 0.0, %v3112
      %v3114 = vpop.f32.mrb[0].mxu0
      %v3115 = vadd.f32 0.0, %v3114
      %v3116 = vpop.f32.mrb[0].mxu0
      %v3117 = vadd.f32 0.0, %v3116
      %3118 = vdwg.mxu0
      %3119 = vmatprep.subr.bf16.mxu0 0
      %3120 = vmatpush1.bf16.msra.mxu0 %v3046
      %3121 = vmatprep.subr.bf16.mxu0 0
      %3122 = vmatpush1.bf16.msra.mxu0 %v3049
      %3123 = vmatprep.subr.bf16.mxu0 0
      %3124 = vmatpush1.bf16.msra.mxu0 0
      %3125 = vmatprep.subr.bf16.mxu0 0
      %3126 = vmatpush1.bf16.msra.mxu0 0
      %3127 = vmatprep.subr.bf16.mxu0 0
      %3128 = vmatpush1.bf16.msra.mxu0 0
      %3129 = vmatprep.subr.bf16.mxu0 0
      %3130 = vmatpush1.bf16.msra.mxu0 0
      %3131 = vmatprep.subr.bf16.mxu0 0
      %3132 = vmatpush1.bf16.msra.mxu0 0
      %3133 = vmatprep.subr.bf16.mxu0 0
      %3134 = vmatpush1.bf16.msra.mxu0 0
      %3135 = vmatprep.subr.bf16.mxu0 0
      %3136 = vmatpush1.bf16.msra.mxu0 0
      %3137 = vmatprep.subr.bf16.mxu0 0
      %3138 = vmatpush1.bf16.msra.mxu0 0
      %3139 = vmatprep.subr.bf16.mxu0 0
      %3140 = vmatpush1.bf16.msra.mxu0 0
      %3141 = vmatprep.subr.bf16.mxu0 0
      %3142 = vmatpush1.bf16.msra.mxu0 0
      %3143 = vmatprep.subr.bf16.mxu0 0
      %3144 = vmatpush1.bf16.msra.mxu0 0
      %3145 = vmatprep.subr.bf16.mxu0 0
      %3146 = vmatpush1.bf16.msra.mxu0 0
      %3147 = vmatprep.subr.bf16.mxu0 0
      %3148 = vmatpush1.bf16.msra.mxu0 0
      %3149 = vmatprep.subr.bf16.mxu0 0
      %3150 = vmatpush1.bf16.msra.mxu0 0
      %3151 = vmatprep.mubr.bf16.mxu0 0
      %3152 = vmatmul.mubr.bf16.gmra.mrb[0].mxu0 %v3061
      %v3153 = vpop.f32.mrb[0].mxu0
      %v3154 = vadd.f32 0.0, %v3153
      %v3155 = vpop.f32.mrb[0].mxu0
      %v3156 = vpop.f32.mrb[0].mxu0
      %v3157 = vadd.f32 0.0, %v3156
      %v3158 = vpop.f32.mrb[0].mxu0
      %3159 = vmatprep.mubr.bf16.mxu0 0
      %3160 = vmatmul.mubr.bf16.gmra.mrb[0].mxu0 %v3064
      %v3161 = vpop.f32.mrb[0].mxu0
      %v3162 = vadd.f32 0.0, %v3161
      %v3163 = vpop.f32.mrb[0].mxu0
      %v3164 = vpop.f32.mrb[0].mxu0
      %v3165 = vadd.f32 0.0, %v3164
      %v3166 = vpop.f32.mrb[0].mxu0
      %3167 = vdwg.mxu0
      %v3168 = vadd.f32 %v2936, %v3101
      %v3169 = vadd.f32 %v2938, %v3103
      %v3170 = vadd.f32 %v2989, %v3154
      %v3171 = vadd.f32 %v2940, %v3105
      %v3172 = vadd.f32 %v2942, %v3107
      %v3173 = vadd.f32 %v2992, %v3157
      %v3174 = vadd.f32 %v2946, %v3111
      %v3175 = vadd.f32 %v2948, %v3113
      %v3176 = vadd.f32 %v2997, %v3162
      %v3177 = vadd.f32 %v2950, %v3115
      %v3178 = vadd.f32 %v2952, %v3117
      %v3179 = vadd.f32 %v3000, %v3165
      %s3180 = scalar_lea.vmem %s5, 192
      %v3181 = vld [vmem:[%s3180] sm:$0xf]
      %v3182 = vld [vmem:[%s3180 + $0x4] sm:$0xf]
      %v3183 = vld [vmem:[%s3180 + $0x8] sm:$0xf]
      %v3184 = vld [vmem:[%s3180 + $0xc] sm:$0xf]
      %3185 = vrot.lane.b32.xlu0 %v2577, 1
      %v3186 = vpop.permute.xlu0 %3185
      %3187 = vrot.lane.b32.xlu0 %v2580, 1
      %v3188 = vpop.permute.xlu0 %3187
      %3189 = vrot.lane.b32.xlu0 %v2583, 1
      %v3190 = vpop.permute.xlu0 %3189
      %3191 = vrot.lane.b32.xlu0 %v2586, 1
      %v3192 = vpop.permute.xlu0 %3191
      %3193 = vrot.lane.b32.xlu0 %v2578, 1
      %v3194 = vpop.permute.xlu0 %3193
      %3195 = vrot.lane.b32.xlu0 %v2581, 1
      %v3196 = vpop.permute.xlu0 %3195
      %3197 = vrot.lane.b32.xlu0 %v2584, 1
      %v3198 = vpop.permute.xlu0 %3197
      %3199 = vrot.lane.b32.xlu0 %v2587, 1
      %v3200 = vpop.permute.xlu0 %3199
      %3201 = vrot.lane.b32.xlu0 %v2579, 1
      %v3202 = vpop.permute.xlu0 %3201
      %3203 = vrot.lane.b32.xlu0 %v2582, 1
      %v3204 = vpop.permute.xlu0 %3203
      %3205 = vrot.lane.b32.xlu0 %v2585, 1
      %v3206 = vpop.permute.xlu0 %3205
      %3207 = vrot.lane.b32.xlu0 %v2588, 1
      %v3208 = vpop.permute.xlu0 %3207
      %v3209 = vsel %vm1204, %v3194, %v3202
      %v3210 = vsel %vm1204, %v3196, %v3204
      %v3211 = vsel %vm1204, %v3198, %v3206
      %v3212 = vsel %vm1204, %v3200, %v3208
      %v3213 = vsel %vm1204, %v3186, %v3194
      %v3214 = vsel %vm1204, %v3188, %v3196
      %v3215 = vsel %vm1204, %v3190, %v3198
      %v3216 = vsel %vm1204, %v3192, %v3200
      %v3217 = vsel %vm1204, %v3202, %v3186
      %v3218 = vsel %vm1204, %v3204, %v3188
      %v3219 = vsel %vm1204, %v3206, %v3190
      %v3220 = vsel %vm1204, %v3208, %v3192
      %v3221 = vpack.c.bf16 %v3218, %v3217
      %v3222 = vpack.c.bf16 %v3214, %v3213
      %v3223 = vpack.c.bf16 %v3210, %v3209
      %v3224 = vpack.c.bf16 %v3220, %v3219
      %v3225 = vpack.c.bf16 %v3216, %v3215
      %v3226 = vpack.c.bf16 %v3212, %v3211
      %v3231 = vunpack.c.l.b16 %v3181
      %v3232 = vunpack.c.l.b16 %v3182
      %v3233 = vunpack.c.l.b16 %v3183
      %v3234 = vunpack.c.l.b16 %v3184
      %v3235 = vpack.c.b16 %v3232, %v3231
      %v3236 = vpack.c.b16 %v3234, %v3233
      %v3238 = vsel %vm770, %v3235, 0
      %v3241 = vsel %vm770, %v3236, 0
      %3243 = vmatprep.subr.bf16.mxu0 %v3222
      %3244 = vmatpush1.bf16.msra.mxu0 %v3221
      %3245 = vmatprep.subr.bf16.mxu0 %v3225
      %3246 = vmatpush1.bf16.msra.mxu0 %v3224
      %3247 = vmatprep.subr.bf16.mxu0 0
      %3248 = vmatpush1.bf16.msra.mxu0 0
      %3249 = vmatprep.subr.bf16.mxu0 0
      %3250 = vmatpush1.bf16.msra.mxu0 0
      %3251 = vmatprep.subr.bf16.mxu0 0
      %3252 = vmatpush1.bf16.msra.mxu0 0
      %3253 = vmatprep.subr.bf16.mxu0 0
      %3254 = vmatpush1.bf16.msra.mxu0 0
      %3255 = vmatprep.subr.bf16.mxu0 0
      %3256 = vmatpush1.bf16.msra.mxu0 0
      %3257 = vmatprep.subr.bf16.mxu0 0
      %3258 = vmatpush1.bf16.msra.mxu0 0
      %3259 = vmatprep.subr.bf16.mxu0 0
      %3260 = vmatpush1.bf16.msra.mxu0 0
      %3261 = vmatprep.subr.bf16.mxu0 0
      %3262 = vmatpush1.bf16.msra.mxu0 0
      %3263 = vmatprep.subr.bf16.mxu0 0
      %3264 = vmatpush1.bf16.msra.mxu0 0
      %3265 = vmatprep.subr.bf16.mxu0 0
      %3266 = vmatpush1.bf16.msra.mxu0 0
      %3267 = vmatprep.subr.bf16.mxu0 0
      %3268 = vmatpush1.bf16.msra.mxu0 0
      %3269 = vmatprep.subr.bf16.mxu0 0
      %3270 = vmatpush1.bf16.msra.mxu0 0
      %3271 = vmatprep.subr.bf16.mxu0 0
      %3272 = vmatpush1.bf16.msra.mxu0 0
      %3273 = vmatprep.subr.bf16.mxu0 0
      %3274 = vmatpush1.bf16.msra.mxu0 0
      %3275 = vmatprep.mubr.bf16.mxu0 0
      %3276 = vmatmul.mubr.bf16.gmra.mrb[0].mxu0 %v3238
      %v3277 = vpop.f32.mrb[0].mxu0
      %v3278 = vadd.f32 0.0, %v3277
      %v3279 = vpop.f32.mrb[0].mxu0
      %v3280 = vadd.f32 0.0, %v3279
      %v3281 = vpop.f32.mrb[0].mxu0
      %v3282 = vadd.f32 0.0, %v3281
      %v3283 = vpop.f32.mrb[0].mxu0
      %v3284 = vadd.f32 0.0, %v3283
      %3285 = vmatprep.mubr.bf16.mxu0 0
      %3286 = vmatmul.mubr.bf16.gmra.mrb[0].mxu0 %v3241
      %v3287 = vpop.f32.mrb[0].mxu0
      %v3288 = vadd.f32 0.0, %v3287
      %v3289 = vpop.f32.mrb[0].mxu0
      %v3290 = vadd.f32 0.0, %v3289
      %v3291 = vpop.f32.mrb[0].mxu0
      %v3292 = vadd.f32 0.0, %v3291
      %v3293 = vpop.f32.mrb[0].mxu0
      %v3294 = vadd.f32 0.0, %v3293
      %3295 = vdwg.mxu0
      %3296 = vmatprep.subr.bf16.mxu0 0
      %3297 = vmatpush1.bf16.msra.mxu0 %v3223
      %3298 = vmatprep.subr.bf16.mxu0 0
      %3299 = vmatpush1.bf16.msra.mxu0 %v3226
      %3300 = vmatprep.subr.bf16.mxu0 0
      %3301 = vmatpush1.bf16.msra.mxu0 0
      %3302 = vmatprep.subr.bf16.mxu0 0
      %3303 = vmatpush1.bf16.msra.mxu0 0
      %3304 = vmatprep.subr.bf16.mxu0 0
      %3305 = vmatpush1.bf16.msra.mxu0 0
      %3306 = vmatprep.subr.bf16.mxu0 0
      %3307 = vmatpush1.bf16.msra.mxu0 0
      %3308 = vmatprep.subr.bf16.mxu0 0
      %3309 = vmatpush1.bf16.msra.mxu0 0
      %3310 = vmatprep.subr.bf16.mxu0 0
      %3311 = vmatpush1.bf16.msra.mxu0 0
      %3312 = vmatprep.subr.bf16.mxu0 0
      %3313 = vmatpush1.bf16.msra.mxu0 0
      %3314 = vmatprep.subr.bf16.mxu0 0
      %3315 = vmatpush1.bf16.msra.mxu0 0
      %3316 = vmatprep.subr.bf16.mxu0 0
      %3317 = vmatpush1.bf16.msra.mxu0 0
      %3318 = vmatprep.subr.bf16.mxu0 0
      %3319 = vmatpush1.bf16.msra.mxu0 0
      %3320 = vmatprep.subr.bf16.mxu0 0
      %3321 = vmatpush1.bf16.msra.mxu0 0
      %3322 = vmatprep.subr.bf16.mxu0 0
      %3323 = vmatpush1.bf16.msra.mxu0 0
      %3324 = vmatprep.subr.bf16.mxu0 0
      %3325 = vmatpush1.bf16.msra.mxu0 0
      %3326 = vmatprep.subr.bf16.mxu0 0
      %3327 = vmatpush1.bf16.msra.mxu0 0
      %3328 = vmatprep.mubr.bf16.mxu0 0
      %3329 = vmatmul.mubr.bf16.gmra.mrb[0].mxu0 %v3238
      %v3330 = vpop.f32.mrb[0].mxu0
      %v3331 = vadd.f32 0.0, %v3330
      %v3332 = vpop.f32.mrb[0].mxu0
      %v3333 = vpop.f32.mrb[0].mxu0
      %v3334 = vadd.f32 0.0, %v3333
      %v3335 = vpop.f32.mrb[0].mxu0
      %3336 = vmatprep.mubr.bf16.mxu0 0
      %3337 = vmatmul.mubr.bf16.gmra.mrb[0].mxu0 %v3241
      %v3338 = vpop.f32.mrb[0].mxu0
      %v3339 = vadd.f32 0.0, %v3338
      %v3340 = vpop.f32.mrb[0].mxu0
      %v3341 = vpop.f32.mrb[0].mxu0
      %v3342 = vadd.f32 0.0, %v3341
      %v3343 = vpop.f32.mrb[0].mxu0
      %3344 = vdwg.mxu0
      %v3345 = vadd.f32 %v3168, %v3278
      %v3346 = vadd.f32 %v3169, %v3280
      %v3347 = vadd.f32 %v3170, %v3331
      %v3348 = vadd.f32 %v3171, %v3282
      %v3349 = vadd.f32 %v3172, %v3284
      %v3350 = vadd.f32 %v3173, %v3334
      %v3351 = vadd.f32 %v3174, %v3288
      %v3352 = vadd.f32 %v3175, %v3290
      %v3353 = vadd.f32 %v3176, %v3339
      %v3354 = vadd.f32 %v3177, %v3292
      %v3355 = vadd.f32 %v3178, %v3294
      %v3356 = vadd.f32 %v3179, %v3342
      %s3357 = scalar_lea.vmem %s5, 208
      %v3358 = vld [vmem:[%s3357] sm:$0xf]
      %v3359 = vld [vmem:[%s3357 + $0x4] sm:$0xf]
      %v3360 = vld [vmem:[%s3357 + $0x8] sm:$0xf]
      %v3361 = vld [vmem:[%s3357 + $0xc] sm:$0xf]
      %v3362 = vpack.c.bf16 %v2580, %v2577
      %v3363 = vpack.c.bf16 %v2581, %v2578
      %v3364 = vpack.c.bf16 %v2582, %v2579
      %v3365 = vpack.c.bf16 %v2586, %v2583
      %v3366 = vpack.c.bf16 %v2587, %v2584
      %v3367 = vpack.c.bf16 %v2588, %v2585
      %v3372 = vunpack.c.l.b16 %v3358
      %v3373 = vunpack.c.l.b16 %v3359
      %v3374 = vunpack.c.l.b16 %v3360
      %v3375 = vunpack.c.l.b16 %v3361
      %v3376 = vpack.c.b16 %v3373, %v3372
      %v3377 = vpack.c.b16 %v3375, %v3374
      %v3379 = vsel %vm770, %v3376, 0
      %v3382 = vsel %vm770, %v3377, 0
      %3384 = vmatprep.subr.bf16.mxu0 %v3363
      %3385 = vmatpush1.bf16.msra.mxu0 %v3362
      %3386 = vmatprep.subr.bf16.mxu0 %v3366
      %3387 = vmatpush1.bf16.msra.mxu0 %v3365
      %3388 = vmatprep.subr.bf16.mxu0 0
      %3389 = vmatpush1.bf16.msra.mxu0 0
      %3390 = vmatprep.subr.bf16.mxu0 0
      %3391 = vmatpush1.bf16.msra.mxu0 0
      %3392 = vmatprep.subr.bf16.mxu0 0
      %3393 = vmatpush1.bf16.msra.mxu0 0
      %3394 = vmatprep.subr.bf16.mxu0 0
      %3395 = vmatpush1.bf16.msra.mxu0 0
      %3396 = vmatprep.subr.bf16.mxu0 0
      %3397 = vmatpush1.bf16.msra.mxu0 0
      %3398 = vmatprep.subr.bf16.mxu0 0
      %3399 = vmatpush1.bf16.msra.mxu0 0
      %3400 = vmatprep.subr.bf16.mxu0 0
      %3401 = vmatpush1.bf16.msra.mxu0 0
      %3402 = vmatprep.subr.bf16.mxu0 0
      %3403 = vmatpush1.bf16.msra.mxu0 0
      %3404 = vmatprep.subr.bf16.mxu0 0
      %3405 = vmatpush1.bf16.msra.mxu0 0
      %3406 = vmatprep.subr.bf16.mxu0 0
      %3407 = vmatpush1.bf16.msra.mxu0 0
      %3408 = vmatprep.subr.bf16.mxu0 0
      %3409 = vmatpush1.bf16.msra.mxu0 0
      %3410 = vmatprep.subr.bf16.mxu0 0
      %3411 = vmatpush1.bf16.msra.mxu0 0
      %3412 = vmatprep.subr.bf16.mxu0 0
      %3413 = vmatpush1.bf16.msra.mxu0 0
      %3414 = vmatprep.subr.bf16.mxu0 0
      %3415 = vmatpush1.bf16.msra.mxu0 0
      %3416 = vmatprep.mubr.bf16.mxu0 0
      %3417 = vmatmul.mubr.bf16.gmra.mrb[0].mxu0 %v3379
      %v3418 = vpop.f32.mrb[0].mxu0
      %v3419 = vadd.f32 0.0, %v3418
      %v3420 = vpop.f32.mrb[0].mxu0
      %v3421 = vadd.f32 0.0, %v3420
      %v3422 = vpop.f32.mrb[0].mxu0
      %v3423 = vadd.f32 0.0, %v3422
      %v3424 = vpop.f32.mrb[0].mxu0
      %v3425 = vadd.f32 0.0, %v3424
      %3426 = vmatprep.mubr.bf16.mxu0 0
      %3427 = vmatmul.mubr.bf16.gmra.mrb[0].mxu0 %v3382
      %v3428 = vpop.f32.mrb[0].mxu0
      %v3429 = vadd.f32 0.0, %v3428
      %v3430 = vpop.f32.mrb[0].mxu0
      %v3431 = vadd.f32 0.0, %v3430
      %v3432 = vpop.f32.mrb[0].mxu0
      %v3433 = vadd.f32 0.0, %v3432
      %v3434 = vpop.f32.mrb[0].mxu0
      %v3435 = vadd.f32 0.0, %v3434
      %3436 = vdwg.mxu0
      %3437 = vmatprep.subr.bf16.mxu0 0
      %3438 = vmatpush1.bf16.msra.mxu0 %v3364
      %3439 = vmatprep.subr.bf16.mxu0 0
      %3440 = vmatpush1.bf16.msra.mxu0 %v3367
      %3441 = vmatprep.subr.bf16.mxu0 0
      %3442 = vmatpush1.bf16.msra.mxu0 0
      %3443 = vmatprep.subr.bf16.mxu0 0
      %3444 = vmatpush1.bf16.msra.mxu0 0
      %3445 = vmatprep.subr.bf16.mxu0 0
      %3446 = vmatpush1.bf16.msra.mxu0 0
      %3447 = vmatprep.subr.bf16.mxu0 0
      %3448 = vmatpush1.bf16.msra.mxu0 0
      %3449 = vmatprep.subr.bf16.mxu0 0
      %3450 = vmatpush1.bf16.msra.mxu0 0
      %3451 = vmatprep.subr.bf16.mxu0 0
      %3452 = vmatpush1.bf16.msra.mxu0 0
      %3453 = vmatprep.subr.bf16.mxu0 0
      %3454 = vmatpush1.bf16.msra.mxu0 0
      %3455 = vmatprep.subr.bf16.mxu0 0
      %3456 = vmatpush1.bf16.msra.mxu0 0
      %3457 = vmatprep.subr.bf16.mxu0 0
      %3458 = vmatpush1.bf16.msra.mxu0 0
      %3459 = vmatprep.subr.bf16.mxu0 0
      %3460 = vmatpush1.bf16.msra.mxu0 0
      %3461 = vmatprep.subr.bf16.mxu0 0
      %3462 = vmatpush1.bf16.msra.mxu0 0
      %3463 = vmatprep.subr.bf16.mxu0 0
      %3464 = vmatpush1.bf16.msra.mxu0 0
      %3465 = vmatprep.subr.bf16.mxu0 0
      %3466 = vmatpush1.bf16.msra.mxu0 0
      %3467 = vmatprep.subr.bf16.mxu0 0
      %3468 = vmatpush1.bf16.msra.mxu0 0
      %3469 = vmatprep.mubr.bf16.mxu0 0
      %3470 = vmatmul.mubr.bf16.gmra.mrb[0].mxu0 %v3379
      %v3471 = vpop.f32.mrb[0].mxu0
      %v3472 = vadd.f32 0.0, %v3471
      %v3473 = vpop.f32.mrb[0].mxu0
      %v3474 = vpop.f32.mrb[0].mxu0
      %v3475 = vadd.f32 0.0, %v3474
      %v3476 = vpop.f32.mrb[0].mxu0
      %3477 = vmatprep.mubr.bf16.mxu0 0
      %3478 = vmatmul.mubr.bf16.gmra.mrb[0].mxu0 %v3382
      %v3479 = vpop.f32.mrb[0].mxu0
      %v3480 = vadd.f32 0.0, %v3479
      %v3481 = vpop.f32.mrb[0].mxu0
      %v3482 = vpop.f32.mrb[0].mxu0
      %v3483 = vadd.f32 0.0, %v3482
      %v3484 = vpop.f32.mrb[0].mxu0
      %3485 = vdwg.mxu0
      %v3486 = vadd.f32 %v3345, %v3419
      %v3487 = vadd.f32 %v3346, %v3421
      %v3488 = vadd.f32 %v3347, %v3472
      %v3489 = vadd.f32 %v3348, %v3423
      %v3490 = vadd.f32 %v3349, %v3425
      %v3491 = vadd.f32 %v3350, %v3475
      %v3492 = vadd.f32 %v3351, %v3429
      %v3493 = vadd.f32 %v3352, %v3431
      %v3494 = vadd.f32 %v3353, %v3480
      %v3495 = vadd.f32 %v3354, %v3433
      %v3496 = vadd.f32 %v3355, %v3435
      %v3497 = vadd.f32 %v3356, %v3483
      %s3498 = scalar_lea.vmem %s5, 224
      %v3499 = vld [vmem:[%s3498] sm:$0xf]
      %v3500 = vld [vmem:[%s3498 + $0x4] sm:$0xf]
      %v3501 = vld [vmem:[%s3498 + $0x8] sm:$0xf]
      %v3502 = vld [vmem:[%s3498 + $0xc] sm:$0xf]
      %3503 = vrot.lane.b32.xlu0 %v2577, 127
      %v3504 = vpop.permute.xlu0 %3503
      %3505 = vrot.lane.b32.xlu0 %v2580, 127
      %v3506 = vpop.permute.xlu0 %3505
      %3507 = vrot.lane.b32.xlu0 %v2583, 127
      %v3508 = vpop.permute.xlu0 %3507
      %3509 = vrot.lane.b32.xlu0 %v2586, 127
      %v3510 = vpop.permute.xlu0 %3509
      %3511 = vrot.lane.b32.xlu0 %v2578, 127
      %v3512 = vpop.permute.xlu0 %3511
      %3513 = vrot.lane.b32.xlu0 %v2581, 127
      %v3514 = vpop.permute.xlu0 %3513
      %3515 = vrot.lane.b32.xlu0 %v2584, 127
      %v3516 = vpop.permute.xlu0 %3515
      %3517 = vrot.lane.b32.xlu0 %v2587, 127
      %v3518 = vpop.permute.xlu0 %3517
      %3519 = vrot.lane.b32.xlu0 %v2579, 127
      %v3520 = vpop.permute.xlu0 %3519
      %3521 = vrot.lane.b32.xlu0 %v2582, 127
      %v3522 = vpop.permute.xlu0 %3521
      %3523 = vrot.lane.b32.xlu0 %v2585, 127
      %v3524 = vpop.permute.xlu0 %3523
      %3525 = vrot.lane.b32.xlu0 %v2588, 127
      %v3526 = vpop.permute.xlu0 %3525
      %v3527 = vsel %vm1523, %v3512, %v3520
      %v3528 = vsel %vm1523, %v3514, %v3522
      %v3529 = vsel %vm1523, %v3516, %v3524
      %v3530 = vsel %vm1523, %v3518, %v3526
      %v3531 = vsel %vm1523, %v3504, %v3512
      %v3532 = vsel %vm1523, %v3506, %v3514
      %v3533 = vsel %vm1523, %v3508, %v3516
      %v3534 = vsel %vm1523, %v3510, %v3518
      %v3535 = vsel %vm1523, %v3520, %v3504
      %v3536 = vsel %vm1523, %v3522, %v3506
      %v3537 = vsel %vm1523, %v3524, %v3508
      %v3538 = vsel %vm1523, %v3526, %v3510
      %v3539 = vpack.c.bf16 %v3532, %v3531
      %v3540 = vpack.c.bf16 %v3528, %v3527
      %v3541 = vpack.c.bf16 %v3536, %v3535
      %v3542 = vpack.c.bf16 %v3534, %v3533
      %v3543 = vpack.c.bf16 %v3530, %v3529
      %v3544 = vpack.c.bf16 %v3538, %v3537
      %v3549 = vunpack.c.l.b16 %v3499
      %v3550 = vunpack.c.l.b16 %v3500
      %v3551 = vunpack.c.l.b16 %v3501
      %v3552 = vunpack.c.l.b16 %v3502
      %v3553 = vpack.c.b16 %v3550, %v3549
      %v3554 = vpack.c.b16 %v3552, %v3551
      %v3556 = vsel %vm770, %v3553, 0
      %v3559 = vsel %vm770, %v3554, 0
      %3561 = vmatprep.subr.bf16.mxu0 %v3540
      %3562 = vmatpush1.bf16.msra.mxu0 %v3539
      %3563 = vmatprep.subr.bf16.mxu0 %v3543
      %3564 = vmatpush1.bf16.msra.mxu0 %v3542
      %3565 = vmatprep.subr.bf16.mxu0 0
      %3566 = vmatpush1.bf16.msra.mxu0 0
      %3567 = vmatprep.subr.bf16.mxu0 0
      %3568 = vmatpush1.bf16.msra.mxu0 0
      %3569 = vmatprep.subr.bf16.mxu0 0
      %3570 = vmatpush1.bf16.msra.mxu0 0
      %3571 = vmatprep.subr.bf16.mxu0 0
      %3572 = vmatpush1.bf16.msra.mxu0 0
      %3573 = vmatprep.subr.bf16.mxu0 0
      %3574 = vmatpush1.bf16.msra.mxu0 0
      %3575 = vmatprep.subr.bf16.mxu0 0
      %3576 = vmatpush1.bf16.msra.mxu0 0
      %3577 = vmatprep.subr.bf16.mxu0 0
      %3578 = vmatpush1.bf16.msra.mxu0 0
      %3579 = vmatprep.subr.bf16.mxu0 0
      %3580 = vmatpush1.bf16.msra.mxu0 0
      %3581 = vmatprep.subr.bf16.mxu0 0
      %3582 = vmatpush1.bf16.msra.mxu0 0
      %3583 = vmatprep.subr.bf16.mxu0 0
      %3584 = vmatpush1.bf16.msra.mxu0 0
      %3585 = vmatprep.subr.bf16.mxu0 0
      %3586 = vmatpush1.bf16.msra.mxu0 0
      %3587 = vmatprep.subr.bf16.mxu0 0
      %3588 = vmatpush1.bf16.msra.mxu0 0
      %3589 = vmatprep.subr.bf16.mxu0 0
      %3590 = vmatpush1.bf16.msra.mxu0 0
      %3591 = vmatprep.subr.bf16.mxu0 0
      %3592 = vmatpush1.bf16.msra.mxu0 0
      %3593 = vmatprep.mubr.bf16.mxu0 0
      %3594 = vmatmul.mubr.bf16.gmra.mrb[0].mxu0 %v3556
      %v3595 = vpop.f32.mrb[0].mxu0
      %v3596 = vadd.f32 0.0, %v3595
      %v3597 = vpop.f32.mrb[0].mxu0
      %v3598 = vadd.f32 0.0, %v3597
      %v3599 = vpop.f32.mrb[0].mxu0
      %v3600 = vadd.f32 0.0, %v3599
      %v3601 = vpop.f32.mrb[0].mxu0
      %v3602 = vadd.f32 0.0, %v3601
      %3603 = vmatprep.mubr.bf16.mxu0 0
      %3604 = vmatmul.mubr.bf16.gmra.mrb[0].mxu0 %v3559
      %v3605 = vpop.f32.mrb[0].mxu0
      %v3606 = vadd.f32 0.0, %v3605
      %v3607 = vpop.f32.mrb[0].mxu0
      %v3608 = vadd.f32 0.0, %v3607
      %v3609 = vpop.f32.mrb[0].mxu0
      %v3610 = vadd.f32 0.0, %v3609
      %v3611 = vpop.f32.mrb[0].mxu0
      %v3612 = vadd.f32 0.0, %v3611
      %3613 = vdwg.mxu0
      %3614 = vmatprep.subr.bf16.mxu0 0
      %3615 = vmatpush1.bf16.msra.mxu0 %v3541
      %3616 = vmatprep.subr.bf16.mxu0 0
      %3617 = vmatpush1.bf16.msra.mxu0 %v3544
      %3618 = vmatprep.subr.bf16.mxu0 0
      %3619 = vmatpush1.bf16.msra.mxu0 0
      %3620 = vmatprep.subr.bf16.mxu0 0
      %3621 = vmatpush1.bf16.msra.mxu0 0
      %3622 = vmatprep.subr.bf16.mxu0 0
      %3623 = vmatpush1.bf16.msra.mxu0 0
      %3624 = vmatprep.subr.bf16.mxu0 0
      %3625 = vmatpush1.bf16.msra.mxu0 0
      %3626 = vmatprep.subr.bf16.mxu0 0
      %3627 = vmatpush1.bf16.msra.mxu0 0
      %3628 = vmatprep.subr.bf16.mxu0 0
      %3629 = vmatpush1.bf16.msra.mxu0 0
      %3630 = vmatprep.subr.bf16.mxu0 0
      %3631 = vmatpush1.bf16.msra.mxu0 0
      %3632 = vmatprep.subr.bf16.mxu0 0
      %3633 = vmatpush1.bf16.msra.mxu0 0
      %3634 = vmatprep.subr.bf16.mxu0 0
      %3635 = vmatpush1.bf16.msra.mxu0 0
      %3636 = vmatprep.subr.bf16.mxu0 0
      %3637 = vmatpush1.bf16.msra.mxu0 0
      %3638 = vmatprep.subr.bf16.mxu0 0
      %3639 = vmatpush1.bf16.msra.mxu0 0
      %3640 = vmatprep.subr.bf16.mxu0 0
      %3641 = vmatpush1.bf16.msra.mxu0 0
      %3642 = vmatprep.subr.bf16.mxu0 0
      %3643 = vmatpush1.bf16.msra.mxu0 0
      %3644 = vmatprep.subr.bf16.mxu0 0
      %3645 = vmatpush1.bf16.msra.mxu0 0
      %3646 = vmatprep.mubr.bf16.mxu0 0
      %3647 = vmatmul.mubr.bf16.gmra.mrb[0].mxu0 %v3556
      %v3648 = vpop.f32.mrb[0].mxu0
      %v3649 = vadd.f32 0.0, %v3648
      %v3650 = vpop.f32.mrb[0].mxu0
      %v3651 = vpop.f32.mrb[0].mxu0
      %v3652 = vadd.f32 0.0, %v3651
      %v3653 = vpop.f32.mrb[0].mxu0
      %3654 = vmatprep.mubr.bf16.mxu0 0
      %3655 = vmatmul.mubr.bf16.gmra.mrb[0].mxu0 %v3559
      %v3656 = vpop.f32.mrb[0].mxu0
      %v3657 = vadd.f32 0.0, %v3656
      %v3658 = vpop.f32.mrb[0].mxu0
      %v3659 = vpop.f32.mrb[0].mxu0
      %v3660 = vadd.f32 0.0, %v3659
      %v3661 = vpop.f32.mrb[0].mxu0
      %3662 = vdwg.mxu0
      %v3663 = vadd.f32 %v3486, %v3596
      %v3664 = vadd.f32 %v3487, %v3598
      %v3665 = vadd.f32 %v3488, %v3649
      %v3666 = vadd.f32 %v3489, %v3600
      %v3667 = vadd.f32 %v3490, %v3602
      %v3668 = vadd.f32 %v3491, %v3652
      %v3669 = vadd.f32 %v3492, %v3606
      %v3670 = vadd.f32 %v3493, %v3608
      %v3671 = vadd.f32 %v3494, %v3657
      %v3672 = vadd.f32 %v3495, %v3610
      %v3673 = vadd.f32 %v3496, %v3612
      %v3674 = vadd.f32 %v3497, %v3660
      %s3675 = scalar_lea.vmem %s5, 240
      %v3676 = vld [vmem:[%s3675] sm:$0xf]
      %v3677 = vld [vmem:[%s3675 + $0x4] sm:$0xf]
      %v3678 = vld [vmem:[%s3675 + $0x8] sm:$0xf]
      %v3679 = vld [vmem:[%s3675 + $0xc] sm:$0xf]
      %3680 = vrot.lane.b32.xlu0 %v2577, 111
      %v3681 = vpop.permute.xlu0 %3680
      %3682 = vrot.lane.b32.xlu0 %v2580, 111
      %v3683 = vpop.permute.xlu0 %3682
      %3684 = vrot.lane.b32.xlu0 %v2583, 111
      %v3685 = vpop.permute.xlu0 %3684
      %3686 = vrot.lane.b32.xlu0 %v2586, 111
      %v3687 = vpop.permute.xlu0 %3686
      %3688 = vrot.lane.b32.xlu0 %v2578, 111
      %v3689 = vpop.permute.xlu0 %3688
      %3690 = vrot.lane.b32.xlu0 %v2581, 111
      %v3691 = vpop.permute.xlu0 %3690
      %3692 = vrot.lane.b32.xlu0 %v2584, 111
      %v3693 = vpop.permute.xlu0 %3692
      %3694 = vrot.lane.b32.xlu0 %v2587, 111
      %v3695 = vpop.permute.xlu0 %3694
      %3696 = vrot.lane.b32.xlu0 %v2579, 111
      %v3697 = vpop.permute.xlu0 %3696
      %3698 = vrot.lane.b32.xlu0 %v2582, 111
      %v3699 = vpop.permute.xlu0 %3698
      %3700 = vrot.lane.b32.xlu0 %v2585, 111
      %v3701 = vpop.permute.xlu0 %3700
      %3702 = vrot.lane.b32.xlu0 %v2588, 111
      %v3703 = vpop.permute.xlu0 %3702
      %v3704 = vsel %vm1701, %v3689, %v3697
      %v3705 = vsel %vm1701, %v3691, %v3699
      %v3706 = vsel %vm1701, %v3693, %v3701
      %v3707 = vsel %vm1701, %v3695, %v3703
      %v3708 = vsel %vm1701, %v3681, %v3689
      %v3709 = vsel %vm1701, %v3683, %v3691
      %v3710 = vsel %vm1701, %v3685, %v3693
      %v3711 = vsel %vm1701, %v3687, %v3695
      %v3712 = vsel %vm1701, %v3697, %v3681
      %v3713 = vsel %vm1701, %v3699, %v3683
      %v3714 = vsel %vm1701, %v3701, %v3685
      %v3715 = vsel %vm1701, %v3703, %v3687
      %v3716 = vpack.c.bf16 %v3709, %v3708
      %v3717 = vpack.c.bf16 %v3705, %v3704
      %v3718 = vpack.c.bf16 %v3713, %v3712
      %v3719 = vpack.c.bf16 %v3711, %v3710
      %v3720 = vpack.c.bf16 %v3707, %v3706
      %v3721 = vpack.c.bf16 %v3715, %v3714
      %v3726 = vunpack.c.l.b16 %v3676
      %v3727 = vunpack.c.l.b16 %v3677
      %v3728 = vunpack.c.l.b16 %v3678
      %v3729 = vunpack.c.l.b16 %v3679
      %v3730 = vpack.c.b16 %v3727, %v3726
      %v3731 = vpack.c.b16 %v3729, %v3728
      %v3733 = vsel %vm770, %v3730, 0
      %v3736 = vsel %vm770, %v3731, 0
      %3738 = vmatprep.subr.bf16.mxu0 %v3717
      %3739 = vmatpush1.bf16.msra.mxu0 %v3716
      %3740 = vmatprep.subr.bf16.mxu0 %v3720
      %3741 = vmatpush1.bf16.msra.mxu0 %v3719
      %3742 = vmatprep.subr.bf16.mxu0 0
      %3743 = vmatpush1.bf16.msra.mxu0 0
      %3744 = vmatprep.subr.bf16.mxu0 0
      %3745 = vmatpush1.bf16.msra.mxu0 0
      %3746 = vmatprep.subr.bf16.mxu0 0
      %3747 = vmatpush1.bf16.msra.mxu0 0
      %3748 = vmatprep.subr.bf16.mxu0 0
      %3749 = vmatpush1.bf16.msra.mxu0 0
      %3750 = vmatprep.subr.bf16.mxu0 0
      %3751 = vmatpush1.bf16.msra.mxu0 0
      %3752 = vmatprep.subr.bf16.mxu0 0
      %3753 = vmatpush1.bf16.msra.mxu0 0
      %3754 = vmatprep.subr.bf16.mxu0 0
      %3755 = vmatpush1.bf16.msra.mxu0 0
      %3756 = vmatprep.subr.bf16.mxu0 0
      %3757 = vmatpush1.bf16.msra.mxu0 0
      %3758 = vmatprep.subr.bf16.mxu0 0
      %3759 = vmatpush1.bf16.msra.mxu0 0
      %3760 = vmatprep.subr.bf16.mxu0 0
      %3761 = vmatpush1.bf16.msra.mxu0 0
      %3762 = vmatprep.subr.bf16.mxu0 0
      %3763 = vmatpush1.bf16.msra.mxu0 0
      %3764 = vmatprep.subr.bf16.mxu0 0
      %3765 = vmatpush1.bf16.msra.mxu0 0
      %3766 = vmatprep.subr.bf16.mxu0 0
      %3767 = vmatpush1.bf16.msra.mxu0 0
      %3768 = vmatprep.subr.bf16.mxu0 0
      %3769 = vmatpush1.bf16.msra.mxu0 0
      %3770 = vmatprep.mubr.bf16.mxu0 0
      %3771 = vmatmul.mubr.bf16.gmra.mrb[0].mxu0 %v3733
      %v3772 = vpop.f32.mrb[0].mxu0
      %v3773 = vadd.f32 0.0, %v3772
      %v3774 = vpop.f32.mrb[0].mxu0
      %v3775 = vadd.f32 0.0, %v3774
      %v3776 = vpop.f32.mrb[0].mxu0
      %v3777 = vadd.f32 0.0, %v3776
      %v3778 = vpop.f32.mrb[0].mxu0
      %v3779 = vadd.f32 0.0, %v3778
      %3780 = vmatprep.mubr.bf16.mxu0 0
      %3781 = vmatmul.mubr.bf16.gmra.mrb[0].mxu0 %v3736
      %v3782 = vpop.f32.mrb[0].mxu0
      %v3783 = vadd.f32 0.0, %v3782
      %v3784 = vpop.f32.mrb[0].mxu0
      %v3785 = vadd.f32 0.0, %v3784
      %v3786 = vpop.f32.mrb[0].mxu0
      %v3787 = vadd.f32 0.0, %v3786
      %v3788 = vpop.f32.mrb[0].mxu0
      %v3789 = vadd.f32 0.0, %v3788
      %3790 = vdwg.mxu0
      %3791 = vmatprep.subr.bf16.mxu0 0
      %3792 = vmatpush1.bf16.msra.mxu0 %v3718
      %3793 = vmatprep.subr.bf16.mxu0 0
      %3794 = vmatpush1.bf16.msra.mxu0 %v3721
      %3795 = vmatprep.subr.bf16.mxu0 0
      %3796 = vmatpush1.bf16.msra.mxu0 0
      %3797 = vmatprep.subr.bf16.mxu0 0
      %3798 = vmatpush1.bf16.msra.mxu0 0
      %3799 = vmatprep.subr.bf16.mxu0 0
      %3800 = vmatpush1.bf16.msra.mxu0 0
      %3801 = vmatprep.subr.bf16.mxu0 0
      %3802 = vmatpush1.bf16.msra.mxu0 0
      %3803 = vmatprep.subr.bf16.mxu0 0
      %3804 = vmatpush1.bf16.msra.mxu0 0
      %3805 = vmatprep.subr.bf16.mxu0 0
      %3806 = vmatpush1.bf16.msra.mxu0 0
      %3807 = vmatprep.subr.bf16.mxu0 0
      %3808 = vmatpush1.bf16.msra.mxu0 0
      %3809 = vmatprep.subr.bf16.mxu0 0
      %3810 = vmatpush1.bf16.msra.mxu0 0
      %3811 = vmatprep.subr.bf16.mxu0 0
      %3812 = vmatpush1.bf16.msra.mxu0 0
      %3813 = vmatprep.subr.bf16.mxu0 0
      %3814 = vmatpush1.bf16.msra.mxu0 0
      %3815 = vmatprep.subr.bf16.mxu0 0
      %3816 = vmatpush1.bf16.msra.mxu0 0
      %3817 = vmatprep.subr.bf16.mxu0 0
      %3818 = vmatpush1.bf16.msra.mxu0 0
      %3819 = vmatprep.subr.bf16.mxu0 0
      %3820 = vmatpush1.bf16.msra.mxu0 0
      %3821 = vmatprep.subr.bf16.mxu0 0
      %3822 = vmatpush1.bf16.msra.mxu0 0
      %3823 = vmatprep.mubr.bf16.mxu0 0
      %3824 = vmatmul.mubr.bf16.gmra.mrb[0].mxu0 %v3733
      %v3825 = vpop.f32.mrb[0].mxu0
      %v3826 = vadd.f32 0.0, %v3825
      %v3827 = vpop.f32.mrb[0].mxu0
      %v3828 = vpop.f32.mrb[0].mxu0
      %v3829 = vadd.f32 0.0, %v3828
      %v3830 = vpop.f32.mrb[0].mxu0
      %3831 = vmatprep.mubr.bf16.mxu0 0
      %3832 = vmatmul.mubr.bf16.gmra.mrb[0].mxu0 %v3736
      %v3833 = vpop.f32.mrb[0].mxu0
      %v3834 = vadd.f32 0.0, %v3833
      %v3835 = vpop.f32.mrb[0].mxu0
      %v3836 = vpop.f32.mrb[0].mxu0
      %v3837 = vadd.f32 0.0, %v3836
      %v3838 = vpop.f32.mrb[0].mxu0
      %3839 = vdwg.mxu0
      %v3840 = vadd.f32 %v3663, %v3773
      %v3841 = vadd.f32 %v3664, %v3775
      %v3842 = vadd.f32 %v3665, %v3826
      %v3843 = vadd.f32 %v3666, %v3777
      %v3844 = vadd.f32 %v3667, %v3779
      %v3845 = vadd.f32 %v3668, %v3829
      %v3846 = vadd.f32 %v3669, %v3783
      %v3847 = vadd.f32 %v3670, %v3785
      %v3848 = vadd.f32 %v3671, %v3834
      %v3849 = vadd.f32 %v3672, %v3787
      %v3850 = vadd.f32 %v3673, %v3789
      %v3851 = vadd.f32 %v3674, %v3837
      %s3852 = scalar_lea.vmem %s5, 256
      %v3853 = vld [vmem:[%s3852] sm:$0xf]
      %v3854 = vld [vmem:[%s3852 + $0x4] sm:$0xf]
      %v3855 = vld [vmem:[%s3852 + $0x8] sm:$0xf]
      %v3856 = vld [vmem:[%s3852 + $0xc] sm:$0xf]
      %3857 = vrot.lane.b32.xlu0 %v2577, 110
      %v3858 = vpop.permute.xlu0 %3857
      %3859 = vrot.lane.b32.xlu0 %v2580, 110
      %v3860 = vpop.permute.xlu0 %3859
      %3861 = vrot.lane.b32.xlu0 %v2583, 110
      %v3862 = vpop.permute.xlu0 %3861
      %3863 = vrot.lane.b32.xlu0 %v2586, 110
      %v3864 = vpop.permute.xlu0 %3863
      %3865 = vrot.lane.b32.xlu0 %v2578, 110
      %v3866 = vpop.permute.xlu0 %3865
      %3867 = vrot.lane.b32.xlu0 %v2581, 110
      %v3868 = vpop.permute.xlu0 %3867
      %3869 = vrot.lane.b32.xlu0 %v2584, 110
      %v3870 = vpop.permute.xlu0 %3869
      %3871 = vrot.lane.b32.xlu0 %v2587, 110
      %v3872 = vpop.permute.xlu0 %3871
      %3873 = vrot.lane.b32.xlu0 %v2579, 110
      %v3874 = vpop.permute.xlu0 %3873
      %3875 = vrot.lane.b32.xlu0 %v2582, 110
      %v3876 = vpop.permute.xlu0 %3875
      %3877 = vrot.lane.b32.xlu0 %v2585, 110
      %v3878 = vpop.permute.xlu0 %3877
      %3879 = vrot.lane.b32.xlu0 %v2588, 110
      %v3880 = vpop.permute.xlu0 %3879
      %v3881 = vsel %vm1879, %v3866, %v3874
      %v3882 = vsel %vm1879, %v3868, %v3876
      %v3883 = vsel %vm1879, %v3870, %v3878
      %v3884 = vsel %vm1879, %v3872, %v3880
      %v3885 = vsel %vm1879, %v3858, %v3866
      %v3886 = vsel %vm1879, %v3860, %v3868
      %v3887 = vsel %vm1879, %v3862, %v3870
      %v3888 = vsel %vm1879, %v3864, %v3872
      %v3889 = vsel %vm1879, %v3874, %v3858
      %v3890 = vsel %vm1879, %v3876, %v3860
      %v3891 = vsel %vm1879, %v3878, %v3862
      %v3892 = vsel %vm1879, %v3880, %v3864
      %v3893 = vpack.c.bf16 %v3886, %v3885
      %v3894 = vpack.c.bf16 %v3882, %v3881
      %v3895 = vpack.c.bf16 %v3890, %v3889
      %v3896 = vpack.c.bf16 %v3888, %v3887
      %v3897 = vpack.c.bf16 %v3884, %v3883
      %v3898 = vpack.c.bf16 %v3892, %v3891
      %v3903 = vunpack.c.l.b16 %v3853
      %v3904 = vunpack.c.l.b16 %v3854
      %v3905 = vunpack.c.l.b16 %v3855
      %v3906 = vunpack.c.l.b16 %v3856
      %v3907 = vpack.c.b16 %v3904, %v3903
      %v3908 = vpack.c.b16 %v3906, %v3905
      %v3910 = vsel %vm770, %v3907, 0
      %v3913 = vsel %vm770, %v3908, 0
      %3915 = vmatprep.subr.bf16.mxu0 %v3894
      %3916 = vmatpush1.bf16.msra.mxu0 %v3893
      %3917 = vmatprep.subr.bf16.mxu0 %v3897
      %3918 = vmatpush1.bf16.msra.mxu0 %v3896
      %3919 = vmatprep.subr.bf16.mxu0 0
      %3920 = vmatpush1.bf16.msra.mxu0 0
      %3921 = vmatprep.subr.bf16.mxu0 0
      %3922 = vmatpush1.bf16.msra.mxu0 0
      %3923 = vmatprep.subr.bf16.mxu0 0
      %3924 = vmatpush1.bf16.msra.mxu0 0
      %3925 = vmatprep.subr.bf16.mxu0 0
      %3926 = vmatpush1.bf16.msra.mxu0 0
      %3927 = vmatprep.subr.bf16.mxu0 0
      %3928 = vmatpush1.bf16.msra.mxu0 0
      %3929 = vmatprep.subr.bf16.mxu0 0
      %3930 = vmatpush1.bf16.msra.mxu0 0
      %3931 = vmatprep.subr.bf16.mxu0 0
      %3932 = vmatpush1.bf16.msra.mxu0 0
      %3933 = vmatprep.subr.bf16.mxu0 0
      %3934 = vmatpush1.bf16.msra.mxu0 0
      %3935 = vmatprep.subr.bf16.mxu0 0
      %3936 = vmatpush1.bf16.msra.mxu0 0
      %3937 = vmatprep.subr.bf16.mxu0 0
      %3938 = vmatpush1.bf16.msra.mxu0 0
      %3939 = vmatprep.subr.bf16.mxu0 0
      %3940 = vmatpush1.bf16.msra.mxu0 0
      %3941 = vmatprep.subr.bf16.mxu0 0
      %3942 = vmatpush1.bf16.msra.mxu0 0
      %3943 = vmatprep.subr.bf16.mxu0 0
      %3944 = vmatpush1.bf16.msra.mxu0 0
      %3945 = vmatprep.subr.bf16.mxu0 0
      %3946 = vmatpush1.bf16.msra.mxu0 0
      %3947 = vmatprep.mubr.bf16.mxu0 0
      %3948 = vmatmul.mubr.bf16.gmra.mrb[0].mxu0 %v3910
      %v3949 = vpop.f32.mrb[0].mxu0
      %v3950 = vadd.f32 0.0, %v3949
      %v3951 = vpop.f32.mrb[0].mxu0
      %v3952 = vadd.f32 0.0, %v3951
      %v3953 = vpop.f32.mrb[0].mxu0
      %v3954 = vadd.f32 0.0, %v3953
      %v3955 = vpop.f32.mrb[0].mxu0
      %v3956 = vadd.f32 0.0, %v3955
      %3957 = vmatprep.mubr.bf16.mxu0 0
      %3958 = vmatmul.mubr.bf16.gmra.mrb[0].mxu0 %v3913
      %v3959 = vpop.f32.mrb[0].mxu0
      %v3960 = vadd.f32 0.0, %v3959
      %v3961 = vpop.f32.mrb[0].mxu0
      %v3962 = vadd.f32 0.0, %v3961
      %v3963 = vpop.f32.mrb[0].mxu0
      %v3964 = vadd.f32 0.0, %v3963
      %v3965 = vpop.f32.mrb[0].mxu0
      %v3966 = vadd.f32 0.0, %v3965
      %3967 = vdwg.mxu0
      %3968 = vmatprep.subr.bf16.mxu0 0
      %3969 = vmatpush1.bf16.msra.mxu0 %v3895
      %3970 = vmatprep.subr.bf16.mxu0 0
      %3971 = vmatpush1.bf16.msra.mxu0 %v3898
      %3972 = vmatprep.subr.bf16.mxu0 0
      %3973 = vmatpush1.bf16.msra.mxu0 0
      %3974 = vmatprep.subr.bf16.mxu0 0
      %3975 = vmatpush1.bf16.msra.mxu0 0
      %3976 = vmatprep.subr.bf16.mxu0 0
      %3977 = vmatpush1.bf16.msra.mxu0 0
      %3978 = vmatprep.subr.bf16.mxu0 0
      %3979 = vmatpush1.bf16.msra.mxu0 0
      %3980 = vmatprep.subr.bf16.mxu0 0
      %3981 = vmatpush1.bf16.msra.mxu0 0
      %3982 = vmatprep.subr.bf16.mxu0 0
      %3983 = vmatpush1.bf16.msra.mxu0 0
      %3984 = vmatprep.subr.bf16.mxu0 0
      %3985 = vmatpush1.bf16.msra.mxu0 0
      %3986 = vmatprep.subr.bf16.mxu0 0
      %3987 = vmatpush1.bf16.msra.mxu0 0
      %3988 = vmatprep.subr.bf16.mxu0 0
      %3989 = vmatpush1.bf16.msra.mxu0 0
      %3990 = vmatprep.subr.bf16.mxu0 0
      %3991 = vmatpush1.bf16.msra.mxu0 0
      %3992 = vmatprep.subr.bf16.mxu0 0
      %3993 = vmatpush1.bf16.msra.mxu0 0
      %3994 = vmatprep.subr.bf16.mxu0 0
      %3995 = vmatpush1.bf16.msra.mxu0 0
      %3996 = vmatprep.subr.bf16.mxu0 0
      %3997 = vmatpush1.bf16.msra.mxu0 0
      %3998 = vmatprep.subr.bf16.mxu0 0
      %3999 = vmatpush1.bf16.msra.mxu0 0
      %4000 = vmatprep.mubr.bf16.mxu0 0
      %4001 = vmatmul.mubr.bf16.gmra.mrb[0].mxu0 %v3910
      %v4002 = vpop.f32.mrb[0].mxu0
      %v4003 = vadd.f32 0.0, %v4002
      %v4004 = vpop.f32.mrb[0].mxu0
      %v4005 = vpop.f32.mrb[0].mxu0
      %v4006 = vadd.f32 0.0, %v4005
      %v4007 = vpop.f32.mrb[0].mxu0
      %4008 = vmatprep.mubr.bf16.mxu0 0
      %4009 = vmatmul.mubr.bf16.gmra.mrb[0].mxu0 %v3913
      %v4010 = vpop.f32.mrb[0].mxu0
      %v4011 = vadd.f32 0.0, %v4010
      %v4012 = vpop.f32.mrb[0].mxu0
      %v4013 = vpop.f32.mrb[0].mxu0
      %v4014 = vadd.f32 0.0, %v4013
      %v4015 = vpop.f32.mrb[0].mxu0
      %4016 = vdwg.mxu0
      %v4017 = vadd.f32 %v3840, %v3950
      %v4018 = vadd.f32 %v3841, %v3952
      %v4019 = vadd.f32 %v3842, %v4003
      %v4020 = vadd.f32 %v3843, %v3954
      %v4021 = vadd.f32 %v3844, %v3956
      %v4022 = vadd.f32 %v3845, %v4006
      %v4023 = vadd.f32 %v3846, %v3960
      %v4024 = vadd.f32 %v3847, %v3962
      %v4025 = vadd.f32 %v3848, %v4011
      %v4026 = vadd.f32 %v3849, %v3964
      %v4027 = vadd.f32 %v3850, %v3966
      %v4028 = vadd.f32 %v3851, %v4014
      %s4029 = scalar_lea.vmem %s5, 272
      %v4030 = vld [vmem:[%s4029] sm:$0xf]
      %v4031 = vld [vmem:[%s4029 + $0x4] sm:$0xf]
      %v4032 = vld [vmem:[%s4029 + $0x8] sm:$0xf]
      %v4033 = vld [vmem:[%s4029 + $0xc] sm:$0xf]
      %4034 = vrot.lane.b32.xlu0 %v2577, 109
      %v4035 = vpop.permute.xlu0 %4034
      %4036 = vrot.lane.b32.xlu0 %v2580, 109
      %v4037 = vpop.permute.xlu0 %4036
      %4038 = vrot.lane.b32.xlu0 %v2583, 109
      %v4039 = vpop.permute.xlu0 %4038
      %4040 = vrot.lane.b32.xlu0 %v2586, 109
      %v4041 = vpop.permute.xlu0 %4040
      %4042 = vrot.lane.b32.xlu0 %v2578, 109
      %v4043 = vpop.permute.xlu0 %4042
      %4044 = vrot.lane.b32.xlu0 %v2581, 109
      %v4045 = vpop.permute.xlu0 %4044
      %4046 = vrot.lane.b32.xlu0 %v2584, 109
      %v4047 = vpop.permute.xlu0 %4046
      %4048 = vrot.lane.b32.xlu0 %v2587, 109
      %v4049 = vpop.permute.xlu0 %4048
      %4050 = vrot.lane.b32.xlu0 %v2579, 109
      %v4051 = vpop.permute.xlu0 %4050
      %4052 = vrot.lane.b32.xlu0 %v2582, 109
      %v4053 = vpop.permute.xlu0 %4052
      %4054 = vrot.lane.b32.xlu0 %v2585, 109
      %v4055 = vpop.permute.xlu0 %4054
      %4056 = vrot.lane.b32.xlu0 %v2588, 109
      %v4057 = vpop.permute.xlu0 %4056
      %v4058 = vsel %vm2057, %v4043, %v4051
      %v4059 = vsel %vm2057, %v4045, %v4053
      %v4060 = vsel %vm2057, %v4047, %v4055
      %v4061 = vsel %vm2057, %v4049, %v4057
      %v4062 = vsel %vm2057, %v4035, %v4043
      %v4063 = vsel %vm2057, %v4037, %v4045
      %v4064 = vsel %vm2057, %v4039, %v4047
      %v4065 = vsel %vm2057, %v4041, %v4049
      %v4066 = vsel %vm2057, %v4051, %v4035
      %v4067 = vsel %vm2057, %v4053, %v4037
      %v4068 = vsel %vm2057, %v4055, %v4039
      %v4069 = vsel %vm2057, %v4057, %v4041
      %v4070 = vpack.c.bf16 %v4063, %v4062
      %v4071 = vpack.c.bf16 %v4059, %v4058
      %v4072 = vpack.c.bf16 %v4067, %v4066
      %v4073 = vpack.c.bf16 %v4065, %v4064
      %v4074 = vpack.c.bf16 %v4061, %v4060
      %v4075 = vpack.c.bf16 %v4069, %v4068
      %v4080 = vunpack.c.l.b16 %v4030
      %v4081 = vunpack.c.l.b16 %v4031
      %v4082 = vunpack.c.l.b16 %v4032
      %v4083 = vunpack.c.l.b16 %v4033
      %v4084 = vpack.c.b16 %v4081, %v4080
      %v4085 = vpack.c.b16 %v4083, %v4082
      %v4087 = vsel %vm770, %v4084, 0
      %v4090 = vsel %vm770, %v4085, 0
      %4092 = vmatprep.subr.bf16.mxu0 %v4071
      %4093 = vmatpush1.bf16.msra.mxu0 %v4070
      %4094 = vmatprep.subr.bf16.mxu0 %v4074
      %4095 = vmatpush1.bf16.msra.mxu0 %v4073
      %4096 = vmatprep.subr.bf16.mxu0 0
      %4097 = vmatpush1.bf16.msra.mxu0 0
      %4098 = vmatprep.subr.bf16.mxu0 0
      %4099 = vmatpush1.bf16.msra.mxu0 0
      %4100 = vmatprep.subr.bf16.mxu0 0
      %4101 = vmatpush1.bf16.msra.mxu0 0
      %4102 = vmatprep.subr.bf16.mxu0 0
      %4103 = vmatpush1.bf16.msra.mxu0 0
      %4104 = vmatprep.subr.bf16.mxu0 0
      %4105 = vmatpush1.bf16.msra.mxu0 0
      %4106 = vmatprep.subr.bf16.mxu0 0
      %4107 = vmatpush1.bf16.msra.mxu0 0
      %4108 = vmatprep.subr.bf16.mxu0 0
      %4109 = vmatpush1.bf16.msra.mxu0 0
      %4110 = vmatprep.subr.bf16.mxu0 0
      %4111 = vmatpush1.bf16.msra.mxu0 0
      %4112 = vmatprep.subr.bf16.mxu0 0
      %4113 = vmatpush1.bf16.msra.mxu0 0
      %4114 = vmatprep.subr.bf16.mxu0 0
      %4115 = vmatpush1.bf16.msra.mxu0 0
      %4116 = vmatprep.subr.bf16.mxu0 0
      %4117 = vmatpush1.bf16.msra.mxu0 0
      %4118 = vmatprep.subr.bf16.mxu0 0
      %4119 = vmatpush1.bf16.msra.mxu0 0
      %4120 = vmatprep.subr.bf16.mxu0 0
      %4121 = vmatpush1.bf16.msra.mxu0 0
      %4122 = vmatprep.subr.bf16.mxu0 0
      %4123 = vmatpush1.bf16.msra.mxu0 0
      %4124 = vmatprep.mubr.bf16.mxu0 0
      %4125 = vmatmul.mubr.bf16.gmra.mrb[0].mxu0 %v4087
      %v4126 = vpop.f32.mrb[0].mxu0
      %v4127 = vadd.f32 0.0, %v4126
      %v4128 = vpop.f32.mrb[0].mxu0
      %v4129 = vadd.f32 0.0, %v4128
      %v4130 = vpop.f32.mrb[0].mxu0
      %v4131 = vadd.f32 0.0, %v4130
      %v4132 = vpop.f32.mrb[0].mxu0
      %v4133 = vadd.f32 0.0, %v4132
      %4134 = vmatprep.mubr.bf16.mxu0 0
      %4135 = vmatmul.mubr.bf16.gmra.mrb[0].mxu0 %v4090
      %v4136 = vpop.f32.mrb[0].mxu0
      %v4137 = vadd.f32 0.0, %v4136
      %v4138 = vpop.f32.mrb[0].mxu0
      %v4139 = vadd.f32 0.0, %v4138
      %v4140 = vpop.f32.mrb[0].mxu0
      %v4141 = vadd.f32 0.0, %v4140
      %v4142 = vpop.f32.mrb[0].mxu0
      %v4143 = vadd.f32 0.0, %v4142
      %4144 = vdwg.mxu0
      %4145 = vmatprep.subr.bf16.mxu0 0
      %4146 = vmatpush1.bf16.msra.mxu0 %v4072
      %4147 = vmatprep.subr.bf16.mxu0 0
      %4148 = vmatpush1.bf16.msra.mxu0 %v4075
      %4149 = vmatprep.subr.bf16.mxu0 0
      %4150 = vmatpush1.bf16.msra.mxu0 0
      %4151 = vmatprep.subr.bf16.mxu0 0
      %4152 = vmatpush1.bf16.msra.mxu0 0
      %4153 = vmatprep.subr.bf16.mxu0 0
      %4154 = vmatpush1.bf16.msra.mxu0 0
      %4155 = vmatprep.subr.bf16.mxu0 0
      %4156 = vmatpush1.bf16.msra.mxu0 0
      %4157 = vmatprep.subr.bf16.mxu0 0
      %4158 = vmatpush1.bf16.msra.mxu0 0
      %4159 = vmatprep.subr.bf16.mxu0 0
      %4160 = vmatpush1.bf16.msra.mxu0 0
      %4161 = vmatprep.subr.bf16.mxu0 0
      %4162 = vmatpush1.bf16.msra.mxu0 0
      %4163 = vmatprep.subr.bf16.mxu0 0
      %4164 = vmatpush1.bf16.msra.mxu0 0
      %4165 = vmatprep.subr.bf16.mxu0 0
      %4166 = vmatpush1.bf16.msra.mxu0 0
      %4167 = vmatprep.subr.bf16.mxu0 0
      %4168 = vmatpush1.bf16.msra.mxu0 0
      %4169 = vmatprep.subr.bf16.mxu0 0
      %4170 = vmatpush1.bf16.msra.mxu0 0
      %4171 = vmatprep.subr.bf16.mxu0 0
      %4172 = vmatpush1.bf16.msra.mxu0 0
      %4173 = vmatprep.subr.bf16.mxu0 0
      %4174 = vmatpush1.bf16.msra.mxu0 0
      %4175 = vmatprep.subr.bf16.mxu0 0
      %4176 = vmatpush1.bf16.msra.mxu0 0
      %4177 = vmatprep.mubr.bf16.mxu0 0
      %4178 = vmatmul.mubr.bf16.gmra.mrb[0].mxu0 %v4087
      %v4179 = vpop.f32.mrb[0].mxu0
      %v4180 = vadd.f32 0.0, %v4179
      %v4181 = vpop.f32.mrb[0].mxu0
      %v4182 = vpop.f32.mrb[0].mxu0
      %v4183 = vadd.f32 0.0, %v4182
      %v4184 = vpop.f32.mrb[0].mxu0
      %4185 = vmatprep.mubr.bf16.mxu0 0
      %4186 = vmatmul.mubr.bf16.gmra.mrb[0].mxu0 %v4090
      %v4187 = vpop.f32.mrb[0].mxu0
      %v4188 = vadd.f32 0.0, %v4187
      %v4189 = vpop.f32.mrb[0].mxu0
      %v4190 = vpop.f32.mrb[0].mxu0
      %v4191 = vadd.f32 0.0, %v4190
      %v4192 = vpop.f32.mrb[0].mxu0
      %4193 = vdwg.mxu0
      %v4194 = vadd.f32 %v4017, %v4127
      %v4195 = vadd.f32 %v4018, %v4129
      %v4196 = vadd.f32 %v4019, %v4180
      %v4197 = vadd.f32 %v4020, %v4131
      %v4198 = vadd.f32 %v4021, %v4133
      %v4199 = vadd.f32 %v4022, %v4183
      %v4200 = vadd.f32 %v4023, %v4137
      %v4201 = vadd.f32 %v4024, %v4139
      %v4202 = vadd.f32 %v4025, %v4188
      %v4203 = vadd.f32 %v4026, %v4141
      %v4204 = vadd.f32 %v4027, %v4143
      %v4205 = vadd.f32 %v4028, %v4191
      %v4206 = vld [vmem:[%s6 + $0x20] sm:$0xff]
      %v4207 = vld [vmem:[%s6 + $0x28] sm:$0xff]
      %v4208 = vld [vmem:[%s6 + $0x30] sm:$0xff]
      %v4209 = vld [vmem:[%s6 + $0x38] sm:$0xff]
      %4211 = vset.pattern.permute.xlu0 0
      %4212 = vperm.xlu0 %4211, %v4206
      %v4213 = vpop.permute.xlu0 %4212
      %4216 = vset.pattern.permute.xlu0 0
      %4217 = vperm.xlu0 %4216, %v4207
      %v4218 = vpop.permute.xlu0 %4217
      %4221 = vset.pattern.permute.xlu0 0
      %4222 = vperm.xlu0 %4221, %v4208
      %v4223 = vpop.permute.xlu0 %4222
      %4226 = vset.pattern.permute.xlu0 0
      %4227 = vperm.xlu0 %4226, %v4209
      %v4228 = vpop.permute.xlu0 %4227
      %v4230 = vadd.f32 %v4194, %v4213
      %v4231 = vadd.f32 %v4195, %v4213
      %v4232 = vadd.f32 %v4196, %v4213
      %v4233 = vadd.f32 %v4197, %v4218
      %v4234 = vadd.f32 %v4198, %v4218
      %v4235 = vadd.f32 %v4199, %v4218
      %v4236 = vadd.f32 %v4200, %v4223
      %v4237 = vadd.f32 %v4201, %v4223
      %v4238 = vadd.f32 %v4202, %v4223
      %v4239 = vadd.f32 %v4203, %v4228
      %v4240 = vadd.f32 %v4204, %v4228
      %v4241 = vadd.f32 %v4205, %v4228
      %v4242 = vadd.f32 %v4230, %v2577
      %v4243 = vadd.f32 %v4231, %v2578
      %v4244 = vadd.f32 %v4232, %v2579
      %v4245 = vadd.f32 %v4233, %v2580
      %v4246 = vadd.f32 %v4234, %v2581
      %v4247 = vadd.f32 %v4235, %v2582
      %v4248 = vadd.f32 %v4236, %v2583
      %v4249 = vadd.f32 %v4237, %v2584
      %v4250 = vadd.f32 %v4238, %v2585
      %v4251 = vadd.f32 %v4239, %v2586
      %v4252 = vadd.f32 %v4240, %v2587
      %v4253 = vadd.f32 %v4241, %v2588
      %v4254 = vmul.f32 %v4242, %v548
      %v4255 = vmul.f32 %v4243, %v552
      %v4256 = vmul.f32 %v4244, %v556
      %v4257 = vmul.f32 %v4245, %v548
      %v4258 = vmul.f32 %v4246, %v552
      %v4259 = vmul.f32 %v4247, %v556
      %v4260 = vmul.f32 %v4248, %v548
      %v4261 = vmul.f32 %v4249, %v552
      %v4262 = vmul.f32 %v4250, %v556
      %v4263 = vmul.f32 %v4251, %v548
      %v4264 = vmul.f32 %v4252, %v552
      %v4265 = vmul.f32 %v4253, %v556
      %v4266 = vadd.f32 %v4254, %v4255
      %v4267 = vadd.f32 %v4266, %v4256
      %4268 = vadd.xlane.f32.xlu0 %v4267
      %v4269 = vpop.xlane.xlu0 %4268
      %v4270 = vadd.f32 %v4257, %v4258
      %v4271 = vadd.f32 %v4270, %v4259
      %4272 = vadd.xlane.f32.xlu0 %v4271
      %v4273 = vpop.xlane.xlu0 %4272
      %v4274 = vadd.f32 %v4260, %v4261
      %v4275 = vadd.f32 %v4274, %v4262
      %4276 = vadd.xlane.f32.xlu0 %v4275
      %v4277 = vpop.xlane.xlu0 %4276
      %v4278 = vadd.f32 %v4263, %v4264
      %v4279 = vadd.f32 %v4278, %v4265
      %4280 = vadd.xlane.f32.xlu0 %v4279
      %v4281 = vpop.xlane.xlu0 %4280
      %v4282 = vmul.f32 %v4269, 0.00390625
      %v4283 = vmul.f32 %v4273, 0.00390625
      %v4284 = vmul.f32 %v4277, 0.00390625
      %v4285 = vmul.f32 %v4281, 0.00390625
      %v4286 = vsub.f32 %v4242, %v4282
      %v4287 = vsub.f32 %v4243, %v4282
      %v4288 = vsub.f32 %v4244, %v4282
      %v4289 = vsub.f32 %v4245, %v4283
      %v4290 = vsub.f32 %v4246, %v4283
      %v4291 = vsub.f32 %v4247, %v4283
      %v4292 = vsub.f32 %v4248, %v4284
      %v4293 = vsub.f32 %v4249, %v4284
      %v4294 = vsub.f32 %v4250, %v4284
      %v4295 = vsub.f32 %v4251, %v4285
      %v4296 = vsub.f32 %v4252, %v4285
      %v4297 = vsub.f32 %v4253, %v4285
      %v4298 = vmul.f32 %v4286, %v548
      %v4299 = vmul.f32 %v4287, %v552
      %v4300 = vmul.f32 %v4288, %v556
      %v4301 = vmul.f32 %v4289, %v548
      %v4302 = vmul.f32 %v4290, %v552
      %v4303 = vmul.f32 %v4291, %v556
      %v4304 = vmul.f32 %v4292, %v548
      %v4305 = vmul.f32 %v4293, %v552
      %v4306 = vmul.f32 %v4294, %v556
      %v4307 = vmul.f32 %v4295, %v548
      %v4308 = vmul.f32 %v4296, %v552
      %v4309 = vmul.f32 %v4297, %v556
      %v4310 = vmul.f32 %v4298, %v4298
      %v4311 = vmul.f32 %v4299, %v4299
      %v4312 = vmul.f32 %v4300, %v4300
      %v4313 = vmul.f32 %v4301, %v4301
      %v4314 = vmul.f32 %v4302, %v4302
      %v4315 = vmul.f32 %v4303, %v4303
      %v4316 = vmul.f32 %v4304, %v4304
      %v4317 = vmul.f32 %v4305, %v4305
      %v4318 = vmul.f32 %v4306, %v4306
      %v4319 = vmul.f32 %v4307, %v4307
      %v4320 = vmul.f32 %v4308, %v4308
      %v4321 = vmul.f32 %v4309, %v4309
      %v4322 = vadd.f32 %v4310, %v4311
      %v4323 = vadd.f32 %v4322, %v4312
      %4324 = vadd.xlane.f32.xlu0 %v4323
      %v4325 = vpop.xlane.xlu0 %4324
      %v4326 = vadd.f32 %v4313, %v4314
      %v4327 = vadd.f32 %v4326, %v4315
      %4328 = vadd.xlane.f32.xlu0 %v4327
      %v4329 = vpop.xlane.xlu0 %4328
      %v4330 = vadd.f32 %v4316, %v4317
      %v4331 = vadd.f32 %v4330, %v4318
      %4332 = vadd.xlane.f32.xlu0 %v4331
      %v4333 = vpop.xlane.xlu0 %4332
      %v4334 = vadd.f32 %v4319, %v4320
      %v4335 = vadd.f32 %v4334, %v4321
      %4336 = vadd.xlane.f32.xlu0 %v4335
      %v4337 = vpop.xlane.xlu0 %4336
      %v4338 = vmul.f32 %v4325, 0.00390625
      %v4339 = vmul.f32 %v4329, 0.00390625
      %v4340 = vmul.f32 %v4333, 0.00390625
      %v4341 = vmul.f32 %v4337, 0.00390625
      %v4342 = vadd.f32 %v4338, 1e-05
      %v4343 = vadd.f32 %v4339, 1e-05
      %v4344 = vadd.f32 %v4340, 1e-05
      %v4345 = vadd.f32 %v4341, 1e-05
      %v4346 = vrsqrt.pop %v4342
      %v4347 = vrsqrt.pop %v4343
      %v4348 = vrsqrt.pop %v4344
      %v4349 = vrsqrt.pop %v4345
      %v4350 = vmul.f32 %v4286, %v4346
      %v4351 = vmul.f32 %v4287, %v4346
      %v4352 = vmul.f32 %v4288, %v4346
      %v4353 = vmul.f32 %v4289, %v4347
      %v4354 = vmul.f32 %v4290, %v4347
      %v4355 = vmul.f32 %v4291, %v4347
      %v4356 = vmul.f32 %v4292, %v4348
      %v4357 = vmul.f32 %v4293, %v4348
      %v4358 = vmul.f32 %v4294, %v4348
      %v4359 = vmul.f32 %v4295, %v4349
      %v4360 = vmul.f32 %v4296, %v4349
      %v4361 = vmul.f32 %v4297, %v4349
      %v4362 = vadd.f32 %v4282, %v4283
      %v4363 = vadd.f32 %v4362, %v4284
      %v4364 = vadd.f32 %v4363, %v4285
      %v4365 = vrot.slane %v4364, 4
      %v4366 = vadd.f32 %v4364, %v4365
      %v4367 = vrot.slane %v4366, 2
      %v4368 = vadd.f32 %v4366, %v4367
      %v4369 = vrot.slane %v4368, 1
      %v4370 = vadd.f32 %v4368, %v4369
      %v4371 = vmul.f32 %v4370, %v2371
      %v4372 = vsub.f32 %v4282, %v4371
      %v4373 = vsub.f32 %v4283, %v4371
      %v4374 = vsub.f32 %v4284, %v4371
      %v4375 = vsub.f32 %v4285, %v4371
      %v4376 = vmul.f32 %v4372, %v4372
      %v4377 = vmul.f32 %v4373, %v4373
      %v4378 = vmul.f32 %v4374, %v4374
      %v4379 = vmul.f32 %v4375, %v4375
      %v4380 = vadd.f32 %v4376, %v4377
      %v4381 = vadd.f32 %v4380, %v4378
      %v4382 = vadd.f32 %v4381, %v4379
      %v4383 = vrot.slane %v4382, 4
      %v4384 = vadd.f32 %v4382, %v4383
      %v4385 = vrot.slane %v4384, 2
      %v4386 = vadd.f32 %v4384, %v4385
      %v4387 = vrot.slane %v4386, 1
      %v4388 = vadd.f32 %v4386, %v4387
      %v4389 = vmul.f32 %v4388, %v2390
      %v4390 = vrsqrt.pop %v4389
      %v4391 = vmul.f32 %v4389, %v4390
      %vm4392 = vcmp.eq.f32.partialorder %v4389, inf
      %v4393 = vsel %vm4392, %v4389, %v4391
      %vm4394 = vcmp.eq.f32.partialorder %v4389, 0.0
      %v4395 = vand.u32 %v4389, 2147483648
      %v4396 = vsel %vm4394, %v4395, %v4393
      %v4397 = vadd.f32 %v4396, 1e-06
      %v4398 = vrcp.pop %v4397
      %v4399 = vmul.f32 %v4372, %v4398
      %v4400 = vmul.f32 %v4373, %v4398
      %v4401 = vmul.f32 %v4374, %v4398
      %v4402 = vmul.f32 %v4375, %v4398
      %4404 = vset.pattern.permute.xlu0 0
      %4405 = vperm.xlu0 %4404, %v2613
      %v4406 = vpop.permute.xlu0 %4405
      %4409 = vset.pattern.permute.xlu0 0
      %4410 = vperm.xlu0 %4409, %v2614
      %v4411 = vpop.permute.xlu0 %4410
      %4414 = vset.pattern.permute.xlu0 0
      %4415 = vperm.xlu0 %4414, %v2615
      %v4416 = vpop.permute.xlu0 %4415
      %4419 = vset.pattern.permute.xlu0 0
      %4420 = vperm.xlu0 %4419, %v2616
      %v4421 = vpop.permute.xlu0 %4420
      %v4423 = vmul.f32 %v4406, %v4350
      %v4424 = vmul.f32 %v4406, %v4351
      %v4425 = vmul.f32 %v4406, %v4352
      %v4426 = vmul.f32 %v4411, %v4353
      %v4427 = vmul.f32 %v4411, %v4354
      %v4428 = vmul.f32 %v4411, %v4355
      %v4429 = vmul.f32 %v4416, %v4356
      %v4430 = vmul.f32 %v4416, %v4357
      %v4431 = vmul.f32 %v4416, %v4358
      %v4432 = vmul.f32 %v4421, %v4359
      %v4433 = vmul.f32 %v4421, %v4360
      %v4434 = vmul.f32 %v4421, %v4361
      %v4435 = vmul.f32 %v2641, %v4399
      %v4436 = vmul.f32 %v2642, %v4400
      %v4437 = vmul.f32 %v2643, %v4401
      %v4438 = vmul.f32 %v2644, %v4402
      %4440 = vset.pattern.permute.xlu0 0
      %4441 = vperm.xlu0 %4440, %v4435
      %v4442 = vpop.permute.xlu0 %4441
      %4445 = vset.pattern.permute.xlu0 0
      %4446 = vperm.xlu0 %4445, %v4436
      %v4447 = vpop.permute.xlu0 %4446
      %4450 = vset.pattern.permute.xlu0 0
      %4451 = vperm.xlu0 %4450, %v4437
      %v4452 = vpop.permute.xlu0 %4451
      %4455 = vset.pattern.permute.xlu0 0
      %4456 = vperm.xlu0 %4455, %v4438
      %v4457 = vpop.permute.xlu0 %4456
      %v4459 = vadd.f32 %v4423, %v4442
      %v4460 = vadd.f32 %v4424, %v4442
      %v4461 = vadd.f32 %v4425, %v4442
      %v4462 = vadd.f32 %v4426, %v4447
      %v4463 = vadd.f32 %v4427, %v4447
      %v4464 = vadd.f32 %v4428, %v4447
      %v4465 = vadd.f32 %v4429, %v4452
      %v4466 = vadd.f32 %v4430, %v4452
      %v4467 = vadd.f32 %v4431, %v4452
      %v4468 = vadd.f32 %v4432, %v4457
      %v4469 = vadd.f32 %v4433, %v4457
      %v4470 = vadd.f32 %v4434, %v4457
      %4472 = vset.pattern.permute.xlu0 0
      %4473 = vperm.xlu0 %4472, %v2669
      %v4474 = vpop.permute.xlu0 %4473
      %4477 = vset.pattern.permute.xlu0 0
      %4478 = vperm.xlu0 %4477, %v2670
      %v4479 = vpop.permute.xlu0 %4478
      %4482 = vset.pattern.permute.xlu0 0
      %4483 = vperm.xlu0 %4482, %v2671
      %v4484 = vpop.permute.xlu0 %4483
      %4487 = vset.pattern.permute.xlu0 0
      %4488 = vperm.xlu0 %4487, %v2672
      %v4489 = vpop.permute.xlu0 %4488
      %v4491 = vadd.f32 %v4459, %v4474
      %v4492 = vadd.f32 %v4460, %v4474
      %v4493 = vadd.f32 %v4461, %v4474
      %v4494 = vadd.f32 %v4462, %v4479
      %v4495 = vadd.f32 %v4463, %v4479
      %v4496 = vadd.f32 %v4464, %v4479
      %v4497 = vadd.f32 %v4465, %v4484
      %v4498 = vadd.f32 %v4466, %v4484
      %v4499 = vadd.f32 %v4467, %v4484
      %v4500 = vadd.f32 %v4468, %v4489
      %v4501 = vadd.f32 %v4469, %v4489
      %v4502 = vadd.f32 %v4470, %v4489
      %vm4503 = vcmp.gt.f32.partialorder %v4491, 0.0
      %vm4504 = vcmp.gt.f32.partialorder %v4492, 0.0
      %vm4505 = vcmp.gt.f32.partialorder %v4493, 0.0
      %vm4506 = vcmp.gt.f32.partialorder %v4494, 0.0
      %vm4507 = vcmp.gt.f32.partialorder %v4495, 0.0
      %vm4508 = vcmp.gt.f32.partialorder %v4496, 0.0
      %vm4509 = vcmp.gt.f32.partialorder %v4497, 0.0
      %vm4510 = vcmp.gt.f32.partialorder %v4498, 0.0
      %vm4511 = vcmp.gt.f32.partialorder %v4499, 0.0
      %vm4512 = vcmp.gt.f32.partialorder %v4500, 0.0
      %vm4513 = vcmp.gt.f32.partialorder %v4501, 0.0
      %vm4514 = vcmp.gt.f32.partialorder %v4502, 0.0
      %v4515 = vsel %vm4503, 0.0, %v4491
      %v4516 = vsel %vm4504, 0.0, %v4492
      %v4517 = vsel %vm4505, 0.0, %v4493
      %v4518 = vsel %vm4506, 0.0, %v4494
      %v4519 = vsel %vm4507, 0.0, %v4495
      %v4520 = vsel %vm4508, 0.0, %v4496
      %v4521 = vsel %vm4509, 0.0, %v4497
      %v4522 = vsel %vm4510, 0.0, %v4498
      %v4523 = vsel %vm4511, 0.0, %v4499
      %v4524 = vsel %vm4512, 0.0, %v4500
      %v4525 = vsel %vm4513, 0.0, %v4501
      %v4526 = vsel %vm4514, 0.0, %v4502
      %v4527 = vmul.f32 %v4515, 1.442695
      %v4528 = vpow.pop %v4527
      %v4529 = vmul.f32 %v4516, 1.442695
      %v4530 = vpow.pop %v4529
      %v4531 = vmul.f32 %v4517, 1.442695
      %v4532 = vpow.pop %v4531
      %v4533 = vmul.f32 %v4518, 1.442695
      %v4534 = vpow.pop %v4533
      %v4535 = vmul.f32 %v4519, 1.442695
      %v4536 = vpow.pop %v4535
      %v4537 = vmul.f32 %v4520, 1.442695
      %v4538 = vpow.pop %v4537
      %v4539 = vmul.f32 %v4521, 1.442695
      %v4540 = vpow.pop %v4539
      %v4541 = vmul.f32 %v4522, 1.442695
      %v4542 = vpow.pop %v4541
      %v4543 = vmul.f32 %v4523, 1.442695
      %v4544 = vpow.pop %v4543
      %v4545 = vmul.f32 %v4524, 1.442695
      %v4546 = vpow.pop %v4545
      %v4547 = vmul.f32 %v4525, 1.442695
      %v4548 = vpow.pop %v4547
      %v4549 = vmul.f32 %v4526, 1.442695
      %v4550 = vpow.pop %v4549
      %v4551 = vsub.f32 %v4528, 1.0
      %v4552 = vsub.f32 %v4530, 1.0
      %v4553 = vsub.f32 %v4532, 1.0
      %v4554 = vsub.f32 %v4534, 1.0
      %v4555 = vsub.f32 %v4536, 1.0
      %v4556 = vsub.f32 %v4538, 1.0
      %v4557 = vsub.f32 %v4540, 1.0
      %v4558 = vsub.f32 %v4542, 1.0
      %v4559 = vsub.f32 %v4544, 1.0
      %v4560 = vsub.f32 %v4546, 1.0
      %v4561 = vsub.f32 %v4548, 1.0
      %v4562 = vsub.f32 %v4550, 1.0
      %v4563 = vsel %vm4503, %v4491, %v4551
      %v4564 = vsel %vm4504, %v4492, %v4552
      %v4565 = vsel %vm4505, %v4493, %v4553
      %v4566 = vsel %vm4506, %v4494, %v4554
      %v4567 = vsel %vm4507, %v4495, %v4555
      %v4568 = vsel %vm4508, %v4496, %v4556
      %v4569 = vsel %vm4509, %v4497, %v4557
      %v4570 = vsel %vm4510, %v4498, %v4558
      %v4571 = vsel %vm4511, %v4499, %v4559
      %v4572 = vsel %vm4512, %v4500, %v4560
      %v4573 = vsel %vm4513, %v4501, %v4561
      %v4574 = vsel %vm4514, %v4502, %v4562
      %v4575 = vmul.f32 %v4563, %v548
      %v4576 = vmul.f32 %v4564, %v552
      %v4577 = vmul.f32 %v4565, %v556
      %v4578 = vmul.f32 %v4566, %v548
      %v4579 = vmul.f32 %v4567, %v552
      %v4580 = vmul.f32 %v4568, %v556
      %v4581 = vmul.f32 %v4569, %v548
      %v4582 = vmul.f32 %v4570, %v552
      %v4583 = vmul.f32 %v4571, %v556
      %v4584 = vmul.f32 %v4572, %v548
      %v4585 = vmul.f32 %v4573, %v552
      %v4586 = vmul.f32 %v4574, %v556
      %v4587 = vld [vmem:[%s7 + $0xc0] sm:$0xff]
      %v4588 = vld [vmem:[%s7 + $0xc8] sm:$0xff]
      %v4589 = vld [vmem:[%s7 + $0xd0] sm:$0xff]
      %v4590 = vld [vmem:[%s7 + $0xd8] sm:$0xff]
      %v4591 = vld [vmem:[%s8 + $0xc0] sm:$0xff]
      %v4592 = vld [vmem:[%s8 + $0xc8] sm:$0xff]
      %v4593 = vld [vmem:[%s8 + $0xd0] sm:$0xff]
      %v4594 = vld [vmem:[%s8 + $0xd8] sm:$0xff]
      %v4595 = vmul.f32 %v4587, %v584
      %v4596 = vmul.f32 %v4588, %v584
      %v4597 = vmul.f32 %v4589, %v584
      %v4598 = vmul.f32 %v4590, %v584
      %v4599 = vsel %vm590, %v4595, 0.0
      %4600 = vadd.xlane.f32.xlu0 %v4599
      %v4601 = vpop.xlane.xlu0 %4600
      %v4602 = vsel %vm590, %v4596, 0.0
      %4603 = vadd.xlane.f32.xlu0 %v4602
      %v4604 = vpop.xlane.xlu0 %4603
      %v4605 = vsel %vm590, %v4597, 0.0
      %4606 = vadd.xlane.f32.xlu0 %v4605
      %v4607 = vpop.xlane.xlu0 %4606
      %v4608 = vsel %vm590, %v4598, 0.0
      %4609 = vadd.xlane.f32.xlu0 %v4608
      %v4610 = vpop.xlane.xlu0 %4609
      %v4611 = vadd.f32 %v4601, %v4591
      %v4612 = vadd.f32 %v4604, %v4592
      %v4613 = vadd.f32 %v4607, %v4593
      %v4614 = vadd.f32 %v4610, %v4594
      %v4615 = vld [vmem:[%s7 + $0xe0] sm:$0xff]
      %v4616 = vld [vmem:[%s7 + $0xe8] sm:$0xff]
      %v4617 = vld [vmem:[%s7 + $0xf0] sm:$0xff]
      %v4618 = vld [vmem:[%s7 + $0xf8] sm:$0xff]
      %v4619 = vld [vmem:[%s8 + $0xe0] sm:$0xff]
      %v4620 = vld [vmem:[%s8 + $0xe8] sm:$0xff]
      %v4621 = vld [vmem:[%s8 + $0xf0] sm:$0xff]
      %v4622 = vld [vmem:[%s8 + $0xf8] sm:$0xff]
      %v4623 = vmul.f32 %v4615, %v584
      %v4624 = vmul.f32 %v4616, %v584
      %v4625 = vmul.f32 %v4617, %v584
      %v4626 = vmul.f32 %v4618, %v584
      %v4627 = vsel %vm590, %v4623, 0.0
      %4628 = vadd.xlane.f32.xlu0 %v4627
      %v4629 = vpop.xlane.xlu0 %4628
      %v4630 = vsel %vm590, %v4624, 0.0
      %4631 = vadd.xlane.f32.xlu0 %v4630
      %v4632 = vpop.xlane.xlu0 %4631
      %v4633 = vsel %vm590, %v4625, 0.0
      %4634 = vadd.xlane.f32.xlu0 %v4633
      %v4635 = vpop.xlane.xlu0 %4634
      %v4636 = vsel %vm590, %v4626, 0.0
      %4637 = vadd.xlane.f32.xlu0 %v4636
      %v4638 = vpop.xlane.xlu0 %4637
      %v4639 = vadd.f32 %v4629, %v4619
      %v4640 = vadd.f32 %v4632, %v4620
      %v4641 = vadd.f32 %v4635, %v4621
      %v4642 = vadd.f32 %v4638, %v4622
      %v4643 = vld [vmem:[%s7 + $0x100] sm:$0xff]
      %v4644 = vld [vmem:[%s7 + $0x108] sm:$0xff]
      %v4645 = vld [vmem:[%s7 + $0x110] sm:$0xff]
      %v4646 = vld [vmem:[%s7 + $0x118] sm:$0xff]
      %v4647 = vld [vmem:[%s8 + $0x100] sm:$0xff]
      %v4648 = vld [vmem:[%s8 + $0x108] sm:$0xff]
      %v4649 = vld [vmem:[%s8 + $0x110] sm:$0xff]
      %v4650 = vld [vmem:[%s8 + $0x118] sm:$0xff]
      %v4651 = vmul.f32 %v4643, %v584
      %v4652 = vmul.f32 %v4644, %v584
      %v4653 = vmul.f32 %v4645, %v584
      %v4654 = vmul.f32 %v4646, %v584
      %v4655 = vsel %vm590, %v4651, 0.0
      %4656 = vadd.xlane.f32.xlu0 %v4655
      %v4657 = vpop.xlane.xlu0 %4656
      %v4658 = vsel %vm590, %v4652, 0.0
      %4659 = vadd.xlane.f32.xlu0 %v4658
      %v4660 = vpop.xlane.xlu0 %4659
      %v4661 = vsel %vm590, %v4653, 0.0
      %4662 = vadd.xlane.f32.xlu0 %v4661
      %v4663 = vpop.xlane.xlu0 %4662
      %v4664 = vsel %vm590, %v4654, 0.0
      %4665 = vadd.xlane.f32.xlu0 %v4664
      %v4666 = vpop.xlane.xlu0 %4665
      %v4667 = vadd.f32 %v4657, %v4647
      %v4668 = vadd.f32 %v4660, %v4648
      %v4669 = vadd.f32 %v4663, %v4649
      %v4670 = vadd.f32 %v4666, %v4650
      %s4671 = scalar_lea.vmem %s5, 288
      %v4672 = vld [vmem:[%s4671] sm:$0xf]
      %v4673 = vld [vmem:[%s4671 + $0x4] sm:$0xf]
      %v4674 = vld [vmem:[%s4671 + $0x8] sm:$0xf]
      %v4675 = vld [vmem:[%s4671 + $0xc] sm:$0xf]
      %4676 = vrot.lane.b32.xlu0 %v4575, 19
      %v4677 = vpop.permute.xlu0 %4676
      %4678 = vrot.lane.b32.xlu0 %v4578, 19
      %v4679 = vpop.permute.xlu0 %4678
      %4680 = vrot.lane.b32.xlu0 %v4581, 19
      %v4681 = vpop.permute.xlu0 %4680
      %4682 = vrot.lane.b32.xlu0 %v4584, 19
      %v4683 = vpop.permute.xlu0 %4682
      %4684 = vrot.lane.b32.xlu0 %v4576, 19
      %v4685 = vpop.permute.xlu0 %4684
      %4686 = vrot.lane.b32.xlu0 %v4579, 19
      %v4687 = vpop.permute.xlu0 %4686
      %4688 = vrot.lane.b32.xlu0 %v4582, 19
      %v4689 = vpop.permute.xlu0 %4688
      %4690 = vrot.lane.b32.xlu0 %v4585, 19
      %v4691 = vpop.permute.xlu0 %4690
      %4692 = vrot.lane.b32.xlu0 %v4577, 19
      %v4693 = vpop.permute.xlu0 %4692
      %4694 = vrot.lane.b32.xlu0 %v4580, 19
      %v4695 = vpop.permute.xlu0 %4694
      %4696 = vrot.lane.b32.xlu0 %v4583, 19
      %v4697 = vpop.permute.xlu0 %4696
      %4698 = vrot.lane.b32.xlu0 %v4586, 19
      %v4699 = vpop.permute.xlu0 %4698
      %v4700 = vsel %vm693, %v4685, %v4693
      %v4701 = vsel %vm693, %v4687, %v4695
      %v4702 = vsel %vm693, %v4689, %v4697
      %v4703 = vsel %vm693, %v4691, %v4699
      %v4704 = vsel %vm693, %v4677, %v4685
      %v4705 = vsel %vm693, %v4679, %v4687
      %v4706 = vsel %vm693, %v4681, %v4689
      %v4707 = vsel %vm693, %v4683, %v4691
      %v4708 = vsel %vm693, %v4693, %v4677
      %v4709 = vsel %vm693, %v4695, %v4679
      %v4710 = vsel %vm693, %v4697, %v4681
      %v4711 = vsel %vm693, %v4699, %v4683
      %v4712 = vpack.c.bf16 %v4709, %v4708
      %v4713 = vpack.c.bf16 %v4705, %v4704
      %v4714 = vpack.c.bf16 %v4701, %v4700
      %v4715 = vpack.c.bf16 %v4711, %v4710
      %v4716 = vpack.c.bf16 %v4707, %v4706
      %v4717 = vpack.c.bf16 %v4703, %v4702
      %s4718 = scalar_lea.vmem %s5, 304
      %v4719 = vld [vmem:[%s4718] sm:$0xf]
      %v4720 = vld [vmem:[%s4718 + $0x4] sm:$0xf]
      %v4721 = vld [vmem:[%s4718 + $0x8] sm:$0xf]
      %v4722 = vld [vmem:[%s4718 + $0xc] sm:$0xf]
      %4723 = vrot.lane.b32.xlu0 %v4575, 18
      %v4724 = vpop.permute.xlu0 %4723
      %4725 = vrot.lane.b32.xlu0 %v4578, 18
      %v4726 = vpop.permute.xlu0 %4725
      %4727 = vrot.lane.b32.xlu0 %v4581, 18
      %v4728 = vpop.permute.xlu0 %4727
      %4729 = vrot.lane.b32.xlu0 %v4584, 18
      %v4730 = vpop.permute.xlu0 %4729
      %4731 = vrot.lane.b32.xlu0 %v4576, 18
      %v4732 = vpop.permute.xlu0 %4731
      %4733 = vrot.lane.b32.xlu0 %v4579, 18
      %v4734 = vpop.permute.xlu0 %4733
      %4735 = vrot.lane.b32.xlu0 %v4582, 18
      %v4736 = vpop.permute.xlu0 %4735
      %4737 = vrot.lane.b32.xlu0 %v4585, 18
      %v4738 = vpop.permute.xlu0 %4737
      %4739 = vrot.lane.b32.xlu0 %v4577, 18
      %v4740 = vpop.permute.xlu0 %4739
      %4741 = vrot.lane.b32.xlu0 %v4580, 18
      %v4742 = vpop.permute.xlu0 %4741
      %4743 = vrot.lane.b32.xlu0 %v4583, 18
      %v4744 = vpop.permute.xlu0 %4743
      %4745 = vrot.lane.b32.xlu0 %v4586, 18
      %v4746 = vpop.permute.xlu0 %4745
      %v4747 = vsel %vm741, %v4732, %v4740
      %v4748 = vsel %vm741, %v4734, %v4742
      %v4749 = vsel %vm741, %v4736, %v4744
      %v4750 = vsel %vm741, %v4738, %v4746
      %v4751 = vsel %vm741, %v4724, %v4732
      %v4752 = vsel %vm741, %v4726, %v4734
      %v4753 = vsel %vm741, %v4728, %v4736
      %v4754 = vsel %vm741, %v4730, %v4738
      %v4755 = vsel %vm741, %v4740, %v4724
      %v4756 = vsel %vm741, %v4742, %v4726
      %v4757 = vsel %vm741, %v4744, %v4728
      %v4758 = vsel %vm741, %v4746, %v4730
      %v4759 = vpack.c.bf16 %v4756, %v4755
      %v4760 = vpack.c.bf16 %v4752, %v4751
      %v4761 = vpack.c.bf16 %v4748, %v4747
      %v4762 = vpack.c.bf16 %v4758, %v4757
      %v4763 = vpack.c.bf16 %v4754, %v4753
      %v4764 = vpack.c.bf16 %v4750, %v4749
      %v4769 = vunpack.c.l.b16 %v4719
      %v4770 = vunpack.c.l.b16 %v4720
      %v4771 = vunpack.c.l.b16 %v4721
      %v4772 = vunpack.c.l.b16 %v4722
      %v4773 = vpack.c.b16 %v4770, %v4769
      %v4774 = vpack.c.b16 %v4772, %v4771
      %v4776 = vsel %vm770, %v4773, 0
      %v4779 = vsel %vm770, %v4774, 0
      %4781 = vmatprep.subr.bf16.mxu0 %v4760
      %4782 = vmatpush1.bf16.msra.mxu0 %v4759
      %4783 = vmatprep.subr.bf16.mxu0 %v4763
      %4784 = vmatpush1.bf16.msra.mxu0 %v4762
      %4785 = vmatprep.subr.bf16.mxu0 0
      %4786 = vmatpush1.bf16.msra.mxu0 0
      %4787 = vmatprep.subr.bf16.mxu0 0
      %4788 = vmatpush1.bf16.msra.mxu0 0
      %4789 = vmatprep.subr.bf16.mxu0 0
      %4790 = vmatpush1.bf16.msra.mxu0 0
      %4791 = vmatprep.subr.bf16.mxu0 0
      %4792 = vmatpush1.bf16.msra.mxu0 0
      %4793 = vmatprep.subr.bf16.mxu0 0
      %4794 = vmatpush1.bf16.msra.mxu0 0
      %4795 = vmatprep.subr.bf16.mxu0 0
      %4796 = vmatpush1.bf16.msra.mxu0 0
      %4797 = vmatprep.subr.bf16.mxu0 0
      %4798 = vmatpush1.bf16.msra.mxu0 0
      %4799 = vmatprep.subr.bf16.mxu0 0
      %4800 = vmatpush1.bf16.msra.mxu0 0
      %4801 = vmatprep.subr.bf16.mxu0 0
      %4802 = vmatpush1.bf16.msra.mxu0 0
      %4803 = vmatprep.subr.bf16.mxu0 0
      %4804 = vmatpush1.bf16.msra.mxu0 0
      %4805 = vmatprep.subr.bf16.mxu0 0
      %4806 = vmatpush1.bf16.msra.mxu0 0
      %4807 = vmatprep.subr.bf16.mxu0 0
      %4808 = vmatpush1.bf16.msra.mxu0 0
      %4809 = vmatprep.subr.bf16.mxu0 0
      %4810 = vmatpush1.bf16.msra.mxu0 0
      %4811 = vmatprep.subr.bf16.mxu0 0
      %4812 = vmatpush1.bf16.msra.mxu0 0
      %4813 = vmatprep.mubr.bf16.mxu0 0
      %4814 = vmatmul.mubr.bf16.gmra.mrb[0].mxu0 %v4776
      %v4815 = vpop.f32.mrb[0].mxu0
      %v4816 = vadd.f32 0.0, %v4815
      %v4817 = vpop.f32.mrb[0].mxu0
      %v4818 = vadd.f32 0.0, %v4817
      %v4819 = vpop.f32.mrb[0].mxu0
      %v4820 = vadd.f32 0.0, %v4819
      %v4821 = vpop.f32.mrb[0].mxu0
      %v4822 = vadd.f32 0.0, %v4821
      %4823 = vmatprep.mubr.bf16.mxu0 0
      %4824 = vmatmul.mubr.bf16.gmra.mrb[0].mxu0 %v4779
      %v4825 = vpop.f32.mrb[0].mxu0
      %v4826 = vadd.f32 0.0, %v4825
      %v4827 = vpop.f32.mrb[0].mxu0
      %v4828 = vadd.f32 0.0, %v4827
      %v4829 = vpop.f32.mrb[0].mxu0
      %v4830 = vadd.f32 0.0, %v4829
      %v4831 = vpop.f32.mrb[0].mxu0
      %v4832 = vadd.f32 0.0, %v4831
      %4833 = vdwg.mxu0
      %4834 = vmatprep.subr.bf16.mxu0 0
      %4835 = vmatpush1.bf16.msra.mxu0 %v4761
      %4836 = vmatprep.subr.bf16.mxu0 0
      %4837 = vmatpush1.bf16.msra.mxu0 %v4764
      %4838 = vmatprep.subr.bf16.mxu0 0
      %4839 = vmatpush1.bf16.msra.mxu0 0
      %4840 = vmatprep.subr.bf16.mxu0 0
      %4841 = vmatpush1.bf16.msra.mxu0 0
      %4842 = vmatprep.subr.bf16.mxu0 0
      %4843 = vmatpush1.bf16.msra.mxu0 0
      %4844 = vmatprep.subr.bf16.mxu0 0
      %4845 = vmatpush1.bf16.msra.mxu0 0
      %4846 = vmatprep.subr.bf16.mxu0 0
      %4847 = vmatpush1.bf16.msra.mxu0 0
      %4848 = vmatprep.subr.bf16.mxu0 0
      %4849 = vmatpush1.bf16.msra.mxu0 0
      %4850 = vmatprep.subr.bf16.mxu0 0
      %4851 = vmatpush1.bf16.msra.mxu0 0
      %4852 = vmatprep.subr.bf16.mxu0 0
      %4853 = vmatpush1.bf16.msra.mxu0 0
      %4854 = vmatprep.subr.bf16.mxu0 0
      %4855 = vmatpush1.bf16.msra.mxu0 0
      %4856 = vmatprep.subr.bf16.mxu0 0
      %4857 = vmatpush1.bf16.msra.mxu0 0
      %4858 = vmatprep.subr.bf16.mxu0 0
      %4859 = vmatpush1.bf16.msra.mxu0 0
      %4860 = vmatprep.subr.bf16.mxu0 0
      %4861 = vmatpush1.bf16.msra.mxu0 0
      %4862 = vmatprep.subr.bf16.mxu0 0
      %4863 = vmatpush1.bf16.msra.mxu0 0
      %4864 = vmatprep.subr.bf16.mxu0 0
      %4865 = vmatpush1.bf16.msra.mxu0 0
      %4866 = vmatprep.mubr.bf16.mxu0 0
      %4867 = vmatmul.mubr.bf16.gmra.mrb[0].mxu0 %v4776
      %v4868 = vpop.f32.mrb[0].mxu0
      %v4869 = vadd.f32 0.0, %v4868
      %v4870 = vpop.f32.mrb[0].mxu0
      %v4871 = vpop.f32.mrb[0].mxu0
      %v4872 = vadd.f32 0.0, %v4871
      %v4873 = vpop.f32.mrb[0].mxu0
      %4874 = vmatprep.mubr.bf16.mxu0 0
      %4875 = vmatmul.mubr.bf16.gmra.mrb[0].mxu0 %v4779
      %v4876 = vpop.f32.mrb[0].mxu0
      %v4877 = vadd.f32 0.0, %v4876
      %v4878 = vpop.f32.mrb[0].mxu0
      %v4879 = vpop.f32.mrb[0].mxu0
      %v4880 = vadd.f32 0.0, %v4879
      %v4881 = vpop.f32.mrb[0].mxu0
      %4882 = vdwg.mxu0
      %v4887 = vunpack.c.l.b16 %v4672
      %v4888 = vunpack.c.l.b16 %v4673
      %v4889 = vunpack.c.l.b16 %v4674
      %v4890 = vunpack.c.l.b16 %v4675
      %v4891 = vpack.c.b16 %v4888, %v4887
      %v4892 = vpack.c.b16 %v4890, %v4889
      %v4894 = vsel %vm770, %v4891, 0
      %v4897 = vsel %vm770, %v4892, 0
      %4899 = vmatprep.subr.bf16.mxu0 %v4713
      %4900 = vmatpush1.bf16.msra.mxu0 %v4712
      %4901 = vmatprep.subr.bf16.mxu0 %v4716
      %4902 = vmatpush1.bf16.msra.mxu0 %v4715
      %4903 = vmatprep.subr.bf16.mxu0 0
      %4904 = vmatpush1.bf16.msra.mxu0 0
      %4905 = vmatprep.subr.bf16.mxu0 0
      %4906 = vmatpush1.bf16.msra.mxu0 0
      %4907 = vmatprep.subr.bf16.mxu0 0
      %4908 = vmatpush1.bf16.msra.mxu0 0
      %4909 = vmatprep.subr.bf16.mxu0 0
      %4910 = vmatpush1.bf16.msra.mxu0 0
      %4911 = vmatprep.subr.bf16.mxu0 0
      %4912 = vmatpush1.bf16.msra.mxu0 0
      %4913 = vmatprep.subr.bf16.mxu0 0
      %4914 = vmatpush1.bf16.msra.mxu0 0
      %4915 = vmatprep.subr.bf16.mxu0 0
      %4916 = vmatpush1.bf16.msra.mxu0 0
      %4917 = vmatprep.subr.bf16.mxu0 0
      %4918 = vmatpush1.bf16.msra.mxu0 0
      %4919 = vmatprep.subr.bf16.mxu0 0
      %4920 = vmatpush1.bf16.msra.mxu0 0
      %4921 = vmatprep.subr.bf16.mxu0 0
      %4922 = vmatpush1.bf16.msra.mxu0 0
      %4923 = vmatprep.subr.bf16.mxu0 0
      %4924 = vmatpush1.bf16.msra.mxu0 0
      %4925 = vmatprep.subr.bf16.mxu0 0
      %4926 = vmatpush1.bf16.msra.mxu0 0
      %4927 = vmatprep.subr.bf16.mxu0 0
      %4928 = vmatpush1.bf16.msra.mxu0 0
      %4929 = vmatprep.subr.bf16.mxu0 0
      %4930 = vmatpush1.bf16.msra.mxu0 0
      %4931 = vmatprep.mubr.bf16.mxu0 0
      %4932 = vmatmul.mubr.bf16.gmra.mrb[0].mxu0 %v4894
      %v4933 = vpop.f32.mrb[0].mxu0
      %v4934 = vadd.f32 %v4816, %v4933
      %v4935 = vpop.f32.mrb[0].mxu0
      %v4936 = vadd.f32 %v4818, %v4935
      %v4937 = vpop.f32.mrb[0].mxu0
      %v4938 = vadd.f32 %v4820, %v4937
      %v4939 = vpop.f32.mrb[0].mxu0
      %v4940 = vadd.f32 %v4822, %v4939
      %4941 = vmatprep.mubr.bf16.mxu0 0
      %4942 = vmatmul.mubr.bf16.gmra.mrb[0].mxu0 %v4897
      %v4943 = vpop.f32.mrb[0].mxu0
      %v4944 = vadd.f32 %v4826, %v4943
      %v4945 = vpop.f32.mrb[0].mxu0
      %v4946 = vadd.f32 %v4828, %v4945
      %v4947 = vpop.f32.mrb[0].mxu0
      %v4948 = vadd.f32 %v4830, %v4947
      %v4949 = vpop.f32.mrb[0].mxu0
      %v4950 = vadd.f32 %v4832, %v4949
      %4951 = vdwg.mxu0
      %4952 = vmatprep.subr.bf16.mxu0 0
      %4953 = vmatpush1.bf16.msra.mxu0 %v4714
      %4954 = vmatprep.subr.bf16.mxu0 0
      %4955 = vmatpush1.bf16.msra.mxu0 %v4717
      %4956 = vmatprep.subr.bf16.mxu0 0
      %4957 = vmatpush1.bf16.msra.mxu0 0
      %4958 = vmatprep.subr.bf16.mxu0 0
      %4959 = vmatpush1.bf16.msra.mxu0 0
      %4960 = vmatprep.subr.bf16.mxu0 0
      %4961 = vmatpush1.bf16.msra.mxu0 0
      %4962 = vmatprep.subr.bf16.mxu0 0
      %4963 = vmatpush1.bf16.msra.mxu0 0
      %4964 = vmatprep.subr.bf16.mxu0 0
      %4965 = vmatpush1.bf16.msra.mxu0 0
      %4966 = vmatprep.subr.bf16.mxu0 0
      %4967 = vmatpush1.bf16.msra.mxu0 0
      %4968 = vmatprep.subr.bf16.mxu0 0
      %4969 = vmatpush1.bf16.msra.mxu0 0
      %4970 = vmatprep.subr.bf16.mxu0 0
      %4971 = vmatpush1.bf16.msra.mxu0 0
      %4972 = vmatprep.subr.bf16.mxu0 0
      %4973 = vmatpush1.bf16.msra.mxu0 0
      %4974 = vmatprep.subr.bf16.mxu0 0
      %4975 = vmatpush1.bf16.msra.mxu0 0
      %4976 = vmatprep.subr.bf16.mxu0 0
      %4977 = vmatpush1.bf16.msra.mxu0 0
      %4978 = vmatprep.subr.bf16.mxu0 0
      %4979 = vmatpush1.bf16.msra.mxu0 0
      %4980 = vmatprep.subr.bf16.mxu0 0
      %4981 = vmatpush1.bf16.msra.mxu0 0
      %4982 = vmatprep.subr.bf16.mxu0 0
      %4983 = vmatpush1.bf16.msra.mxu0 0
      %4984 = vmatprep.mubr.bf16.mxu0 0
      %4985 = vmatmul.mubr.bf16.gmra.mrb[0].mxu0 %v4894
      %v4986 = vpop.f32.mrb[0].mxu0
      %v4987 = vadd.f32 %v4869, %v4986
      %v4988 = vpop.f32.mrb[0].mxu0
      %v4989 = vpop.f32.mrb[0].mxu0
      %v4990 = vadd.f32 %v4872, %v4989
      %v4991 = vpop.f32.mrb[0].mxu0
      %4992 = vmatprep.mubr.bf16.mxu0 0
      %4993 = vmatmul.mubr.bf16.gmra.mrb[0].mxu0 %v4897
      %v4994 = vpop.f32.mrb[0].mxu0
      %v4995 = vadd.f32 %v4877, %v4994
      %v4996 = vpop.f32.mrb[0].mxu0
      %v4997 = vpop.f32.mrb[0].mxu0
      %v4998 = vadd.f32 %v4880, %v4997
      %v4999 = vpop.f32.mrb[0].mxu0
      %5000 = vdwg.mxu0
      %s5001 = scalar_lea.vmem %s5, 320
      %v5002 = vld [vmem:[%s5001] sm:$0xf]
      %v5003 = vld [vmem:[%s5001 + $0x4] sm:$0xf]
      %v5004 = vld [vmem:[%s5001 + $0x8] sm:$0xf]
      %v5005 = vld [vmem:[%s5001 + $0xc] sm:$0xf]
      %5006 = vrot.lane.b32.xlu0 %v4575, 17
      %v5007 = vpop.permute.xlu0 %5006
      %5008 = vrot.lane.b32.xlu0 %v4578, 17
      %v5009 = vpop.permute.xlu0 %5008
      %5010 = vrot.lane.b32.xlu0 %v4581, 17
      %v5011 = vpop.permute.xlu0 %5010
      %5012 = vrot.lane.b32.xlu0 %v4584, 17
      %v5013 = vpop.permute.xlu0 %5012
      %5014 = vrot.lane.b32.xlu0 %v4576, 17
      %v5015 = vpop.permute.xlu0 %5014
      %5016 = vrot.lane.b32.xlu0 %v4579, 17
      %v5017 = vpop.permute.xlu0 %5016
      %5018 = vrot.lane.b32.xlu0 %v4582, 17
      %v5019 = vpop.permute.xlu0 %5018
      %5020 = vrot.lane.b32.xlu0 %v4585, 17
      %v5021 = vpop.permute.xlu0 %5020
      %5022 = vrot.lane.b32.xlu0 %v4577, 17
      %v5023 = vpop.permute.xlu0 %5022
      %5024 = vrot.lane.b32.xlu0 %v4580, 17
      %v5025 = vpop.permute.xlu0 %5024
      %5026 = vrot.lane.b32.xlu0 %v4583, 17
      %v5027 = vpop.permute.xlu0 %5026
      %5028 = vrot.lane.b32.xlu0 %v4586, 17
      %v5029 = vpop.permute.xlu0 %5028
      %v5030 = vsel %vm1026, %v5015, %v5023
      %v5031 = vsel %vm1026, %v5017, %v5025
      %v5032 = vsel %vm1026, %v5019, %v5027
      %v5033 = vsel %vm1026, %v5021, %v5029
      %v5034 = vsel %vm1026, %v5007, %v5015
      %v5035 = vsel %vm1026, %v5009, %v5017
      %v5036 = vsel %vm1026, %v5011, %v5019
      %v5037 = vsel %vm1026, %v5013, %v5021
      %v5038 = vsel %vm1026, %v5023, %v5007
      %v5039 = vsel %vm1026, %v5025, %v5009
      %v5040 = vsel %vm1026, %v5027, %v5011
      %v5041 = vsel %vm1026, %v5029, %v5013
      %v5042 = vpack.c.bf16 %v5039, %v5038
      %v5043 = vpack.c.bf16 %v5035, %v5034
      %v5044 = vpack.c.bf16 %v5031, %v5030
      %v5045 = vpack.c.bf16 %v5041, %v5040
      %v5046 = vpack.c.bf16 %v5037, %v5036
      %v5047 = vpack.c.bf16 %v5033, %v5032
      %v5052 = vunpack.c.l.b16 %v5002
      %v5053 = vunpack.c.l.b16 %v5003
      %v5054 = vunpack.c.l.b16 %v5004
      %v5055 = vunpack.c.l.b16 %v5005
      %v5056 = vpack.c.b16 %v5053, %v5052
      %v5057 = vpack.c.b16 %v5055, %v5054
      %v5059 = vsel %vm770, %v5056, 0
      %v5062 = vsel %vm770, %v5057, 0
      %5064 = vmatprep.subr.bf16.mxu0 %v5043
      %5065 = vmatpush1.bf16.msra.mxu0 %v5042
      %5066 = vmatprep.subr.bf16.mxu0 %v5046
      %5067 = vmatpush1.bf16.msra.mxu0 %v5045
      %5068 = vmatprep.subr.bf16.mxu0 0
      %5069 = vmatpush1.bf16.msra.mxu0 0
      %5070 = vmatprep.subr.bf16.mxu0 0
      %5071 = vmatpush1.bf16.msra.mxu0 0
      %5072 = vmatprep.subr.bf16.mxu0 0
      %5073 = vmatpush1.bf16.msra.mxu0 0
      %5074 = vmatprep.subr.bf16.mxu0 0
      %5075 = vmatpush1.bf16.msra.mxu0 0
      %5076 = vmatprep.subr.bf16.mxu0 0
      %5077 = vmatpush1.bf16.msra.mxu0 0
      %5078 = vmatprep.subr.bf16.mxu0 0
      %5079 = vmatpush1.bf16.msra.mxu0 0
      %5080 = vmatprep.subr.bf16.mxu0 0
      %5081 = vmatpush1.bf16.msra.mxu0 0
      %5082 = vmatprep.subr.bf16.mxu0 0
      %5083 = vmatpush1.bf16.msra.mxu0 0
      %5084 = vmatprep.subr.bf16.mxu0 0
      %5085 = vmatpush1.bf16.msra.mxu0 0
      %5086 = vmatprep.subr.bf16.mxu0 0
      %5087 = vmatpush1.bf16.msra.mxu0 0
      %5088 = vmatprep.subr.bf16.mxu0 0
      %5089 = vmatpush1.bf16.msra.mxu0 0
      %5090 = vmatprep.subr.bf16.mxu0 0
      %5091 = vmatpush1.bf16.msra.mxu0 0
      %5092 = vmatprep.subr.bf16.mxu0 0
      %5093 = vmatpush1.bf16.msra.mxu0 0
      %5094 = vmatprep.subr.bf16.mxu0 0
      %5095 = vmatpush1.bf16.msra.mxu0 0
      %5096 = vmatprep.mubr.bf16.mxu0 0
      %5097 = vmatmul.mubr.bf16.gmra.mrb[0].mxu0 %v5059
      %v5098 = vpop.f32.mrb[0].mxu0
      %v5099 = vadd.f32 0.0, %v5098
      %v5100 = vpop.f32.mrb[0].mxu0
      %v5101 = vadd.f32 0.0, %v5100
      %v5102 = vpop.f32.mrb[0].mxu0
      %v5103 = vadd.f32 0.0, %v5102
      %v5104 = vpop.f32.mrb[0].mxu0
      %v5105 = vadd.f32 0.0, %v5104
      %5106 = vmatprep.mubr.bf16.mxu0 0
      %5107 = vmatmul.mubr.bf16.gmra.mrb[0].mxu0 %v5062
      %v5108 = vpop.f32.mrb[0].mxu0
      %v5109 = vadd.f32 0.0, %v5108
      %v5110 = vpop.f32.mrb[0].mxu0
      %v5111 = vadd.f32 0.0, %v5110
      %v5112 = vpop.f32.mrb[0].mxu0
      %v5113 = vadd.f32 0.0, %v5112
      %v5114 = vpop.f32.mrb[0].mxu0
      %v5115 = vadd.f32 0.0, %v5114
      %5116 = vdwg.mxu0
      %5117 = vmatprep.subr.bf16.mxu0 0
      %5118 = vmatpush1.bf16.msra.mxu0 %v5044
      %5119 = vmatprep.subr.bf16.mxu0 0
      %5120 = vmatpush1.bf16.msra.mxu0 %v5047
      %5121 = vmatprep.subr.bf16.mxu0 0
      %5122 = vmatpush1.bf16.msra.mxu0 0
      %5123 = vmatprep.subr.bf16.mxu0 0
      %5124 = vmatpush1.bf16.msra.mxu0 0
      %5125 = vmatprep.subr.bf16.mxu0 0
      %5126 = vmatpush1.bf16.msra.mxu0 0
      %5127 = vmatprep.subr.bf16.mxu0 0
      %5128 = vmatpush1.bf16.msra.mxu0 0
      %5129 = vmatprep.subr.bf16.mxu0 0
      %5130 = vmatpush1.bf16.msra.mxu0 0
      %5131 = vmatprep.subr.bf16.mxu0 0
      %5132 = vmatpush1.bf16.msra.mxu0 0
      %5133 = vmatprep.subr.bf16.mxu0 0
      %5134 = vmatpush1.bf16.msra.mxu0 0
      %5135 = vmatprep.subr.bf16.mxu0 0
      %5136 = vmatpush1.bf16.msra.mxu0 0
      %5137 = vmatprep.subr.bf16.mxu0 0
      %5138 = vmatpush1.bf16.msra.mxu0 0
      %5139 = vmatprep.subr.bf16.mxu0 0
      %5140 = vmatpush1.bf16.msra.mxu0 0
      %5141 = vmatprep.subr.bf16.mxu0 0
      %5142 = vmatpush1.bf16.msra.mxu0 0
      %5143 = vmatprep.subr.bf16.mxu0 0
      %5144 = vmatpush1.bf16.msra.mxu0 0
      %5145 = vmatprep.subr.bf16.mxu0 0
      %5146 = vmatpush1.bf16.msra.mxu0 0
      %5147 = vmatprep.subr.bf16.mxu0 0
      %5148 = vmatpush1.bf16.msra.mxu0 0
      %5149 = vmatprep.mubr.bf16.mxu0 0
      %5150 = vmatmul.mubr.bf16.gmra.mrb[0].mxu0 %v5059
      %v5151 = vpop.f32.mrb[0].mxu0
      %v5152 = vadd.f32 0.0, %v5151
      %v5153 = vpop.f32.mrb[0].mxu0
      %v5154 = vpop.f32.mrb[0].mxu0
      %v5155 = vadd.f32 0.0, %v5154
      %v5156 = vpop.f32.mrb[0].mxu0
      %5157 = vmatprep.mubr.bf16.mxu0 0
      %5158 = vmatmul.mubr.bf16.gmra.mrb[0].mxu0 %v5062
      %v5159 = vpop.f32.mrb[0].mxu0
      %v5160 = vadd.f32 0.0, %v5159
      %v5161 = vpop.f32.mrb[0].mxu0
      %v5162 = vpop.f32.mrb[0].mxu0
      %v5163 = vadd.f32 0.0, %v5162
      %v5164 = vpop.f32.mrb[0].mxu0
      %5165 = vdwg.mxu0
      %v5166 = vadd.f32 %v4934, %v5099
      %v5167 = vadd.f32 %v4936, %v5101
      %v5168 = vadd.f32 %v4987, %v5152
      %v5169 = vadd.f32 %v4938, %v5103
      %v5170 = vadd.f32 %v4940, %v5105
      %v5171 = vadd.f32 %v4990, %v5155
      %v5172 = vadd.f32 %v4944, %v5109
      %v5173 = vadd.f32 %v4946, %v5111
      %v5174 = vadd.f32 %v4995, %v5160
      %v5175 = vadd.f32 %v4948, %v5113
      %v5176 = vadd.f32 %v4950, %v5115
      %v5177 = vadd.f32 %v4998, %v5163
      %s5178 = scalar_lea.vmem %s5, 336
      %v5179 = vld [vmem:[%s5178] sm:$0xf]
      %v5180 = vld [vmem:[%s5178 + $0x4] sm:$0xf]
      %v5181 = vld [vmem:[%s5178 + $0x8] sm:$0xf]
      %v5182 = vld [vmem:[%s5178 + $0xc] sm:$0xf]
      %5183 = vrot.lane.b32.xlu0 %v4575, 1
      %v5184 = vpop.permute.xlu0 %5183
      %5185 = vrot.lane.b32.xlu0 %v4578, 1
      %v5186 = vpop.permute.xlu0 %5185
      %5187 = vrot.lane.b32.xlu0 %v4581, 1
      %v5188 = vpop.permute.xlu0 %5187
      %5189 = vrot.lane.b32.xlu0 %v4584, 1
      %v5190 = vpop.permute.xlu0 %5189
      %5191 = vrot.lane.b32.xlu0 %v4576, 1
      %v5192 = vpop.permute.xlu0 %5191
      %5193 = vrot.lane.b32.xlu0 %v4579, 1
      %v5194 = vpop.permute.xlu0 %5193
      %5195 = vrot.lane.b32.xlu0 %v4582, 1
      %v5196 = vpop.permute.xlu0 %5195
      %5197 = vrot.lane.b32.xlu0 %v4585, 1
      %v5198 = vpop.permute.xlu0 %5197
      %5199 = vrot.lane.b32.xlu0 %v4577, 1
      %v5200 = vpop.permute.xlu0 %5199
      %5201 = vrot.lane.b32.xlu0 %v4580, 1
      %v5202 = vpop.permute.xlu0 %5201
      %5203 = vrot.lane.b32.xlu0 %v4583, 1
      %v5204 = vpop.permute.xlu0 %5203
      %5205 = vrot.lane.b32.xlu0 %v4586, 1
      %v5206 = vpop.permute.xlu0 %5205
      %v5207 = vsel %vm1204, %v5192, %v5200
      %v5208 = vsel %vm1204, %v5194, %v5202
      %v5209 = vsel %vm1204, %v5196, %v5204
      %v5210 = vsel %vm1204, %v5198, %v5206
      %v5211 = vsel %vm1204, %v5184, %v5192
      %v5212 = vsel %vm1204, %v5186, %v5194
      %v5213 = vsel %vm1204, %v5188, %v5196
      %v5214 = vsel %vm1204, %v5190, %v5198
      %v5215 = vsel %vm1204, %v5200, %v5184
      %v5216 = vsel %vm1204, %v5202, %v5186
      %v5217 = vsel %vm1204, %v5204, %v5188
      %v5218 = vsel %vm1204, %v5206, %v5190
      %v5219 = vpack.c.bf16 %v5216, %v5215
      %v5220 = vpack.c.bf16 %v5212, %v5211
      %v5221 = vpack.c.bf16 %v5208, %v5207
      %v5222 = vpack.c.bf16 %v5218, %v5217
      %v5223 = vpack.c.bf16 %v5214, %v5213
      %v5224 = vpack.c.bf16 %v5210, %v5209
      %v5229 = vunpack.c.l.b16 %v5179
      %v5230 = vunpack.c.l.b16 %v5180
      %v5231 = vunpack.c.l.b16 %v5181
      %v5232 = vunpack.c.l.b16 %v5182
      %v5233 = vpack.c.b16 %v5230, %v5229
      %v5234 = vpack.c.b16 %v5232, %v5231
      %v5236 = vsel %vm770, %v5233, 0
      %v5239 = vsel %vm770, %v5234, 0
      %5241 = vmatprep.subr.bf16.mxu0 %v5220
      %5242 = vmatpush1.bf16.msra.mxu0 %v5219
      %5243 = vmatprep.subr.bf16.mxu0 %v5223
      %5244 = vmatpush1.bf16.msra.mxu0 %v5222
      %5245 = vmatprep.subr.bf16.mxu0 0
      %5246 = vmatpush1.bf16.msra.mxu0 0
      %5247 = vmatprep.subr.bf16.mxu0 0
      %5248 = vmatpush1.bf16.msra.mxu0 0
      %5249 = vmatprep.subr.bf16.mxu0 0
      %5250 = vmatpush1.bf16.msra.mxu0 0
      %5251 = vmatprep.subr.bf16.mxu0 0
      %5252 = vmatpush1.bf16.msra.mxu0 0
      %5253 = vmatprep.subr.bf16.mxu0 0
      %5254 = vmatpush1.bf16.msra.mxu0 0
      %5255 = vmatprep.subr.bf16.mxu0 0
      %5256 = vmatpush1.bf16.msra.mxu0 0
      %5257 = vmatprep.subr.bf16.mxu0 0
      %5258 = vmatpush1.bf16.msra.mxu0 0
      %5259 = vmatprep.subr.bf16.mxu0 0
      %5260 = vmatpush1.bf16.msra.mxu0 0
      %5261 = vmatprep.subr.bf16.mxu0 0
      %5262 = vmatpush1.bf16.msra.mxu0 0
      %5263 = vmatprep.subr.bf16.mxu0 0
      %5264 = vmatpush1.bf16.msra.mxu0 0
      %5265 = vmatprep.subr.bf16.mxu0 0
      %5266 = vmatpush1.bf16.msra.mxu0 0
      %5267 = vmatprep.subr.bf16.mxu0 0
      %5268 = vmatpush1.bf16.msra.mxu0 0
      %5269 = vmatprep.subr.bf16.mxu0 0
      %5270 = vmatpush1.bf16.msra.mxu0 0
      %5271 = vmatprep.subr.bf16.mxu0 0
      %5272 = vmatpush1.bf16.msra.mxu0 0
      %5273 = vmatprep.mubr.bf16.mxu0 0
      %5274 = vmatmul.mubr.bf16.gmra.mrb[0].mxu0 %v5236
      %v5275 = vpop.f32.mrb[0].mxu0
      %v5276 = vadd.f32 0.0, %v5275
      %v5277 = vpop.f32.mrb[0].mxu0
      %v5278 = vadd.f32 0.0, %v5277
      %v5279 = vpop.f32.mrb[0].mxu0
      %v5280 = vadd.f32 0.0, %v5279
      %v5281 = vpop.f32.mrb[0].mxu0
      %v5282 = vadd.f32 0.0, %v5281
      %5283 = vmatprep.mubr.bf16.mxu0 0
      %5284 = vmatmul.mubr.bf16.gmra.mrb[0].mxu0 %v5239
      %v5285 = vpop.f32.mrb[0].mxu0
      %v5286 = vadd.f32 0.0, %v5285
      %v5287 = vpop.f32.mrb[0].mxu0
      %v5288 = vadd.f32 0.0, %v5287
      %v5289 = vpop.f32.mrb[0].mxu0
      %v5290 = vadd.f32 0.0, %v5289
      %v5291 = vpop.f32.mrb[0].mxu0
      %v5292 = vadd.f32 0.0, %v5291
      %5293 = vdwg.mxu0
      %5294 = vmatprep.subr.bf16.mxu0 0
      %5295 = vmatpush1.bf16.msra.mxu0 %v5221
      %5296 = vmatprep.subr.bf16.mxu0 0
      %5297 = vmatpush1.bf16.msra.mxu0 %v5224
      %5298 = vmatprep.subr.bf16.mxu0 0
      %5299 = vmatpush1.bf16.msra.mxu0 0
      %5300 = vmatprep.subr.bf16.mxu0 0
      %5301 = vmatpush1.bf16.msra.mxu0 0
      %5302 = vmatprep.subr.bf16.mxu0 0
      %5303 = vmatpush1.bf16.msra.mxu0 0
      %5304 = vmatprep.subr.bf16.mxu0 0
      %5305 = vmatpush1.bf16.msra.mxu0 0
      %5306 = vmatprep.subr.bf16.mxu0 0
      %5307 = vmatpush1.bf16.msra.mxu0 0
      %5308 = vmatprep.subr.bf16.mxu0 0
      %5309 = vmatpush1.bf16.msra.mxu0 0
      %5310 = vmatprep.subr.bf16.mxu0 0
      %5311 = vmatpush1.bf16.msra.mxu0 0
      %5312 = vmatprep.subr.bf16.mxu0 0
      %5313 = vmatpush1.bf16.msra.mxu0 0
      %5314 = vmatprep.subr.bf16.mxu0 0
      %5315 = vmatpush1.bf16.msra.mxu0 0
      %5316 = vmatprep.subr.bf16.mxu0 0
      %5317 = vmatpush1.bf16.msra.mxu0 0
      %5318 = vmatprep.subr.bf16.mxu0 0
      %5319 = vmatpush1.bf16.msra.mxu0 0
      %5320 = vmatprep.subr.bf16.mxu0 0
      %5321 = vmatpush1.bf16.msra.mxu0 0
      %5322 = vmatprep.subr.bf16.mxu0 0
      %5323 = vmatpush1.bf16.msra.mxu0 0
      %5324 = vmatprep.subr.bf16.mxu0 0
      %5325 = vmatpush1.bf16.msra.mxu0 0
      %5326 = vmatprep.mubr.bf16.mxu0 0
      %5327 = vmatmul.mubr.bf16.gmra.mrb[0].mxu0 %v5236
      %v5328 = vpop.f32.mrb[0].mxu0
      %v5329 = vadd.f32 0.0, %v5328
      %v5330 = vpop.f32.mrb[0].mxu0
      %v5331 = vpop.f32.mrb[0].mxu0
      %v5332 = vadd.f32 0.0, %v5331
      %v5333 = vpop.f32.mrb[0].mxu0
      %5334 = vmatprep.mubr.bf16.mxu0 0
      %5335 = vmatmul.mubr.bf16.gmra.mrb[0].mxu0 %v5239
      %v5336 = vpop.f32.mrb[0].mxu0
      %v5337 = vadd.f32 0.0, %v5336
      %v5338 = vpop.f32.mrb[0].mxu0
      %v5339 = vpop.f32.mrb[0].mxu0
      %v5340 = vadd.f32 0.0, %v5339
      %v5341 = vpop.f32.mrb[0].mxu0
      %5342 = vdwg.mxu0
      %v5343 = vadd.f32 %v5166, %v5276
      %v5344 = vadd.f32 %v5167, %v5278
      %v5345 = vadd.f32 %v5168, %v5329
      %v5346 = vadd.f32 %v5169, %v5280
      %v5347 = vadd.f32 %v5170, %v5282
      %v5348 = vadd.f32 %v5171, %v5332
      %v5349 = vadd.f32 %v5172, %v5286
      %v5350 = vadd.f32 %v5173, %v5288
      %v5351 = vadd.f32 %v5174, %v5337
      %v5352 = vadd.f32 %v5175, %v5290
      %v5353 = vadd.f32 %v5176, %v5292
      %v5354 = vadd.f32 %v5177, %v5340
      %s5355 = scalar_lea.vmem %s5, 352
      %v5356 = vld [vmem:[%s5355] sm:$0xf]
      %v5357 = vld [vmem:[%s5355 + $0x4] sm:$0xf]
      %v5358 = vld [vmem:[%s5355 + $0x8] sm:$0xf]
      %v5359 = vld [vmem:[%s5355 + $0xc] sm:$0xf]
      %v5360 = vpack.c.bf16 %v4578, %v4575
      %v5361 = vpack.c.bf16 %v4579, %v4576
      %v5362 = vpack.c.bf16 %v4580, %v4577
      %v5363 = vpack.c.bf16 %v4584, %v4581
      %v5364 = vpack.c.bf16 %v4585, %v4582
      %v5365 = vpack.c.bf16 %v4586, %v4583
      %v5370 = vunpack.c.l.b16 %v5356
      %v5371 = vunpack.c.l.b16 %v5357
      %v5372 = vunpack.c.l.b16 %v5358
      %v5373 = vunpack.c.l.b16 %v5359
      %v5374 = vpack.c.b16 %v5371, %v5370
      %v5375 = vpack.c.b16 %v5373, %v5372
      %v5377 = vsel %vm770, %v5374, 0
      %v5380 = vsel %vm770, %v5375, 0
      %5382 = vmatprep.subr.bf16.mxu0 %v5361
      %5383 = vmatpush1.bf16.msra.mxu0 %v5360
      %5384 = vmatprep.subr.bf16.mxu0 %v5364
      %5385 = vmatpush1.bf16.msra.mxu0 %v5363
      %5386 = vmatprep.subr.bf16.mxu0 0
      %5387 = vmatpush1.bf16.msra.mxu0 0
      %5388 = vmatprep.subr.bf16.mxu0 0
      %5389 = vmatpush1.bf16.msra.mxu0 0
      %5390 = vmatprep.subr.bf16.mxu0 0
      %5391 = vmatpush1.bf16.msra.mxu0 0
      %5392 = vmatprep.subr.bf16.mxu0 0
      %5393 = vmatpush1.bf16.msra.mxu0 0
      %5394 = vmatprep.subr.bf16.mxu0 0
      %5395 = vmatpush1.bf16.msra.mxu0 0
      %5396 = vmatprep.subr.bf16.mxu0 0
      %5397 = vmatpush1.bf16.msra.mxu0 0
      %5398 = vmatprep.subr.bf16.mxu0 0
      %5399 = vmatpush1.bf16.msra.mxu0 0
      %5400 = vmatprep.subr.bf16.mxu0 0
      %5401 = vmatpush1.bf16.msra.mxu0 0
      %5402 = vmatprep.subr.bf16.mxu0 0
      %5403 = vmatpush1.bf16.msra.mxu0 0
      %5404 = vmatprep.subr.bf16.mxu0 0
      %5405 = vmatpush1.bf16.msra.mxu0 0
      %5406 = vmatprep.subr.bf16.mxu0 0
      %5407 = vmatpush1.bf16.msra.mxu0 0
      %5408 = vmatprep.subr.bf16.mxu0 0
      %5409 = vmatpush1.bf16.msra.mxu0 0
      %5410 = vmatprep.subr.bf16.mxu0 0
      %5411 = vmatpush1.bf16.msra.mxu0 0
      %5412 = vmatprep.subr.bf16.mxu0 0
      %5413 = vmatpush1.bf16.msra.mxu0 0
      %5414 = vmatprep.mubr.bf16.mxu0 0
      %5415 = vmatmul.mubr.bf16.gmra.mrb[0].mxu0 %v5377
      %v5416 = vpop.f32.mrb[0].mxu0
      %v5417 = vadd.f32 0.0, %v5416
      %v5418 = vpop.f32.mrb[0].mxu0
      %v5419 = vadd.f32 0.0, %v5418
      %v5420 = vpop.f32.mrb[0].mxu0
      %v5421 = vadd.f32 0.0, %v5420
      %v5422 = vpop.f32.mrb[0].mxu0
      %v5423 = vadd.f32 0.0, %v5422
      %5424 = vmatprep.mubr.bf16.mxu0 0
      %5425 = vmatmul.mubr.bf16.gmra.mrb[0].mxu0 %v5380
      %v5426 = vpop.f32.mrb[0].mxu0
      %v5427 = vadd.f32 0.0, %v5426
      %v5428 = vpop.f32.mrb[0].mxu0
      %v5429 = vadd.f32 0.0, %v5428
      %v5430 = vpop.f32.mrb[0].mxu0
      %v5431 = vadd.f32 0.0, %v5430
      %v5432 = vpop.f32.mrb[0].mxu0
      %v5433 = vadd.f32 0.0, %v5432
      %5434 = vdwg.mxu0
      %5435 = vmatprep.subr.bf16.mxu0 0
      %5436 = vmatpush1.bf16.msra.mxu0 %v5362
      %5437 = vmatprep.subr.bf16.mxu0 0
      %5438 = vmatpush1.bf16.msra.mxu0 %v5365
      %5439 = vmatprep.subr.bf16.mxu0 0
      %5440 = vmatpush1.bf16.msra.mxu0 0
      %5441 = vmatprep.subr.bf16.mxu0 0
      %5442 = vmatpush1.bf16.msra.mxu0 0
      %5443 = vmatprep.subr.bf16.mxu0 0
      %5444 = vmatpush1.bf16.msra.mxu0 0
      %5445 = vmatprep.subr.bf16.mxu0 0
      %5446 = vmatpush1.bf16.msra.mxu0 0
      %5447 = vmatprep.subr.bf16.mxu0 0
      %5448 = vmatpush1.bf16.msra.mxu0 0
      %5449 = vmatprep.subr.bf16.mxu0 0
      %5450 = vmatpush1.bf16.msra.mxu0 0
      %5451 = vmatprep.subr.bf16.mxu0 0
      %5452 = vmatpush1.bf16.msra.mxu0 0
      %5453 = vmatprep.subr.bf16.mxu0 0
      %5454 = vmatpush1.bf16.msra.mxu0 0
      %5455 = vmatprep.subr.bf16.mxu0 0
      %5456 = vmatpush1.bf16.msra.mxu0 0
      %5457 = vmatprep.subr.bf16.mxu0 0
      %5458 = vmatpush1.bf16.msra.mxu0 0
      %5459 = vmatprep.subr.bf16.mxu0 0
      %5460 = vmatpush1.bf16.msra.mxu0 0
      %5461 = vmatprep.subr.bf16.mxu0 0
      %5462 = vmatpush1.bf16.msra.mxu0 0
      %5463 = vmatprep.subr.bf16.mxu0 0
      %5464 = vmatpush1.bf16.msra.mxu0 0
      %5465 = vmatprep.subr.bf16.mxu0 0
      %5466 = vmatpush1.bf16.msra.mxu0 0
      %5467 = vmatprep.mubr.bf16.mxu0 0
      %5468 = vmatmul.mubr.bf16.gmra.mrb[0].mxu0 %v5377
      %v5469 = vpop.f32.mrb[0].mxu0
      %v5470 = vadd.f32 0.0, %v5469
      %v5471 = vpop.f32.mrb[0].mxu0
      %v5472 = vpop.f32.mrb[0].mxu0
      %v5473 = vadd.f32 0.0, %v5472
      %v5474 = vpop.f32.mrb[0].mxu0
      %5475 = vmatprep.mubr.bf16.mxu0 0
      %5476 = vmatmul.mubr.bf16.gmra.mrb[0].mxu0 %v5380
      %v5477 = vpop.f32.mrb[0].mxu0
      %v5478 = vadd.f32 0.0, %v5477
      %v5479 = vpop.f32.mrb[0].mxu0
      %v5480 = vpop.f32.mrb[0].mxu0
      %v5481 = vadd.f32 0.0, %v5480
      %v5482 = vpop.f32.mrb[0].mxu0
      %5483 = vdwg.mxu0
      %v5484 = vadd.f32 %v5343, %v5417
      %v5485 = vadd.f32 %v5344, %v5419
      %v5486 = vadd.f32 %v5345, %v5470
      %v5487 = vadd.f32 %v5346, %v5421
      %v5488 = vadd.f32 %v5347, %v5423
      %v5489 = vadd.f32 %v5348, %v5473
      %v5490 = vadd.f32 %v5349, %v5427
      %v5491 = vadd.f32 %v5350, %v5429
      %v5492 = vadd.f32 %v5351, %v5478
      %v5493 = vadd.f32 %v5352, %v5431
      %v5494 = vadd.f32 %v5353, %v5433
      %v5495 = vadd.f32 %v5354, %v5481
      %s5496 = scalar_lea.vmem %s5, 368
      %v5497 = vld [vmem:[%s5496] sm:$0xf]
      %v5498 = vld [vmem:[%s5496 + $0x4] sm:$0xf]
      %v5499 = vld [vmem:[%s5496 + $0x8] sm:$0xf]
      %v5500 = vld [vmem:[%s5496 + $0xc] sm:$0xf]
      %5501 = vrot.lane.b32.xlu0 %v4575, 127
      %v5502 = vpop.permute.xlu0 %5501
      %5503 = vrot.lane.b32.xlu0 %v4578, 127
      %v5504 = vpop.permute.xlu0 %5503
      %5505 = vrot.lane.b32.xlu0 %v4581, 127
      %v5506 = vpop.permute.xlu0 %5505
      %5507 = vrot.lane.b32.xlu0 %v4584, 127
      %v5508 = vpop.permute.xlu0 %5507
      %5509 = vrot.lane.b32.xlu0 %v4576, 127
      %v5510 = vpop.permute.xlu0 %5509
      %5511 = vrot.lane.b32.xlu0 %v4579, 127
      %v5512 = vpop.permute.xlu0 %5511
      %5513 = vrot.lane.b32.xlu0 %v4582, 127
      %v5514 = vpop.permute.xlu0 %5513
      %5515 = vrot.lane.b32.xlu0 %v4585, 127
      %v5516 = vpop.permute.xlu0 %5515
      %5517 = vrot.lane.b32.xlu0 %v4577, 127
      %v5518 = vpop.permute.xlu0 %5517
      %5519 = vrot.lane.b32.xlu0 %v4580, 127
      %v5520 = vpop.permute.xlu0 %5519
      %5521 = vrot.lane.b32.xlu0 %v4583, 127
      %v5522 = vpop.permute.xlu0 %5521
      %5523 = vrot.lane.b32.xlu0 %v4586, 127
      %v5524 = vpop.permute.xlu0 %5523
      %v5525 = vsel %vm1523, %v5510, %v5518
      %v5526 = vsel %vm1523, %v5512, %v5520
      %v5527 = vsel %vm1523, %v5514, %v5522
      %v5528 = vsel %vm1523, %v5516, %v5524
      %v5529 = vsel %vm1523, %v5502, %v5510
      %v5530 = vsel %vm1523, %v5504, %v5512
      %v5531 = vsel %vm1523, %v5506, %v5514
      %v5532 = vsel %vm1523, %v5508, %v5516
      %v5533 = vsel %vm1523, %v5518, %v5502
      %v5534 = vsel %vm1523, %v5520, %v5504
      %v5535 = vsel %vm1523, %v5522, %v5506
      %v5536 = vsel %vm1523, %v5524, %v5508
      %v5537 = vpack.c.bf16 %v5530, %v5529
      %v5538 = vpack.c.bf16 %v5526, %v5525
      %v5539 = vpack.c.bf16 %v5534, %v5533
      %v5540 = vpack.c.bf16 %v5532, %v5531
      %v5541 = vpack.c.bf16 %v5528, %v5527
      %v5542 = vpack.c.bf16 %v5536, %v5535
      %v5547 = vunpack.c.l.b16 %v5497
      %v5548 = vunpack.c.l.b16 %v5498
      %v5549 = vunpack.c.l.b16 %v5499
      %v5550 = vunpack.c.l.b16 %v5500
      %v5551 = vpack.c.b16 %v5548, %v5547
      %v5552 = vpack.c.b16 %v5550, %v5549
      %v5554 = vsel %vm770, %v5551, 0
      %v5557 = vsel %vm770, %v5552, 0
      %5559 = vmatprep.subr.bf16.mxu0 %v5538
      %5560 = vmatpush1.bf16.msra.mxu0 %v5537
      %5561 = vmatprep.subr.bf16.mxu0 %v5541
      %5562 = vmatpush1.bf16.msra.mxu0 %v5540
      %5563 = vmatprep.subr.bf16.mxu0 0
      %5564 = vmatpush1.bf16.msra.mxu0 0
      %5565 = vmatprep.subr.bf16.mxu0 0
      %5566 = vmatpush1.bf16.msra.mxu0 0
      %5567 = vmatprep.subr.bf16.mxu0 0
      %5568 = vmatpush1.bf16.msra.mxu0 0
      %5569 = vmatprep.subr.bf16.mxu0 0
      %5570 = vmatpush1.bf16.msra.mxu0 0
      %5571 = vmatprep.subr.bf16.mxu0 0
      %5572 = vmatpush1.bf16.msra.mxu0 0
      %5573 = vmatprep.subr.bf16.mxu0 0
      %5574 = vmatpush1.bf16.msra.mxu0 0
      %5575 = vmatprep.subr.bf16.mxu0 0
      %5576 = vmatpush1.bf16.msra.mxu0 0
      %5577 = vmatprep.subr.bf16.mxu0 0
      %5578 = vmatpush1.bf16.msra.mxu0 0
      %5579 = vmatprep.subr.bf16.mxu0 0
      %5580 = vmatpush1.bf16.msra.mxu0 0
      %5581 = vmatprep.subr.bf16.mxu0 0
      %5582 = vmatpush1.bf16.msra.mxu0 0
      %5583 = vmatprep.subr.bf16.mxu0 0
      %5584 = vmatpush1.bf16.msra.mxu0 0
      %5585 = vmatprep.subr.bf16.mxu0 0
      %5586 = vmatpush1.bf16.msra.mxu0 0
      %5587 = vmatprep.subr.bf16.mxu0 0
      %5588 = vmatpush1.bf16.msra.mxu0 0
      %5589 = vmatprep.subr.bf16.mxu0 0
      %5590 = vmatpush1.bf16.msra.mxu0 0
      %5591 = vmatprep.mubr.bf16.mxu0 0
      %5592 = vmatmul.mubr.bf16.gmra.mrb[0].mxu0 %v5554
      %v5593 = vpop.f32.mrb[0].mxu0
      %v5594 = vadd.f32 0.0, %v5593
      %v5595 = vpop.f32.mrb[0].mxu0
      %v5596 = vadd.f32 0.0, %v5595
      %v5597 = vpop.f32.mrb[0].mxu0
      %v5598 = vadd.f32 0.0, %v5597
      %v5599 = vpop.f32.mrb[0].mxu0
      %v5600 = vadd.f32 0.0, %v5599
      %5601 = vmatprep.mubr.bf16.mxu0 0
      %5602 = vmatmul.mubr.bf16.gmra.mrb[0].mxu0 %v5557
      %v5603 = vpop.f32.mrb[0].mxu0
      %v5604 = vadd.f32 0.0, %v5603
      %v5605 = vpop.f32.mrb[0].mxu0
      %v5606 = vadd.f32 0.0, %v5605
      %v5607 = vpop.f32.mrb[0].mxu0
      %v5608 = vadd.f32 0.0, %v5607
      %v5609 = vpop.f32.mrb[0].mxu0
      %v5610 = vadd.f32 0.0, %v5609
      %5611 = vdwg.mxu0
      %5612 = vmatprep.subr.bf16.mxu0 0
      %5613 = vmatpush1.bf16.msra.mxu0 %v5539
      %5614 = vmatprep.subr.bf16.mxu0 0
      %5615 = vmatpush1.bf16.msra.mxu0 %v5542
      %5616 = vmatprep.subr.bf16.mxu0 0
      %5617 = vmatpush1.bf16.msra.mxu0 0
      %5618 = vmatprep.subr.bf16.mxu0 0
      %5619 = vmatpush1.bf16.msra.mxu0 0
      %5620 = vmatprep.subr.bf16.mxu0 0
      %5621 = vmatpush1.bf16.msra.mxu0 0
      %5622 = vmatprep.subr.bf16.mxu0 0
      %5623 = vmatpush1.bf16.msra.mxu0 0
      %5624 = vmatprep.subr.bf16.mxu0 0
      %5625 = vmatpush1.bf16.msra.mxu0 0
      %5626 = vmatprep.subr.bf16.mxu0 0
      %5627 = vmatpush1.bf16.msra.mxu0 0
      %5628 = vmatprep.subr.bf16.mxu0 0
      %5629 = vmatpush1.bf16.msra.mxu0 0
      %5630 = vmatprep.subr.bf16.mxu0 0
      %5631 = vmatpush1.bf16.msra.mxu0 0
      %5632 = vmatprep.subr.bf16.mxu0 0
      %5633 = vmatpush1.bf16.msra.mxu0 0
      %5634 = vmatprep.subr.bf16.mxu0 0
      %5635 = vmatpush1.bf16.msra.mxu0 0
      %5636 = vmatprep.subr.bf16.mxu0 0
      %5637 = vmatpush1.bf16.msra.mxu0 0
      %5638 = vmatprep.subr.bf16.mxu0 0
      %5639 = vmatpush1.bf16.msra.mxu0 0
      %5640 = vmatprep.subr.bf16.mxu0 0
      %5641 = vmatpush1.bf16.msra.mxu0 0
      %5642 = vmatprep.subr.bf16.mxu0 0
      %5643 = vmatpush1.bf16.msra.mxu0 0
      %5644 = vmatprep.mubr.bf16.mxu0 0
      %5645 = vmatmul.mubr.bf16.gmra.mrb[0].mxu0 %v5554
      %v5646 = vpop.f32.mrb[0].mxu0
      %v5647 = vadd.f32 0.0, %v5646
      %v5648 = vpop.f32.mrb[0].mxu0
      %v5649 = vpop.f32.mrb[0].mxu0
      %v5650 = vadd.f32 0.0, %v5649
      %v5651 = vpop.f32.mrb[0].mxu0
      %5652 = vmatprep.mubr.bf16.mxu0 0
      %5653 = vmatmul.mubr.bf16.gmra.mrb[0].mxu0 %v5557
      %v5654 = vpop.f32.mrb[0].mxu0
      %v5655 = vadd.f32 0.0, %v5654
      %v5656 = vpop.f32.mrb[0].mxu0
      %v5657 = vpop.f32.mrb[0].mxu0
      %v5658 = vadd.f32 0.0, %v5657
      %v5659 = vpop.f32.mrb[0].mxu0
      %5660 = vdwg.mxu0
      %v5661 = vadd.f32 %v5484, %v5594
      %v5662 = vadd.f32 %v5485, %v5596
      %v5663 = vadd.f32 %v5486, %v5647
      %v5664 = vadd.f32 %v5487, %v5598
      %v5665 = vadd.f32 %v5488, %v5600
      %v5666 = vadd.f32 %v5489, %v5650
      %v5667 = vadd.f32 %v5490, %v5604
      %v5668 = vadd.f32 %v5491, %v5606
      %v5669 = vadd.f32 %v5492, %v5655
      %v5670 = vadd.f32 %v5493, %v5608
      %v5671 = vadd.f32 %v5494, %v5610
      %v5672 = vadd.f32 %v5495, %v5658
      %s5673 = scalar_lea.vmem %s5, 384
      %v5674 = vld [vmem:[%s5673] sm:$0xf]
      %v5675 = vld [vmem:[%s5673 + $0x4] sm:$0xf]
      %v5676 = vld [vmem:[%s5673 + $0x8] sm:$0xf]
      %v5677 = vld [vmem:[%s5673 + $0xc] sm:$0xf]
      %5678 = vrot.lane.b32.xlu0 %v4575, 111
      %v5679 = vpop.permute.xlu0 %5678
      %5680 = vrot.lane.b32.xlu0 %v4578, 111
      %v5681 = vpop.permute.xlu0 %5680
      %5682 = vrot.lane.b32.xlu0 %v4581, 111
      %v5683 = vpop.permute.xlu0 %5682
      %5684 = vrot.lane.b32.xlu0 %v4584, 111
      %v5685 = vpop.permute.xlu0 %5684
      %5686 = vrot.lane.b32.xlu0 %v4576, 111
      %v5687 = vpop.permute.xlu0 %5686
      %5688 = vrot.lane.b32.xlu0 %v4579, 111
      %v5689 = vpop.permute.xlu0 %5688
      %5690 = vrot.lane.b32.xlu0 %v4582, 111
      %v5691 = vpop.permute.xlu0 %5690
      %5692 = vrot.lane.b32.xlu0 %v4585, 111
      %v5693 = vpop.permute.xlu0 %5692
      %5694 = vrot.lane.b32.xlu0 %v4577, 111
      %v5695 = vpop.permute.xlu0 %5694
      %5696 = vrot.lane.b32.xlu0 %v4580, 111
      %v5697 = vpop.permute.xlu0 %5696
      %5698 = vrot.lane.b32.xlu0 %v4583, 111
      %v5699 = vpop.permute.xlu0 %5698
      %5700 = vrot.lane.b32.xlu0 %v4586, 111
      %v5701 = vpop.permute.xlu0 %5700
      %v5702 = vsel %vm1701, %v5687, %v5695
      %v5703 = vsel %vm1701, %v5689, %v5697
      %v5704 = vsel %vm1701, %v5691, %v5699
      %v5705 = vsel %vm1701, %v5693, %v5701
      %v5706 = vsel %vm1701, %v5679, %v5687
      %v5707 = vsel %vm1701, %v5681, %v5689
      %v5708 = vsel %vm1701, %v5683, %v5691
      %v5709 = vsel %vm1701, %v5685, %v5693
      %v5710 = vsel %vm1701, %v5695, %v5679
      %v5711 = vsel %vm1701, %v5697, %v5681
      %v5712 = vsel %vm1701, %v5699, %v5683
      %v5713 = vsel %vm1701, %v5701, %v5685
      %v5714 = vpack.c.bf16 %v5707, %v5706
      %v5715 = vpack.c.bf16 %v5703, %v5702
      %v5716 = vpack.c.bf16 %v5711, %v5710
      %v5717 = vpack.c.bf16 %v5709, %v5708
      %v5718 = vpack.c.bf16 %v5705, %v5704
      %v5719 = vpack.c.bf16 %v5713, %v5712
      %v5724 = vunpack.c.l.b16 %v5674
      %v5725 = vunpack.c.l.b16 %v5675
      %v5726 = vunpack.c.l.b16 %v5676
      %v5727 = vunpack.c.l.b16 %v5677
      %v5728 = vpack.c.b16 %v5725, %v5724
      %v5729 = vpack.c.b16 %v5727, %v5726
      %v5731 = vsel %vm770, %v5728, 0
      %v5734 = vsel %vm770, %v5729, 0
      %5736 = vmatprep.subr.bf16.mxu0 %v5715
      %5737 = vmatpush1.bf16.msra.mxu0 %v5714
      %5738 = vmatprep.subr.bf16.mxu0 %v5718
      %5739 = vmatpush1.bf16.msra.mxu0 %v5717
      %5740 = vmatprep.subr.bf16.mxu0 0
      %5741 = vmatpush1.bf16.msra.mxu0 0
      %5742 = vmatprep.subr.bf16.mxu0 0
      %5743 = vmatpush1.bf16.msra.mxu0 0
      %5744 = vmatprep.subr.bf16.mxu0 0
      %5745 = vmatpush1.bf16.msra.mxu0 0
      %5746 = vmatprep.subr.bf16.mxu0 0
      %5747 = vmatpush1.bf16.msra.mxu0 0
      %5748 = vmatprep.subr.bf16.mxu0 0
      %5749 = vmatpush1.bf16.msra.mxu0 0
      %5750 = vmatprep.subr.bf16.mxu0 0
      %5751 = vmatpush1.bf16.msra.mxu0 0
      %5752 = vmatprep.subr.bf16.mxu0 0
      %5753 = vmatpush1.bf16.msra.mxu0 0
      %5754 = vmatprep.subr.bf16.mxu0 0
      %5755 = vmatpush1.bf16.msra.mxu0 0
      %5756 = vmatprep.subr.bf16.mxu0 0
      %5757 = vmatpush1.bf16.msra.mxu0 0
      %5758 = vmatprep.subr.bf16.mxu0 0
      %5759 = vmatpush1.bf16.msra.mxu0 0
      %5760 = vmatprep.subr.bf16.mxu0 0
      %5761 = vmatpush1.bf16.msra.mxu0 0
      %5762 = vmatprep.subr.bf16.mxu0 0
      %5763 = vmatpush1.bf16.msra.mxu0 0
      %5764 = vmatprep.subr.bf16.mxu0 0
      %5765 = vmatpush1.bf16.msra.mxu0 0
      %5766 = vmatprep.subr.bf16.mxu0 0
      %5767 = vmatpush1.bf16.msra.mxu0 0
      %5768 = vmatprep.mubr.bf16.mxu0 0
      %5769 = vmatmul.mubr.bf16.gmra.mrb[0].mxu0 %v5731
      %v5770 = vpop.f32.mrb[0].mxu0
      %v5771 = vadd.f32 0.0, %v5770
      %v5772 = vpop.f32.mrb[0].mxu0
      %v5773 = vadd.f32 0.0, %v5772
      %v5774 = vpop.f32.mrb[0].mxu0
      %v5775 = vadd.f32 0.0, %v5774
      %v5776 = vpop.f32.mrb[0].mxu0
      %v5777 = vadd.f32 0.0, %v5776
      %5778 = vmatprep.mubr.bf16.mxu0 0
      %5779 = vmatmul.mubr.bf16.gmra.mrb[0].mxu0 %v5734
      %v5780 = vpop.f32.mrb[0].mxu0
      %v5781 = vadd.f32 0.0, %v5780
      %v5782 = vpop.f32.mrb[0].mxu0
      %v5783 = vadd.f32 0.0, %v5782
      %v5784 = vpop.f32.mrb[0].mxu0
      %v5785 = vadd.f32 0.0, %v5784
      %v5786 = vpop.f32.mrb[0].mxu0
      %v5787 = vadd.f32 0.0, %v5786
      %5788 = vdwg.mxu0
      %5789 = vmatprep.subr.bf16.mxu0 0
      %5790 = vmatpush1.bf16.msra.mxu0 %v5716
      %5791 = vmatprep.subr.bf16.mxu0 0
      %5792 = vmatpush1.bf16.msra.mxu0 %v5719
      %5793 = vmatprep.subr.bf16.mxu0 0
      %5794 = vmatpush1.bf16.msra.mxu0 0
      %5795 = vmatprep.subr.bf16.mxu0 0
      %5796 = vmatpush1.bf16.msra.mxu0 0
      %5797 = vmatprep.subr.bf16.mxu0 0
      %5798 = vmatpush1.bf16.msra.mxu0 0
      %5799 = vmatprep.subr.bf16.mxu0 0
      %5800 = vmatpush1.bf16.msra.mxu0 0
      %5801 = vmatprep.subr.bf16.mxu0 0
      %5802 = vmatpush1.bf16.msra.mxu0 0
      %5803 = vmatprep.subr.bf16.mxu0 0
      %5804 = vmatpush1.bf16.msra.mxu0 0
      %5805 = vmatprep.subr.bf16.mxu0 0
      %5806 = vmatpush1.bf16.msra.mxu0 0
      %5807 = vmatprep.subr.bf16.mxu0 0
      %5808 = vmatpush1.bf16.msra.mxu0 0
      %5809 = vmatprep.subr.bf16.mxu0 0
      %5810 = vmatpush1.bf16.msra.mxu0 0
      %5811 = vmatprep.subr.bf16.mxu0 0
      %5812 = vmatpush1.bf16.msra.mxu0 0
      %5813 = vmatprep.subr.bf16.mxu0 0
      %5814 = vmatpush1.bf16.msra.mxu0 0
      %5815 = vmatprep.subr.bf16.mxu0 0
      %5816 = vmatpush1.bf16.msra.mxu0 0
      %5817 = vmatprep.subr.bf16.mxu0 0
      %5818 = vmatpush1.bf16.msra.mxu0 0
      %5819 = vmatprep.subr.bf16.mxu0 0
      %5820 = vmatpush1.bf16.msra.mxu0 0
      %5821 = vmatprep.mubr.bf16.mxu0 0
      %5822 = vmatmul.mubr.bf16.gmra.mrb[0].mxu0 %v5731
      %v5823 = vpop.f32.mrb[0].mxu0
      %v5824 = vadd.f32 0.0, %v5823
      %v5825 = vpop.f32.mrb[0].mxu0
      %v5826 = vpop.f32.mrb[0].mxu0
      %v5827 = vadd.f32 0.0, %v5826
      %v5828 = vpop.f32.mrb[0].mxu0
      %5829 = vmatprep.mubr.bf16.mxu0 0
      %5830 = vmatmul.mubr.bf16.gmra.mrb[0].mxu0 %v5734
      %v5831 = vpop.f32.mrb[0].mxu0
      %v5832 = vadd.f32 0.0, %v5831
      %v5833 = vpop.f32.mrb[0].mxu0
      %v5834 = vpop.f32.mrb[0].mxu0
      %v5835 = vadd.f32 0.0, %v5834
      %v5836 = vpop.f32.mrb[0].mxu0
      %5837 = vdwg.mxu0
      %v5838 = vadd.f32 %v5661, %v5771
      %v5839 = vadd.f32 %v5662, %v5773
      %v5840 = vadd.f32 %v5663, %v5824
      %v5841 = vadd.f32 %v5664, %v5775
      %v5842 = vadd.f32 %v5665, %v5777
      %v5843 = vadd.f32 %v5666, %v5827
      %v5844 = vadd.f32 %v5667, %v5781
      %v5845 = vadd.f32 %v5668, %v5783
      %v5846 = vadd.f32 %v5669, %v5832
      %v5847 = vadd.f32 %v5670, %v5785
      %v5848 = vadd.f32 %v5671, %v5787
      %v5849 = vadd.f32 %v5672, %v5835
      %s5850 = scalar_lea.vmem %s5, 400
      %v5851 = vld [vmem:[%s5850] sm:$0xf]
      %v5852 = vld [vmem:[%s5850 + $0x4] sm:$0xf]
      %v5853 = vld [vmem:[%s5850 + $0x8] sm:$0xf]
      %v5854 = vld [vmem:[%s5850 + $0xc] sm:$0xf]
      %5855 = vrot.lane.b32.xlu0 %v4575, 110
      %v5856 = vpop.permute.xlu0 %5855
      %5857 = vrot.lane.b32.xlu0 %v4578, 110
      %v5858 = vpop.permute.xlu0 %5857
      %5859 = vrot.lane.b32.xlu0 %v4581, 110
      %v5860 = vpop.permute.xlu0 %5859
      %5861 = vrot.lane.b32.xlu0 %v4584, 110
      %v5862 = vpop.permute.xlu0 %5861
      %5863 = vrot.lane.b32.xlu0 %v4576, 110
      %v5864 = vpop.permute.xlu0 %5863
      %5865 = vrot.lane.b32.xlu0 %v4579, 110
      %v5866 = vpop.permute.xlu0 %5865
      %5867 = vrot.lane.b32.xlu0 %v4582, 110
      %v5868 = vpop.permute.xlu0 %5867
      %5869 = vrot.lane.b32.xlu0 %v4585, 110
      %v5870 = vpop.permute.xlu0 %5869
      %5871 = vrot.lane.b32.xlu0 %v4577, 110
      %v5872 = vpop.permute.xlu0 %5871
      %5873 = vrot.lane.b32.xlu0 %v4580, 110
      %v5874 = vpop.permute.xlu0 %5873
      %5875 = vrot.lane.b32.xlu0 %v4583, 110
      %v5876 = vpop.permute.xlu0 %5875
      %5877 = vrot.lane.b32.xlu0 %v4586, 110
      %v5878 = vpop.permute.xlu0 %5877
      %v5879 = vsel %vm1879, %v5864, %v5872
      %v5880 = vsel %vm1879, %v5866, %v5874
      %v5881 = vsel %vm1879, %v5868, %v5876
      %v5882 = vsel %vm1879, %v5870, %v5878
      %v5883 = vsel %vm1879, %v5856, %v5864
      %v5884 = vsel %vm1879, %v5858, %v5866
      %v5885 = vsel %vm1879, %v5860, %v5868
      %v5886 = vsel %vm1879, %v5862, %v5870
      %v5887 = vsel %vm1879, %v5872, %v5856
      %v5888 = vsel %vm1879, %v5874, %v5858
      %v5889 = vsel %vm1879, %v5876, %v5860
      %v5890 = vsel %vm1879, %v5878, %v5862
      %v5891 = vpack.c.bf16 %v5884, %v5883
      %v5892 = vpack.c.bf16 %v5880, %v5879
      %v5893 = vpack.c.bf16 %v5888, %v5887
      %v5894 = vpack.c.bf16 %v5886, %v5885
      %v5895 = vpack.c.bf16 %v5882, %v5881
      %v5896 = vpack.c.bf16 %v5890, %v5889
      %v5901 = vunpack.c.l.b16 %v5851
      %v5902 = vunpack.c.l.b16 %v5852
      %v5903 = vunpack.c.l.b16 %v5853
      %v5904 = vunpack.c.l.b16 %v5854
      %v5905 = vpack.c.b16 %v5902, %v5901
      %v5906 = vpack.c.b16 %v5904, %v5903
      %v5908 = vsel %vm770, %v5905, 0
      %v5911 = vsel %vm770, %v5906, 0
      %5913 = vmatprep.subr.bf16.mxu0 %v5892
      %5914 = vmatpush1.bf16.msra.mxu0 %v5891
      %5915 = vmatprep.subr.bf16.mxu0 %v5895
      %5916 = vmatpush1.bf16.msra.mxu0 %v5894
      %5917 = vmatprep.subr.bf16.mxu0 0
      %5918 = vmatpush1.bf16.msra.mxu0 0
      %5919 = vmatprep.subr.bf16.mxu0 0
      %5920 = vmatpush1.bf16.msra.mxu0 0
      %5921 = vmatprep.subr.bf16.mxu0 0
      %5922 = vmatpush1.bf16.msra.mxu0 0
      %5923 = vmatprep.subr.bf16.mxu0 0
      %5924 = vmatpush1.bf16.msra.mxu0 0
      %5925 = vmatprep.subr.bf16.mxu0 0
      %5926 = vmatpush1.bf16.msra.mxu0 0
      %5927 = vmatprep.subr.bf16.mxu0 0
      %5928 = vmatpush1.bf16.msra.mxu0 0
      %5929 = vmatprep.subr.bf16.mxu0 0
      %5930 = vmatpush1.bf16.msra.mxu0 0
      %5931 = vmatprep.subr.bf16.mxu0 0
      %5932 = vmatpush1.bf16.msra.mxu0 0
      %5933 = vmatprep.subr.bf16.mxu0 0
      %5934 = vmatpush1.bf16.msra.mxu0 0
      %5935 = vmatprep.subr.bf16.mxu0 0
      %5936 = vmatpush1.bf16.msra.mxu0 0
      %5937 = vmatprep.subr.bf16.mxu0 0
      %5938 = vmatpush1.bf16.msra.mxu0 0
      %5939 = vmatprep.subr.bf16.mxu0 0
      %5940 = vmatpush1.bf16.msra.mxu0 0
      %5941 = vmatprep.subr.bf16.mxu0 0
      %5942 = vmatpush1.bf16.msra.mxu0 0
      %5943 = vmatprep.subr.bf16.mxu0 0
      %5944 = vmatpush1.bf16.msra.mxu0 0
      %5945 = vmatprep.mubr.bf16.mxu0 0
      %5946 = vmatmul.mubr.bf16.gmra.mrb[0].mxu0 %v5908
      %v5947 = vpop.f32.mrb[0].mxu0
      %v5948 = vadd.f32 0.0, %v5947
      %v5949 = vpop.f32.mrb[0].mxu0
      %v5950 = vadd.f32 0.0, %v5949
      %v5951 = vpop.f32.mrb[0].mxu0
      %v5952 = vadd.f32 0.0, %v5951
      %v5953 = vpop.f32.mrb[0].mxu0
      %v5954 = vadd.f32 0.0, %v5953
      %5955 = vmatprep.mubr.bf16.mxu0 0
      %5956 = vmatmul.mubr.bf16.gmra.mrb[0].mxu0 %v5911
      %v5957 = vpop.f32.mrb[0].mxu0
      %v5958 = vadd.f32 0.0, %v5957
      %v5959 = vpop.f32.mrb[0].mxu0
      %v5960 = vadd.f32 0.0, %v5959
      %v5961 = vpop.f32.mrb[0].mxu0
      %v5962 = vadd.f32 0.0, %v5961
      %v5963 = vpop.f32.mrb[0].mxu0
      %v5964 = vadd.f32 0.0, %v5963
      %5965 = vdwg.mxu0
      %5966 = vmatprep.subr.bf16.mxu0 0
      %5967 = vmatpush1.bf16.msra.mxu0 %v5893
      %5968 = vmatprep.subr.bf16.mxu0 0
      %5969 = vmatpush1.bf16.msra.mxu0 %v5896
      %5970 = vmatprep.subr.bf16.mxu0 0
      %5971 = vmatpush1.bf16.msra.mxu0 0
      %5972 = vmatprep.subr.bf16.mxu0 0
      %5973 = vmatpush1.bf16.msra.mxu0 0
      %5974 = vmatprep.subr.bf16.mxu0 0
      %5975 = vmatpush1.bf16.msra.mxu0 0
      %5976 = vmatprep.subr.bf16.mxu0 0
      %5977 = vmatpush1.bf16.msra.mxu0 0
      %5978 = vmatprep.subr.bf16.mxu0 0
      %5979 = vmatpush1.bf16.msra.mxu0 0
      %5980 = vmatprep.subr.bf16.mxu0 0
      %5981 = vmatpush1.bf16.msra.mxu0 0
      %5982 = vmatprep.subr.bf16.mxu0 0
      %5983 = vmatpush1.bf16.msra.mxu0 0
      %5984 = vmatprep.subr.bf16.mxu0 0
      %5985 = vmatpush1.bf16.msra.mxu0 0
      %5986 = vmatprep.subr.bf16.mxu0 0
      %5987 = vmatpush1.bf16.msra.mxu0 0
      %5988 = vmatprep.subr.bf16.mxu0 0
      %5989 = vmatpush1.bf16.msra.mxu0 0
      %5990 = vmatprep.subr.bf16.mxu0 0
      %5991 = vmatpush1.bf16.msra.mxu0 0
      %5992 = vmatprep.subr.bf16.mxu0 0
      %5993 = vmatpush1.bf16.msra.mxu0 0
      %5994 = vmatprep.subr.bf16.mxu0 0
      %5995 = vmatpush1.bf16.msra.mxu0 0
      %5996 = vmatprep.subr.bf16.mxu0 0
      %5997 = vmatpush1.bf16.msra.mxu0 0
      %5998 = vmatprep.mubr.bf16.mxu0 0
      %5999 = vmatmul.mubr.bf16.gmra.mrb[0].mxu0 %v5908
      %v6000 = vpop.f32.mrb[0].mxu0
      %v6001 = vadd.f32 0.0, %v6000
      %v6002 = vpop.f32.mrb[0].mxu0
      %v6003 = vpop.f32.mrb[0].mxu0
      %v6004 = vadd.f32 0.0, %v6003
      %v6005 = vpop.f32.mrb[0].mxu0
      %6006 = vmatprep.mubr.bf16.mxu0 0
      %6007 = vmatmul.mubr.bf16.gmra.mrb[0].mxu0 %v5911
      %v6008 = vpop.f32.mrb[0].mxu0
      %v6009 = vadd.f32 0.0, %v6008
      %v6010 = vpop.f32.mrb[0].mxu0
      %v6011 = vpop.f32.mrb[0].mxu0
      %v6012 = vadd.f32 0.0, %v6011
      %v6013 = vpop.f32.mrb[0].mxu0
      %6014 = vdwg.mxu0
      %v6015 = vadd.f32 %v5838, %v5948
      %v6016 = vadd.f32 %v5839, %v5950
      %v6017 = vadd.f32 %v5840, %v6001
      %v6018 = vadd.f32 %v5841, %v5952
      %v6019 = vadd.f32 %v5842, %v5954
      %v6020 = vadd.f32 %v5843, %v6004
      %v6021 = vadd.f32 %v5844, %v5958
      %v6022 = vadd.f32 %v5845, %v5960
      %v6023 = vadd.f32 %v5846, %v6009
      %v6024 = vadd.f32 %v5847, %v5962
      %v6025 = vadd.f32 %v5848, %v5964
      %v6026 = vadd.f32 %v5849, %v6012
      %s6027 = scalar_lea.vmem %s5, 416
      %v6028 = vld [vmem:[%s6027] sm:$0xf]
      %v6029 = vld [vmem:[%s6027 + $0x4] sm:$0xf]
      %v6030 = vld [vmem:[%s6027 + $0x8] sm:$0xf]
      %v6031 = vld [vmem:[%s6027 + $0xc] sm:$0xf]
      %6032 = vrot.lane.b32.xlu0 %v4575, 109
      %v6033 = vpop.permute.xlu0 %6032
      %6034 = vrot.lane.b32.xlu0 %v4578, 109
      %v6035 = vpop.permute.xlu0 %6034
      %6036 = vrot.lane.b32.xlu0 %v4581, 109
      %v6037 = vpop.permute.xlu0 %6036
      %6038 = vrot.lane.b32.xlu0 %v4584, 109
      %v6039 = vpop.permute.xlu0 %6038
      %6040 = vrot.lane.b32.xlu0 %v4576, 109
      %v6041 = vpop.permute.xlu0 %6040
      %6042 = vrot.lane.b32.xlu0 %v4579, 109
      %v6043 = vpop.permute.xlu0 %6042
      %6044 = vrot.lane.b32.xlu0 %v4582, 109
      %v6045 = vpop.permute.xlu0 %6044
      %6046 = vrot.lane.b32.xlu0 %v4585, 109
      %v6047 = vpop.permute.xlu0 %6046
      %6048 = vrot.lane.b32.xlu0 %v4577, 109
      %v6049 = vpop.permute.xlu0 %6048
      %6050 = vrot.lane.b32.xlu0 %v4580, 109
      %v6051 = vpop.permute.xlu0 %6050
      %6052 = vrot.lane.b32.xlu0 %v4583, 109
      %v6053 = vpop.permute.xlu0 %6052
      %6054 = vrot.lane.b32.xlu0 %v4586, 109
      %v6055 = vpop.permute.xlu0 %6054
      %v6056 = vsel %vm2057, %v6041, %v6049
      %v6057 = vsel %vm2057, %v6043, %v6051
      %v6058 = vsel %vm2057, %v6045, %v6053
      %v6059 = vsel %vm2057, %v6047, %v6055
      %v6060 = vsel %vm2057, %v6033, %v6041
      %v6061 = vsel %vm2057, %v6035, %v6043
      %v6062 = vsel %vm2057, %v6037, %v6045
      %v6063 = vsel %vm2057, %v6039, %v6047
      %v6064 = vsel %vm2057, %v6049, %v6033
      %v6065 = vsel %vm2057, %v6051, %v6035
      %v6066 = vsel %vm2057, %v6053, %v6037
      %v6067 = vsel %vm2057, %v6055, %v6039
      %v6068 = vpack.c.bf16 %v6061, %v6060
      %v6069 = vpack.c.bf16 %v6057, %v6056
      %v6070 = vpack.c.bf16 %v6065, %v6064
      %v6071 = vpack.c.bf16 %v6063, %v6062
      %v6072 = vpack.c.bf16 %v6059, %v6058
      %v6073 = vpack.c.bf16 %v6067, %v6066
      %v6078 = vunpack.c.l.b16 %v6028
      %v6079 = vunpack.c.l.b16 %v6029
      %v6080 = vunpack.c.l.b16 %v6030
      %v6081 = vunpack.c.l.b16 %v6031
      %v6082 = vpack.c.b16 %v6079, %v6078
      %v6083 = vpack.c.b16 %v6081, %v6080
      %v6085 = vsel %vm770, %v6082, 0
      %v6088 = vsel %vm770, %v6083, 0
      %6090 = vmatprep.subr.bf16.mxu0 %v6069
      %6091 = vmatpush1.bf16.msra.mxu0 %v6068
      %6092 = vmatprep.subr.bf16.mxu0 %v6072
      %6093 = vmatpush1.bf16.msra.mxu0 %v6071
      %6094 = vmatprep.subr.bf16.mxu0 0
      %6095 = vmatpush1.bf16.msra.mxu0 0
      %6096 = vmatprep.subr.bf16.mxu0 0
      %6097 = vmatpush1.bf16.msra.mxu0 0
      %6098 = vmatprep.subr.bf16.mxu0 0
      %6099 = vmatpush1.bf16.msra.mxu0 0
      %6100 = vmatprep.subr.bf16.mxu0 0
      %6101 = vmatpush1.bf16.msra.mxu0 0
      %6102 = vmatprep.subr.bf16.mxu0 0
      %6103 = vmatpush1.bf16.msra.mxu0 0
      %6104 = vmatprep.subr.bf16.mxu0 0
      %6105 = vmatpush1.bf16.msra.mxu0 0
      %6106 = vmatprep.subr.bf16.mxu0 0
      %6107 = vmatpush1.bf16.msra.mxu0 0
      %6108 = vmatprep.subr.bf16.mxu0 0
      %6109 = vmatpush1.bf16.msra.mxu0 0
      %6110 = vmatprep.subr.bf16.mxu0 0
      %6111 = vmatpush1.bf16.msra.mxu0 0
      %6112 = vmatprep.subr.bf16.mxu0 0
      %6113 = vmatpush1.bf16.msra.mxu0 0
      %6114 = vmatprep.subr.bf16.mxu0 0
      %6115 = vmatpush1.bf16.msra.mxu0 0
      %6116 = vmatprep.subr.bf16.mxu0 0
      %6117 = vmatpush1.bf16.msra.mxu0 0
      %6118 = vmatprep.subr.bf16.mxu0 0
      %6119 = vmatpush1.bf16.msra.mxu0 0
      %6120 = vmatprep.subr.bf16.mxu0 0
      %6121 = vmatpush1.bf16.msra.mxu0 0
      %6122 = vmatprep.mubr.bf16.mxu0 0
      %6123 = vmatmul.mubr.bf16.gmra.mrb[0].mxu0 %v6085
      %v6124 = vpop.f32.mrb[0].mxu0
      %v6125 = vadd.f32 0.0, %v6124
      %v6126 = vpop.f32.mrb[0].mxu0
      %v6127 = vadd.f32 0.0, %v6126
      %v6128 = vpop.f32.mrb[0].mxu0
      %v6129 = vadd.f32 0.0, %v6128
      %v6130 = vpop.f32.mrb[0].mxu0
      %v6131 = vadd.f32 0.0, %v6130
      %6132 = vmatprep.mubr.bf16.mxu0 0
      %6133 = vmatmul.mubr.bf16.gmra.mrb[0].mxu0 %v6088
      %v6134 = vpop.f32.mrb[0].mxu0
      %v6135 = vadd.f32 0.0, %v6134
      %v6136 = vpop.f32.mrb[0].mxu0
      %v6137 = vadd.f32 0.0, %v6136
      %v6138 = vpop.f32.mrb[0].mxu0
      %v6139 = vadd.f32 0.0, %v6138
      %v6140 = vpop.f32.mrb[0].mxu0
      %v6141 = vadd.f32 0.0, %v6140
      %6142 = vdwg.mxu0
      %6143 = vmatprep.subr.bf16.mxu0 0
      %6144 = vmatpush1.bf16.msra.mxu0 %v6070
      %6145 = vmatprep.subr.bf16.mxu0 0
      %6146 = vmatpush1.bf16.msra.mxu0 %v6073
      %6147 = vmatprep.subr.bf16.mxu0 0
      %6148 = vmatpush1.bf16.msra.mxu0 0
      %6149 = vmatprep.subr.bf16.mxu0 0
      %6150 = vmatpush1.bf16.msra.mxu0 0
      %6151 = vmatprep.subr.bf16.mxu0 0
      %6152 = vmatpush1.bf16.msra.mxu0 0
      %6153 = vmatprep.subr.bf16.mxu0 0
      %6154 = vmatpush1.bf16.msra.mxu0 0
      %6155 = vmatprep.subr.bf16.mxu0 0
      %6156 = vmatpush1.bf16.msra.mxu0 0
      %6157 = vmatprep.subr.bf16.mxu0 0
      %6158 = vmatpush1.bf16.msra.mxu0 0
      %6159 = vmatprep.subr.bf16.mxu0 0
      %6160 = vmatpush1.bf16.msra.mxu0 0
      %6161 = vmatprep.subr.bf16.mxu0 0
      %6162 = vmatpush1.bf16.msra.mxu0 0
      %6163 = vmatprep.subr.bf16.mxu0 0
      %6164 = vmatpush1.bf16.msra.mxu0 0
      %6165 = vmatprep.subr.bf16.mxu0 0
      %6166 = vmatpush1.bf16.msra.mxu0 0
      %6167 = vmatprep.subr.bf16.mxu0 0
      %6168 = vmatpush1.bf16.msra.mxu0 0
      %6169 = vmatprep.subr.bf16.mxu0 0
      %6170 = vmatpush1.bf16.msra.mxu0 0
      %6171 = vmatprep.subr.bf16.mxu0 0
      %6172 = vmatpush1.bf16.msra.mxu0 0
      %6173 = vmatprep.subr.bf16.mxu0 0
      %6174 = vmatpush1.bf16.msra.mxu0 0
      %6175 = vmatprep.mubr.bf16.mxu0 0
      %6176 = vmatmul.mubr.bf16.gmra.mrb[0].mxu0 %v6085
      %v6177 = vpop.f32.mrb[0].mxu0
      %v6178 = vadd.f32 0.0, %v6177
      %v6179 = vpop.f32.mrb[0].mxu0
      %v6180 = vpop.f32.mrb[0].mxu0
      %v6181 = vadd.f32 0.0, %v6180
      %v6182 = vpop.f32.mrb[0].mxu0
      %6183 = vmatprep.mubr.bf16.mxu0 0
      %6184 = vmatmul.mubr.bf16.gmra.mrb[0].mxu0 %v6088
      %v6185 = vpop.f32.mrb[0].mxu0
      %v6186 = vadd.f32 0.0, %v6185
      %v6187 = vpop.f32.mrb[0].mxu0
      %v6188 = vpop.f32.mrb[0].mxu0
      %v6189 = vadd.f32 0.0, %v6188
      %v6190 = vpop.f32.mrb[0].mxu0
      %6191 = vdwg.mxu0
      %v6192 = vadd.f32 %v6015, %v6125
      %v6193 = vadd.f32 %v6016, %v6127
      %v6194 = vadd.f32 %v6017, %v6178
      %v6195 = vadd.f32 %v6018, %v6129
      %v6196 = vadd.f32 %v6019, %v6131
      %v6197 = vadd.f32 %v6020, %v6181
      %v6198 = vadd.f32 %v6021, %v6135
      %v6199 = vadd.f32 %v6022, %v6137
      %v6200 = vadd.f32 %v6023, %v6186
      %v6201 = vadd.f32 %v6024, %v6139
      %v6202 = vadd.f32 %v6025, %v6141
      %v6203 = vadd.f32 %v6026, %v6189
      %v6204 = vld [vmem:[%s6 + $0x40] sm:$0xff]
      %v6205 = vld [vmem:[%s6 + $0x48] sm:$0xff]
      %v6206 = vld [vmem:[%s6 + $0x50] sm:$0xff]
      %v6207 = vld [vmem:[%s6 + $0x58] sm:$0xff]
      %6209 = vset.pattern.permute.xlu0 0
      %6210 = vperm.xlu0 %6209, %v6204
      %v6211 = vpop.permute.xlu0 %6210
      %6214 = vset.pattern.permute.xlu0 0
      %6215 = vperm.xlu0 %6214, %v6205
      %v6216 = vpop.permute.xlu0 %6215
      %6219 = vset.pattern.permute.xlu0 0
      %6220 = vperm.xlu0 %6219, %v6206
      %v6221 = vpop.permute.xlu0 %6220
      %6224 = vset.pattern.permute.xlu0 0
      %6225 = vperm.xlu0 %6224, %v6207
      %v6226 = vpop.permute.xlu0 %6225
      %v6228 = vadd.f32 %v6192, %v6211
      %v6229 = vadd.f32 %v6193, %v6211
      %v6230 = vadd.f32 %v6194, %v6211
      %v6231 = vadd.f32 %v6195, %v6216
      %v6232 = vadd.f32 %v6196, %v6216
      %v6233 = vadd.f32 %v6197, %v6216
      %v6234 = vadd.f32 %v6198, %v6221
      %v6235 = vadd.f32 %v6199, %v6221
      %v6236 = vadd.f32 %v6200, %v6221
      %v6237 = vadd.f32 %v6201, %v6226
      %v6238 = vadd.f32 %v6202, %v6226
      %v6239 = vadd.f32 %v6203, %v6226
      %v6240 = vadd.f32 %v6228, %v4575
      %v6241 = vadd.f32 %v6229, %v4576
      %v6242 = vadd.f32 %v6230, %v4577
      %v6243 = vadd.f32 %v6231, %v4578
      %v6244 = vadd.f32 %v6232, %v4579
      %v6245 = vadd.f32 %v6233, %v4580
      %v6246 = vadd.f32 %v6234, %v4581
      %v6247 = vadd.f32 %v6235, %v4582
      %v6248 = vadd.f32 %v6236, %v4583
      %v6249 = vadd.f32 %v6237, %v4584
      %v6250 = vadd.f32 %v6238, %v4585
      %v6251 = vadd.f32 %v6239, %v4586
      %v6252 = vmul.f32 %v6240, %v548
      %v6253 = vmul.f32 %v6241, %v552
      %v6254 = vmul.f32 %v6242, %v556
      %v6255 = vmul.f32 %v6243, %v548
      %v6256 = vmul.f32 %v6244, %v552
      %v6257 = vmul.f32 %v6245, %v556
      %v6258 = vmul.f32 %v6246, %v548
      %v6259 = vmul.f32 %v6247, %v552
      %v6260 = vmul.f32 %v6248, %v556
      %v6261 = vmul.f32 %v6249, %v548
      %v6262 = vmul.f32 %v6250, %v552
      %v6263 = vmul.f32 %v6251, %v556
      %v6264 = vadd.f32 %v6252, %v6253
      %v6265 = vadd.f32 %v6264, %v6254
      %6266 = vadd.xlane.f32.xlu0 %v6265
      %v6267 = vpop.xlane.xlu0 %6266
      %v6268 = vadd.f32 %v6255, %v6256
      %v6269 = vadd.f32 %v6268, %v6257
      %6270 = vadd.xlane.f32.xlu0 %v6269
      %v6271 = vpop.xlane.xlu0 %6270
      %v6272 = vadd.f32 %v6258, %v6259
      %v6273 = vadd.f32 %v6272, %v6260
      %6274 = vadd.xlane.f32.xlu0 %v6273
      %v6275 = vpop.xlane.xlu0 %6274
      %v6276 = vadd.f32 %v6261, %v6262
      %v6277 = vadd.f32 %v6276, %v6263
      %6278 = vadd.xlane.f32.xlu0 %v6277
      %v6279 = vpop.xlane.xlu0 %6278
      %v6280 = vmul.f32 %v6267, 0.00390625
      %v6281 = vmul.f32 %v6271, 0.00390625
      %v6282 = vmul.f32 %v6275, 0.00390625
      %v6283 = vmul.f32 %v6279, 0.00390625
      %v6284 = vsub.f32 %v6240, %v6280
      %v6285 = vsub.f32 %v6241, %v6280
      %v6286 = vsub.f32 %v6242, %v6280
      %v6287 = vsub.f32 %v6243, %v6281
      %v6288 = vsub.f32 %v6244, %v6281
      %v6289 = vsub.f32 %v6245, %v6281
      %v6290 = vsub.f32 %v6246, %v6282
      %v6291 = vsub.f32 %v6247, %v6282
      %v6292 = vsub.f32 %v6248, %v6282
      %v6293 = vsub.f32 %v6249, %v6283
      %v6294 = vsub.f32 %v6250, %v6283
      %v6295 = vsub.f32 %v6251, %v6283
      %v6296 = vmul.f32 %v6284, %v548
      %v6297 = vmul.f32 %v6285, %v552
      %v6298 = vmul.f32 %v6286, %v556
      %v6299 = vmul.f32 %v6287, %v548
      %v6300 = vmul.f32 %v6288, %v552
      %v6301 = vmul.f32 %v6289, %v556
      %v6302 = vmul.f32 %v6290, %v548
      %v6303 = vmul.f32 %v6291, %v552
      %v6304 = vmul.f32 %v6292, %v556
      %v6305 = vmul.f32 %v6293, %v548
      %v6306 = vmul.f32 %v6294, %v552
      %v6307 = vmul.f32 %v6295, %v556
      %v6308 = vmul.f32 %v6296, %v6296
      %v6309 = vmul.f32 %v6297, %v6297
      %v6310 = vmul.f32 %v6298, %v6298
      %v6311 = vmul.f32 %v6299, %v6299
      %v6312 = vmul.f32 %v6300, %v6300
      %v6313 = vmul.f32 %v6301, %v6301
      %v6314 = vmul.f32 %v6302, %v6302
      %v6315 = vmul.f32 %v6303, %v6303
      %v6316 = vmul.f32 %v6304, %v6304
      %v6317 = vmul.f32 %v6305, %v6305
      %v6318 = vmul.f32 %v6306, %v6306
      %v6319 = vmul.f32 %v6307, %v6307
      %v6320 = vadd.f32 %v6308, %v6309
      %v6321 = vadd.f32 %v6320, %v6310
      %6322 = vadd.xlane.f32.xlu0 %v6321
      %v6323 = vpop.xlane.xlu0 %6322
      %v6324 = vadd.f32 %v6311, %v6312
      %v6325 = vadd.f32 %v6324, %v6313
      %6326 = vadd.xlane.f32.xlu0 %v6325
      %v6327 = vpop.xlane.xlu0 %6326
      %v6328 = vadd.f32 %v6314, %v6315
      %v6329 = vadd.f32 %v6328, %v6316
      %6330 = vadd.xlane.f32.xlu0 %v6329
      %v6331 = vpop.xlane.xlu0 %6330
      %v6332 = vadd.f32 %v6317, %v6318
      %v6333 = vadd.f32 %v6332, %v6319
      %6334 = vadd.xlane.f32.xlu0 %v6333
      %v6335 = vpop.xlane.xlu0 %6334
      %v6336 = vmul.f32 %v6323, 0.00390625
      %v6337 = vmul.f32 %v6327, 0.00390625
      %v6338 = vmul.f32 %v6331, 0.00390625
      %v6339 = vmul.f32 %v6335, 0.00390625
      %v6340 = vadd.f32 %v6336, 1e-05
      %v6341 = vadd.f32 %v6337, 1e-05
      %v6342 = vadd.f32 %v6338, 1e-05
      %v6343 = vadd.f32 %v6339, 1e-05
      %v6344 = vrsqrt.pop %v6340
      %v6345 = vrsqrt.pop %v6341
      %v6346 = vrsqrt.pop %v6342
      %v6347 = vrsqrt.pop %v6343
      %v6348 = vmul.f32 %v6284, %v6344
      %v6349 = vmul.f32 %v6285, %v6344
      %v6350 = vmul.f32 %v6286, %v6344
      %v6351 = vmul.f32 %v6287, %v6345
      %v6352 = vmul.f32 %v6288, %v6345
      %v6353 = vmul.f32 %v6289, %v6345
      %v6354 = vmul.f32 %v6290, %v6346
      %v6355 = vmul.f32 %v6291, %v6346
      %v6356 = vmul.f32 %v6292, %v6346
      %v6357 = vmul.f32 %v6293, %v6347
      %v6358 = vmul.f32 %v6294, %v6347
      %v6359 = vmul.f32 %v6295, %v6347
      %v6360 = vadd.f32 %v6280, %v6281
      %v6361 = vadd.f32 %v6360, %v6282
      %v6362 = vadd.f32 %v6361, %v6283
      %v6363 = vrot.slane %v6362, 4
      %v6364 = vadd.f32 %v6362, %v6363
      %v6365 = vrot.slane %v6364, 2
      %v6366 = vadd.f32 %v6364, %v6365
      %v6367 = vrot.slane %v6366, 1
      %v6368 = vadd.f32 %v6366, %v6367
      %v6369 = vmul.f32 %v6368, %v2371
      %v6370 = vsub.f32 %v6280, %v6369
      %v6371 = vsub.f32 %v6281, %v6369
      %v6372 = vsub.f32 %v6282, %v6369
      %v6373 = vsub.f32 %v6283, %v6369
      %v6374 = vmul.f32 %v6370, %v6370
      %v6375 = vmul.f32 %v6371, %v6371
      %v6376 = vmul.f32 %v6372, %v6372
      %v6377 = vmul.f32 %v6373, %v6373
      %v6378 = vadd.f32 %v6374, %v6375
      %v6379 = vadd.f32 %v6378, %v6376
      %v6380 = vadd.f32 %v6379, %v6377
      %v6381 = vrot.slane %v6380, 4
      %v6382 = vadd.f32 %v6380, %v6381
      %v6383 = vrot.slane %v6382, 2
      %v6384 = vadd.f32 %v6382, %v6383
      %v6385 = vrot.slane %v6384, 1
      %v6386 = vadd.f32 %v6384, %v6385
      %v6387 = vmul.f32 %v6386, %v2390
      %v6388 = vrsqrt.pop %v6387
      %v6389 = vmul.f32 %v6387, %v6388
      %vm6390 = vcmp.eq.f32.partialorder %v6387, inf
      %v6391 = vsel %vm6390, %v6387, %v6389
      %vm6392 = vcmp.eq.f32.partialorder %v6387, 0.0
      %v6393 = vand.u32 %v6387, 2147483648
      %v6394 = vsel %vm6392, %v6393, %v6391
      %v6395 = vadd.f32 %v6394, 1e-06
      %v6396 = vrcp.pop %v6395
      %v6397 = vmul.f32 %v6370, %v6396
      %v6398 = vmul.f32 %v6371, %v6396
      %v6399 = vmul.f32 %v6372, %v6396
      %v6400 = vmul.f32 %v6373, %v6396
      %6402 = vset.pattern.permute.xlu0 0
      %6403 = vperm.xlu0 %6402, %v4611
      %v6404 = vpop.permute.xlu0 %6403
      %6407 = vset.pattern.permute.xlu0 0
      %6408 = vperm.xlu0 %6407, %v4612
      %v6409 = vpop.permute.xlu0 %6408
      %6412 = vset.pattern.permute.xlu0 0
      %6413 = vperm.xlu0 %6412, %v4613
      %v6414 = vpop.permute.xlu0 %6413
      %6417 = vset.pattern.permute.xlu0 0
      %6418 = vperm.xlu0 %6417, %v4614
      %v6419 = vpop.permute.xlu0 %6418
      %v6421 = vmul.f32 %v6404, %v6348
      %v6422 = vmul.f32 %v6404, %v6349
      %v6423 = vmul.f32 %v6404, %v6350
      %v6424 = vmul.f32 %v6409, %v6351
      %v6425 = vmul.f32 %v6409, %v6352
      %v6426 = vmul.f32 %v6409, %v6353
      %v6427 = vmul.f32 %v6414, %v6354
      %v6428 = vmul.f32 %v6414, %v6355
      %v6429 = vmul.f32 %v6414, %v6356
      %v6430 = vmul.f32 %v6419, %v6357
      %v6431 = vmul.f32 %v6419, %v6358
      %v6432 = vmul.f32 %v6419, %v6359
      %v6433 = vmul.f32 %v4639, %v6397
      %v6434 = vmul.f32 %v4640, %v6398
      %v6435 = vmul.f32 %v4641, %v6399
      %v6436 = vmul.f32 %v4642, %v6400
      %6438 = vset.pattern.permute.xlu0 0
      %6439 = vperm.xlu0 %6438, %v6433
      %v6440 = vpop.permute.xlu0 %6439
      %6443 = vset.pattern.permute.xlu0 0
      %6444 = vperm.xlu0 %6443, %v6434
      %v6445 = vpop.permute.xlu0 %6444
      %6448 = vset.pattern.permute.xlu0 0
      %6449 = vperm.xlu0 %6448, %v6435
      %v6450 = vpop.permute.xlu0 %6449
      %6453 = vset.pattern.permute.xlu0 0
      %6454 = vperm.xlu0 %6453, %v6436
      %v6455 = vpop.permute.xlu0 %6454
      %v6457 = vadd.f32 %v6421, %v6440
      %v6458 = vadd.f32 %v6422, %v6440
      %v6459 = vadd.f32 %v6423, %v6440
      %v6460 = vadd.f32 %v6424, %v6445
      %v6461 = vadd.f32 %v6425, %v6445
      %v6462 = vadd.f32 %v6426, %v6445
      %v6463 = vadd.f32 %v6427, %v6450
      %v6464 = vadd.f32 %v6428, %v6450
      %v6465 = vadd.f32 %v6429, %v6450
      %v6466 = vadd.f32 %v6430, %v6455
      %v6467 = vadd.f32 %v6431, %v6455
      %v6468 = vadd.f32 %v6432, %v6455
      %6470 = vset.pattern.permute.xlu0 0
      %6471 = vperm.xlu0 %6470, %v4667
      %v6472 = vpop.permute.xlu0 %6471
      %6475 = vset.pattern.permute.xlu0 0
      %6476 = vperm.xlu0 %6475, %v4668
      %v6477 = vpop.permute.xlu0 %6476
      %6480 = vset.pattern.permute.xlu0 0
      %6481 = vperm.xlu0 %6480, %v4669
      %v6482 = vpop.permute.xlu0 %6481
      %6485 = vset.pattern.permute.xlu0 0
      %6486 = vperm.xlu0 %6485, %v4670
      %v6487 = vpop.permute.xlu0 %6486
      %v6489 = vadd.f32 %v6457, %v6472
      %v6490 = vadd.f32 %v6458, %v6472
      %v6491 = vadd.f32 %v6459, %v6472
      %v6492 = vadd.f32 %v6460, %v6477
      %v6493 = vadd.f32 %v6461, %v6477
      %v6494 = vadd.f32 %v6462, %v6477
      %v6495 = vadd.f32 %v6463, %v6482
      %v6496 = vadd.f32 %v6464, %v6482
      %v6497 = vadd.f32 %v6465, %v6482
      %v6498 = vadd.f32 %v6466, %v6487
      %v6499 = vadd.f32 %v6467, %v6487
      %v6500 = vadd.f32 %v6468, %v6487
      %vm6501 = vcmp.gt.f32.partialorder %v6489, 0.0
      %vm6502 = vcmp.gt.f32.partialorder %v6490, 0.0
      %vm6503 = vcmp.gt.f32.partialorder %v6491, 0.0
      %vm6504 = vcmp.gt.f32.partialorder %v6492, 0.0
      %vm6505 = vcmp.gt.f32.partialorder %v6493, 0.0
      %vm6506 = vcmp.gt.f32.partialorder %v6494, 0.0
      %vm6507 = vcmp.gt.f32.partialorder %v6495, 0.0
      %vm6508 = vcmp.gt.f32.partialorder %v6496, 0.0
      %vm6509 = vcmp.gt.f32.partialorder %v6497, 0.0
      %vm6510 = vcmp.gt.f32.partialorder %v6498, 0.0
      %vm6511 = vcmp.gt.f32.partialorder %v6499, 0.0
      %vm6512 = vcmp.gt.f32.partialorder %v6500, 0.0
      %v6513 = vsel %vm6501, 0.0, %v6489
      %v6514 = vsel %vm6502, 0.0, %v6490
      %v6515 = vsel %vm6503, 0.0, %v6491
      %v6516 = vsel %vm6504, 0.0, %v6492
      %v6517 = vsel %vm6505, 0.0, %v6493
      %v6518 = vsel %vm6506, 0.0, %v6494
      %v6519 = vsel %vm6507, 0.0, %v6495
      %v6520 = vsel %vm6508, 0.0, %v6496
      %v6521 = vsel %vm6509, 0.0, %v6497
      %v6522 = vsel %vm6510, 0.0, %v6498
      %v6523 = vsel %vm6511, 0.0, %v6499
      %v6524 = vsel %vm6512, 0.0, %v6500
      %v6525 = vmul.f32 %v6513, 1.442695
      %v6526 = vpow.pop %v6525
      %v6527 = vmul.f32 %v6514, 1.442695
      %v6528 = vpow.pop %v6527
      %v6529 = vmul.f32 %v6515, 1.442695
      %v6530 = vpow.pop %v6529
      %v6531 = vmul.f32 %v6516, 1.442695
      %v6532 = vpow.pop %v6531
      %v6533 = vmul.f32 %v6517, 1.442695
      %v6534 = vpow.pop %v6533
      %v6535 = vmul.f32 %v6518, 1.442695
      %v6536 = vpow.pop %v6535
      %v6537 = vmul.f32 %v6519, 1.442695
      %v6538 = vpow.pop %v6537
      %v6539 = vmul.f32 %v6520, 1.442695
      %v6540 = vpow.pop %v6539
      %v6541 = vmul.f32 %v6521, 1.442695
      %v6542 = vpow.pop %v6541
      %v6543 = vmul.f32 %v6522, 1.442695
      %v6544 = vpow.pop %v6543
      %v6545 = vmul.f32 %v6523, 1.442695
      %v6546 = vpow.pop %v6545
      %v6547 = vmul.f32 %v6524, 1.442695
      %v6548 = vpow.pop %v6547
      %v6549 = vsub.f32 %v6526, 1.0
      %v6550 = vsub.f32 %v6528, 1.0
      %v6551 = vsub.f32 %v6530, 1.0
      %v6552 = vsub.f32 %v6532, 1.0
      %v6553 = vsub.f32 %v6534, 1.0
      %v6554 = vsub.f32 %v6536, 1.0
      %v6555 = vsub.f32 %v6538, 1.0
      %v6556 = vsub.f32 %v6540, 1.0
      %v6557 = vsub.f32 %v6542, 1.0
      %v6558 = vsub.f32 %v6544, 1.0
      %v6559 = vsub.f32 %v6546, 1.0
      %v6560 = vsub.f32 %v6548, 1.0
      %v6561 = vsel %vm6501, %v6489, %v6549
      %v6562 = vsel %vm6502, %v6490, %v6550
      %v6563 = vsel %vm6503, %v6491, %v6551
      %v6564 = vsel %vm6504, %v6492, %v6552
      %v6565 = vsel %vm6505, %v6493, %v6553
      %v6566 = vsel %vm6506, %v6494, %v6554
      %v6567 = vsel %vm6507, %v6495, %v6555
      %v6568 = vsel %vm6508, %v6496, %v6556
      %v6569 = vsel %vm6509, %v6497, %v6557
      %v6570 = vsel %vm6510, %v6498, %v6558
      %v6571 = vsel %vm6511, %v6499, %v6559
      %v6572 = vsel %vm6512, %v6500, %v6560
      %v6573 = vmul.f32 %v6561, %v548
      %v6574 = vmul.f32 %v6562, %v552
      %v6575 = vmul.f32 %v6563, %v556
      %v6576 = vmul.f32 %v6564, %v548
      %v6577 = vmul.f32 %v6565, %v552
      %v6578 = vmul.f32 %v6566, %v556
      %v6579 = vmul.f32 %v6567, %v548
      %v6580 = vmul.f32 %v6568, %v552
      %v6581 = vmul.f32 %v6569, %v556
      %v6582 = vmul.f32 %v6570, %v548
      %v6583 = vmul.f32 %v6571, %v552
      %v6584 = vmul.f32 %v6572, %v556
      %v6585 = vld [vmem:[%s7 + $0x120] sm:$0xff]
      %v6586 = vld [vmem:[%s7 + $0x128] sm:$0xff]
      %v6587 = vld [vmem:[%s7 + $0x130] sm:$0xff]
      %v6588 = vld [vmem:[%s7 + $0x138] sm:$0xff]
      %v6589 = vld [vmem:[%s8 + $0x120] sm:$0xff]
      %v6590 = vld [vmem:[%s8 + $0x128] sm:$0xff]
      %v6591 = vld [vmem:[%s8 + $0x130] sm:$0xff]
      %v6592 = vld [vmem:[%s8 + $0x138] sm:$0xff]
      %v6593 = vmul.f32 %v6585, %v584
      %v6594 = vmul.f32 %v6586, %v584
      %v6595 = vmul.f32 %v6587, %v584
      %v6596 = vmul.f32 %v6588, %v584
      %v6597 = vsel %vm590, %v6593, 0.0
      %6598 = vadd.xlane.f32.xlu0 %v6597
      %v6599 = vpop.xlane.xlu0 %6598
      %v6600 = vsel %vm590, %v6594, 0.0
      %6601 = vadd.xlane.f32.xlu0 %v6600
      %v6602 = vpop.xlane.xlu0 %6601
      %v6603 = vsel %vm590, %v6595, 0.0
      %6604 = vadd.xlane.f32.xlu0 %v6603
      %v6605 = vpop.xlane.xlu0 %6604
      %v6606 = vsel %vm590, %v6596, 0.0
      %6607 = vadd.xlane.f32.xlu0 %v6606
      %v6608 = vpop.xlane.xlu0 %6607
      %v6609 = vadd.f32 %v6599, %v6589
      %v6610 = vadd.f32 %v6602, %v6590
      %v6611 = vadd.f32 %v6605, %v6591
      %v6612 = vadd.f32 %v6608, %v6592
      %v6613 = vld [vmem:[%s7 + $0x140] sm:$0xff]
      %v6614 = vld [vmem:[%s7 + $0x148] sm:$0xff]
      %v6615 = vld [vmem:[%s7 + $0x150] sm:$0xff]
      %v6616 = vld [vmem:[%s7 + $0x158] sm:$0xff]
      %v6617 = vld [vmem:[%s8 + $0x140] sm:$0xff]
      %v6618 = vld [vmem:[%s8 + $0x148] sm:$0xff]
      %v6619 = vld [vmem:[%s8 + $0x150] sm:$0xff]
      %v6620 = vld [vmem:[%s8 + $0x158] sm:$0xff]
      %v6621 = vmul.f32 %v6613, %v584
      %v6622 = vmul.f32 %v6614, %v584
      %v6623 = vmul.f32 %v6615, %v584
      %v6624 = vmul.f32 %v6616, %v584
      %v6625 = vsel %vm590, %v6621, 0.0
      %6626 = vadd.xlane.f32.xlu0 %v6625
      %v6627 = vpop.xlane.xlu0 %6626
      %v6628 = vsel %vm590, %v6622, 0.0
      %6629 = vadd.xlane.f32.xlu0 %v6628
      %v6630 = vpop.xlane.xlu0 %6629
      %v6631 = vsel %vm590, %v6623, 0.0
      %6632 = vadd.xlane.f32.xlu0 %v6631
      %v6633 = vpop.xlane.xlu0 %6632
      %v6634 = vsel %vm590, %v6624, 0.0
      %6635 = vadd.xlane.f32.xlu0 %v6634
      %v6636 = vpop.xlane.xlu0 %6635
      %v6637 = vadd.f32 %v6627, %v6617
      %v6638 = vadd.f32 %v6630, %v6618
      %v6639 = vadd.f32 %v6633, %v6619
      %v6640 = vadd.f32 %v6636, %v6620
      %v6641 = vld [vmem:[%s7 + $0x160] sm:$0xff]
      %v6642 = vld [vmem:[%s7 + $0x168] sm:$0xff]
      %v6643 = vld [vmem:[%s7 + $0x170] sm:$0xff]
      %v6644 = vld [vmem:[%s7 + $0x178] sm:$0xff]
      %v6645 = vld [vmem:[%s8 + $0x160] sm:$0xff]
      %v6646 = vld [vmem:[%s8 + $0x168] sm:$0xff]
      %v6647 = vld [vmem:[%s8 + $0x170] sm:$0xff]
      %v6648 = vld [vmem:[%s8 + $0x178] sm:$0xff]
      %v6649 = vmul.f32 %v6641, %v584
      %v6650 = vmul.f32 %v6642, %v584
      %v6651 = vmul.f32 %v6643, %v584
      %v6652 = vmul.f32 %v6644, %v584
      %v6653 = vsel %vm590, %v6649, 0.0
      %6654 = vadd.xlane.f32.xlu0 %v6653
      %v6655 = vpop.xlane.xlu0 %6654
      %v6656 = vsel %vm590, %v6650, 0.0
      %6657 = vadd.xlane.f32.xlu0 %v6656
      %v6658 = vpop.xlane.xlu0 %6657
      %v6659 = vsel %vm590, %v6651, 0.0
      %6660 = vadd.xlane.f32.xlu0 %v6659
      %v6661 = vpop.xlane.xlu0 %6660
      %v6662 = vsel %vm590, %v6652, 0.0
      %6663 = vadd.xlane.f32.xlu0 %v6662
      %v6664 = vpop.xlane.xlu0 %6663
      %v6665 = vadd.f32 %v6655, %v6645
      %v6666 = vadd.f32 %v6658, %v6646
      %v6667 = vadd.f32 %v6661, %v6647
      %v6668 = vadd.f32 %v6664, %v6648
      %s6669 = scalar_lea.vmem %s5, 432
      %v6670 = vld [vmem:[%s6669] sm:$0xf]
      %v6671 = vld [vmem:[%s6669 + $0x4] sm:$0xf]
      %v6672 = vld [vmem:[%s6669 + $0x8] sm:$0xf]
      %v6673 = vld [vmem:[%s6669 + $0xc] sm:$0xf]
      %6674 = vrot.lane.b32.xlu0 %v6573, 19
      %v6675 = vpop.permute.xlu0 %6674
      %6676 = vrot.lane.b32.xlu0 %v6576, 19
      %v6677 = vpop.permute.xlu0 %6676
      %6678 = vrot.lane.b32.xlu0 %v6579, 19
      %v6679 = vpop.permute.xlu0 %6678
      %6680 = vrot.lane.b32.xlu0 %v6582, 19
      %v6681 = vpop.permute.xlu0 %6680
      %6682 = vrot.lane.b32.xlu0 %v6574, 19
      %v6683 = vpop.permute.xlu0 %6682
      %6684 = vrot.lane.b32.xlu0 %v6577, 19
      %v6685 = vpop.permute.xlu0 %6684
      %6686 = vrot.lane.b32.xlu0 %v6580, 19
      %v6687 = vpop.permute.xlu0 %6686
      %6688 = vrot.lane.b32.xlu0 %v6583, 19
      %v6689 = vpop.permute.xlu0 %6688
      %6690 = vrot.lane.b32.xlu0 %v6575, 19
      %v6691 = vpop.permute.xlu0 %6690
      %6692 = vrot.lane.b32.xlu0 %v6578, 19
      %v6693 = vpop.permute.xlu0 %6692
      %6694 = vrot.lane.b32.xlu0 %v6581, 19
      %v6695 = vpop.permute.xlu0 %6694
      %6696 = vrot.lane.b32.xlu0 %v6584, 19
      %v6697 = vpop.permute.xlu0 %6696
      %v6698 = vsel %vm693, %v6683, %v6691
      %v6699 = vsel %vm693, %v6685, %v6693
      %v6700 = vsel %vm693, %v6687, %v6695
      %v6701 = vsel %vm693, %v6689, %v6697
      %v6702 = vsel %vm693, %v6675, %v6683
      %v6703 = vsel %vm693, %v6677, %v6685
      %v6704 = vsel %vm693, %v6679, %v6687
      %v6705 = vsel %vm693, %v6681, %v6689
      %v6706 = vsel %vm693, %v6691, %v6675
      %v6707 = vsel %vm693, %v6693, %v6677
      %v6708 = vsel %vm693, %v6695, %v6679
      %v6709 = vsel %vm693, %v6697, %v6681
      %v6710 = vpack.c.bf16 %v6707, %v6706
      %v6711 = vpack.c.bf16 %v6703, %v6702
      %v6712 = vpack.c.bf16 %v6699, %v6698
      %v6713 = vpack.c.bf16 %v6709, %v6708
      %v6714 = vpack.c.bf16 %v6705, %v6704
      %v6715 = vpack.c.bf16 %v6701, %v6700
      %s6716 = scalar_lea.vmem %s5, 448
      %v6717 = vld [vmem:[%s6716] sm:$0xf]
      %v6718 = vld [vmem:[%s6716 + $0x4] sm:$0xf]
      %v6719 = vld [vmem:[%s6716 + $0x8] sm:$0xf]
      %v6720 = vld [vmem:[%s6716 + $0xc] sm:$0xf]
      %6721 = vrot.lane.b32.xlu0 %v6573, 18
      %v6722 = vpop.permute.xlu0 %6721
      %6723 = vrot.lane.b32.xlu0 %v6576, 18
      %v6724 = vpop.permute.xlu0 %6723
      %6725 = vrot.lane.b32.xlu0 %v6579, 18
      %v6726 = vpop.permute.xlu0 %6725
      %6727 = vrot.lane.b32.xlu0 %v6582, 18
      %v6728 = vpop.permute.xlu0 %6727
      %6729 = vrot.lane.b32.xlu0 %v6574, 18
      %v6730 = vpop.permute.xlu0 %6729
      %6731 = vrot.lane.b32.xlu0 %v6577, 18
      %v6732 = vpop.permute.xlu0 %6731
      %6733 = vrot.lane.b32.xlu0 %v6580, 18
      %v6734 = vpop.permute.xlu0 %6733
      %6735 = vrot.lane.b32.xlu0 %v6583, 18
      %v6736 = vpop.permute.xlu0 %6735
      %6737 = vrot.lane.b32.xlu0 %v6575, 18
      %v6738 = vpop.permute.xlu0 %6737
      %6739 = vrot.lane.b32.xlu0 %v6578, 18
      %v6740 = vpop.permute.xlu0 %6739
      %6741 = vrot.lane.b32.xlu0 %v6581, 18
      %v6742 = vpop.permute.xlu0 %6741
      %6743 = vrot.lane.b32.xlu0 %v6584, 18
      %v6744 = vpop.permute.xlu0 %6743
      %v6745 = vsel %vm741, %v6730, %v6738
      %v6746 = vsel %vm741, %v6732, %v6740
      %v6747 = vsel %vm741, %v6734, %v6742
      %v6748 = vsel %vm741, %v6736, %v6744
      %v6749 = vsel %vm741, %v6722, %v6730
      %v6750 = vsel %vm741, %v6724, %v6732
      %v6751 = vsel %vm741, %v6726, %v6734
      %v6752 = vsel %vm741, %v6728, %v6736
      %v6753 = vsel %vm741, %v6738, %v6722
      %v6754 = vsel %vm741, %v6740, %v6724
      %v6755 = vsel %vm741, %v6742, %v6726
      %v6756 = vsel %vm741, %v6744, %v6728
      %v6757 = vpack.c.bf16 %v6754, %v6753
      %v6758 = vpack.c.bf16 %v6750, %v6749
      %v6759 = vpack.c.bf16 %v6746, %v6745
      %v6760 = vpack.c.bf16 %v6756, %v6755
      %v6761 = vpack.c.bf16 %v6752, %v6751
      %v6762 = vpack.c.bf16 %v6748, %v6747
      %v6767 = vunpack.c.l.b16 %v6717
      %v6768 = vunpack.c.l.b16 %v6718
      %v6769 = vunpack.c.l.b16 %v6719
      %v6770 = vunpack.c.l.b16 %v6720
      %v6771 = vpack.c.b16 %v6768, %v6767
      %v6772 = vpack.c.b16 %v6770, %v6769
      %v6774 = vsel %vm770, %v6771, 0
      %v6777 = vsel %vm770, %v6772, 0
      %6779 = vmatprep.subr.bf16.mxu0 %v6758
      %6780 = vmatpush1.bf16.msra.mxu0 %v6757
      %6781 = vmatprep.subr.bf16.mxu0 %v6761
      %6782 = vmatpush1.bf16.msra.mxu0 %v6760
      %6783 = vmatprep.subr.bf16.mxu0 0
      %6784 = vmatpush1.bf16.msra.mxu0 0
      %6785 = vmatprep.subr.bf16.mxu0 0
      %6786 = vmatpush1.bf16.msra.mxu0 0
      %6787 = vmatprep.subr.bf16.mxu0 0
      %6788 = vmatpush1.bf16.msra.mxu0 0
      %6789 = vmatprep.subr.bf16.mxu0 0
      %6790 = vmatpush1.bf16.msra.mxu0 0
      %6791 = vmatprep.subr.bf16.mxu0 0
      %6792 = vmatpush1.bf16.msra.mxu0 0
      %6793 = vmatprep.subr.bf16.mxu0 0
      %6794 = vmatpush1.bf16.msra.mxu0 0
      %6795 = vmatprep.subr.bf16.mxu0 0
      %6796 = vmatpush1.bf16.msra.mxu0 0
      %6797 = vmatprep.subr.bf16.mxu0 0
      %6798 = vmatpush1.bf16.msra.mxu0 0
      %6799 = vmatprep.subr.bf16.mxu0 0
      %6800 = vmatpush1.bf16.msra.mxu0 0
      %6801 = vmatprep.subr.bf16.mxu0 0
      %6802 = vmatpush1.bf16.msra.mxu0 0
      %6803 = vmatprep.subr.bf16.mxu0 0
      %6804 = vmatpush1.bf16.msra.mxu0 0
      %6805 = vmatprep.subr.bf16.mxu0 0
      %6806 = vmatpush1.bf16.msra.mxu0 0
      %6807 = vmatprep.subr.bf16.mxu0 0
      %6808 = vmatpush1.bf16.msra.mxu0 0
      %6809 = vmatprep.subr.bf16.mxu0 0
      %6810 = vmatpush1.bf16.msra.mxu0 0
      %6811 = vmatprep.mubr.bf16.mxu0 0
      %6812 = vmatmul.mubr.bf16.gmra.mrb[0].mxu0 %v6774
      %v6813 = vpop.f32.mrb[0].mxu0
      %v6814 = vadd.f32 0.0, %v6813
      %v6815 = vpop.f32.mrb[0].mxu0
      %v6816 = vadd.f32 0.0, %v6815
      %v6817 = vpop.f32.mrb[0].mxu0
      %v6818 = vadd.f32 0.0, %v6817
      %v6819 = vpop.f32.mrb[0].mxu0
      %v6820 = vadd.f32 0.0, %v6819
      %6821 = vmatprep.mubr.bf16.mxu0 0
      %6822 = vmatmul.mubr.bf16.gmra.mrb[0].mxu0 %v6777
      %v6823 = vpop.f32.mrb[0].mxu0
      %v6824 = vadd.f32 0.0, %v6823
      %v6825 = vpop.f32.mrb[0].mxu0
      %v6826 = vadd.f32 0.0, %v6825
      %v6827 = vpop.f32.mrb[0].mxu0
      %v6828 = vadd.f32 0.0, %v6827
      %v6829 = vpop.f32.mrb[0].mxu0
      %v6830 = vadd.f32 0.0, %v6829
      %6831 = vdwg.mxu0
      %6832 = vmatprep.subr.bf16.mxu0 0
      %6833 = vmatpush1.bf16.msra.mxu0 %v6759
      %6834 = vmatprep.subr.bf16.mxu0 0
      %6835 = vmatpush1.bf16.msra.mxu0 %v6762
      %6836 = vmatprep.subr.bf16.mxu0 0
      %6837 = vmatpush1.bf16.msra.mxu0 0
      %6838 = vmatprep.subr.bf16.mxu0 0
      %6839 = vmatpush1.bf16.msra.mxu0 0
      %6840 = vmatprep.subr.bf16.mxu0 0
      %6841 = vmatpush1.bf16.msra.mxu0 0
      %6842 = vmatprep.subr.bf16.mxu0 0
      %6843 = vmatpush1.bf16.msra.mxu0 0
      %6844 = vmatprep.subr.bf16.mxu0 0
      %6845 = vmatpush1.bf16.msra.mxu0 0
      %6846 = vmatprep.subr.bf16.mxu0 0
      %6847 = vmatpush1.bf16.msra.mxu0 0
      %6848 = vmatprep.subr.bf16.mxu0 0
      %6849 = vmatpush1.bf16.msra.mxu0 0
      %6850 = vmatprep.subr.bf16.mxu0 0
      %6851 = vmatpush1.bf16.msra.mxu0 0
      %6852 = vmatprep.subr.bf16.mxu0 0
      %6853 = vmatpush1.bf16.msra.mxu0 0
      %6854 = vmatprep.subr.bf16.mxu0 0
      %6855 = vmatpush1.bf16.msra.mxu0 0
      %6856 = vmatprep.subr.bf16.mxu0 0
      %6857 = vmatpush1.bf16.msra.mxu0 0
      %6858 = vmatprep.subr.bf16.mxu0 0
      %6859 = vmatpush1.bf16.msra.mxu0 0
      %6860 = vmatprep.subr.bf16.mxu0 0
      %6861 = vmatpush1.bf16.msra.mxu0 0
      %6862 = vmatprep.subr.bf16.mxu0 0
      %6863 = vmatpush1.bf16.msra.mxu0 0
      %6864 = vmatprep.mubr.bf16.mxu0 0
      %6865 = vmatmul.mubr.bf16.gmra.mrb[0].mxu0 %v6774
      %v6866 = vpop.f32.mrb[0].mxu0
      %v6867 = vadd.f32 0.0, %v6866
      %v6868 = vpop.f32.mrb[0].mxu0
      %v6869 = vpop.f32.mrb[0].mxu0
      %v6870 = vadd.f32 0.0, %v6869
      %v6871 = vpop.f32.mrb[0].mxu0
      %6872 = vmatprep.mubr.bf16.mxu0 0
      %6873 = vmatmul.mubr.bf16.gmra.mrb[0].mxu0 %v6777
      %v6874 = vpop.f32.mrb[0].mxu0
      %v6875 = vadd.f32 0.0, %v6874
      %v6876 = vpop.f32.mrb[0].mxu0
      %v6877 = vpop.f32.mrb[0].mxu0
      %v6878 = vadd.f32 0.0, %v6877
      %v6879 = vpop.f32.mrb[0].mxu0
      %6880 = vdwg.mxu0
      %v6885 = vunpack.c.l.b16 %v6670
      %v6886 = vunpack.c.l.b16 %v6671
      %v6887 = vunpack.c.l.b16 %v6672
      %v6888 = vunpack.c.l.b16 %v6673
      %v6889 = vpack.c.b16 %v6886, %v6885
      %v6890 = vpack.c.b16 %v6888, %v6887
      %v6892 = vsel %vm770, %v6889, 0
      %v6895 = vsel %vm770, %v6890, 0
      %6897 = vmatprep.subr.bf16.mxu0 %v6711
      %6898 = vmatpush1.bf16.msra.mxu0 %v6710
      %6899 = vmatprep.subr.bf16.mxu0 %v6714
      %6900 = vmatpush1.bf16.msra.mxu0 %v6713
      %6901 = vmatprep.subr.bf16.mxu0 0
      %6902 = vmatpush1.bf16.msra.mxu0 0
      %6903 = vmatprep.subr.bf16.mxu0 0
      %6904 = vmatpush1.bf16.msra.mxu0 0
      %6905 = vmatprep.subr.bf16.mxu0 0
      %6906 = vmatpush1.bf16.msra.mxu0 0
      %6907 = vmatprep.subr.bf16.mxu0 0
      %6908 = vmatpush1.bf16.msra.mxu0 0
      %6909 = vmatprep.subr.bf16.mxu0 0
      %6910 = vmatpush1.bf16.msra.mxu0 0
      %6911 = vmatprep.subr.bf16.mxu0 0
      %6912 = vmatpush1.bf16.msra.mxu0 0
      %6913 = vmatprep.subr.bf16.mxu0 0
      %6914 = vmatpush1.bf16.msra.mxu0 0
      %6915 = vmatprep.subr.bf16.mxu0 0
      %6916 = vmatpush1.bf16.msra.mxu0 0
      %6917 = vmatprep.subr.bf16.mxu0 0
      %6918 = vmatpush1.bf16.msra.mxu0 0
      %6919 = vmatprep.subr.bf16.mxu0 0
      %6920 = vmatpush1.bf16.msra.mxu0 0
      %6921 = vmatprep.subr.bf16.mxu0 0
      %6922 = vmatpush1.bf16.msra.mxu0 0
      %6923 = vmatprep.subr.bf16.mxu0 0
      %6924 = vmatpush1.bf16.msra.mxu0 0
      %6925 = vmatprep.subr.bf16.mxu0 0
      %6926 = vmatpush1.bf16.msra.mxu0 0
      %6927 = vmatprep.subr.bf16.mxu0 0
      %6928 = vmatpush1.bf16.msra.mxu0 0
      %6929 = vmatprep.mubr.bf16.mxu0 0
      %6930 = vmatmul.mubr.bf16.gmra.mrb[0].mxu0 %v6892
      %v6931 = vpop.f32.mrb[0].mxu0
      %v6932 = vadd.f32 %v6814, %v6931
      %v6933 = vpop.f32.mrb[0].mxu0
      %v6934 = vadd.f32 %v6816, %v6933
      %v6935 = vpop.f32.mrb[0].mxu0
      %v6936 = vadd.f32 %v6818, %v6935
      %v6937 = vpop.f32.mrb[0].mxu0
      %v6938 = vadd.f32 %v6820, %v6937
      %6939 = vmatprep.mubr.bf16.mxu0 0
      %6940 = vmatmul.mubr.bf16.gmra.mrb[0].mxu0 %v6895
      %v6941 = vpop.f32.mrb[0].mxu0
      %v6942 = vadd.f32 %v6824, %v6941
      %v6943 = vpop.f32.mrb[0].mxu0
      %v6944 = vadd.f32 %v6826, %v6943
      %v6945 = vpop.f32.mrb[0].mxu0
      %v6946 = vadd.f32 %v6828, %v6945
      %v6947 = vpop.f32.mrb[0].mxu0
      %v6948 = vadd.f32 %v6830, %v6947
      %6949 = vdwg.mxu0
      %6950 = vmatprep.subr.bf16.mxu0 0
      %6951 = vmatpush1.bf16.msra.mxu0 %v6712
      %6952 = vmatprep.subr.bf16.mxu0 0
      %6953 = vmatpush1.bf16.msra.mxu0 %v6715
      %6954 = vmatprep.subr.bf16.mxu0 0
      %6955 = vmatpush1.bf16.msra.mxu0 0
      %6956 = vmatprep.subr.bf16.mxu0 0
      %6957 = vmatpush1.bf16.msra.mxu0 0
      %6958 = vmatprep.subr.bf16.mxu0 0
      %6959 = vmatpush1.bf16.msra.mxu0 0
      %6960 = vmatprep.subr.bf16.mxu0 0
      %6961 = vmatpush1.bf16.msra.mxu0 0
      %6962 = vmatprep.subr.bf16.mxu0 0
      %6963 = vmatpush1.bf16.msra.mxu0 0
      %6964 = vmatprep.subr.bf16.mxu0 0
      %6965 = vmatpush1.bf16.msra.mxu0 0
      %6966 = vmatprep.subr.bf16.mxu0 0
      %6967 = vmatpush1.bf16.msra.mxu0 0
      %6968 = vmatprep.subr.bf16.mxu0 0
      %6969 = vmatpush1.bf16.msra.mxu0 0
      %6970 = vmatprep.subr.bf16.mxu0 0
      %6971 = vmatpush1.bf16.msra.mxu0 0
      %6972 = vmatprep.subr.bf16.mxu0 0
      %6973 = vmatpush1.bf16.msra.mxu0 0
      %6974 = vmatprep.subr.bf16.mxu0 0
      %6975 = vmatpush1.bf16.msra.mxu0 0
      %6976 = vmatprep.subr.bf16.mxu0 0
      %6977 = vmatpush1.bf16.msra.mxu0 0
      %6978 = vmatprep.subr.bf16.mxu0 0
      %6979 = vmatpush1.bf16.msra.mxu0 0
      %6980 = vmatprep.subr.bf16.mxu0 0
      %6981 = vmatpush1.bf16.msra.mxu0 0
      %6982 = vmatprep.mubr.bf16.mxu0 0
      %6983 = vmatmul.mubr.bf16.gmra.mrb[0].mxu0 %v6892
      %v6984 = vpop.f32.mrb[0].mxu0
      %v6985 = vadd.f32 %v6867, %v6984
      %v6986 = vpop.f32.mrb[0].mxu0
      %v6987 = vpop.f32.mrb[0].mxu0
      %v6988 = vadd.f32 %v6870, %v6987
      %v6989 = vpop.f32.mrb[0].mxu0
      %6990 = vmatprep.mubr.bf16.mxu0 0
      %6991 = vmatmul.mubr.bf16.gmra.mrb[0].mxu0 %v6895
      %v6992 = vpop.f32.mrb[0].mxu0
      %v6993 = vadd.f32 %v6875, %v6992
      %v6994 = vpop.f32.mrb[0].mxu0
      %v6995 = vpop.f32.mrb[0].mxu0
      %v6996 = vadd.f32 %v6878, %v6995
      %v6997 = vpop.f32.mrb[0].mxu0
      %6998 = vdwg.mxu0
      %s6999 = scalar_lea.vmem %s5, 464
      %v7000 = vld [vmem:[%s6999] sm:$0xf]
      %v7001 = vld [vmem:[%s6999 + $0x4] sm:$0xf]
      %v7002 = vld [vmem:[%s6999 + $0x8] sm:$0xf]
      %v7003 = vld [vmem:[%s6999 + $0xc] sm:$0xf]
      %7004 = vrot.lane.b32.xlu0 %v6573, 17
      %v7005 = vpop.permute.xlu0 %7004
      %7006 = vrot.lane.b32.xlu0 %v6576, 17
      %v7007 = vpop.permute.xlu0 %7006
      %7008 = vrot.lane.b32.xlu0 %v6579, 17
      %v7009 = vpop.permute.xlu0 %7008
      %7010 = vrot.lane.b32.xlu0 %v6582, 17
      %v7011 = vpop.permute.xlu0 %7010
      %7012 = vrot.lane.b32.xlu0 %v6574, 17
      %v7013 = vpop.permute.xlu0 %7012
      %7014 = vrot.lane.b32.xlu0 %v6577, 17
      %v7015 = vpop.permute.xlu0 %7014
      %7016 = vrot.lane.b32.xlu0 %v6580, 17
      %v7017 = vpop.permute.xlu0 %7016
      %7018 = vrot.lane.b32.xlu0 %v6583, 17
      %v7019 = vpop.permute.xlu0 %7018
      %7020 = vrot.lane.b32.xlu0 %v6575, 17
      %v7021 = vpop.permute.xlu0 %7020
      %7022 = vrot.lane.b32.xlu0 %v6578, 17
      %v7023 = vpop.permute.xlu0 %7022
      %7024 = vrot.lane.b32.xlu0 %v6581, 17
      %v7025 = vpop.permute.xlu0 %7024
      %7026 = vrot.lane.b32.xlu0 %v6584, 17
      %v7027 = vpop.permute.xlu0 %7026
      %v7028 = vsel %vm1026, %v7013, %v7021
      %v7029 = vsel %vm1026, %v7015, %v7023
      %v7030 = vsel %vm1026, %v7017, %v7025
      %v7031 = vsel %vm1026, %v7019, %v7027
      %v7032 = vsel %vm1026, %v7005, %v7013
      %v7033 = vsel %vm1026, %v7007, %v7015
      %v7034 = vsel %vm1026, %v7009, %v7017
      %v7035 = vsel %vm1026, %v7011, %v7019
      %v7036 = vsel %vm1026, %v7021, %v7005
      %v7037 = vsel %vm1026, %v7023, %v7007
      %v7038 = vsel %vm1026, %v7025, %v7009
      %v7039 = vsel %vm1026, %v7027, %v7011
      %v7040 = vpack.c.bf16 %v7037, %v7036
      %v7041 = vpack.c.bf16 %v7033, %v7032
      %v7042 = vpack.c.bf16 %v7029, %v7028
      %v7043 = vpack.c.bf16 %v7039, %v7038
      %v7044 = vpack.c.bf16 %v7035, %v7034
      %v7045 = vpack.c.bf16 %v7031, %v7030
      %v7050 = vunpack.c.l.b16 %v7000
      %v7051 = vunpack.c.l.b16 %v7001
      %v7052 = vunpack.c.l.b16 %v7002
      %v7053 = vunpack.c.l.b16 %v7003
      %v7054 = vpack.c.b16 %v7051, %v7050
      %v7055 = vpack.c.b16 %v7053, %v7052
      %v7057 = vsel %vm770, %v7054, 0
      %v7060 = vsel %vm770, %v7055, 0
      %7062 = vmatprep.subr.bf16.mxu0 %v7041
      %7063 = vmatpush1.bf16.msra.mxu0 %v7040
      %7064 = vmatprep.subr.bf16.mxu0 %v7044
      %7065 = vmatpush1.bf16.msra.mxu0 %v7043
      %7066 = vmatprep.subr.bf16.mxu0 0
      %7067 = vmatpush1.bf16.msra.mxu0 0
      %7068 = vmatprep.subr.bf16.mxu0 0
      %7069 = vmatpush1.bf16.msra.mxu0 0
      %7070 = vmatprep.subr.bf16.mxu0 0
      %7071 = vmatpush1.bf16.msra.mxu0 0
      %7072 = vmatprep.subr.bf16.mxu0 0
      %7073 = vmatpush1.bf16.msra.mxu0 0
      %7074 = vmatprep.subr.bf16.mxu0 0
      %7075 = vmatpush1.bf16.msra.mxu0 0
      %7076 = vmatprep.subr.bf16.mxu0 0
      %7077 = vmatpush1.bf16.msra.mxu0 0
      %7078 = vmatprep.subr.bf16.mxu0 0
      %7079 = vmatpush1.bf16.msra.mxu0 0
      %7080 = vmatprep.subr.bf16.mxu0 0
      %7081 = vmatpush1.bf16.msra.mxu0 0
      %7082 = vmatprep.subr.bf16.mxu0 0
      %7083 = vmatpush1.bf16.msra.mxu0 0
      %7084 = vmatprep.subr.bf16.mxu0 0
      %7085 = vmatpush1.bf16.msra.mxu0 0
      %7086 = vmatprep.subr.bf16.mxu0 0
      %7087 = vmatpush1.bf16.msra.mxu0 0
      %7088 = vmatprep.subr.bf16.mxu0 0
      %7089 = vmatpush1.bf16.msra.mxu0 0
      %7090 = vmatprep.subr.bf16.mxu0 0
      %7091 = vmatpush1.bf16.msra.mxu0 0
      %7092 = vmatprep.subr.bf16.mxu0 0
      %7093 = vmatpush1.bf16.msra.mxu0 0
      %7094 = vmatprep.mubr.bf16.mxu0 0
      %7095 = vmatmul.mubr.bf16.gmra.mrb[0].mxu0 %v7057
      %v7096 = vpop.f32.mrb[0].mxu0
      %v7097 = vadd.f32 0.0, %v7096
      %v7098 = vpop.f32.mrb[0].mxu0
      %v7099 = vadd.f32 0.0, %v7098
      %v7100 = vpop.f32.mrb[0].mxu0
      %v7101 = vadd.f32 0.0, %v7100
      %v7102 = vpop.f32.mrb[0].mxu0
      %v7103 = vadd.f32 0.0, %v7102
      %7104 = vmatprep.mubr.bf16.mxu0 0
      %7105 = vmatmul.mubr.bf16.gmra.mrb[0].mxu0 %v7060
      %v7106 = vpop.f32.mrb[0].mxu0
      %v7107 = vadd.f32 0.0, %v7106
      %v7108 = vpop.f32.mrb[0].mxu0
      %v7109 = vadd.f32 0.0, %v7108
      %v7110 = vpop.f32.mrb[0].mxu0
      %v7111 = vadd.f32 0.0, %v7110
      %v7112 = vpop.f32.mrb[0].mxu0
      %v7113 = vadd.f32 0.0, %v7112
      %7114 = vdwg.mxu0
      %7115 = vmatprep.subr.bf16.mxu0 0
      %7116 = vmatpush1.bf16.msra.mxu0 %v7042
      %7117 = vmatprep.subr.bf16.mxu0 0
      %7118 = vmatpush1.bf16.msra.mxu0 %v7045
      %7119 = vmatprep.subr.bf16.mxu0 0
      %7120 = vmatpush1.bf16.msra.mxu0 0
      %7121 = vmatprep.subr.bf16.mxu0 0
      %7122 = vmatpush1.bf16.msra.mxu0 0
      %7123 = vmatprep.subr.bf16.mxu0 0
      %7124 = vmatpush1.bf16.msra.mxu0 0
      %7125 = vmatprep.subr.bf16.mxu0 0
      %7126 = vmatpush1.bf16.msra.mxu0 0
      %7127 = vmatprep.subr.bf16.mxu0 0
      %7128 = vmatpush1.bf16.msra.mxu0 0
      %7129 = vmatprep.subr.bf16.mxu0 0
      %7130 = vmatpush1.bf16.msra.mxu0 0
      %7131 = vmatprep.subr.bf16.mxu0 0
      %7132 = vmatpush1.bf16.msra.mxu0 0
      %7133 = vmatprep.subr.bf16.mxu0 0
      %7134 = vmatpush1.bf16.msra.mxu0 0
      %7135 = vmatprep.subr.bf16.mxu0 0
      %7136 = vmatpush1.bf16.msra.mxu0 0
      %7137 = vmatprep.subr.bf16.mxu0 0
      %7138 = vmatpush1.bf16.msra.mxu0 0
      %7139 = vmatprep.subr.bf16.mxu0 0
      %7140 = vmatpush1.bf16.msra.mxu0 0
      %7141 = vmatprep.subr.bf16.mxu0 0
      %7142 = vmatpush1.bf16.msra.mxu0 0
      %7143 = vmatprep.subr.bf16.mxu0 0
      %7144 = vmatpush1.bf16.msra.mxu0 0
      %7145 = vmatprep.subr.bf16.mxu0 0
      %7146 = vmatpush1.bf16.msra.mxu0 0
      %7147 = vmatprep.mubr.bf16.mxu0 0
      %7148 = vmatmul.mubr.bf16.gmra.mrb[0].mxu0 %v7057
      %v7149 = vpop.f32.mrb[0].mxu0
      %v7150 = vadd.f32 0.0, %v7149
      %v7151 = vpop.f32.mrb[0].mxu0
      %v7152 = vpop.f32.mrb[0].mxu0
      %v7153 = vadd.f32 0.0, %v7152
      %v7154 = vpop.f32.mrb[0].mxu0
      %7155 = vmatprep.mubr.bf16.mxu0 0
      %7156 = vmatmul.mubr.bf16.gmra.mrb[0].mxu0 %v7060
      %v7157 = vpop.f32.mrb[0].mxu0
      %v7158 = vadd.f32 0.0, %v7157
      %v7159 = vpop.f32.mrb[0].mxu0
      %v7160 = vpop.f32.mrb[0].mxu0
      %v7161 = vadd.f32 0.0, %v7160
      %v7162 = vpop.f32.mrb[0].mxu0
      %7163 = vdwg.mxu0
      %v7164 = vadd.f32 %v6932, %v7097
      %v7165 = vadd.f32 %v6934, %v7099
      %v7166 = vadd.f32 %v6985, %v7150
      %v7167 = vadd.f32 %v6936, %v7101
      %v7168 = vadd.f32 %v6938, %v7103
      %v7169 = vadd.f32 %v6988, %v7153
      %v7170 = vadd.f32 %v6942, %v7107
      %v7171 = vadd.f32 %v6944, %v7109
      %v7172 = vadd.f32 %v6993, %v7158
      %v7173 = vadd.f32 %v6946, %v7111
      %v7174 = vadd.f32 %v6948, %v7113
      %v7175 = vadd.f32 %v6996, %v7161
      %s7176 = scalar_lea.vmem %s5, 480
      %v7177 = vld [vmem:[%s7176] sm:$0xf]
      %v7178 = vld [vmem:[%s7176 + $0x4] sm:$0xf]
      %v7179 = vld [vmem:[%s7176 + $0x8] sm:$0xf]
      %v7180 = vld [vmem:[%s7176 + $0xc] sm:$0xf]
      %7181 = vrot.lane.b32.xlu0 %v6573, 1
      %v7182 = vpop.permute.xlu0 %7181
      %7183 = vrot.lane.b32.xlu0 %v6576, 1
      %v7184 = vpop.permute.xlu0 %7183
      %7185 = vrot.lane.b32.xlu0 %v6579, 1
      %v7186 = vpop.permute.xlu0 %7185
      %7187 = vrot.lane.b32.xlu0 %v6582, 1
      %v7188 = vpop.permute.xlu0 %7187
      %7189 = vrot.lane.b32.xlu0 %v6574, 1
      %v7190 = vpop.permute.xlu0 %7189
      %7191 = vrot.lane.b32.xlu0 %v6577, 1
      %v7192 = vpop.permute.xlu0 %7191
      %7193 = vrot.lane.b32.xlu0 %v6580, 1
      %v7194 = vpop.permute.xlu0 %7193
      %7195 = vrot.lane.b32.xlu0 %v6583, 1
      %v7196 = vpop.permute.xlu0 %7195
      %7197 = vrot.lane.b32.xlu0 %v6575, 1
      %v7198 = vpop.permute.xlu0 %7197
      %7199 = vrot.lane.b32.xlu0 %v6578, 1
      %v7200 = vpop.permute.xlu0 %7199
      %7201 = vrot.lane.b32.xlu0 %v6581, 1
      %v7202 = vpop.permute.xlu0 %7201
      %7203 = vrot.lane.b32.xlu0 %v6584, 1
      %v7204 = vpop.permute.xlu0 %7203
      %v7205 = vsel %vm1204, %v7190, %v7198
      %v7206 = vsel %vm1204, %v7192, %v7200
      %v7207 = vsel %vm1204, %v7194, %v7202
      %v7208 = vsel %vm1204, %v7196, %v7204
      %v7209 = vsel %vm1204, %v7182, %v7190
      %v7210 = vsel %vm1204, %v7184, %v7192
      %v7211 = vsel %vm1204, %v7186, %v7194
      %v7212 = vsel %vm1204, %v7188, %v7196
      %v7213 = vsel %vm1204, %v7198, %v7182
      %v7214 = vsel %vm1204, %v7200, %v7184
      %v7215 = vsel %vm1204, %v7202, %v7186
      %v7216 = vsel %vm1204, %v7204, %v7188
      %v7217 = vpack.c.bf16 %v7214, %v7213
      %v7218 = vpack.c.bf16 %v7210, %v7209
      %v7219 = vpack.c.bf16 %v7206, %v7205
      %v7220 = vpack.c.bf16 %v7216, %v7215
      %v7221 = vpack.c.bf16 %v7212, %v7211
      %v7222 = vpack.c.bf16 %v7208, %v7207
      %v7227 = vunpack.c.l.b16 %v7177
      %v7228 = vunpack.c.l.b16 %v7178
      %v7229 = vunpack.c.l.b16 %v7179
      %v7230 = vunpack.c.l.b16 %v7180
      %v7231 = vpack.c.b16 %v7228, %v7227
      %v7232 = vpack.c.b16 %v7230, %v7229
      %v7234 = vsel %vm770, %v7231, 0
      %v7237 = vsel %vm770, %v7232, 0
      %7239 = vmatprep.subr.bf16.mxu0 %v7218
      %7240 = vmatpush1.bf16.msra.mxu0 %v7217
      %7241 = vmatprep.subr.bf16.mxu0 %v7221
      %7242 = vmatpush1.bf16.msra.mxu0 %v7220
      %7243 = vmatprep.subr.bf16.mxu0 0
      %7244 = vmatpush1.bf16.msra.mxu0 0
      %7245 = vmatprep.subr.bf16.mxu0 0
      %7246 = vmatpush1.bf16.msra.mxu0 0
      %7247 = vmatprep.subr.bf16.mxu0 0
      %7248 = vmatpush1.bf16.msra.mxu0 0
      %7249 = vmatprep.subr.bf16.mxu0 0
      %7250 = vmatpush1.bf16.msra.mxu0 0
      %7251 = vmatprep.subr.bf16.mxu0 0
      %7252 = vmatpush1.bf16.msra.mxu0 0
      %7253 = vmatprep.subr.bf16.mxu0 0
      %7254 = vmatpush1.bf16.msra.mxu0 0
      %7255 = vmatprep.subr.bf16.mxu0 0
      %7256 = vmatpush1.bf16.msra.mxu0 0
      %7257 = vmatprep.subr.bf16.mxu0 0
      %7258 = vmatpush1.bf16.msra.mxu0 0
      %7259 = vmatprep.subr.bf16.mxu0 0
      %7260 = vmatpush1.bf16.msra.mxu0 0
      %7261 = vmatprep.subr.bf16.mxu0 0
      %7262 = vmatpush1.bf16.msra.mxu0 0
      %7263 = vmatprep.subr.bf16.mxu0 0
      %7264 = vmatpush1.bf16.msra.mxu0 0
      %7265 = vmatprep.subr.bf16.mxu0 0
      %7266 = vmatpush1.bf16.msra.mxu0 0
      %7267 = vmatprep.subr.bf16.mxu0 0
      %7268 = vmatpush1.bf16.msra.mxu0 0
      %7269 = vmatprep.subr.bf16.mxu0 0
      %7270 = vmatpush1.bf16.msra.mxu0 0
      %7271 = vmatprep.mubr.bf16.mxu0 0
      %7272 = vmatmul.mubr.bf16.gmra.mrb[0].mxu0 %v7234
      %v7273 = vpop.f32.mrb[0].mxu0
      %v7274 = vadd.f32 0.0, %v7273
      %v7275 = vpop.f32.mrb[0].mxu0
      %v7276 = vadd.f32 0.0, %v7275
      %v7277 = vpop.f32.mrb[0].mxu0
      %v7278 = vadd.f32 0.0, %v7277
      %v7279 = vpop.f32.mrb[0].mxu0
      %v7280 = vadd.f32 0.0, %v7279
      %7281 = vmatprep.mubr.bf16.mxu0 0
      %7282 = vmatmul.mubr.bf16.gmra.mrb[0].mxu0 %v7237
      %v7283 = vpop.f32.mrb[0].mxu0
      %v7284 = vadd.f32 0.0, %v7283
      %v7285 = vpop.f32.mrb[0].mxu0
      %v7286 = vadd.f32 0.0, %v7285
      %v7287 = vpop.f32.mrb[0].mxu0
      %v7288 = vadd.f32 0.0, %v7287
      %v7289 = vpop.f32.mrb[0].mxu0
      %v7290 = vadd.f32 0.0, %v7289
      %7291 = vdwg.mxu0
      %7292 = vmatprep.subr.bf16.mxu0 0
      %7293 = vmatpush1.bf16.msra.mxu0 %v7219
      %7294 = vmatprep.subr.bf16.mxu0 0
      %7295 = vmatpush1.bf16.msra.mxu0 %v7222
      %7296 = vmatprep.subr.bf16.mxu0 0
      %7297 = vmatpush1.bf16.msra.mxu0 0
      %7298 = vmatprep.subr.bf16.mxu0 0
      %7299 = vmatpush1.bf16.msra.mxu0 0
      %7300 = vmatprep.subr.bf16.mxu0 0
      %7301 = vmatpush1.bf16.msra.mxu0 0
      %7302 = vmatprep.subr.bf16.mxu0 0
      %7303 = vmatpush1.bf16.msra.mxu0 0
      %7304 = vmatprep.subr.bf16.mxu0 0
      %7305 = vmatpush1.bf16.msra.mxu0 0
      %7306 = vmatprep.subr.bf16.mxu0 0
      %7307 = vmatpush1.bf16.msra.mxu0 0
      %7308 = vmatprep.subr.bf16.mxu0 0
      %7309 = vmatpush1.bf16.msra.mxu0 0
      %7310 = vmatprep.subr.bf16.mxu0 0
      %7311 = vmatpush1.bf16.msra.mxu0 0
      %7312 = vmatprep.subr.bf16.mxu0 0
      %7313 = vmatpush1.bf16.msra.mxu0 0
      %7314 = vmatprep.subr.bf16.mxu0 0
      %7315 = vmatpush1.bf16.msra.mxu0 0
      %7316 = vmatprep.subr.bf16.mxu0 0
      %7317 = vmatpush1.bf16.msra.mxu0 0
      %7318 = vmatprep.subr.bf16.mxu0 0
      %7319 = vmatpush1.bf16.msra.mxu0 0
      %7320 = vmatprep.subr.bf16.mxu0 0
      %7321 = vmatpush1.bf16.msra.mxu0 0
      %7322 = vmatprep.subr.bf16.mxu0 0
      %7323 = vmatpush1.bf16.msra.mxu0 0
      %7324 = vmatprep.mubr.bf16.mxu0 0
      %7325 = vmatmul.mubr.bf16.gmra.mrb[0].mxu0 %v7234
      %v7326 = vpop.f32.mrb[0].mxu0
      %v7327 = vadd.f32 0.0, %v7326
      %v7328 = vpop.f32.mrb[0].mxu0
      %v7329 = vpop.f32.mrb[0].mxu0
      %v7330 = vadd.f32 0.0, %v7329
      %v7331 = vpop.f32.mrb[0].mxu0
      %7332 = vmatprep.mubr.bf16.mxu0 0
      %7333 = vmatmul.mubr.bf16.gmra.mrb[0].mxu0 %v7237
      %v7334 = vpop.f32.mrb[0].mxu0
      %v7335 = vadd.f32 0.0, %v7334
      %v7336 = vpop.f32.mrb[0].mxu0
      %v7337 = vpop.f32.mrb[0].mxu0
      %v7338 = vadd.f32 0.0, %v7337
      %v7339 = vpop.f32.mrb[0].mxu0
      %7340 = vdwg.mxu0
      %v7341 = vadd.f32 %v7164, %v7274
      %v7342 = vadd.f32 %v7165, %v7276
      %v7343 = vadd.f32 %v7166, %v7327
      %v7344 = vadd.f32 %v7167, %v7278
      %v7345 = vadd.f32 %v7168, %v7280
      %v7346 = vadd.f32 %v7169, %v7330
      %v7347 = vadd.f32 %v7170, %v7284
      %v7348 = vadd.f32 %v7171, %v7286
      %v7349 = vadd.f32 %v7172, %v7335
      %v7350 = vadd.f32 %v7173, %v7288
      %v7351 = vadd.f32 %v7174, %v7290
      %v7352 = vadd.f32 %v7175, %v7338
      %s7353 = scalar_lea.vmem %s5, 496
      %v7354 = vld [vmem:[%s7353] sm:$0xf]
      %v7355 = vld [vmem:[%s7353 + $0x4] sm:$0xf]
      %v7356 = vld [vmem:[%s7353 + $0x8] sm:$0xf]
      %v7357 = vld [vmem:[%s7353 + $0xc] sm:$0xf]
      %v7358 = vpack.c.bf16 %v6576, %v6573
      %v7359 = vpack.c.bf16 %v6577, %v6574
      %v7360 = vpack.c.bf16 %v6578, %v6575
      %v7361 = vpack.c.bf16 %v6582, %v6579
      %v7362 = vpack.c.bf16 %v6583, %v6580
      %v7363 = vpack.c.bf16 %v6584, %v6581
      %v7368 = vunpack.c.l.b16 %v7354
      %v7369 = vunpack.c.l.b16 %v7355
      %v7370 = vunpack.c.l.b16 %v7356
      %v7371 = vunpack.c.l.b16 %v7357
      %v7372 = vpack.c.b16 %v7369, %v7368
      %v7373 = vpack.c.b16 %v7371, %v7370
      %v7375 = vsel %vm770, %v7372, 0
      %v7378 = vsel %vm770, %v7373, 0
      %7380 = vmatprep.subr.bf16.mxu0 %v7359
      %7381 = vmatpush1.bf16.msra.mxu0 %v7358
      %7382 = vmatprep.subr.bf16.mxu0 %v7362
      %7383 = vmatpush1.bf16.msra.mxu0 %v7361
      %7384 = vmatprep.subr.bf16.mxu0 0
      %7385 = vmatpush1.bf16.msra.mxu0 0
      %7386 = vmatprep.subr.bf16.mxu0 0
      %7387 = vmatpush1.bf16.msra.mxu0 0
      %7388 = vmatprep.subr.bf16.mxu0 0
      %7389 = vmatpush1.bf16.msra.mxu0 0
      %7390 = vmatprep.subr.bf16.mxu0 0
      %7391 = vmatpush1.bf16.msra.mxu0 0
      %7392 = vmatprep.subr.bf16.mxu0 0
      %7393 = vmatpush1.bf16.msra.mxu0 0
      %7394 = vmatprep.subr.bf16.mxu0 0
      %7395 = vmatpush1.bf16.msra.mxu0 0
      %7396 = vmatprep.subr.bf16.mxu0 0
      %7397 = vmatpush1.bf16.msra.mxu0 0
      %7398 = vmatprep.subr.bf16.mxu0 0
      %7399 = vmatpush1.bf16.msra.mxu0 0
      %7400 = vmatprep.subr.bf16.mxu0 0
      %7401 = vmatpush1.bf16.msra.mxu0 0
      %7402 = vmatprep.subr.bf16.mxu0 0
      %7403 = vmatpush1.bf16.msra.mxu0 0
      %7404 = vmatprep.subr.bf16.mxu0 0
      %7405 = vmatpush1.bf16.msra.mxu0 0
      %7406 = vmatprep.subr.bf16.mxu0 0
      %7407 = vmatpush1.bf16.msra.mxu0 0
      %7408 = vmatprep.subr.bf16.mxu0 0
      %7409 = vmatpush1.bf16.msra.mxu0 0
      %7410 = vmatprep.subr.bf16.mxu0 0
      %7411 = vmatpush1.bf16.msra.mxu0 0
      %7412 = vmatprep.mubr.bf16.mxu0 0
      %7413 = vmatmul.mubr.bf16.gmra.mrb[0].mxu0 %v7375
      %v7414 = vpop.f32.mrb[0].mxu0
      %v7415 = vadd.f32 0.0, %v7414
      %v7416 = vpop.f32.mrb[0].mxu0
      %v7417 = vadd.f32 0.0, %v7416
      %v7418 = vpop.f32.mrb[0].mxu0
      %v7419 = vadd.f32 0.0, %v7418
      %v7420 = vpop.f32.mrb[0].mxu0
      %v7421 = vadd.f32 0.0, %v7420
      %7422 = vmatprep.mubr.bf16.mxu0 0
      %7423 = vmatmul.mubr.bf16.gmra.mrb[0].mxu0 %v7378
      %v7424 = vpop.f32.mrb[0].mxu0
      %v7425 = vadd.f32 0.0, %v7424
      %v7426 = vpop.f32.mrb[0].mxu0
      %v7427 = vadd.f32 0.0, %v7426
      %v7428 = vpop.f32.mrb[0].mxu0
      %v7429 = vadd.f32 0.0, %v7428
      %v7430 = vpop.f32.mrb[0].mxu0
      %v7431 = vadd.f32 0.0, %v7430
      %7432 = vdwg.mxu0
      %7433 = vmatprep.subr.bf16.mxu0 0
      %7434 = vmatpush1.bf16.msra.mxu0 %v7360
      %7435 = vmatprep.subr.bf16.mxu0 0
      %7436 = vmatpush1.bf16.msra.mxu0 %v7363
      %7437 = vmatprep.subr.bf16.mxu0 0
      %7438 = vmatpush1.bf16.msra.mxu0 0
      %7439 = vmatprep.subr.bf16.mxu0 0
      %7440 = vmatpush1.bf16.msra.mxu0 0
      %7441 = vmatprep.subr.bf16.mxu0 0
      %7442 = vmatpush1.bf16.msra.mxu0 0
      %7443 = vmatprep.subr.bf16.mxu0 0
      %7444 = vmatpush1.bf16.msra.mxu0 0
      %7445 = vmatprep.subr.bf16.mxu0 0
      %7446 = vmatpush1.bf16.msra.mxu0 0
      %7447 = vmatprep.subr.bf16.mxu0 0
      %7448 = vmatpush1.bf16.msra.mxu0 0
      %7449 = vmatprep.subr.bf16.mxu0 0
      %7450 = vmatpush1.bf16.msra.mxu0 0
      %7451 = vmatprep.subr.bf16.mxu0 0
      %7452 = vmatpush1.bf16.msra.mxu0 0
      %7453 = vmatprep.subr.bf16.mxu0 0
      %7454 = vmatpush1.bf16.msra.mxu0 0
      %7455 = vmatprep.subr.bf16.mxu0 0
      %7456 = vmatpush1.bf16.msra.mxu0 0
      %7457 = vmatprep.subr.bf16.mxu0 0
      %7458 = vmatpush1.bf16.msra.mxu0 0
      %7459 = vmatprep.subr.bf16.mxu0 0
      %7460 = vmatpush1.bf16.msra.mxu0 0
      %7461 = vmatprep.subr.bf16.mxu0 0
      %7462 = vmatpush1.bf16.msra.mxu0 0
      %7463 = vmatprep.subr.bf16.mxu0 0
      %7464 = vmatpush1.bf16.msra.mxu0 0
      %7465 = vmatprep.mubr.bf16.mxu0 0
      %7466 = vmatmul.mubr.bf16.gmra.mrb[0].mxu0 %v7375
      %v7467 = vpop.f32.mrb[0].mxu0
      %v7468 = vadd.f32 0.0, %v7467
      %v7469 = vpop.f32.mrb[0].mxu0
      %v7470 = vpop.f32.mrb[0].mxu0
      %v7471 = vadd.f32 0.0, %v7470
      %v7472 = vpop.f32.mrb[0].mxu0
      %7473 = vmatprep.mubr.bf16.mxu0 0
      %7474 = vmatmul.mubr.bf16.gmra.mrb[0].mxu0 %v7378
      %v7475 = vpop.f32.mrb[0].mxu0
      %v7476 = vadd.f32 0.0, %v7475
      %v7477 = vpop.f32.mrb[0].mxu0
      %v7478 = vpop.f32.mrb[0].mxu0
      %v7479 = vadd.f32 0.0, %v7478
      %v7480 = vpop.f32.mrb[0].mxu0
      %7481 = vdwg.mxu0
      %v7482 = vadd.f32 %v7341, %v7415
      %v7483 = vadd.f32 %v7342, %v7417
      %v7484 = vadd.f32 %v7343, %v7468
      %v7485 = vadd.f32 %v7344, %v7419
      %v7486 = vadd.f32 %v7345, %v7421
      %v7487 = vadd.f32 %v7346, %v7471
      %v7488 = vadd.f32 %v7347, %v7425
      %v7489 = vadd.f32 %v7348, %v7427
      %v7490 = vadd.f32 %v7349, %v7476
      %v7491 = vadd.f32 %v7350, %v7429
      %v7492 = vadd.f32 %v7351, %v7431
      %v7493 = vadd.f32 %v7352, %v7479
      %s7494 = scalar_lea.vmem %s5, 512
      %v7495 = vld [vmem:[%s7494] sm:$0xf]
      %v7496 = vld [vmem:[%s7494 + $0x4] sm:$0xf]
      %v7497 = vld [vmem:[%s7494 + $0x8] sm:$0xf]
      %v7498 = vld [vmem:[%s7494 + $0xc] sm:$0xf]
      %7499 = vrot.lane.b32.xlu0 %v6573, 127
      %v7500 = vpop.permute.xlu0 %7499
      %7501 = vrot.lane.b32.xlu0 %v6576, 127
      %v7502 = vpop.permute.xlu0 %7501
      %7503 = vrot.lane.b32.xlu0 %v6579, 127
      %v7504 = vpop.permute.xlu0 %7503
      %7505 = vrot.lane.b32.xlu0 %v6582, 127
      %v7506 = vpop.permute.xlu0 %7505
      %7507 = vrot.lane.b32.xlu0 %v6574, 127
      %v7508 = vpop.permute.xlu0 %7507
      %7509 = vrot.lane.b32.xlu0 %v6577, 127
      %v7510 = vpop.permute.xlu0 %7509
      %7511 = vrot.lane.b32.xlu0 %v6580, 127
      %v7512 = vpop.permute.xlu0 %7511
      %7513 = vrot.lane.b32.xlu0 %v6583, 127
      %v7514 = vpop.permute.xlu0 %7513
      %7515 = vrot.lane.b32.xlu0 %v6575, 127
      %v7516 = vpop.permute.xlu0 %7515
      %7517 = vrot.lane.b32.xlu0 %v6578, 127
      %v7518 = vpop.permute.xlu0 %7517
      %7519 = vrot.lane.b32.xlu0 %v6581, 127
      %v7520 = vpop.permute.xlu0 %7519
      %7521 = vrot.lane.b32.xlu0 %v6584, 127
      %v7522 = vpop.permute.xlu0 %7521
      %v7523 = vsel %vm1523, %v7508, %v7516
      %v7524 = vsel %vm1523, %v7510, %v7518
      %v7525 = vsel %vm1523, %v7512, %v7520
      %v7526 = vsel %vm1523, %v7514, %v7522
      %v7527 = vsel %vm1523, %v7500, %v7508
      %v7528 = vsel %vm1523, %v7502, %v7510
      %v7529 = vsel %vm1523, %v7504, %v7512
      %v7530 = vsel %vm1523, %v7506, %v7514
      %v7531 = vsel %vm1523, %v7516, %v7500
      %v7532 = vsel %vm1523, %v7518, %v7502
      %v7533 = vsel %vm1523, %v7520, %v7504
      %v7534 = vsel %vm1523, %v7522, %v7506
      %v7535 = vpack.c.bf16 %v7528, %v7527
      %v7536 = vpack.c.bf16 %v7524, %v7523
      %v7537 = vpack.c.bf16 %v7532, %v7531
      %v7538 = vpack.c.bf16 %v7530, %v7529
      %v7539 = vpack.c.bf16 %v7526, %v7525
      %v7540 = vpack.c.bf16 %v7534, %v7533
      %v7545 = vunpack.c.l.b16 %v7495
      %v7546 = vunpack.c.l.b16 %v7496
      %v7547 = vunpack.c.l.b16 %v7497
      %v7548 = vunpack.c.l.b16 %v7498
      %v7549 = vpack.c.b16 %v7546, %v7545
      %v7550 = vpack.c.b16 %v7548, %v7547
      %v7552 = vsel %vm770, %v7549, 0
      %v7555 = vsel %vm770, %v7550, 0
      %7557 = vmatprep.subr.bf16.mxu0 %v7536
      %7558 = vmatpush1.bf16.msra.mxu0 %v7535
      %7559 = vmatprep.subr.bf16.mxu0 %v7539
      %7560 = vmatpush1.bf16.msra.mxu0 %v7538
      %7561 = vmatprep.subr.bf16.mxu0 0
      %7562 = vmatpush1.bf16.msra.mxu0 0
      %7563 = vmatprep.subr.bf16.mxu0 0
      %7564 = vmatpush1.bf16.msra.mxu0 0
      %7565 = vmatprep.subr.bf16.mxu0 0
      %7566 = vmatpush1.bf16.msra.mxu0 0
      %7567 = vmatprep.subr.bf16.mxu0 0
      %7568 = vmatpush1.bf16.msra.mxu0 0
      %7569 = vmatprep.subr.bf16.mxu0 0
      %7570 = vmatpush1.bf16.msra.mxu0 0
      %7571 = vmatprep.subr.bf16.mxu0 0
      %7572 = vmatpush1.bf16.msra.mxu0 0
      %7573 = vmatprep.subr.bf16.mxu0 0
      %7574 = vmatpush1.bf16.msra.mxu0 0
      %7575 = vmatprep.subr.bf16.mxu0 0
      %7576 = vmatpush1.bf16.msra.mxu0 0
      %7577 = vmatprep.subr.bf16.mxu0 0
      %7578 = vmatpush1.bf16.msra.mxu0 0
      %7579 = vmatprep.subr.bf16.mxu0 0
      %7580 = vmatpush1.bf16.msra.mxu0 0
      %7581 = vmatprep.subr.bf16.mxu0 0
      %7582 = vmatpush1.bf16.msra.mxu0 0
      %7583 = vmatprep.subr.bf16.mxu0 0
      %7584 = vmatpush1.bf16.msra.mxu0 0
      %7585 = vmatprep.subr.bf16.mxu0 0
      %7586 = vmatpush1.bf16.msra.mxu0 0
      %7587 = vmatprep.subr.bf16.mxu0 0
      %7588 = vmatpush1.bf16.msra.mxu0 0
      %7589 = vmatprep.mubr.bf16.mxu0 0
      %7590 = vmatmul.mubr.bf16.gmra.mrb[0].mxu0 %v7552
      %v7591 = vpop.f32.mrb[0].mxu0
      %v7592 = vadd.f32 0.0, %v7591
      %v7593 = vpop.f32.mrb[0].mxu0
      %v7594 = vadd.f32 0.0, %v7593
      %v7595 = vpop.f32.mrb[0].mxu0
      %v7596 = vadd.f32 0.0, %v7595
      %v7597 = vpop.f32.mrb[0].mxu0
      %v7598 = vadd.f32 0.0, %v7597
      %7599 = vmatprep.mubr.bf16.mxu0 0
      %7600 = vmatmul.mubr.bf16.gmra.mrb[0].mxu0 %v7555
      %v7601 = vpop.f32.mrb[0].mxu0
      %v7602 = vadd.f32 0.0, %v7601
      %v7603 = vpop.f32.mrb[0].mxu0
      %v7604 = vadd.f32 0.0, %v7603
      %v7605 = vpop.f32.mrb[0].mxu0
      %v7606 = vadd.f32 0.0, %v7605
      %v7607 = vpop.f32.mrb[0].mxu0
      %v7608 = vadd.f32 0.0, %v7607
      %7609 = vdwg.mxu0
      %7610 = vmatprep.subr.bf16.mxu0 0
      %7611 = vmatpush1.bf16.msra.mxu0 %v7537
      %7612 = vmatprep.subr.bf16.mxu0 0
      %7613 = vmatpush1.bf16.msra.mxu0 %v7540
      %7614 = vmatprep.subr.bf16.mxu0 0
      %7615 = vmatpush1.bf16.msra.mxu0 0
      %7616 = vmatprep.subr.bf16.mxu0 0
      %7617 = vmatpush1.bf16.msra.mxu0 0
      %7618 = vmatprep.subr.bf16.mxu0 0
      %7619 = vmatpush1.bf16.msra.mxu0 0
      %7620 = vmatprep.subr.bf16.mxu0 0
      %7621 = vmatpush1.bf16.msra.mxu0 0
      %7622 = vmatprep.subr.bf16.mxu0 0
      %7623 = vmatpush1.bf16.msra.mxu0 0
      %7624 = vmatprep.subr.bf16.mxu0 0
      %7625 = vmatpush1.bf16.msra.mxu0 0
      %7626 = vmatprep.subr.bf16.mxu0 0
      %7627 = vmatpush1.bf16.msra.mxu0 0
      %7628 = vmatprep.subr.bf16.mxu0 0
      %7629 = vmatpush1.bf16.msra.mxu0 0
      %7630 = vmatprep.subr.bf16.mxu0 0
      %7631 = vmatpush1.bf16.msra.mxu0 0
      %7632 = vmatprep.subr.bf16.mxu0 0
      %7633 = vmatpush1.bf16.msra.mxu0 0
      %7634 = vmatprep.subr.bf16.mxu0 0
      %7635 = vmatpush1.bf16.msra.mxu0 0
      %7636 = vmatprep.subr.bf16.mxu0 0
      %7637 = vmatpush1.bf16.msra.mxu0 0
      %7638 = vmatprep.subr.bf16.mxu0 0
      %7639 = vmatpush1.bf16.msra.mxu0 0
      %7640 = vmatprep.subr.bf16.mxu0 0
      %7641 = vmatpush1.bf16.msra.mxu0 0
      %7642 = vmatprep.mubr.bf16.mxu0 0
      %7643 = vmatmul.mubr.bf16.gmra.mrb[0].mxu0 %v7552
      %v7644 = vpop.f32.mrb[0].mxu0
      %v7645 = vadd.f32 0.0, %v7644
      %v7646 = vpop.f32.mrb[0].mxu0
      %v7647 = vpop.f32.mrb[0].mxu0
      %v7648 = vadd.f32 0.0, %v7647
      %v7649 = vpop.f32.mrb[0].mxu0
      %7650 = vmatprep.mubr.bf16.mxu0 0
      %7651 = vmatmul.mubr.bf16.gmra.mrb[0].mxu0 %v7555
      %v7652 = vpop.f32.mrb[0].mxu0
      %v7653 = vadd.f32 0.0, %v7652
      %v7654 = vpop.f32.mrb[0].mxu0
      %v7655 = vpop.f32.mrb[0].mxu0
      %v7656 = vadd.f32 0.0, %v7655
      %v7657 = vpop.f32.mrb[0].mxu0
      %7658 = vdwg.mxu0
      %v7659 = vadd.f32 %v7482, %v7592
      %v7660 = vadd.f32 %v7483, %v7594
      %v7661 = vadd.f32 %v7484, %v7645
      %v7662 = vadd.f32 %v7485, %v7596
      %v7663 = vadd.f32 %v7486, %v7598
      %v7664 = vadd.f32 %v7487, %v7648
      %v7665 = vadd.f32 %v7488, %v7602
      %v7666 = vadd.f32 %v7489, %v7604
      %v7667 = vadd.f32 %v7490, %v7653
      %v7668 = vadd.f32 %v7491, %v7606
      %v7669 = vadd.f32 %v7492, %v7608
      %v7670 = vadd.f32 %v7493, %v7656
      %s7671 = scalar_lea.vmem %s5, 528
      %v7672 = vld [vmem:[%s7671] sm:$0xf]
      %v7673 = vld [vmem:[%s7671 + $0x4] sm:$0xf]
      %v7674 = vld [vmem:[%s7671 + $0x8] sm:$0xf]
      %v7675 = vld [vmem:[%s7671 + $0xc] sm:$0xf]
      %7676 = vrot.lane.b32.xlu0 %v6573, 111
      %v7677 = vpop.permute.xlu0 %7676
      %7678 = vrot.lane.b32.xlu0 %v6576, 111
      %v7679 = vpop.permute.xlu0 %7678
      %7680 = vrot.lane.b32.xlu0 %v6579, 111
      %v7681 = vpop.permute.xlu0 %7680
      %7682 = vrot.lane.b32.xlu0 %v6582, 111
      %v7683 = vpop.permute.xlu0 %7682
      %7684 = vrot.lane.b32.xlu0 %v6574, 111
      %v7685 = vpop.permute.xlu0 %7684
      %7686 = vrot.lane.b32.xlu0 %v6577, 111
      %v7687 = vpop.permute.xlu0 %7686
      %7688 = vrot.lane.b32.xlu0 %v6580, 111
      %v7689 = vpop.permute.xlu0 %7688
      %7690 = vrot.lane.b32.xlu0 %v6583, 111
      %v7691 = vpop.permute.xlu0 %7690
      %7692 = vrot.lane.b32.xlu0 %v6575, 111
      %v7693 = vpop.permute.xlu0 %7692
      %7694 = vrot.lane.b32.xlu0 %v6578, 111
      %v7695 = vpop.permute.xlu0 %7694
      %7696 = vrot.lane.b32.xlu0 %v6581, 111
      %v7697 = vpop.permute.xlu0 %7696
      %7698 = vrot.lane.b32.xlu0 %v6584, 111
      %v7699 = vpop.permute.xlu0 %7698
      %v7700 = vsel %vm1701, %v7685, %v7693
      %v7701 = vsel %vm1701, %v7687, %v7695
      %v7702 = vsel %vm1701, %v7689, %v7697
      %v7703 = vsel %vm1701, %v7691, %v7699
      %v7704 = vsel %vm1701, %v7677, %v7685
      %v7705 = vsel %vm1701, %v7679, %v7687
      %v7706 = vsel %vm1701, %v7681, %v7689
      %v7707 = vsel %vm1701, %v7683, %v7691
      %v7708 = vsel %vm1701, %v7693, %v7677
      %v7709 = vsel %vm1701, %v7695, %v7679
      %v7710 = vsel %vm1701, %v7697, %v7681
      %v7711 = vsel %vm1701, %v7699, %v7683
      %v7712 = vpack.c.bf16 %v7705, %v7704
      %v7713 = vpack.c.bf16 %v7701, %v7700
      %v7714 = vpack.c.bf16 %v7709, %v7708
      %v7715 = vpack.c.bf16 %v7707, %v7706
      %v7716 = vpack.c.bf16 %v7703, %v7702
      %v7717 = vpack.c.bf16 %v7711, %v7710
      %v7722 = vunpack.c.l.b16 %v7672
      %v7723 = vunpack.c.l.b16 %v7673
      %v7724 = vunpack.c.l.b16 %v7674
      %v7725 = vunpack.c.l.b16 %v7675
      %v7726 = vpack.c.b16 %v7723, %v7722
      %v7727 = vpack.c.b16 %v7725, %v7724
      %v7729 = vsel %vm770, %v7726, 0
      %v7732 = vsel %vm770, %v7727, 0
      %7734 = vmatprep.subr.bf16.mxu0 %v7713
      %7735 = vmatpush1.bf16.msra.mxu0 %v7712
      %7736 = vmatprep.subr.bf16.mxu0 %v7716
      %7737 = vmatpush1.bf16.msra.mxu0 %v7715
      %7738 = vmatprep.subr.bf16.mxu0 0
      %7739 = vmatpush1.bf16.msra.mxu0 0
      %7740 = vmatprep.subr.bf16.mxu0 0
      %7741 = vmatpush1.bf16.msra.mxu0 0
      %7742 = vmatprep.subr.bf16.mxu0 0
      %7743 = vmatpush1.bf16.msra.mxu0 0
      %7744 = vmatprep.subr.bf16.mxu0 0
      %7745 = vmatpush1.bf16.msra.mxu0 0
      %7746 = vmatprep.subr.bf16.mxu0 0
      %7747 = vmatpush1.bf16.msra.mxu0 0
      %7748 = vmatprep.subr.bf16.mxu0 0
      %7749 = vmatpush1.bf16.msra.mxu0 0
      %7750 = vmatprep.subr.bf16.mxu0 0
      %7751 = vmatpush1.bf16.msra.mxu0 0
      %7752 = vmatprep.subr.bf16.mxu0 0
      %7753 = vmatpush1.bf16.msra.mxu0 0
      %7754 = vmatprep.subr.bf16.mxu0 0
      %7755 = vmatpush1.bf16.msra.mxu0 0
      %7756 = vmatprep.subr.bf16.mxu0 0
      %7757 = vmatpush1.bf16.msra.mxu0 0
      %7758 = vmatprep.subr.bf16.mxu0 0
      %7759 = vmatpush1.bf16.msra.mxu0 0
      %7760 = vmatprep.subr.bf16.mxu0 0
      %7761 = vmatpush1.bf16.msra.mxu0 0
      %7762 = vmatprep.subr.bf16.mxu0 0
      %7763 = vmatpush1.bf16.msra.mxu0 0
      %7764 = vmatprep.subr.bf16.mxu0 0
      %7765 = vmatpush1.bf16.msra.mxu0 0
      %7766 = vmatprep.mubr.bf16.mxu0 0
      %7767 = vmatmul.mubr.bf16.gmra.mrb[0].mxu0 %v7729
      %v7768 = vpop.f32.mrb[0].mxu0
      %v7769 = vadd.f32 0.0, %v7768
      %v7770 = vpop.f32.mrb[0].mxu0
      %v7771 = vadd.f32 0.0, %v7770
      %v7772 = vpop.f32.mrb[0].mxu0
      %v7773 = vadd.f32 0.0, %v7772
      %v7774 = vpop.f32.mrb[0].mxu0
      %v7775 = vadd.f32 0.0, %v7774
      %7776 = vmatprep.mubr.bf16.mxu0 0
      %7777 = vmatmul.mubr.bf16.gmra.mrb[0].mxu0 %v7732
      %v7778 = vpop.f32.mrb[0].mxu0
      %v7779 = vadd.f32 0.0, %v7778
      %v7780 = vpop.f32.mrb[0].mxu0
      %v7781 = vadd.f32 0.0, %v7780
      %v7782 = vpop.f32.mrb[0].mxu0
      %v7783 = vadd.f32 0.0, %v7782
      %v7784 = vpop.f32.mrb[0].mxu0
      %v7785 = vadd.f32 0.0, %v7784
      %7786 = vdwg.mxu0
      %7787 = vmatprep.subr.bf16.mxu0 0
      %7788 = vmatpush1.bf16.msra.mxu0 %v7714
      %7789 = vmatprep.subr.bf16.mxu0 0
      %7790 = vmatpush1.bf16.msra.mxu0 %v7717
      %7791 = vmatprep.subr.bf16.mxu0 0
      %7792 = vmatpush1.bf16.msra.mxu0 0
      %7793 = vmatprep.subr.bf16.mxu0 0
      %7794 = vmatpush1.bf16.msra.mxu0 0
      %7795 = vmatprep.subr.bf16.mxu0 0
      %7796 = vmatpush1.bf16.msra.mxu0 0
      %7797 = vmatprep.subr.bf16.mxu0 0
      %7798 = vmatpush1.bf16.msra.mxu0 0
      %7799 = vmatprep.subr.bf16.mxu0 0
      %7800 = vmatpush1.bf16.msra.mxu0 0
      %7801 = vmatprep.subr.bf16.mxu0 0
      %7802 = vmatpush1.bf16.msra.mxu0 0
      %7803 = vmatprep.subr.bf16.mxu0 0
      %7804 = vmatpush1.bf16.msra.mxu0 0
      %7805 = vmatprep.subr.bf16.mxu0 0
      %7806 = vmatpush1.bf16.msra.mxu0 0
      %7807 = vmatprep.subr.bf16.mxu0 0
      %7808 = vmatpush1.bf16.msra.mxu0 0
      %7809 = vmatprep.subr.bf16.mxu0 0
      %7810 = vmatpush1.bf16.msra.mxu0 0
      %7811 = vmatprep.subr.bf16.mxu0 0
      %7812 = vmatpush1.bf16.msra.mxu0 0
      %7813 = vmatprep.subr.bf16.mxu0 0
      %7814 = vmatpush1.bf16.msra.mxu0 0
      %7815 = vmatprep.subr.bf16.mxu0 0
      %7816 = vmatpush1.bf16.msra.mxu0 0
      %7817 = vmatprep.subr.bf16.mxu0 0
      %7818 = vmatpush1.bf16.msra.mxu0 0
      %7819 = vmatprep.mubr.bf16.mxu0 0
      %7820 = vmatmul.mubr.bf16.gmra.mrb[0].mxu0 %v7729
      %v7821 = vpop.f32.mrb[0].mxu0
      %v7822 = vadd.f32 0.0, %v7821
      %v7823 = vpop.f32.mrb[0].mxu0
      %v7824 = vpop.f32.mrb[0].mxu0
      %v7825 = vadd.f32 0.0, %v7824
      %v7826 = vpop.f32.mrb[0].mxu0
      %7827 = vmatprep.mubr.bf16.mxu0 0
      %7828 = vmatmul.mubr.bf16.gmra.mrb[0].mxu0 %v7732
      %v7829 = vpop.f32.mrb[0].mxu0
      %v7830 = vadd.f32 0.0, %v7829
      %v7831 = vpop.f32.mrb[0].mxu0
      %v7832 = vpop.f32.mrb[0].mxu0
      %v7833 = vadd.f32 0.0, %v7832
      %v7834 = vpop.f32.mrb[0].mxu0
      %7835 = vdwg.mxu0
      %v7836 = vadd.f32 %v7659, %v7769
      %v7837 = vadd.f32 %v7660, %v7771
      %v7838 = vadd.f32 %v7661, %v7822
      %v7839 = vadd.f32 %v7662, %v7773
      %v7840 = vadd.f32 %v7663, %v7775
      %v7841 = vadd.f32 %v7664, %v7825
      %v7842 = vadd.f32 %v7665, %v7779
      %v7843 = vadd.f32 %v7666, %v7781
      %v7844 = vadd.f32 %v7667, %v7830
      %v7845 = vadd.f32 %v7668, %v7783
      %v7846 = vadd.f32 %v7669, %v7785
      %v7847 = vadd.f32 %v7670, %v7833
      %s7848 = scalar_lea.vmem %s5, 544
      %v7849 = vld [vmem:[%s7848] sm:$0xf]
      %v7850 = vld [vmem:[%s7848 + $0x4] sm:$0xf]
      %v7851 = vld [vmem:[%s7848 + $0x8] sm:$0xf]
      %v7852 = vld [vmem:[%s7848 + $0xc] sm:$0xf]
      %7853 = vrot.lane.b32.xlu0 %v6573, 110
      %v7854 = vpop.permute.xlu0 %7853
      %7855 = vrot.lane.b32.xlu0 %v6576, 110
      %v7856 = vpop.permute.xlu0 %7855
      %7857 = vrot.lane.b32.xlu0 %v6579, 110
      %v7858 = vpop.permute.xlu0 %7857
      %7859 = vrot.lane.b32.xlu0 %v6582, 110
      %v7860 = vpop.permute.xlu0 %7859
      %7861 = vrot.lane.b32.xlu0 %v6574, 110
      %v7862 = vpop.permute.xlu0 %7861
      %7863 = vrot.lane.b32.xlu0 %v6577, 110
      %v7864 = vpop.permute.xlu0 %7863
      %7865 = vrot.lane.b32.xlu0 %v6580, 110
      %v7866 = vpop.permute.xlu0 %7865
      %7867 = vrot.lane.b32.xlu0 %v6583, 110
      %v7868 = vpop.permute.xlu0 %7867
      %7869 = vrot.lane.b32.xlu0 %v6575, 110
      %v7870 = vpop.permute.xlu0 %7869
      %7871 = vrot.lane.b32.xlu0 %v6578, 110
      %v7872 = vpop.permute.xlu0 %7871
      %7873 = vrot.lane.b32.xlu0 %v6581, 110
      %v7874 = vpop.permute.xlu0 %7873
      %7875 = vrot.lane.b32.xlu0 %v6584, 110
      %v7876 = vpop.permute.xlu0 %7875
      %v7877 = vsel %vm1879, %v7862, %v7870
      %v7878 = vsel %vm1879, %v7864, %v7872
      %v7879 = vsel %vm1879, %v7866, %v7874
      %v7880 = vsel %vm1879, %v7868, %v7876
      %v7881 = vsel %vm1879, %v7854, %v7862
      %v7882 = vsel %vm1879, %v7856, %v7864
      %v7883 = vsel %vm1879, %v7858, %v7866
      %v7884 = vsel %vm1879, %v7860, %v7868
      %v7885 = vsel %vm1879, %v7870, %v7854
      %v7886 = vsel %vm1879, %v7872, %v7856
      %v7887 = vsel %vm1879, %v7874, %v7858
      %v7888 = vsel %vm1879, %v7876, %v7860
      %v7889 = vpack.c.bf16 %v7882, %v7881
      %v7890 = vpack.c.bf16 %v7878, %v7877
      %v7891 = vpack.c.bf16 %v7886, %v7885
      %v7892 = vpack.c.bf16 %v7884, %v7883
      %v7893 = vpack.c.bf16 %v7880, %v7879
      %v7894 = vpack.c.bf16 %v7888, %v7887
      %v7899 = vunpack.c.l.b16 %v7849
      %v7900 = vunpack.c.l.b16 %v7850
      %v7901 = vunpack.c.l.b16 %v7851
      %v7902 = vunpack.c.l.b16 %v7852
      %v7903 = vpack.c.b16 %v7900, %v7899
      %v7904 = vpack.c.b16 %v7902, %v7901
      %v7906 = vsel %vm770, %v7903, 0
      %v7909 = vsel %vm770, %v7904, 0
      %7911 = vmatprep.subr.bf16.mxu0 %v7890
      %7912 = vmatpush1.bf16.msra.mxu0 %v7889
      %7913 = vmatprep.subr.bf16.mxu0 %v7893
      %7914 = vmatpush1.bf16.msra.mxu0 %v7892
      %7915 = vmatprep.subr.bf16.mxu0 0
      %7916 = vmatpush1.bf16.msra.mxu0 0
      %7917 = vmatprep.subr.bf16.mxu0 0
      %7918 = vmatpush1.bf16.msra.mxu0 0
      %7919 = vmatprep.subr.bf16.mxu0 0
      %7920 = vmatpush1.bf16.msra.mxu0 0
      %7921 = vmatprep.subr.bf16.mxu0 0
      %7922 = vmatpush1.bf16.msra.mxu0 0
      %7923 = vmatprep.subr.bf16.mxu0 0
      %7924 = vmatpush1.bf16.msra.mxu0 0
      %7925 = vmatprep.subr.bf16.mxu0 0
      %7926 = vmatpush1.bf16.msra.mxu0 0
      %7927 = vmatprep.subr.bf16.mxu0 0
      %7928 = vmatpush1.bf16.msra.mxu0 0
      %7929 = vmatprep.subr.bf16.mxu0 0
      %7930 = vmatpush1.bf16.msra.mxu0 0
      %7931 = vmatprep.subr.bf16.mxu0 0
      %7932 = vmatpush1.bf16.msra.mxu0 0
      %7933 = vmatprep.subr.bf16.mxu0 0
      %7934 = vmatpush1.bf16.msra.mxu0 0
      %7935 = vmatprep.subr.bf16.mxu0 0
      %7936 = vmatpush1.bf16.msra.mxu0 0
      %7937 = vmatprep.subr.bf16.mxu0 0
      %7938 = vmatpush1.bf16.msra.mxu0 0
      %7939 = vmatprep.subr.bf16.mxu0 0
      %7940 = vmatpush1.bf16.msra.mxu0 0
      %7941 = vmatprep.subr.bf16.mxu0 0
      %7942 = vmatpush1.bf16.msra.mxu0 0
      %7943 = vmatprep.mubr.bf16.mxu0 0
      %7944 = vmatmul.mubr.bf16.gmra.mrb[0].mxu0 %v7906
      %v7945 = vpop.f32.mrb[0].mxu0
      %v7946 = vadd.f32 0.0, %v7945
      %v7947 = vpop.f32.mrb[0].mxu0
      %v7948 = vadd.f32 0.0, %v7947
      %v7949 = vpop.f32.mrb[0].mxu0
      %v7950 = vadd.f32 0.0, %v7949
      %v7951 = vpop.f32.mrb[0].mxu0
      %v7952 = vadd.f32 0.0, %v7951
      %7953 = vmatprep.mubr.bf16.mxu0 0
      %7954 = vmatmul.mubr.bf16.gmra.mrb[0].mxu0 %v7909
      %v7955 = vpop.f32.mrb[0].mxu0
      %v7956 = vadd.f32 0.0, %v7955
      %v7957 = vpop.f32.mrb[0].mxu0
      %v7958 = vadd.f32 0.0, %v7957
      %v7959 = vpop.f32.mrb[0].mxu0
      %v7960 = vadd.f32 0.0, %v7959
      %v7961 = vpop.f32.mrb[0].mxu0
      %v7962 = vadd.f32 0.0, %v7961
      %7963 = vdwg.mxu0
      %7964 = vmatprep.subr.bf16.mxu0 0
      %7965 = vmatpush1.bf16.msra.mxu0 %v7891
      %7966 = vmatprep.subr.bf16.mxu0 0
      %7967 = vmatpush1.bf16.msra.mxu0 %v7894
      %7968 = vmatprep.subr.bf16.mxu0 0
      %7969 = vmatpush1.bf16.msra.mxu0 0
      %7970 = vmatprep.subr.bf16.mxu0 0
      %7971 = vmatpush1.bf16.msra.mxu0 0
      %7972 = vmatprep.subr.bf16.mxu0 0
      %7973 = vmatpush1.bf16.msra.mxu0 0
      %7974 = vmatprep.subr.bf16.mxu0 0
      %7975 = vmatpush1.bf16.msra.mxu0 0
      %7976 = vmatprep.subr.bf16.mxu0 0
      %7977 = vmatpush1.bf16.msra.mxu0 0
      %7978 = vmatprep.subr.bf16.mxu0 0
      %7979 = vmatpush1.bf16.msra.mxu0 0
      %7980 = vmatprep.subr.bf16.mxu0 0
      %7981 = vmatpush1.bf16.msra.mxu0 0
      %7982 = vmatprep.subr.bf16.mxu0 0
      %7983 = vmatpush1.bf16.msra.mxu0 0
      %7984 = vmatprep.subr.bf16.mxu0 0
      %7985 = vmatpush1.bf16.msra.mxu0 0
      %7986 = vmatprep.subr.bf16.mxu0 0
      %7987 = vmatpush1.bf16.msra.mxu0 0
      %7988 = vmatprep.subr.bf16.mxu0 0
      %7989 = vmatpush1.bf16.msra.mxu0 0
      %7990 = vmatprep.subr.bf16.mxu0 0
      %7991 = vmatpush1.bf16.msra.mxu0 0
      %7992 = vmatprep.subr.bf16.mxu0 0
      %7993 = vmatpush1.bf16.msra.mxu0 0
      %7994 = vmatprep.subr.bf16.mxu0 0
      %7995 = vmatpush1.bf16.msra.mxu0 0
      %7996 = vmatprep.mubr.bf16.mxu0 0
      %7997 = vmatmul.mubr.bf16.gmra.mrb[0].mxu0 %v7906
      %v7998 = vpop.f32.mrb[0].mxu0
      %v7999 = vadd.f32 0.0, %v7998
      %v8000 = vpop.f32.mrb[0].mxu0
      %v8001 = vpop.f32.mrb[0].mxu0
      %v8002 = vadd.f32 0.0, %v8001
      %v8003 = vpop.f32.mrb[0].mxu0
      %8004 = vmatprep.mubr.bf16.mxu0 0
      %8005 = vmatmul.mubr.bf16.gmra.mrb[0].mxu0 %v7909
      %v8006 = vpop.f32.mrb[0].mxu0
      %v8007 = vadd.f32 0.0, %v8006
      %v8008 = vpop.f32.mrb[0].mxu0
      %v8009 = vpop.f32.mrb[0].mxu0
      %v8010 = vadd.f32 0.0, %v8009
      %v8011 = vpop.f32.mrb[0].mxu0
      %8012 = vdwg.mxu0
      %v8013 = vadd.f32 %v7836, %v7946
      %v8014 = vadd.f32 %v7837, %v7948
      %v8015 = vadd.f32 %v7838, %v7999
      %v8016 = vadd.f32 %v7839, %v7950
      %v8017 = vadd.f32 %v7840, %v7952
      %v8018 = vadd.f32 %v7841, %v8002
      %v8019 = vadd.f32 %v7842, %v7956
      %v8020 = vadd.f32 %v7843, %v7958
      %v8021 = vadd.f32 %v7844, %v8007
      %v8022 = vadd.f32 %v7845, %v7960
      %v8023 = vadd.f32 %v7846, %v7962
      %v8024 = vadd.f32 %v7847, %v8010
      %s8025 = scalar_lea.vmem %s5, 560
      %v8026 = vld [vmem:[%s8025] sm:$0xf]
      %v8027 = vld [vmem:[%s8025 + $0x4] sm:$0xf]
      %v8028 = vld [vmem:[%s8025 + $0x8] sm:$0xf]
      %v8029 = vld [vmem:[%s8025 + $0xc] sm:$0xf]
      %8030 = vrot.lane.b32.xlu0 %v6573, 109
      %v8031 = vpop.permute.xlu0 %8030
      %8032 = vrot.lane.b32.xlu0 %v6576, 109
      %v8033 = vpop.permute.xlu0 %8032
      %8034 = vrot.lane.b32.xlu0 %v6579, 109
      %v8035 = vpop.permute.xlu0 %8034
      %8036 = vrot.lane.b32.xlu0 %v6582, 109
      %v8037 = vpop.permute.xlu0 %8036
      %8038 = vrot.lane.b32.xlu0 %v6574, 109
      %v8039 = vpop.permute.xlu0 %8038
      %8040 = vrot.lane.b32.xlu0 %v6577, 109
      %v8041 = vpop.permute.xlu0 %8040
      %8042 = vrot.lane.b32.xlu0 %v6580, 109
      %v8043 = vpop.permute.xlu0 %8042
      %8044 = vrot.lane.b32.xlu0 %v6583, 109
      %v8045 = vpop.permute.xlu0 %8044
      %8046 = vrot.lane.b32.xlu0 %v6575, 109
      %v8047 = vpop.permute.xlu0 %8046
      %8048 = vrot.lane.b32.xlu0 %v6578, 109
      %v8049 = vpop.permute.xlu0 %8048
      %8050 = vrot.lane.b32.xlu0 %v6581, 109
      %v8051 = vpop.permute.xlu0 %8050
      %8052 = vrot.lane.b32.xlu0 %v6584, 109
      %v8053 = vpop.permute.xlu0 %8052
      %v8054 = vsel %vm2057, %v8039, %v8047
      %v8055 = vsel %vm2057, %v8041, %v8049
      %v8056 = vsel %vm2057, %v8043, %v8051
      %v8057 = vsel %vm2057, %v8045, %v8053
      %v8058 = vsel %vm2057, %v8031, %v8039
      %v8059 = vsel %vm2057, %v8033, %v8041
      %v8060 = vsel %vm2057, %v8035, %v8043
      %v8061 = vsel %vm2057, %v8037, %v8045
      %v8062 = vsel %vm2057, %v8047, %v8031
      %v8063 = vsel %vm2057, %v8049, %v8033
      %v8064 = vsel %vm2057, %v8051, %v8035
      %v8065 = vsel %vm2057, %v8053, %v8037
      %v8066 = vpack.c.bf16 %v8059, %v8058
      %v8067 = vpack.c.bf16 %v8055, %v8054
      %v8068 = vpack.c.bf16 %v8063, %v8062
      %v8069 = vpack.c.bf16 %v8061, %v8060
      %v8070 = vpack.c.bf16 %v8057, %v8056
      %v8071 = vpack.c.bf16 %v8065, %v8064
      %v8076 = vunpack.c.l.b16 %v8026
      %v8077 = vunpack.c.l.b16 %v8027
      %v8078 = vunpack.c.l.b16 %v8028
      %v8079 = vunpack.c.l.b16 %v8029
      %v8080 = vpack.c.b16 %v8077, %v8076
      %v8081 = vpack.c.b16 %v8079, %v8078
      %v8083 = vsel %vm770, %v8080, 0
      %v8086 = vsel %vm770, %v8081, 0
      %8088 = vmatprep.subr.bf16.mxu0 %v8067
      %8089 = vmatpush1.bf16.msra.mxu0 %v8066
      %8090 = vmatprep.subr.bf16.mxu0 %v8070
      %8091 = vmatpush1.bf16.msra.mxu0 %v8069
      %8092 = vmatprep.subr.bf16.mxu0 0
      %8093 = vmatpush1.bf16.msra.mxu0 0
      %8094 = vmatprep.subr.bf16.mxu0 0
      %8095 = vmatpush1.bf16.msra.mxu0 0
      %8096 = vmatprep.subr.bf16.mxu0 0
      %8097 = vmatpush1.bf16.msra.mxu0 0
      %8098 = vmatprep.subr.bf16.mxu0 0
      %8099 = vmatpush1.bf16.msra.mxu0 0
      %8100 = vmatprep.subr.bf16.mxu0 0
      %8101 = vmatpush1.bf16.msra.mxu0 0
      %8102 = vmatprep.subr.bf16.mxu0 0
      %8103 = vmatpush1.bf16.msra.mxu0 0
      %8104 = vmatprep.subr.bf16.mxu0 0
      %8105 = vmatpush1.bf16.msra.mxu0 0
      %8106 = vmatprep.subr.bf16.mxu0 0
      %8107 = vmatpush1.bf16.msra.mxu0 0
      %8108 = vmatprep.subr.bf16.mxu0 0
      %8109 = vmatpush1.bf16.msra.mxu0 0
      %8110 = vmatprep.subr.bf16.mxu0 0
      %8111 = vmatpush1.bf16.msra.mxu0 0
      %8112 = vmatprep.subr.bf16.mxu0 0
      %8113 = vmatpush1.bf16.msra.mxu0 0
      %8114 = vmatprep.subr.bf16.mxu0 0
      %8115 = vmatpush1.bf16.msra.mxu0 0
      %8116 = vmatprep.subr.bf16.mxu0 0
      %8117 = vmatpush1.bf16.msra.mxu0 0
      %8118 = vmatprep.subr.bf16.mxu0 0
      %8119 = vmatpush1.bf16.msra.mxu0 0
      %8120 = vmatprep.mubr.bf16.mxu0 0
      %8121 = vmatmul.mubr.bf16.gmra.mrb[0].mxu0 %v8083
      %v8122 = vpop.f32.mrb[0].mxu0
      %v8123 = vadd.f32 0.0, %v8122
      %v8124 = vpop.f32.mrb[0].mxu0
      %v8125 = vadd.f32 0.0, %v8124
      %v8126 = vpop.f32.mrb[0].mxu0
      %v8127 = vadd.f32 0.0, %v8126
      %v8128 = vpop.f32.mrb[0].mxu0
      %v8129 = vadd.f32 0.0, %v8128
      %8130 = vmatprep.mubr.bf16.mxu0 0
      %8131 = vmatmul.mubr.bf16.gmra.mrb[0].mxu0 %v8086
      %v8132 = vpop.f32.mrb[0].mxu0
      %v8133 = vadd.f32 0.0, %v8132
      %v8134 = vpop.f32.mrb[0].mxu0
      %v8135 = vadd.f32 0.0, %v8134
      %v8136 = vpop.f32.mrb[0].mxu0
      %v8137 = vadd.f32 0.0, %v8136
      %v8138 = vpop.f32.mrb[0].mxu0
      %v8139 = vadd.f32 0.0, %v8138
      %8140 = vdwg.mxu0
      %8141 = vmatprep.subr.bf16.mxu0 0
      %8142 = vmatpush1.bf16.msra.mxu0 %v8068
      %8143 = vmatprep.subr.bf16.mxu0 0
      %8144 = vmatpush1.bf16.msra.mxu0 %v8071
      %8145 = vmatprep.subr.bf16.mxu0 0
      %8146 = vmatpush1.bf16.msra.mxu0 0
      %8147 = vmatprep.subr.bf16.mxu0 0
      %8148 = vmatpush1.bf16.msra.mxu0 0
      %8149 = vmatprep.subr.bf16.mxu0 0
      %8150 = vmatpush1.bf16.msra.mxu0 0
      %8151 = vmatprep.subr.bf16.mxu0 0
      %8152 = vmatpush1.bf16.msra.mxu0 0
      %8153 = vmatprep.subr.bf16.mxu0 0
      %8154 = vmatpush1.bf16.msra.mxu0 0
      %8155 = vmatprep.subr.bf16.mxu0 0
      %8156 = vmatpush1.bf16.msra.mxu0 0
      %8157 = vmatprep.subr.bf16.mxu0 0
      %8158 = vmatpush1.bf16.msra.mxu0 0
      %8159 = vmatprep.subr.bf16.mxu0 0
      %8160 = vmatpush1.bf16.msra.mxu0 0
      %8161 = vmatprep.subr.bf16.mxu0 0
      %8162 = vmatpush1.bf16.msra.mxu0 0
      %8163 = vmatprep.subr.bf16.mxu0 0
      %8164 = vmatpush1.bf16.msra.mxu0 0
      %8165 = vmatprep.subr.bf16.mxu0 0
      %8166 = vmatpush1.bf16.msra.mxu0 0
      %8167 = vmatprep.subr.bf16.mxu0 0
      %8168 = vmatpush1.bf16.msra.mxu0 0
      %8169 = vmatprep.subr.bf16.mxu0 0
      %8170 = vmatpush1.bf16.msra.mxu0 0
      %8171 = vmatprep.subr.bf16.mxu0 0
      %8172 = vmatpush1.bf16.msra.mxu0 0
      %8173 = vmatprep.mubr.bf16.mxu0 0
      %8174 = vmatmul.mubr.bf16.gmra.mrb[0].mxu0 %v8083
      %v8175 = vpop.f32.mrb[0].mxu0
      %v8176 = vadd.f32 0.0, %v8175
      %v8177 = vpop.f32.mrb[0].mxu0
      %v8178 = vpop.f32.mrb[0].mxu0
      %v8179 = vadd.f32 0.0, %v8178
      %v8180 = vpop.f32.mrb[0].mxu0
      %8181 = vmatprep.mubr.bf16.mxu0 0
      %8182 = vmatmul.mubr.bf16.gmra.mrb[0].mxu0 %v8086
      %v8183 = vpop.f32.mrb[0].mxu0
      %v8184 = vadd.f32 0.0, %v8183
      %v8185 = vpop.f32.mrb[0].mxu0
      %v8186 = vpop.f32.mrb[0].mxu0
      %v8187 = vadd.f32 0.0, %v8186
      %v8188 = vpop.f32.mrb[0].mxu0
      %8189 = vdwg.mxu0
      %v8190 = vadd.f32 %v8013, %v8123
      %v8191 = vadd.f32 %v8014, %v8125
      %v8192 = vadd.f32 %v8015, %v8176
      %v8193 = vadd.f32 %v8016, %v8127
      %v8194 = vadd.f32 %v8017, %v8129
      %v8195 = vadd.f32 %v8018, %v8179
      %v8196 = vadd.f32 %v8019, %v8133
      %v8197 = vadd.f32 %v8020, %v8135
      %v8198 = vadd.f32 %v8021, %v8184
      %v8199 = vadd.f32 %v8022, %v8137
      %v8200 = vadd.f32 %v8023, %v8139
      %v8201 = vadd.f32 %v8024, %v8187
      %v8202 = vld [vmem:[%s6 + $0x60] sm:$0xff]
      %v8203 = vld [vmem:[%s6 + $0x68] sm:$0xff]
      %v8204 = vld [vmem:[%s6 + $0x70] sm:$0xff]
      %v8205 = vld [vmem:[%s6 + $0x78] sm:$0xff]
      %8207 = vset.pattern.permute.xlu0 0
      %8208 = vperm.xlu0 %8207, %v8202
      %v8209 = vpop.permute.xlu0 %8208
      %8212 = vset.pattern.permute.xlu0 0
      %8213 = vperm.xlu0 %8212, %v8203
      %v8214 = vpop.permute.xlu0 %8213
      %8217 = vset.pattern.permute.xlu0 0
      %8218 = vperm.xlu0 %8217, %v8204
      %v8219 = vpop.permute.xlu0 %8218
      %8222 = vset.pattern.permute.xlu0 0
      %8223 = vperm.xlu0 %8222, %v8205
      %v8224 = vpop.permute.xlu0 %8223
      %v8226 = vadd.f32 %v8190, %v8209
      %v8227 = vadd.f32 %v8191, %v8209
      %v8228 = vadd.f32 %v8192, %v8209
      %v8229 = vadd.f32 %v8193, %v8214
      %v8230 = vadd.f32 %v8194, %v8214
      %v8231 = vadd.f32 %v8195, %v8214
      %v8232 = vadd.f32 %v8196, %v8219
      %v8233 = vadd.f32 %v8197, %v8219
      %v8234 = vadd.f32 %v8198, %v8219
      %v8235 = vadd.f32 %v8199, %v8224
      %v8236 = vadd.f32 %v8200, %v8224
      %v8237 = vadd.f32 %v8201, %v8224
      %v8238 = vadd.f32 %v8226, %v6573
      %v8239 = vadd.f32 %v8227, %v6574
      %v8240 = vadd.f32 %v8228, %v6575
      %v8241 = vadd.f32 %v8229, %v6576
      %v8242 = vadd.f32 %v8230, %v6577
      %v8243 = vadd.f32 %v8231, %v6578
      %v8244 = vadd.f32 %v8232, %v6579
      %v8245 = vadd.f32 %v8233, %v6580
      %v8246 = vadd.f32 %v8234, %v6581
      %v8247 = vadd.f32 %v8235, %v6582
      %v8248 = vadd.f32 %v8236, %v6583
      %v8249 = vadd.f32 %v8237, %v6584
      %v8250 = vmul.f32 %v8238, %v548
      %v8251 = vmul.f32 %v8239, %v552
      %v8252 = vmul.f32 %v8240, %v556
      %v8253 = vmul.f32 %v8241, %v548
      %v8254 = vmul.f32 %v8242, %v552
      %v8255 = vmul.f32 %v8243, %v556
      %v8256 = vmul.f32 %v8244, %v548
      %v8257 = vmul.f32 %v8245, %v552
      %v8258 = vmul.f32 %v8246, %v556
      %v8259 = vmul.f32 %v8247, %v548
      %v8260 = vmul.f32 %v8248, %v552
      %v8261 = vmul.f32 %v8249, %v556
      %v8262 = vadd.f32 %v8250, %v8251
      %v8263 = vadd.f32 %v8262, %v8252
      %8264 = vadd.xlane.f32.xlu0 %v8263
      %v8265 = vpop.xlane.xlu0 %8264
      %v8266 = vadd.f32 %v8253, %v8254
      %v8267 = vadd.f32 %v8266, %v8255
      %8268 = vadd.xlane.f32.xlu0 %v8267
      %v8269 = vpop.xlane.xlu0 %8268
      %v8270 = vadd.f32 %v8256, %v8257
      %v8271 = vadd.f32 %v8270, %v8258
      %8272 = vadd.xlane.f32.xlu0 %v8271
      %v8273 = vpop.xlane.xlu0 %8272
      %v8274 = vadd.f32 %v8259, %v8260
      %v8275 = vadd.f32 %v8274, %v8261
      %8276 = vadd.xlane.f32.xlu0 %v8275
      %v8277 = vpop.xlane.xlu0 %8276
      %v8278 = vmul.f32 %v8265, 0.00390625
      %v8279 = vmul.f32 %v8269, 0.00390625
      %v8280 = vmul.f32 %v8273, 0.00390625
      %v8281 = vmul.f32 %v8277, 0.00390625
      %v8282 = vsub.f32 %v8238, %v8278
      %v8283 = vsub.f32 %v8239, %v8278
      %v8284 = vsub.f32 %v8240, %v8278
      %v8285 = vsub.f32 %v8241, %v8279
      %v8286 = vsub.f32 %v8242, %v8279
      %v8287 = vsub.f32 %v8243, %v8279
      %v8288 = vsub.f32 %v8244, %v8280
      %v8289 = vsub.f32 %v8245, %v8280
      %v8290 = vsub.f32 %v8246, %v8280
      %v8291 = vsub.f32 %v8247, %v8281
      %v8292 = vsub.f32 %v8248, %v8281
      %v8293 = vsub.f32 %v8249, %v8281
      %v8294 = vmul.f32 %v8282, %v548
      %v8295 = vmul.f32 %v8283, %v552
      %v8296 = vmul.f32 %v8284, %v556
      %v8297 = vmul.f32 %v8285, %v548
      %v8298 = vmul.f32 %v8286, %v552
      %v8299 = vmul.f32 %v8287, %v556
      %v8300 = vmul.f32 %v8288, %v548
      %v8301 = vmul.f32 %v8289, %v552
      %v8302 = vmul.f32 %v8290, %v556
      %v8303 = vmul.f32 %v8291, %v548
      %v8304 = vmul.f32 %v8292, %v552
      %v8305 = vmul.f32 %v8293, %v556
      %v8306 = vmul.f32 %v8294, %v8294
      %v8307 = vmul.f32 %v8295, %v8295
      %v8308 = vmul.f32 %v8296, %v8296
      %v8309 = vmul.f32 %v8297, %v8297
      %v8310 = vmul.f32 %v8298, %v8298
      %v8311 = vmul.f32 %v8299, %v8299
      %v8312 = vmul.f32 %v8300, %v8300
      %v8313 = vmul.f32 %v8301, %v8301
      %v8314 = vmul.f32 %v8302, %v8302
      %v8315 = vmul.f32 %v8303, %v8303
      %v8316 = vmul.f32 %v8304, %v8304
      %v8317 = vmul.f32 %v8305, %v8305
      %v8318 = vadd.f32 %v8306, %v8307
      %v8319 = vadd.f32 %v8318, %v8308
      %8320 = vadd.xlane.f32.xlu0 %v8319
      %v8321 = vpop.xlane.xlu0 %8320
      %v8322 = vadd.f32 %v8309, %v8310
      %v8323 = vadd.f32 %v8322, %v8311
      %8324 = vadd.xlane.f32.xlu0 %v8323
      %v8325 = vpop.xlane.xlu0 %8324
      %v8326 = vadd.f32 %v8312, %v8313
      %v8327 = vadd.f32 %v8326, %v8314
      %8328 = vadd.xlane.f32.xlu0 %v8327
      %v8329 = vpop.xlane.xlu0 %8328
      %v8330 = vadd.f32 %v8315, %v8316
      %v8331 = vadd.f32 %v8330, %v8317
      %8332 = vadd.xlane.f32.xlu0 %v8331
      %v8333 = vpop.xlane.xlu0 %8332
      %v8334 = vmul.f32 %v8321, 0.00390625
      %v8335 = vmul.f32 %v8325, 0.00390625
      %v8336 = vmul.f32 %v8329, 0.00390625
      %v8337 = vmul.f32 %v8333, 0.00390625
      %v8338 = vadd.f32 %v8334, 1e-05
      %v8339 = vadd.f32 %v8335, 1e-05
      %v8340 = vadd.f32 %v8336, 1e-05
      %v8341 = vadd.f32 %v8337, 1e-05
      %v8342 = vrsqrt.pop %v8338
      %v8343 = vrsqrt.pop %v8339
      %v8344 = vrsqrt.pop %v8340
      %v8345 = vrsqrt.pop %v8341
      %v8346 = vmul.f32 %v8282, %v8342
      %v8347 = vmul.f32 %v8283, %v8342
      %v8348 = vmul.f32 %v8284, %v8342
      %v8349 = vmul.f32 %v8285, %v8343
      %v8350 = vmul.f32 %v8286, %v8343
      %v8351 = vmul.f32 %v8287, %v8343
      %v8352 = vmul.f32 %v8288, %v8344
      %v8353 = vmul.f32 %v8289, %v8344
      %v8354 = vmul.f32 %v8290, %v8344
      %v8355 = vmul.f32 %v8291, %v8345
      %v8356 = vmul.f32 %v8292, %v8345
      %v8357 = vmul.f32 %v8293, %v8345
      %v8358 = vadd.f32 %v8278, %v8279
      %v8359 = vadd.f32 %v8358, %v8280
      %v8360 = vadd.f32 %v8359, %v8281
      %v8361 = vrot.slane %v8360, 4
      %v8362 = vadd.f32 %v8360, %v8361
      %v8363 = vrot.slane %v8362, 2
      %v8364 = vadd.f32 %v8362, %v8363
      %v8365 = vrot.slane %v8364, 1
      %v8366 = vadd.f32 %v8364, %v8365
      %v8367 = vmul.f32 %v8366, %v2371
      %v8368 = vsub.f32 %v8278, %v8367
      %v8369 = vsub.f32 %v8279, %v8367
      %v8370 = vsub.f32 %v8280, %v8367
      %v8371 = vsub.f32 %v8281, %v8367
      %v8372 = vmul.f32 %v8368, %v8368
      %v8373 = vmul.f32 %v8369, %v8369
      %v8374 = vmul.f32 %v8370, %v8370
      %v8375 = vmul.f32 %v8371, %v8371
      %v8376 = vadd.f32 %v8372, %v8373
      %v8377 = vadd.f32 %v8376, %v8374
      %v8378 = vadd.f32 %v8377, %v8375
      %v8379 = vrot.slane %v8378, 4
      %v8380 = vadd.f32 %v8378, %v8379
      %v8381 = vrot.slane %v8380, 2
      %v8382 = vadd.f32 %v8380, %v8381
      %v8383 = vrot.slane %v8382, 1
      %v8384 = vadd.f32 %v8382, %v8383
      %v8385 = vmul.f32 %v8384, %v2390
      %v8386 = vrsqrt.pop %v8385
      %v8387 = vmul.f32 %v8385, %v8386
      %vm8388 = vcmp.eq.f32.partialorder %v8385, inf
      %v8389 = vsel %vm8388, %v8385, %v8387
      %vm8390 = vcmp.eq.f32.partialorder %v8385, 0.0
      %v8391 = vand.u32 %v8385, 2147483648
      %v8392 = vsel %vm8390, %v8391, %v8389
      %v8393 = vadd.f32 %v8392, 1e-06
      %v8394 = vrcp.pop %v8393
      %v8395 = vmul.f32 %v8368, %v8394
      %v8396 = vmul.f32 %v8369, %v8394
      %v8397 = vmul.f32 %v8370, %v8394
      %v8398 = vmul.f32 %v8371, %v8394
      %8400 = vset.pattern.permute.xlu0 0
      %8401 = vperm.xlu0 %8400, %v6609
      %v8402 = vpop.permute.xlu0 %8401
      %8405 = vset.pattern.permute.xlu0 0
      %8406 = vperm.xlu0 %8405, %v6610
      %v8407 = vpop.permute.xlu0 %8406
      %8410 = vset.pattern.permute.xlu0 0
      %8411 = vperm.xlu0 %8410, %v6611
      %v8412 = vpop.permute.xlu0 %8411
      %8415 = vset.pattern.permute.xlu0 0
      %8416 = vperm.xlu0 %8415, %v6612
      %v8417 = vpop.permute.xlu0 %8416
      %v8419 = vmul.f32 %v8402, %v8346
      %v8420 = vmul.f32 %v8402, %v8347
      %v8421 = vmul.f32 %v8402, %v8348
      %v8422 = vmul.f32 %v8407, %v8349
      %v8423 = vmul.f32 %v8407, %v8350
      %v8424 = vmul.f32 %v8407, %v8351
      %v8425 = vmul.f32 %v8412, %v8352
      %v8426 = vmul.f32 %v8412, %v8353
      %v8427 = vmul.f32 %v8412, %v8354
      %v8428 = vmul.f32 %v8417, %v8355
      %v8429 = vmul.f32 %v8417, %v8356
      %v8430 = vmul.f32 %v8417, %v8357
      %v8431 = vmul.f32 %v6637, %v8395
      %v8432 = vmul.f32 %v6638, %v8396
      %v8433 = vmul.f32 %v6639, %v8397
      %v8434 = vmul.f32 %v6640, %v8398
      %8436 = vset.pattern.permute.xlu0 0
      %8437 = vperm.xlu0 %8436, %v8431
      %v8438 = vpop.permute.xlu0 %8437
      %8441 = vset.pattern.permute.xlu0 0
      %8442 = vperm.xlu0 %8441, %v8432
      %v8443 = vpop.permute.xlu0 %8442
      %8446 = vset.pattern.permute.xlu0 0
      %8447 = vperm.xlu0 %8446, %v8433
      %v8448 = vpop.permute.xlu0 %8447
      %8451 = vset.pattern.permute.xlu0 0
      %8452 = vperm.xlu0 %8451, %v8434
      %v8453 = vpop.permute.xlu0 %8452
      %v8455 = vadd.f32 %v8419, %v8438
      %v8456 = vadd.f32 %v8420, %v8438
      %v8457 = vadd.f32 %v8421, %v8438
      %v8458 = vadd.f32 %v8422, %v8443
      %v8459 = vadd.f32 %v8423, %v8443
      %v8460 = vadd.f32 %v8424, %v8443
      %v8461 = vadd.f32 %v8425, %v8448
      %v8462 = vadd.f32 %v8426, %v8448
      %v8463 = vadd.f32 %v8427, %v8448
      %v8464 = vadd.f32 %v8428, %v8453
      %v8465 = vadd.f32 %v8429, %v8453
      %v8466 = vadd.f32 %v8430, %v8453
      %8468 = vset.pattern.permute.xlu0 0
      %8469 = vperm.xlu0 %8468, %v6665
      %v8470 = vpop.permute.xlu0 %8469
      %8473 = vset.pattern.permute.xlu0 0
      %8474 = vperm.xlu0 %8473, %v6666
      %v8475 = vpop.permute.xlu0 %8474
      %8478 = vset.pattern.permute.xlu0 0
      %8479 = vperm.xlu0 %8478, %v6667
      %v8480 = vpop.permute.xlu0 %8479
      %8483 = vset.pattern.permute.xlu0 0
      %8484 = vperm.xlu0 %8483, %v6668
      %v8485 = vpop.permute.xlu0 %8484
      %v8487 = vadd.f32 %v8455, %v8470
      %v8488 = vadd.f32 %v8456, %v8470
      %v8489 = vadd.f32 %v8457, %v8470
      %v8490 = vadd.f32 %v8458, %v8475
      %v8491 = vadd.f32 %v8459, %v8475
      %v8492 = vadd.f32 %v8460, %v8475
      %v8493 = vadd.f32 %v8461, %v8480
      %v8494 = vadd.f32 %v8462, %v8480
      %v8495 = vadd.f32 %v8463, %v8480
      %v8496 = vadd.f32 %v8464, %v8485
      %v8497 = vadd.f32 %v8465, %v8485
      %v8498 = vadd.f32 %v8466, %v8485
      %vm8499 = vcmp.gt.f32.partialorder %v8487, 0.0
      %vm8500 = vcmp.gt.f32.partialorder %v8488, 0.0
      %vm8501 = vcmp.gt.f32.partialorder %v8489, 0.0
      %vm8502 = vcmp.gt.f32.partialorder %v8490, 0.0
      %vm8503 = vcmp.gt.f32.partialorder %v8491, 0.0
      %vm8504 = vcmp.gt.f32.partialorder %v8492, 0.0
      %vm8505 = vcmp.gt.f32.partialorder %v8493, 0.0
      %vm8506 = vcmp.gt.f32.partialorder %v8494, 0.0
      %vm8507 = vcmp.gt.f32.partialorder %v8495, 0.0
      %vm8508 = vcmp.gt.f32.partialorder %v8496, 0.0
      %vm8509 = vcmp.gt.f32.partialorder %v8497, 0.0
      %vm8510 = vcmp.gt.f32.partialorder %v8498, 0.0
      %v8511 = vsel %vm8499, 0.0, %v8487
      %v8512 = vsel %vm8500, 0.0, %v8488
      %v8513 = vsel %vm8501, 0.0, %v8489
      %v8514 = vsel %vm8502, 0.0, %v8490
      %v8515 = vsel %vm8503, 0.0, %v8491
      %v8516 = vsel %vm8504, 0.0, %v8492
      %v8517 = vsel %vm8505, 0.0, %v8493
      %v8518 = vsel %vm8506, 0.0, %v8494
      %v8519 = vsel %vm8507, 0.0, %v8495
      %v8520 = vsel %vm8508, 0.0, %v8496
      %v8521 = vsel %vm8509, 0.0, %v8497
      %v8522 = vsel %vm8510, 0.0, %v8498
      %v8523 = vmul.f32 %v8511, 1.442695
      %v8524 = vpow.pop %v8523
      %v8525 = vmul.f32 %v8512, 1.442695
      %v8526 = vpow.pop %v8525
      %v8527 = vmul.f32 %v8513, 1.442695
      %v8528 = vpow.pop %v8527
      %v8529 = vmul.f32 %v8514, 1.442695
      %v8530 = vpow.pop %v8529
      %v8531 = vmul.f32 %v8515, 1.442695
      %v8532 = vpow.pop %v8531
      %v8533 = vmul.f32 %v8516, 1.442695
      %v8534 = vpow.pop %v8533
      %v8535 = vmul.f32 %v8517, 1.442695
      %v8536 = vpow.pop %v8535
      %v8537 = vmul.f32 %v8518, 1.442695
      %v8538 = vpow.pop %v8537
      %v8539 = vmul.f32 %v8519, 1.442695
      %v8540 = vpow.pop %v8539
      %v8541 = vmul.f32 %v8520, 1.442695
      %v8542 = vpow.pop %v8541
      %v8543 = vmul.f32 %v8521, 1.442695
      %v8544 = vpow.pop %v8543
      %v8545 = vmul.f32 %v8522, 1.442695
      %v8546 = vpow.pop %v8545
      %v8547 = vsub.f32 %v8524, 1.0
      %v8548 = vsub.f32 %v8526, 1.0
      %v8549 = vsub.f32 %v8528, 1.0
      %v8550 = vsub.f32 %v8530, 1.0
      %v8551 = vsub.f32 %v8532, 1.0
      %v8552 = vsub.f32 %v8534, 1.0
      %v8553 = vsub.f32 %v8536, 1.0
      %v8554 = vsub.f32 %v8538, 1.0
      %v8555 = vsub.f32 %v8540, 1.0
      %v8556 = vsub.f32 %v8542, 1.0
      %v8557 = vsub.f32 %v8544, 1.0
      %v8558 = vsub.f32 %v8546, 1.0
      %v8559 = vsel %vm8499, %v8487, %v8547
      %v8560 = vsel %vm8500, %v8488, %v8548
      %v8561 = vsel %vm8501, %v8489, %v8549
      %v8562 = vsel %vm8502, %v8490, %v8550
      %v8563 = vsel %vm8503, %v8491, %v8551
      %v8564 = vsel %vm8504, %v8492, %v8552
      %v8565 = vsel %vm8505, %v8493, %v8553
      %v8566 = vsel %vm8506, %v8494, %v8554
      %v8567 = vsel %vm8507, %v8495, %v8555
      %v8568 = vsel %vm8508, %v8496, %v8556
      %v8569 = vsel %vm8509, %v8497, %v8557
      %v8570 = vsel %vm8510, %v8498, %v8558
      %v8571 = vmul.f32 %v8559, %v548
      %v8572 = vmul.f32 %v8560, %v552
      %v8573 = vmul.f32 %v8561, %v556
      %v8574 = vmul.f32 %v8562, %v548
      %v8575 = vmul.f32 %v8563, %v552
      %v8576 = vmul.f32 %v8564, %v556
      %v8577 = vmul.f32 %v8565, %v548
      %v8578 = vmul.f32 %v8566, %v552
      %v8579 = vmul.f32 %v8567, %v556
      %v8580 = vmul.f32 %v8568, %v548
      %v8581 = vmul.f32 %v8569, %v552
      %v8582 = vmul.f32 %v8570, %v556
      %v8583 = vadd.f32 %v8571, %v8572
      %v8584 = vadd.f32 %v8583, %v8573
      %8585 = vadd.xlane.f32.xlu0 %v8584
      %v8586 = vpop.xlane.xlu0 %8585
      %v8587 = vadd.f32 %v8574, %v8575
      %v8588 = vadd.f32 %v8587, %v8576
      %8589 = vadd.xlane.f32.xlu0 %v8588
      %v8590 = vpop.xlane.xlu0 %8589
      %v8591 = vadd.f32 %v8577, %v8578
      %v8592 = vadd.f32 %v8591, %v8579
      %8593 = vadd.xlane.f32.xlu0 %v8592
      %v8594 = vpop.xlane.xlu0 %8593
      %v8595 = vadd.f32 %v8580, %v8581
      %v8596 = vadd.f32 %v8595, %v8582
      %8597 = vadd.xlane.f32.xlu0 %v8596
      %v8598 = vpop.xlane.xlu0 %8597
      %v8599 = vmul.f32 %v8586, 0.00390625
      %v8600 = vmul.f32 %v8590, 0.00390625
      %v8601 = vmul.f32 %v8594, 0.00390625
      %v8602 = vmul.f32 %v8598, 0.00390625
      %v8603 = vld [vmem:[%s9] sm:$0xff]
      %v8604 = vld [vmem:[%s9 + $0x8] sm:$0xff]
      %v8605 = vld [vmem:[%s9 + $0x10] sm:$0xff]
      %v8606 = vld [vmem:[%s9 + $0x18] sm:$0xff]
      %v8607 = vld [vmem:[%s9 + $0x20] sm:$0xff]
      %v8608 = vld [vmem:[%s9 + $0x28] sm:$0xff]
      %v8609 = vld [vmem:[%s9 + $0x30] sm:$0xff]
      %v8610 = vld [vmem:[%s9 + $0x38] sm:$0xff]
      %v8611 = vld [vmem:[%s9 + $0x40] sm:$0xff]
      %v8612 = vld [vmem:[%s9 + $0x48] sm:$0xff]
      %v8613 = vld [vmem:[%s9 + $0x50] sm:$0xff]
      %v8614 = vld [vmem:[%s9 + $0x58] sm:$0xff]
      %v8615 = vld [vmem:[%s9 + $0x60] sm:$0xff]
      %v8616 = vld [vmem:[%s9 + $0x68] sm:$0xff]
      %v8617 = vld [vmem:[%s9 + $0x70] sm:$0xff]
      %v8618 = vld [vmem:[%s9 + $0x78] sm:$0xff]
      %v8619 = vld [vmem:[%s10] sm:$0xff]
      %v8620 = vld [vmem:[%s10 + $0x8] sm:$0xff]
      %v8621 = vld [vmem:[%s10 + $0x10] sm:$0xff]
      %v8622 = vld [vmem:[%s10 + $0x18] sm:$0xff]
      %v8623 = vld [vmem:[%s10 + $0x20] sm:$0xff]
      %v8624 = vld [vmem:[%s10 + $0x28] sm:$0xff]
      %v8625 = vld [vmem:[%s10 + $0x30] sm:$0xff]
      %v8626 = vld [vmem:[%s10 + $0x38] sm:$0xff]
      %v8627 = vld [vmem:[%s10 + $0x40] sm:$0xff]
      %v8628 = vld [vmem:[%s10 + $0x48] sm:$0xff]
      %v8629 = vld [vmem:[%s10 + $0x50] sm:$0xff]
      %v8630 = vld [vmem:[%s10 + $0x58] sm:$0xff]
      %v8631 = vld [vmem:[%s10 + $0x60] sm:$0xff]
      %v8632 = vld [vmem:[%s10 + $0x68] sm:$0xff]
      %v8633 = vld [vmem:[%s10 + $0x70] sm:$0xff]
      %v8634 = vld [vmem:[%s10 + $0x78] sm:$0xff]
      %v8636 = vsel %vm770, %v8603, 0
      %v8639 = vsel %vm770, %v8604, 0
      %v8642 = vsel %vm770, %v8605, 0
      %v8645 = vsel %vm770, %v8606, 0
      %v8648 = vsel %vm770, %v8607, 0
      %v8651 = vsel %vm770, %v8608, 0
      %v8654 = vsel %vm770, %v8609, 0
      %v8657 = vsel %vm770, %v8610, 0
      %v8660 = vsel %vm770, %v8611, 0
      %v8663 = vsel %vm770, %v8612, 0
      %v8666 = vsel %vm770, %v8613, 0
      %v8669 = vsel %vm770, %v8614, 0
      %v8672 = vsel %vm770, %v8615, 0
      %v8675 = vsel %vm770, %v8616, 0
      %v8678 = vsel %vm770, %v8617, 0
      %v8681 = vsel %vm770, %v8618, 0
      %8683 = vmatprep.subr.mxu0 0.0
      %8684 = vmatpush1.msra.mxu0 %v8599
      %8685 = vmatprep.subr.mxu0 0.0
      %8686 = vmatpush1.msra.mxu0 %v8600
      %8687 = vmatprep.subr.mxu0 0.0
      %8688 = vmatpush1.msra.mxu0 %v8601
      %8689 = vmatprep.subr.mxu0 0.0
      %8690 = vmatpush1.msra.mxu0 %v8602
      %8691 = vmatprep.subr.mxu0 0.0
      %8692 = vmatpush1.msra.mxu0 0.0
      %8693 = vmatprep.subr.mxu0 0.0
      %8694 = vmatpush1.msra.mxu0 0.0
      %8695 = vmatprep.subr.mxu0 0.0
      %8696 = vmatpush1.msra.mxu0 0.0
      %8697 = vmatprep.subr.mxu0 0.0
      %8698 = vmatpush1.msra.mxu0 0.0
      %8699 = vmatprep.subr.mxu0 0.0
      %8700 = vmatpush1.msra.mxu0 0.0
      %8701 = vmatprep.subr.mxu0 0.0
      %8702 = vmatpush1.msra.mxu0 0.0
      %8703 = vmatprep.subr.mxu0 0.0
      %8704 = vmatpush1.msra.mxu0 0.0
      %8705 = vmatprep.subr.mxu0 0.0
      %8706 = vmatpush1.msra.mxu0 0.0
      %8707 = vmatprep.subr.mxu0 0.0
      %8708 = vmatpush1.msra.mxu0 0.0
      %8709 = vmatprep.subr.mxu0 0.0
      %8710 = vmatpush1.msra.mxu0 0.0
      %8711 = vmatprep.subr.mxu0 0.0
      %8712 = vmatpush1.msra.mxu0 0.0
      %8713 = vmatprep.subr.mxu0 0.0
      %8714 = vmatpush1.msra.mxu0 0.0
      %8715 = vmatprep.subr.mxu0 0.0
      %8716 = vmatpush1.msra.mxu0 0.0
      %8717 = vmatprep.subr.mxu0 0.0
      %8718 = vmatpush1.msra.mxu0 0.0
      %8719 = vmatprep.subr.mxu0 0.0
      %8720 = vmatpush1.msra.mxu0 0.0
      %8721 = vmatprep.subr.mxu0 0.0
      %8722 = vmatpush1.msra.mxu0 0.0
      %8723 = vmatprep.subr.mxu0 0.0
      %8724 = vmatpush1.msra.mxu0 0.0
      %8725 = vmatprep.subr.mxu0 0.0
      %8726 = vmatpush1.msra.mxu0 0.0
      %8727 = vmatprep.subr.mxu0 0.0
      %8728 = vmatpush1.msra.mxu0 0.0
      %8729 = vmatprep.subr.mxu0 0.0
      %8730 = vmatpush1.msra.mxu0 0.0
      %8731 = vmatprep.subr.mxu0 0.0
      %8732 = vmatpush1.msra.mxu0 0.0
      %8733 = vmatprep.subr.mxu0 0.0
      %8734 = vmatpush1.msra.mxu0 0.0
      %8735 = vmatprep.subr.mxu0 0.0
      %8736 = vmatpush1.msra.mxu0 0.0
      %8737 = vmatprep.subr.mxu0 0.0
      %8738 = vmatpush1.msra.mxu0 0.0
      %8739 = vmatprep.subr.mxu0 0.0
      %8740 = vmatpush1.msra.mxu0 0.0
      %8741 = vmatprep.subr.mxu0 0.0
      %8742 = vmatpush1.msra.mxu0 0.0
      %8743 = vmatprep.subr.mxu0 0.0
      %8744 = vmatpush1.msra.mxu0 0.0
      %8745 = vmatprep.subr.mxu0 0.0
      %8746 = vmatpush1.msra.mxu0 0.0
      %8747 = vmatprep.mubr.f32.mxu0 0.0
      %8748 = vmatmul.mubr.f32.gmra.mrb[0].mxu0 %v8636
      %v8749 = vpop.f32.mrb[0].mxu0
      %v8750 = vadd.f32 %v8619, %v8749
      %v8751 = vpop.f32.mrb[0].mxu0
      %8752 = vmatprep.mubr.f32.mxu0 0.0
      %8753 = vmatmul.mubr.f32.gmra.mrb[0].mxu0 %v8639
      %v8754 = vpop.f32.mrb[0].mxu0
      %v8755 = vadd.f32 %v8620, %v8754
      %v8756 = vpop.f32.mrb[0].mxu0
      %8757 = vmatprep.mubr.f32.mxu0 0.0
      %8758 = vmatmul.mubr.f32.gmra.mrb[0].mxu0 %v8642
      %v8759 = vpop.f32.mrb[0].mxu0
      %v8760 = vadd.f32 %v8621, %v8759
      %v8761 = vpop.f32.mrb[0].mxu0
      %8762 = vmatprep.mubr.f32.mxu0 0.0
      %8763 = vmatmul.mubr.f32.gmra.mrb[0].mxu0 %v8645
      %v8764 = vpop.f32.mrb[0].mxu0
      %v8765 = vadd.f32 %v8622, %v8764
      %v8766 = vpop.f32.mrb[0].mxu0
      %8767 = vmatprep.mubr.f32.mxu0 0.0
      %8768 = vmatmul.mubr.f32.gmra.mrb[0].mxu0 %v8648
      %v8769 = vpop.f32.mrb[0].mxu0
      %v8770 = vadd.f32 %v8623, %v8769
      %v8771 = vpop.f32.mrb[0].mxu0
      %8772 = vmatprep.mubr.f32.mxu0 0.0
      %8773 = vmatmul.mubr.f32.gmra.mrb[0].mxu0 %v8651
      %v8774 = vpop.f32.mrb[0].mxu0
      %v8775 = vadd.f32 %v8624, %v8774
      %v8776 = vpop.f32.mrb[0].mxu0
      %8777 = vmatprep.mubr.f32.mxu0 0.0
      %8778 = vmatmul.mubr.f32.gmra.mrb[0].mxu0 %v8654
      %v8779 = vpop.f32.mrb[0].mxu0
      %v8780 = vadd.f32 %v8625, %v8779
      %v8781 = vpop.f32.mrb[0].mxu0
      %8782 = vmatprep.mubr.f32.mxu0 0.0
      %8783 = vmatmul.mubr.f32.gmra.mrb[0].mxu0 %v8657
      %v8784 = vpop.f32.mrb[0].mxu0
      %v8785 = vadd.f32 %v8626, %v8784
      %v8786 = vpop.f32.mrb[0].mxu0
      %8787 = vmatprep.mubr.f32.mxu0 0.0
      %8788 = vmatmul.mubr.f32.gmra.mrb[0].mxu0 %v8660
      %v8789 = vpop.f32.mrb[0].mxu0
      %v8790 = vadd.f32 %v8627, %v8789
      %v8791 = vpop.f32.mrb[0].mxu0
      %8792 = vmatprep.mubr.f32.mxu0 0.0
      %8793 = vmatmul.mubr.f32.gmra.mrb[0].mxu0 %v8663
      %v8794 = vpop.f32.mrb[0].mxu0
      %v8795 = vadd.f32 %v8628, %v8794
      %v8796 = vpop.f32.mrb[0].mxu0
      %8797 = vmatprep.mubr.f32.mxu0 0.0
      %8798 = vmatmul.mubr.f32.gmra.mrb[0].mxu0 %v8666
      %v8799 = vpop.f32.mrb[0].mxu0
      %v8800 = vadd.f32 %v8629, %v8799
      %v8801 = vpop.f32.mrb[0].mxu0
      %8802 = vmatprep.mubr.f32.mxu0 0.0
      %8803 = vmatmul.mubr.f32.gmra.mrb[0].mxu0 %v8669
      %v8804 = vpop.f32.mrb[0].mxu0
      %v8805 = vadd.f32 %v8630, %v8804
      %v8806 = vpop.f32.mrb[0].mxu0
      %8807 = vmatprep.mubr.f32.mxu0 0.0
      %8808 = vmatmul.mubr.f32.gmra.mrb[0].mxu0 %v8672
      %v8809 = vpop.f32.mrb[0].mxu0
      %v8810 = vadd.f32 %v8631, %v8809
      %v8811 = vpop.f32.mrb[0].mxu0
      %8812 = vmatprep.mubr.f32.mxu0 0.0
      %8813 = vmatmul.mubr.f32.gmra.mrb[0].mxu0 %v8675
      %v8814 = vpop.f32.mrb[0].mxu0
      %v8815 = vadd.f32 %v8632, %v8814
      %v8816 = vpop.f32.mrb[0].mxu0
      %8817 = vmatprep.mubr.f32.mxu0 0.0
      %8818 = vmatmul.mubr.f32.gmra.mrb[0].mxu0 %v8678
      %v8819 = vpop.f32.mrb[0].mxu0
      %v8820 = vadd.f32 %v8633, %v8819
      %v8821 = vpop.f32.mrb[0].mxu0
      %8822 = vmatprep.mubr.f32.mxu0 0.0
      %8823 = vmatmul.mubr.f32.gmra.mrb[0].mxu0 %v8681
      %v8824 = vpop.f32.mrb[0].mxu0
      %v8825 = vadd.f32 %v8634, %v8824
      %v8826 = vpop.f32.mrb[0].mxu0
      %8827 = vdwg.mxu0
      %v8828 = vld [vmem:[%s11] sm:$0xff]
      %v8829 = vld [vmem:[%s11 + $0x8] sm:$0x3]
      %v8830 = vld [vmem:[%s12] sm:$0xff]
      %v8831 = vld [vmem:[%s12 + $0x8] sm:$0x3]
      %8832 = vmatprep.subr.mxu0 0.0
      %8833 = vmatpush1.msra.mxu0 %v8750
      %8834 = vmatprep.subr.mxu0 0.0
      %8835 = vmatpush1.msra.mxu0 %v8755
      %8836 = vmatprep.subr.mxu0 0.0
      %8837 = vmatpush1.msra.mxu0 %v8760
      %8838 = vmatprep.subr.mxu0 0.0
      %8839 = vmatpush1.msra.mxu0 %v8765
      %8840 = vmatprep.subr.mxu0 0.0
      %8841 = vmatpush1.msra.mxu0 %v8770
      %8842 = vmatprep.subr.mxu0 0.0
      %8843 = vmatpush1.msra.mxu0 %v8775
      %8844 = vmatprep.subr.mxu0 0.0
      %8845 = vmatpush1.msra.mxu0 %v8780
      %8846 = vmatprep.subr.mxu0 0.0
      %8847 = vmatpush1.msra.mxu0 %v8785
      %8848 = vmatprep.subr.mxu0 0.0
      %8849 = vmatpush1.msra.mxu0 %v8790
      %8850 = vmatprep.subr.mxu0 0.0
      %8851 = vmatpush1.msra.mxu0 %v8795
      %8852 = vmatprep.subr.mxu0 0.0
      %8853 = vmatpush1.msra.mxu0 %v8800
      %8854 = vmatprep.subr.mxu0 0.0
      %8855 = vmatpush1.msra.mxu0 %v8805
      %8856 = vmatprep.subr.mxu0 0.0
      %8857 = vmatpush1.msra.mxu0 %v8810
      %8858 = vmatprep.subr.mxu0 0.0
      %8859 = vmatpush1.msra.mxu0 %v8815
      %8860 = vmatprep.subr.mxu0 0.0
      %8861 = vmatpush1.msra.mxu0 %v8820
      %8862 = vmatprep.subr.mxu0 0.0
      %8863 = vmatpush1.msra.mxu0 %v8825
      %8864 = vmatprep.subr.mxu0 0.0
      %8865 = vmatpush1.msra.mxu0 0.0
      %8866 = vmatprep.subr.mxu0 0.0
      %8867 = vmatpush1.msra.mxu0 0.0
      %8868 = vmatprep.subr.mxu0 0.0
      %8869 = vmatpush1.msra.mxu0 0.0
      %8870 = vmatprep.subr.mxu0 0.0
      %8871 = vmatpush1.msra.mxu0 0.0
      %8872 = vmatprep.subr.mxu0 0.0
      %8873 = vmatpush1.msra.mxu0 0.0
      %8874 = vmatprep.subr.mxu0 0.0
      %8875 = vmatpush1.msra.mxu0 0.0
      %8876 = vmatprep.subr.mxu0 0.0
      %8877 = vmatpush1.msra.mxu0 0.0
      %8878 = vmatprep.subr.mxu0 0.0
      %8879 = vmatpush1.msra.mxu0 0.0
      %8880 = vmatprep.subr.mxu0 0.0
      %8881 = vmatpush1.msra.mxu0 0.0
      %8882 = vmatprep.subr.mxu0 0.0
      %8883 = vmatpush1.msra.mxu0 0.0
      %8884 = vmatprep.subr.mxu0 0.0
      %8885 = vmatpush1.msra.mxu0 0.0
      %8886 = vmatprep.subr.mxu0 0.0
      %8887 = vmatpush1.msra.mxu0 0.0
      %8888 = vmatprep.subr.mxu0 0.0
      %8889 = vmatpush1.msra.mxu0 0.0
      %8890 = vmatprep.subr.mxu0 0.0
      %8891 = vmatpush1.msra.mxu0 0.0
      %8892 = vmatprep.subr.mxu0 0.0
      %8893 = vmatpush1.msra.mxu0 0.0
      %8894 = vmatprep.subr.mxu0 0.0
      %8895 = vmatpush1.msra.mxu0 0.0
      %8896 = vmatprep.mubr.f32.mxu0 0.0
      %8897 = vmatmul.mubr.f32.gmra.mrb[0].mxu0 %v8828
      %v8898 = vpop.f32.mrb[0].mxu0
      %v8899 = vadd.f32 %v8830, %v8898
      %v8900 = vpop.f32.mrb[0].mxu0
      %8901 = vmatprep.mubr.f32.mxu0 0.0
      %8902 = vmatmul.mubr.f32.gmra.mrb[0].mxu0 %v8829
      %v8903 = vpop.f32.mrb[0].mxu0
      %v8904 = vadd.f32 %v8831, %v8903
      %v8905 = vpop.f32.mrb[0].mxu0
      %8906 = vdwg.mxu0
      %vm8907 = vcmask 7168
      %8908 = vst.msk [vmem:[%s451] sm:$0xff] %vm8907, %v8899
      %vm8909 = vcmask 1024
      %8910 = vst.msk [vmem:[%s451 + $0x8] sm:$0x3] %vm8909, %v8904
      %p8911 = scmp.lt.s32.totalorder %s24, 1
      %s8912 = scalar_select %p8911, %s24, 1
      %s8913 = smul.addr %s8912, 2
      %s8914 = smul.addr %s8913, 8
      %s8915 = scalar_lea.vmem %s13, %s8914
      // Predicated region
      $region73: #{jvp__.1} parent=71 // pred_check
        %p8916 = pneg %p325
      $region74: #{jvp__.1} parent=71 // pred_check_branch
        %8918 = sbr.rel (%p8916) target = $region76
      $region75: #{jvp__.1} parent=71 // pred_region
        _
      $region76: #{jvp__.1} parent=71 // pred_fallthru
        _
    $region72: #{jvp__.1} parent=5 // pred_fallthru
      _
    %p8919 = scmp.le.s32.totalorder 2, %s19
    // Predicated region
    $region77: #{jvp__.1} parent=5 // pred_check
      %p8920 = pneg %p8919
    $region78: #{jvp__.1} parent=5 // pred_check_branch
      %8922 = sbr.rel (%p8920) target = $region80
    $region79: #{jvp__.1} parent=5 // pred_region
      %s8923 = ssub.s32 %s19, 2
      // Predicated region
      $region81: #{jvp__.1} parent=79 // pred_check
        %p8924 = pneg %p331
      $region82: #{jvp__.1} parent=79 // pred_check_branch
        %8926 = sbr.rel (%p8924) target = $region84
      $region83: #{jvp__.1} parent=79 // pred_region
        %p8927 = scmp.lt.s32.totalorder %s25, 1
        %s8928 = scalar_select %p8927, %s25, 1
        %s8929 = smul.addr %s8928, 2
        %s8930 = smul.addr %s8929, 8
        %s8931 = scalar_lea.vmem %s13, %s8930
      $region84: #{jvp__.1} parent=79 // pred_fallthru
        _
    $region80: #{jvp__.1} parent=5 // pred_fallthru
      _
  $region6: #{jvp__.1} parent=0 // loop_footer
    %s23 = sadd.s32 1, %s19
  $region7: #{jvp__.1} parent=0 // loop_footer_branch
    %18 = sbr.rel target = $region3
  $region8: #{jvp__.1} parent=0 // loop_exit
    _

// kernel: split.95
$region0: #{split.95}
  #allocation0 [shape = 'u32[2048]{0}', space=vmem, size = 0x2000, scoped, tag = 'scoped memory for split.95']
  #allocation1 [shape = 'u32[2048]{0}', space=vmem, size = 0x2000, scoped, tag = 'scoped memory for split.95']
  #allocation2 [shape = 'u32[2048]{0}', space=vmem, size = 0x2000, scoped, tag = 'scoped memory for split.95']
  #allocation3 [shape = 'u32[2048]{0}', space=vmem, size = 0x2000, scoped, tag = 'scoped memory for split.95']
  #allocation4 [shape = 'u32[2048]{0}', space=vmem, size = 0x2000, scoped, tag = 'scoped memory for split.95']
  #allocation5 [shape = 's32[1]{0}', space=sflag, size = 0x4, scoped, tag = 'scoped memory for split.95']
  %s0 = inlined_call_operand.vmem [shape: f32[2,32,384], index: 0, kind: input, shape index: {}]
  %s1 = inlined_call_operand.vmem [shape: f32[2,32,19], index: 1, kind: output, shape index: {}]
  %v2 = vld [vmem:[%s0] sm:$0xff]
  %3 = vst [vmem:[%s1] sm:$0xff] %v2
  %s4 = scalar_lea.vmem %s0, 96
  %v5 = vld [vmem:[%s4] sm:$0xff]
  %s6 = scalar_lea.vmem %s1, 32
  %7 = vst [vmem:[%s6] sm:$0xff] %v5
  %s8 = scalar_lea.vmem %s0, 24
  %v9 = vld [vmem:[%s8] sm:$0xff]
  %s10 = scalar_lea.vmem %s1, 8
  %11 = vst [vmem:[%s10] sm:$0xff] %v9
  %s12 = scalar_lea.vmem %s0, 120
  %v13 = vld [vmem:[%s12] sm:$0xff]
  %s14 = scalar_lea.vmem %s1, 40
  %15 = vst [vmem:[%s14] sm:$0xff] %v13
  %s16 = scalar_lea.vmem %s0, 48
  %v17 = vld [vmem:[%s16] sm:$0xff]
  %s18 = scalar_lea.vmem %s1, 16
  %19 = vst [vmem:[%s18] sm:$0xff] %v17
  %s20 = scalar_lea.vmem %s0, 144
  %v21 = vld [vmem:[%s20] sm:$0xff]
  %s22 = scalar_lea.vmem %s1, 48
  %23 = vst [vmem:[%s22] sm:$0xff] %v21
  %s24 = scalar_lea.vmem %s0, 72
  %v25 = vld [vmem:[%s24] sm:$0xff]
  %s26 = scalar_lea.vmem %s1, 24
  %27 = vst [vmem:[%s26] sm:$0xff] %v25
  %s28 = scalar_lea.vmem %s0, 168
  %v29 = vld [vmem:[%s28] sm:$0xff]
  %s30 = scalar_lea.vmem %s1, 56
  %31 = vst [vmem:[%s30] sm:$0xff] %v29

// kernel: split.94
$region0: #{split.94}
  #allocation0 [shape = 'u32[2048]{0}', space=vmem, size = 0x2000, scoped, tag = 'scoped memory for split.94']
  #allocation1 [shape = 'u32[2048]{0}', space=vmem, size = 0x2000, scoped, tag = 'scoped memory for split.94']
  #allocation2 [shape = 'u32[2048]{0}', space=vmem, size = 0x2000, scoped, tag = 'scoped memory for split.94']
  #allocation3 [shape = 'u32[2048]{0}', space=vmem, size = 0x2000, scoped, tag = 'scoped memory for split.94']
  #allocation4 [shape = 'u32[2048]{0}', space=vmem, size = 0x2000, scoped, tag = 'scoped memory for split.94']
  #allocation5 [shape = 's32[1]{0}', space=sflag, size = 0x4, scoped, tag = 'scoped memory for split.94']
  %s0 = inlined_call_operand.vmem [shape: f32[2,32,384], index: 0, kind: input, shape index: {}]
  %s1 = inlined_call_operand.vmem [shape: f32[2,32,365], index: 1, kind: output, shape index: {}]
  %v2 = vld [vmem:[%s0] sm:$0xff]
  %s3 = scalar_lea.vmem %s0, 8
  %v4 = vld [vmem:[%s3] sm:$0xff]
  %v5 = vlaneseq
  %v6 = vand.u32 %v5, 127
  %vm7 = vcmp.lt.s32.totalorder %v6, 19
  %v8 = vsel %vm7, %v4, %v2
  %9 = vrot.lane.b32.xlu0 %v8, 109
  %v10 = vpop.permute.xlu0 %9
  %11 = vst [vmem:[%s1] sm:$0xff] %v10
  %s12 = scalar_lea.vmem %s0, 96
  %v13 = vld [vmem:[%s12] sm:$0xff]
  %s14 = scalar_lea.vmem %s0, 104
  %v15 = vld [vmem:[%s14] sm:$0xff]
  %v16 = vlaneseq
  %v17 = vand.u32 %v16, 127
  %vm18 = vcmp.lt.s32.totalorder %v17, 19
  %v19 = vsel %vm18, %v15, %v13
  %20 = vrot.lane.b32.xlu0 %v19, 109
  %v21 = vpop.permute.xlu0 %20
  %s22 = scalar_lea.vmem %s1, 96
  %23 = vst [vmem:[%s22] sm:$0xff] %v21
  %s24 = scalar_lea.vmem %s0, 24
  %v25 = vld [vmem:[%s24] sm:$0xff]
  %s26 = scalar_lea.vmem %s0, 32
  %v27 = vld [vmem:[%s26] sm:$0xff]
  %v28 = vlaneseq
  %v29 = vand.u32 %v28, 127
  %vm30 = vcmp.lt.s32.totalorder %v29, 19
  %v31 = vsel %vm30, %v27, %v25
  %32 = vrot.lane.b32.xlu0 %v31, 109
  %v33 = vpop.permute.xlu0 %32
  %s34 = scalar_lea.vmem %s1, 24
  %35 = vst [vmem:[%s34] sm:$0xff] %v33
  %s36 = scalar_lea.vmem %s0, 120
  %v37 = vld [vmem:[%s36] sm:$0xff]
  %s38 = scalar_lea.vmem %s0, 128
  %v39 = vld [vmem:[%s38] sm:$0xff]
  %v40 = vlaneseq
  %v41 = vand.u32 %v40, 127
  %vm42 = vcmp.lt.s32.totalorder %v41, 19
  %v43 = vsel %vm42, %v39, %v37
  %44 = vrot.lane.b32.xlu0 %v43, 109
  %v45 = vpop.permute.xlu0 %44
  %s46 = scalar_lea.vmem %s1, 120
  %47 = vst [vmem:[%s46] sm:$0xff] %v45
  %s48 = scalar_lea.vmem %s0, 48
  %v49 = vld [vmem:[%s48] sm:$0xff]
  %s50 = scalar_lea.vmem %s0, 56
  %v51 = vld [vmem:[%s50] sm:$0xff]
  %v52 = vlaneseq
  %v53 = vand.u32 %v52, 127
  %vm54 = vcmp.lt.s32.totalorder %v53, 19
  %v55 = vsel %vm54, %v51, %v49
  %56 = vrot.lane.b32.xlu0 %v55, 109
  %v57 = vpop.permute.xlu0 %56
  %s58 = scalar_lea.vmem %s1, 48
  %59 = vst [vmem:[%s58] sm:$0xff] %v57
  %s60 = scalar_lea.vmem %s0, 144
  %v61 = vld [vmem:[%s60] sm:$0xff]
  %s62 = scalar_lea.vmem %s0, 152
  %v63 = vld [vmem:[%s62] sm:$0xff]
  %v64 = vlaneseq
  %v65 = vand.u32 %v64, 127
  %vm66 = vcmp.lt.s32.totalorder %v65, 19
  %v67 = vsel %vm66, %v63, %v61
  %68 = vrot.lane.b32.xlu0 %v67, 109
  %v69 = vpop.permute.xlu0 %68
  %s70 = scalar_lea.vmem %s1, 144
  %71 = vst [vmem:[%s70] sm:$0xff] %v69
  %s72 = scalar_lea.vmem %s0, 72
  %v73 = vld [vmem:[%s72] sm:$0xff]
  %s74 = scalar_lea.vmem %s0, 80
  %v75 = vld [vmem:[%s74] sm:$0xff]
  %v76 = vlaneseq
  %v77 = vand.u32 %v76, 127
  %vm78 = vcmp.lt.s32.totalorder %v77, 19
  %v79 = vsel %vm78, %v75, %v73
  %80 = vrot.lane.b32.xlu0 %v79, 109
  %v81 = vpop.permute.xlu0 %80
  %s82 = scalar_lea.vmem %s1, 72
  %83 = vst [vmem:[%s82] sm:$0xff] %v81
  %s84 = scalar_lea.vmem %s0, 168
  %v85 = vld [vmem:[%s84] sm:$0xff]
  %s86 = scalar_lea.vmem %s0, 176
  %v87 = vld [vmem:[%s86] sm:$0xff]
  %v88 = vlaneseq
  %v89 = vand.u32 %v88, 127
  %vm90 = vcmp.lt.s32.totalorder %v89, 19
  %v91 = vsel %vm90, %v87, %v85
  %92 = vrot.lane.b32.xlu0 %v91, 109
  %v93 = vpop.permute.xlu0 %92
  %s94 = scalar_lea.vmem %s1, 168
  %95 = vst [vmem:[%s94] sm:$0xff] %v93
  %s96 = scalar_lea.vmem %s0, 16
  %v97 = vld [vmem:[%s96] sm:$0xff]
  %v98 = vlaneseq
  %v99 = vand.u32 %v98, 127
  %vm100 = vcmp.lt.s32.totalorder %v99, 19
  %v101 = vsel %vm100, %v97, %v4
  %102 = vrot.lane.b32.xlu0 %v101, 109
  %v103 = vpop.permute.xlu0 %102
  %s104 = scalar_lea.vmem %s1, 8
  %105 = vst [vmem:[%s104] sm:$0xff] %v103
  %s106 = scalar_lea.vmem %s0, 112
  %v107 = vld [vmem:[%s106] sm:$0xff]
  %v108 = vlaneseq
  %v109 = vand.u32 %v108, 127
  %vm110 = vcmp.lt.s32.totalorder %v109, 19
  %v111 = vsel %vm110, %v107, %v15
  %112 = vrot.lane.b32.xlu0 %v111, 109
  %v113 = vpop.permute.xlu0 %112
  %s114 = scalar_lea.vmem %s1, 104
  %115 = vst [vmem:[%s114] sm:$0xff] %v113
  %s116 = scalar_lea.vmem %s0, 40
  %v117 = vld [vmem:[%s116] sm:$0xff]
  %v118 = vlaneseq
  %v119 = vand.u32 %v118, 127
  %vm120 = vcmp.lt.s32.totalorder %v119, 19
  %v121 = vsel %vm120, %v117, %v27
  %122 = vrot.lane.b32.xlu0 %v121, 109
  %v123 = vpop.permute.xlu0 %122
  %s124 = scalar_lea.vmem %s1, 32
  %125 = vst [vmem:[%s124] sm:$0xff] %v123
  %s126 = scalar_lea.vmem %s0, 136
  %v127 = vld [vmem:[%s126] sm:$0xff]
  %v128 = vlaneseq
  %v129 = vand.u32 %v128, 127
  %vm130 = vcmp.lt.s32.totalorder %v129, 19
  %v131 = vsel %vm130, %v127, %v39
  %132 = vrot.lane.b32.xlu0 %v131, 109
  %v133 = vpop.permute.xlu0 %132
  %s134 = scalar_lea.vmem %s1, 128
  %135 = vst [vmem:[%s134] sm:$0xff] %v133
  %s136 = scalar_lea.vmem %s0, 64
  %v137 = vld [vmem:[%s136] sm:$0xff]
  %v138 = vlaneseq
  %v139 = vand.u32 %v138, 127
  %vm140 = vcmp.lt.s32.totalorder %v139, 19
  %v141 = vsel %vm140, %v137, %v51
  %142 = vrot.lane.b32.xlu0 %v141, 109
  %v143 = vpop.permute.xlu0 %142
  %s144 = scalar_lea.vmem %s1, 56
  %145 = vst [vmem:[%s144] sm:$0xff] %v143
  %s146 = scalar_lea.vmem %s0, 160
  %v147 = vld [vmem:[%s146] sm:$0xff]
  %v148 = vlaneseq
  %v149 = vand.u32 %v148, 127
  %vm150 = vcmp.lt.s32.totalorder %v149, 19
  %v151 = vsel %vm150, %v147, %v63
  %152 = vrot.lane.b32.xlu0 %v151, 109
  %v153 = vpop.permute.xlu0 %152
  %s154 = scalar_lea.vmem %s1, 152
  %155 = vst [vmem:[%s154] sm:$0xff] %v153
  %s156 = scalar_lea.vmem %s0, 88
  %v157 = vld [vmem:[%s156] sm:$0xff]
  %v158 = vlaneseq
  %v159 = vand.u32 %v158, 127
  %vm160 = vcmp.lt.s32.totalorder %v159, 19
  %v161 = vsel %vm160, %v157, %v75
  %162 = vrot.lane.b32.xlu0 %v161, 109
  %v163 = vpop.permute.xlu0 %162
  %s164 = scalar_lea.vmem %s1, 80
  %165 = vst [vmem:[%s164] sm:$0xff] %v163
  %s166 = scalar_lea.vmem %s0, 184
  %v167 = vld [vmem:[%s166] sm:$0xff]
  %v168 = vlaneseq
  %v169 = vand.u32 %v168, 127
  %vm170 = vcmp.lt.s32.totalorder %v169, 19
  %v171 = vsel %vm170, %v167, %v87
  %172 = vrot.lane.b32.xlu0 %v171, 109
  %v173 = vpop.permute.xlu0 %172
  %s174 = scalar_lea.vmem %s1, 176
  %175 = vst [vmem:[%s174] sm:$0xff] %v173
  %v176 = vlaneseq
  %v177 = vand.u32 %v176, 127
  %vm178 = vcmp.lt.s32.totalorder %v177, 19
  %v179 = vsel %vm178, 0, %v97
  %180 = vrot.lane.b32.xlu0 %v179, 109
  %v181 = vpop.permute.xlu0 %180
  %s182 = scalar_lea.vmem %s1, 16
  %183 = vst [vmem:[%s182] sm:$0xff] %v181
  %v184 = vlaneseq
  %v185 = vand.u32 %v184, 127
  %vm186 = vcmp.lt.s32.totalorder %v185, 19
  %v187 = vsel %vm186, 0, %v107
  %188 = vrot.lane.b32.xlu0 %v187, 109
  %v189 = vpop.permute.xlu0 %188
  %s190 = scalar_lea.vmem %s1, 112
  %191 = vst [vmem:[%s190] sm:$0xff] %v189
  %v192 = vlaneseq
  %v193 = vand.u32 %v192, 127
  %vm194 = vcmp.lt.s32.totalorder %v193, 19
  %v195 = vsel %vm194, 0, %v117
  %196 = vrot.lane.b32.xlu0 %v195, 109
  %v197 = vpop.permute.xlu0 %196
  %s198 = scalar_lea.vmem %s1, 40
  %199 = vst [vmem:[%s198] sm:$0xff] %v197
  %v200 = vlaneseq
  %v201 = vand.u32 %v200, 127
  %vm202 = vcmp.lt.s32.totalorder %v201, 19
  %v203 = vsel %vm202, 0, %v127
  %204 = vrot.lane.b32.xlu0 %v203, 109
  %v205 = vpop.permute.xlu0 %204
  %s206 = scalar_lea.vmem %s1, 136
  %207 = vst [vmem:[%s206] sm:$0xff] %v205
  %v208 = vlaneseq
  %v209 = vand.u32 %v208, 127
  %vm210 = vcmp.lt.s32.totalorder %v209, 19
  %v211 = vsel %vm210, 0, %v137
  %212 = vrot.lane.b32.xlu0 %v211, 109
  %v213 = vpop.permute.xlu0 %212
  %s214 = scalar_lea.vmem %s1, 64
  %215 = vst [vmem:[%s214] sm:$0xff] %v213
  %v216 = vlaneseq
  %v217 = vand.u32 %v216, 127
  %vm218 = vcmp.lt.s32.totalorder %v217, 19
  %v219 = vsel %vm218, 0, %v147
  %220 = vrot.lane.b32.xlu0 %v219, 109
  %v221 = vpop.permute.xlu0 %220
  %s222 = scalar_lea.vmem %s1, 160
  %223 = vst [vmem:[%s222] sm:$0xff] %v221
  %v224 = vlaneseq
  %v225 = vand.u32 %v224, 127
  %vm226 = vcmp.lt.s32.totalorder %v225, 19
  %v227 = vsel %vm226, 0, %v157
  %228 = vrot.lane.b32.xlu0 %v227, 109
  %v229 = vpop.permute.xlu0 %228
  %s230 = scalar_lea.vmem %s1, 88
  %231 = vst [vmem:[%s230] sm:$0xff] %v229
  %v232 = vlaneseq
  %v233 = vand.u32 %v232, 127
  %vm234 = vcmp.lt.s32.totalorder %v233, 19
  %v235 = vsel %vm234, 0, %v167
  %236 = vrot.lane.b32.xlu0 %v235, 109
  %v237 = vpop.permute.xlu0 %236
  %s238 = scalar_lea.vmem %s1, 184
  %239 = vst [vmem:[%s238] sm:$0xff] %v237

// kernel: split.93
$region0: #{split.93}
  #allocation0 [shape = 'u32[2048]{0}', space=vmem, size = 0x2000, scoped, tag = 'scoped memory for split.93']
  #allocation1 [shape = 'u32[2048]{0}', space=vmem, size = 0x2000, scoped, tag = 'scoped memory for split.93']
  #allocation2 [shape = 'u32[2048]{0}', space=vmem, size = 0x2000, scoped, tag = 'scoped memory for split.93']
  #allocation3 [shape = 'u32[2048]{0}', space=vmem, size = 0x2000, scoped, tag = 'scoped memory for split.93']
  #allocation4 [shape = 'u32[2048]{0}', space=vmem, size = 0x2000, scoped, tag = 'scoped memory for split.93']
  #allocation5 [shape = 's32[1]{0}', space=sflag, size = 0x4, scoped, tag = 'scoped memory for split.93']
  %s0 = inlined_call_operand.vmem [shape: f32[2,32,384], index: 0, kind: input, shape index: {}]
  %s1 = inlined_call_operand.vmem [shape: f32[2,32,18], index: 1, kind: output, shape index: {}]
  %v2 = vld [vmem:[%s0] sm:$0xff]
  %3 = vst [vmem:[%s1] sm:$0xff] %v2
  %s4 = scalar_lea.vmem %s0, 96
  %v5 = vld [vmem:[%s4] sm:$0xff]
  %s6 = scalar_lea.vmem %s1, 32
  %7 = vst [vmem:[%s6] sm:$0xff] %v5
  %s8 = scalar_lea.vmem %s0, 24
  %v9 = vld [vmem:[%s8] sm:$0xff]
  %s10 = scalar_lea.vmem %s1, 8
  %11 = vst [vmem:[%s10] sm:$0xff] %v9
  %s12 = scalar_lea.vmem %s0, 120
  %v13 = vld [vmem:[%s12] sm:$0xff]
  %s14 = scalar_lea.vmem %s1, 40
  %15 = vst [vmem:[%s14] sm:$0xff] %v13
  %s16 = scalar_lea.vmem %s0, 48
  %v17 = vld [vmem:[%s16] sm:$0xff]
  %s18 = scalar_lea.vmem %s1, 16
  %19 = vst [vmem:[%s18] sm:$0xff] %v17
  %s20 = scalar_lea.vmem %s0, 144
  %v21 = vld [vmem:[%s20] sm:$0xff]
  %s22 = scalar_lea.vmem %s1, 48
  %23 = vst [vmem:[%s22] sm:$0xff] %v21
  %s24 = scalar_lea.vmem %s0, 72
  %v25 = vld [vmem:[%s24] sm:$0xff]
  %s26 = scalar_lea.vmem %s1, 24
  %27 = vst [vmem:[%s26] sm:$0xff] %v25
  %s28 = scalar_lea.vmem %s0, 168
  %v29 = vld [vmem:[%s28] sm:$0xff]
  %s30 = scalar_lea.vmem %s1, 56
  %31 = vst [vmem:[%s30] sm:$0xff] %v29

// kernel: split.92
$region0: #{split.92}
  #allocation0 [shape = 'u32[2048]{0}', space=vmem, size = 0x2000, scoped, tag = 'scoped memory for split.92']
  #allocation1 [shape = 'u32[2048]{0}', space=vmem, size = 0x2000, scoped, tag = 'scoped memory for split.92']
  #allocation2 [shape = 'u32[2048]{0}', space=vmem, size = 0x2000, scoped, tag = 'scoped memory for split.92']
  #allocation3 [shape = 'u32[2048]{0}', space=vmem, size = 0x2000, scoped, tag = 'scoped memory for split.92']
  #allocation4 [shape = 'u32[2048]{0}', space=vmem, size = 0x2000, scoped, tag = 'scoped memory for split.92']
  #allocation5 [shape = 's32[1]{0}', space=sflag, size = 0x4, scoped, tag = 'scoped memory for split.92']
  %s0 = inlined_call_operand.vmem [shape: f32[2,32,384], index: 0, kind: input, shape index: {}]
  %s1 = inlined_call_operand.vmem [shape: f32[2,32,366], index: 1, kind: output, shape index: {}]
  %v2 = vld [vmem:[%s0] sm:$0xff]
  %s3 = scalar_lea.vmem %s0, 8
  %v4 = vld [vmem:[%s3] sm:$0xff]
  %v5 = vlaneseq
  %v6 = vand.u32 %v5, 127
  %vm7 = vcmp.lt.s32.totalorder %v6, 18
  %v8 = vsel %vm7, %v4, %v2
  %9 = vrot.lane.b32.xlu0 %v8, 110
  %v10 = vpop.permute.xlu0 %9
  %11 = vst [vmem:[%s1] sm:$0xff] %v10
  %s12 = scalar_lea.vmem %s0, 96
  %v13 = vld [vmem:[%s12] sm:$0xff]
  %s14 = scalar_lea.vmem %s0, 104
  %v15 = vld [vmem:[%s14] sm:$0xff]
  %v16 = vlaneseq
  %v17 = vand.u32 %v16, 127
  %vm18 = vcmp.lt.s32.totalorder %v17, 18
  %v19 = vsel %vm18, %v15, %v13
  %20 = vrot.lane.b32.xlu0 %v19, 110
  %v21 = vpop.permute.xlu0 %20
  %s22 = scalar_lea.vmem %s1, 96
  %23 = vst [vmem:[%s22] sm:$0xff] %v21
  %s24 = scalar_lea.vmem %s0, 24
  %v25 = vld [vmem:[%s24] sm:$0xff]
  %s26 = scalar_lea.vmem %s0, 32
  %v27 = vld [vmem:[%s26] sm:$0xff]
  %v28 = vlaneseq
  %v29 = vand.u32 %v28, 127
  %vm30 = vcmp.lt.s32.totalorder %v29, 18
  %v31 = vsel %vm30, %v27, %v25
  %32 = vrot.lane.b32.xlu0 %v31, 110
  %v33 = vpop.permute.xlu0 %32
  %s34 = scalar_lea.vmem %s1, 24
  %35 = vst [vmem:[%s34] sm:$0xff] %v33
  %s36 = scalar_lea.vmem %s0, 120
  %v37 = vld [vmem:[%s36] sm:$0xff]
  %s38 = scalar_lea.vmem %s0, 128
  %v39 = vld [vmem:[%s38] sm:$0xff]
  %v40 = vlaneseq
  %v41 = vand.u32 %v40, 127
  %vm42 = vcmp.lt.s32.totalorder %v41, 18
  %v43 = vsel %vm42, %v39, %v37
  %44 = vrot.lane.b32.xlu0 %v43, 110
  %v45 = vpop.permute.xlu0 %44
  %s46 = scalar_lea.vmem %s1, 120
  %47 = vst [vmem:[%s46] sm:$0xff] %v45
  %s48 = scalar_lea.vmem %s0, 48
  %v49 = vld [vmem:[%s48] sm:$0xff]
  %s50 = scalar_lea.vmem %s0, 56
  %v51 = vld [vmem:[%s50] sm:$0xff]
  %v52 = vlaneseq
  %v53 = vand.u32 %v52, 127
  %vm54 = vcmp.lt.s32.totalorder %v53, 18
  %v55 = vsel %vm54, %v51, %v49
  %56 = vrot.lane.b32.xlu0 %v55, 110
  %v57 = vpop.permute.xlu0 %56
  %s58 = scalar_lea.vmem %s1, 48
  %59 = vst [vmem:[%s58] sm:$0xff] %v57
  %s60 = scalar_lea.vmem %s0, 144
  %v61 = vld [vmem:[%s60] sm:$0xff]
  %s62 = scalar_lea.vmem %s0, 152
  %v63 = vld [vmem:[%s62] sm:$0xff]
  %v64 = vlaneseq
  %v65 = vand.u32 %v64, 127
  %vm66 = vcmp.lt.s32.totalorder %v65, 18
  %v67 = vsel %vm66, %v63, %v61
  %68 = vrot.lane.b32.xlu0 %v67, 110
  %v69 = vpop.permute.xlu0 %68
  %s70 = scalar_lea.vmem %s1, 144
  %71 = vst [vmem:[%s70] sm:$0xff] %v69
  %s72 = scalar_lea.vmem %s0, 72
  %v73 = vld [vmem:[%s72] sm:$0xff]
  %s74 = scalar_lea.vmem %s0, 80
  %v75 = vld [vmem:[%s74] sm:$0xff]
  %v76 = vlaneseq
  %v77 = vand.u32 %v76, 127
  %vm78 = vcmp.lt.s32.totalorder %v77, 18
  %v79 = vsel %vm78, %v75, %v73
  %80 = vrot.lane.b32.xlu0 %v79, 110
  %v81 = vpop.permute.xlu0 %80
  %s82 = scalar_lea.vmem %s1, 72
  %83 = vst [vmem:[%s82] sm:$0xff] %v81
  %s84 = scalar_lea.vmem %s0, 168
  %v85 = vld [vmem:[%s84] sm:$0xff]
  %s86 = scalar_lea.vmem %s0, 176
  %v87 = vld [vmem:[%s86] sm:$0xff]
  %v88 = vlaneseq
  %v89 = vand.u32 %v88, 127
  %vm90 = vcmp.lt.s32.totalorder %v89, 18
  %v91 = vsel %vm90, %v87, %v85
  %92 = vrot.lane.b32.xlu0 %v91, 110
  %v93 = vpop.permute.xlu0 %92
  %s94 = scalar_lea.vmem %s1, 168
  %95 = vst [vmem:[%s94] sm:$0xff] %v93
  %s96 = scalar_lea.vmem %s0, 16
  %v97 = vld [vmem:[%s96] sm:$0xff]
  %v98 = vlaneseq
  %v99 = vand.u32 %v98, 127
  %vm100 = vcmp.lt.s32.totalorder %v99, 18
  %v101 = vsel %vm100, %v97, %v4
  %102 = vrot.lane.b32.xlu0 %v101, 110
  %v103 = vpop.permute.xlu0 %102
  %s104 = scalar_lea.vmem %s1, 8
  %105 = vst [vmem:[%s104] sm:$0xff] %v103
  %s106 = scalar_lea.vmem %s0, 112
  %v107 = vld [vmem:[%s106] sm:$0xff]
  %v108 = vlaneseq
  %v109 = vand.u32 %v108, 127
  %vm110 = vcmp.lt.s32.totalorder %v109, 18
  %v111 = vsel %vm110, %v107, %v15
  %112 = vrot.lane.b32.xlu0 %v111, 110
  %v113 = vpop.permute.xlu0 %112
  %s114 = scalar_lea.vmem %s1, 104
  %115 = vst [vmem:[%s114] sm:$0xff] %v113
  %s116 = scalar_lea.vmem %s0, 40
  %v117 = vld [vmem:[%s116] sm:$0xff]
  %v118 = vlaneseq
  %v119 = vand.u32 %v118, 127
  %vm120 = vcmp.lt.s32.totalorder %v119, 18
  %v121 = vsel %vm120, %v117, %v27
  %122 = vrot.lane.b32.xlu0 %v121, 110
  %v123 = vpop.permute.xlu0 %122
  %s124 = scalar_lea.vmem %s1, 32
  %125 = vst [vmem:[%s124] sm:$0xff] %v123
  %s126 = scalar_lea.vmem %s0, 136
  %v127 = vld [vmem:[%s126] sm:$0xff]
  %v128 = vlaneseq
  %v129 = vand.u32 %v128, 127
  %vm130 = vcmp.lt.s32.totalorder %v129, 18
  %v131 = vsel %vm130, %v127, %v39
  %132 = vrot.lane.b32.xlu0 %v131, 110
  %v133 = vpop.permute.xlu0 %132
  %s134 = scalar_lea.vmem %s1, 128
  %135 = vst [vmem:[%s134] sm:$0xff] %v133
  %s136 = scalar_lea.vmem %s0, 64
  %v137 = vld [vmem:[%s136] sm:$0xff]
  %v138 = vlaneseq
  %v139 = vand.u32 %v138, 127
  %vm140 = vcmp.lt.s32.totalorder %v139, 18
  %v141 = vsel %vm140, %v137, %v51
  %142 = vrot.lane.b32.xlu0 %v141, 110
  %v143 = vpop.permute.xlu0 %142
  %s144 = scalar_lea.vmem %s1, 56
  %145 = vst [vmem:[%s144] sm:$0xff] %v143
  %s146 = scalar_lea.vmem %s0, 160
  %v147 = vld [vmem:[%s146] sm:$0xff]
  %v148 = vlaneseq
  %v149 = vand.u32 %v148, 127
  %vm150 = vcmp.lt.s32.totalorder %v149, 18
  %v151 = vsel %vm150, %v147, %v63
  %152 = vrot.lane.b32.xlu0 %v151, 110
  %v153 = vpop.permute.xlu0 %152
  %s154 = scalar_lea.vmem %s1, 152
  %155 = vst [vmem:[%s154] sm:$0xff] %v153
  %s156 = scalar_lea.vmem %s0, 88
  %v157 = vld [vmem:[%s156] sm:$0xff]
  %v158 = vlaneseq
  %v159 = vand.u32 %v158, 127
  %vm160 = vcmp.lt.s32.totalorder %v159, 18
  %v161 = vsel %vm160, %v157, %v75
  %162 = vrot.lane.b32.xlu0 %v161, 110
  %v163 = vpop.permute.xlu0 %162
  %s164 = scalar_lea.vmem %s1, 80
  %165 = vst [vmem:[%s164] sm:$0xff] %v163
  %s166 = scalar_lea.vmem %s0, 184
  %v167 = vld [vmem:[%s166] sm:$0xff]
  %v168 = vlaneseq
  %v169 = vand.u32 %v168, 127
  %vm170 = vcmp.lt.s32.totalorder %v169, 18
  %v171 = vsel %vm170, %v167, %v87
  %172 = vrot.lane.b32.xlu0 %v171, 110
  %v173 = vpop.permute.xlu0 %172
  %s174 = scalar_lea.vmem %s1, 176
  %175 = vst [vmem:[%s174] sm:$0xff] %v173
  %v176 = vlaneseq
  %v177 = vand.u32 %v176, 127
  %vm178 = vcmp.lt.s32.totalorder %v177, 18
  %v179 = vsel %vm178, 0, %v97
  %180 = vrot.lane.b32.xlu0 %v179, 110
  %v181 = vpop.permute.xlu0 %180
  %s182 = scalar_lea.vmem %s1, 16
  %183 = vst [vmem:[%s182] sm:$0xff] %v181
  %v184 = vlaneseq
  %v185 = vand.u32 %v184, 127
  %vm186 = vcmp.lt.s32.totalorder %v185, 18
  %v187 = vsel %vm186, 0, %v107
  %188 = vrot.lane.b32.xlu0 %v187, 110
  %v189 = vpop.permute.xlu0 %188
  %s190 = scalar_lea.vmem %s1, 112
  %191 = vst [vmem:[%s190] sm:$0xff] %v189
  %v192 = vlaneseq
  %v193 = vand.u32 %v192, 127
  %vm194 = vcmp.lt.s32.totalorder %v193, 18
  %v195 = vsel %vm194, 0, %v117
  %196 = vrot.lane.b32.xlu0 %v195, 110
  %v197 = vpop.permute.xlu0 %196
  %s198 = scalar_lea.vmem %s1, 40
  %199 = vst [vmem:[%s198] sm:$0xff] %v197
  %v200 = vlaneseq
  %v201 = vand.u32 %v200, 127
  %vm202 = vcmp.lt.s32.totalorder %v201, 18
  %v203 = vsel %vm202, 0, %v127
  %204 = vrot.lane.b32.xlu0 %v203, 110
  %v205 = vpop.permute.xlu0 %204
  %s206 = scalar_lea.vmem %s1, 136
  %207 = vst [vmem:[%s206] sm:$0xff] %v205
  %v208 = vlaneseq
  %v209 = vand.u32 %v208, 127
  %vm210 = vcmp.lt.s32.totalorder %v209, 18
  %v211 = vsel %vm210, 0, %v137
  %212 = vrot.lane.b32.xlu0 %v211, 110
  %v213 = vpop.permute.xlu0 %212
  %s214 = scalar_lea.vmem %s1, 64
  %215 = vst [vmem:[%s214] sm:$0xff] %v213
  %v216 = vlaneseq
  %v217 = vand.u32 %v216, 127
  %vm218 = vcmp.lt.s32.totalorder %v217, 18
  %v219 = vsel %vm218, 0, %v147
  %220 = vrot.lane.b32.xlu0 %v219, 110
  %v221 = vpop.permute.xlu0 %220
  %s222 = scalar_lea.vmem %s1, 160
  %223 = vst [vmem:[%s222] sm:$0xff] %v221
  %v224 = vlaneseq
  %v225 = vand.u32 %v224, 127
  %vm226 = vcmp.lt.s32.totalorder %v225, 18
  %v227 = vsel %vm226, 0, %v157
  %228 = vrot.lane.b32.xlu0 %v227, 110
  %v229 = vpop.permute.xlu0 %228
  %s230 = scalar_lea.vmem %s1, 88
  %231 = vst [vmem:[%s230] sm:$0xff] %v229
  %v232 = vlaneseq
  %v233 = vand.u32 %v232, 127
  %vm234 = vcmp.lt.s32.totalorder %v233, 18
  %v235 = vsel %vm234, 0, %v167
  %236 = vrot.lane.b32.xlu0 %v235, 110
  %v237 = vpop.permute.xlu0 %236
  %s238 = scalar_lea.vmem %s1, 184
  %239 = vst [vmem:[%s238] sm:$0xff] %v237

// kernel: split.91
$region0: #{split.91}
  #allocation0 [shape = 'u32[2048]{0}', space=vmem, size = 0x2000, scoped, tag = 'scoped memory for split.91']
  #allocation1 [shape = 'u32[2048]{0}', space=vmem, size = 0x2000, scoped, tag = 'scoped memory for split.91']
  #allocation2 [shape = 'u32[2048]{0}', space=vmem, size = 0x2000, scoped, tag = 'scoped memory for split.91']
  #allocation3 [shape = 'u32[2048]{0}', space=vmem, size = 0x2000, scoped, tag = 'scoped memory for split.91']
  #allocation4 [shape = 'u32[2048]{0}', space=vmem, size = 0x2000, scoped, tag = 'scoped memory for split.91']
  #allocation5 [shape = 's32[1]{0}', space=sflag, size = 0x4, scoped, tag = 'scoped memory for split.91']
  %s0 = inlined_call_operand.vmem [shape: f32[2,32,384], index: 0, kind: input, shape index: {}]
  %s1 = inlined_call_operand.vmem [shape: f32[2,32,17], index: 1, kind: output, shape index: {}]
  %v2 = vld [vmem:[%s0] sm:$0xff]
  %3 = vst [vmem:[%s1] sm:$0xff] %v2
  %s4 = scalar_lea.vmem %s0, 96
  %v5 = vld [vmem:[%s4] sm:$0xff]
  %s6 = scalar_lea.vmem %s1, 32
  %7 = vst [vmem:[%s6] sm:$0xff] %v5
  %s8 = scalar_lea.vmem %s0, 24
  %v9 = vld [vmem:[%s8] sm:$0xff]
  %s10 = scalar_lea.vmem %s1, 8
  %11 = vst [vmem:[%s10] sm:$0xff] %v9
  %s12 = scalar_lea.vmem %s0, 120
  %v13 = vld [vmem:[%s12] sm:$0xff]
  %s14 = scalar_lea.vmem %s1, 40
  %15 = vst [vmem:[%s14] sm:$0xff] %v13
  %s16 = scalar_lea.vmem %s0, 48
  %v17 = vld [vmem:[%s16] sm:$0xff]
  %s18 = scalar_lea.vmem %s1, 16
  %19 = vst [vmem:[%s18] sm:$0xff] %v17
  %s20 = scalar_lea.vmem %s0, 144
  %v21 = vld [vmem:[%s20] sm:$0xff]
  %s22 = scalar_lea.vmem %s1, 48
  %23 = vst [vmem:[%s22] sm:$0xff] %v21
  %s24 = scalar_lea.vmem %s0, 72
  %v25 = vld [vmem:[%s24] sm:$0xff]
  %s26 = scalar_lea.vmem %s1, 24
  %27 = vst [vmem:[%s26] sm:$0xff] %v25
  %s28 = scalar_lea.vmem %s0, 168
  %v29 = vld [vmem:[%s28] sm:$0xff]
  %s30 = scalar_lea.vmem %s1, 56
  %31 = vst [vmem:[%s30] sm:$0xff] %v29

// kernel: split.90
$region0: #{split.90}
  #allocation0 [shape = 'u32[2048]{0}', space=vmem, size = 0x2000, scoped, tag = 'scoped memory for split.90']
  #allocation1 [shape = 'u32[2048]{0}', space=vmem, size = 0x2000, scoped, tag = 'scoped memory for split.90']
  #allocation2 [shape = 'u32[2048]{0}', space=vmem, size = 0x2000, scoped, tag = 'scoped memory for split.90']
  #allocation3 [shape = 'u32[2048]{0}', space=vmem, size = 0x2000, scoped, tag = 'scoped memory for split.90']
  #allocation4 [shape = 'u32[2048]{0}', space=vmem, size = 0x2000, scoped, tag = 'scoped memory for split.90']
  #allocation5 [shape = 's32[1]{0}', space=sflag, size = 0x4, scoped, tag = 'scoped memory for split.90']
  %s0 = inlined_call_operand.vmem [shape: f32[2,32,384], index: 0, kind: input, shape index: {}]
  %s1 = inlined_call_operand.vmem [shape: f32[2,32,367], index: 1, kind: output, shape index: {}]
  %v2 = vld [vmem:[%s0] sm:$0xff]
  %s3 = scalar_lea.vmem %s0, 8
  %v4 = vld [vmem:[%s3] sm:$0xff]
  %v5 = vlaneseq
  %v6 = vand.u32 %v5, 127
  %vm7 = vcmp.lt.s32.totalorder %v6, 17
  %v8 = vsel %vm7, %v4, %v2
  %9 = vrot.lane.b32.xlu0 %v8, 111
  %v10 = vpop.permute.xlu0 %9
  %11 = vst [vmem:[%s1] sm:$0xff] %v10
  %s12 = scalar_lea.vmem %s0, 96
  %v13 = vld [vmem:[%s12] sm:$0xff]
  %s14 = scalar_lea.vmem %s0, 104
  %v15 = vld [vmem:[%s14] sm:$0xff]
  %v16 = vlaneseq
  %v17 = vand.u32 %v16, 127
  %vm18 = vcmp.lt.s32.totalorder %v17, 17
  %v19 = vsel %vm18, %v15, %v13
  %20 = vrot.lane.b32.xlu0 %v19, 111
  %v21 = vpop.permute.xlu0 %20
  %s22 = scalar_lea.vmem %s1, 96
  %23 = vst [vmem:[%s22] sm:$0xff] %v21
  %s24 = scalar_lea.vmem %s0, 24
  %v25 = vld [vmem:[%s24] sm:$0xff]
  %s26 = scalar_lea.vmem %s0, 32
  %v27 = vld [vmem:[%s26] sm:$0xff]
  %v28 = vlaneseq
  %v29 = vand.u32 %v28, 127
  %vm30 = vcmp.lt.s32.totalorder %v29, 17
  %v31 = vsel %vm30, %v27, %v25
  %32 = vrot.lane.b32.xlu0 %v31, 111
  %v33 = vpop.permute.xlu0 %32
  %s34 = scalar_lea.vmem %s1, 24
  %35 = vst [vmem:[%s34] sm:$0xff] %v33
  %s36 = scalar_lea.vmem %s0, 120
  %v37 = vld [vmem:[%s36] sm:$0xff]
  %s38 = scalar_lea.vmem %s0, 128
  %v39 = vld [vmem:[%s38] sm:$0xff]
  %v40 = vlaneseq
  %v41 = vand.u32 %v40, 127
  %vm42 = vcmp.lt.s32.totalorder %v41, 17
  %v43 = vsel %vm42, %v39, %v37
  %44 = vrot.lane.b32.xlu0 %v43, 111
  %v45 = vpop.permute.xlu0 %44
  %s46 = scalar_lea.vmem %s1, 120
  %47 = vst [vmem:[%s46] sm:$0xff] %v45
  %s48 = scalar_lea.vmem %s0, 48
  %v49 = vld [vmem:[%s48] sm:$0xff]
  %s50 = scalar_lea.vmem %s0, 56
  %v51 = vld [vmem:[%s50] sm:$0xff]
  %v52 = vlaneseq
  %v53 = vand.u32 %v52, 127
  %vm54 = vcmp.lt.s32.totalorder %v53, 17
  %v55 = vsel %vm54, %v51, %v49
  %56 = vrot.lane.b32.xlu0 %v55, 111
  %v57 = vpop.permute.xlu0 %56
  %s58 = scalar_lea.vmem %s1, 48
  %59 = vst [vmem:[%s58] sm:$0xff] %v57
  %s60 = scalar_lea.vmem %s0, 144
  %v61 = vld [vmem:[%s60] sm:$0xff]
  %s62 = scalar_lea.vmem %s0, 152
  %v63 = vld [vmem:[%s62] sm:$0xff]
  %v64 = vlaneseq
  %v65 = vand.u32 %v64, 127
  %vm66 = vcmp.lt.s32.totalorder %v65, 17
  %v67 = vsel %vm66, %v63, %v61
  %68 = vrot.lane.b32.xlu0 %v67, 111
  %v69 = vpop.permute.xlu0 %68
  %s70 = scalar_lea.vmem %s1, 144
  %71 = vst [vmem:[%s70] sm:$0xff] %v69
  %s72 = scalar_lea.vmem %s0, 72
  %v73 = vld [vmem:[%s72] sm:$0xff]
  %s74 = scalar_lea.vmem %s0, 80
  %v75 = vld [vmem:[%s74] sm:$0xff]
  %v76 = vlaneseq
  %v77 = vand.u32 %v76, 127
  %vm78 = vcmp.lt.s32.totalorder %v77, 17
  %v79 = vsel %vm78, %v75, %v73
  %80 = vrot.lane.b32.xlu0 %v79, 111
  %v81 = vpop.permute.xlu0 %80
  %s82 = scalar_lea.vmem %s1, 72
  %83 = vst [vmem:[%s82] sm:$0xff] %v81
  %s84 = scalar_lea.vmem %s0, 168
  %v85 = vld [vmem:[%s84] sm:$0xff]
  %s86 = scalar_lea.vmem %s0, 176
  %v87 = vld [vmem:[%s86] sm:$0xff]
  %v88 = vlaneseq
  %v89 = vand.u32 %v88, 127
  %vm90 = vcmp.lt.s32.totalorder %v89, 17
  %v91 = vsel %vm90, %v87, %v85
  %92 = vrot.lane.b32.xlu0 %v91, 111
  %v93 = vpop.permute.xlu0 %92
  %s94 = scalar_lea.vmem %s1, 168
  %95 = vst [vmem:[%s94] sm:$0xff] %v93
  %s96 = scalar_lea.vmem %s0, 16
  %v97 = vld [vmem:[%s96] sm:$0xff]
  %v98 = vlaneseq
  %v99 = vand.u32 %v98, 127
  %vm100 = vcmp.lt.s32.totalorder %v99, 17
  %v101 = vsel %vm100, %v97, %v4
  %102 = vrot.lane.b32.xlu0 %v101, 111
  %v103 = vpop.permute.xlu0 %102
  %s104 = scalar_lea.vmem %s1, 8
  %105 = vst [vmem:[%s104] sm:$0xff] %v103
  %s106 = scalar_lea.vmem %s0, 112
  %v107 = vld [vmem:[%s106] sm:$0xff]
  %v108 = vlaneseq
  %v109 = vand.u32 %v108, 127
  %vm110 = vcmp.lt.s32.totalorder %v109, 17
  %v111 = vsel %vm110, %v107, %v15
  %112 = vrot.lane.b32.xlu0 %v111, 111
  %v113 = vpop.permute.xlu0 %112
  %s114 = scalar_lea.vmem %s1, 104
  %115 = vst [vmem:[%s114] sm:$0xff] %v113
  %s116 = scalar_lea.vmem %s0, 40
  %v117 = vld [vmem:[%s116] sm:$0xff]
  %v118 = vlaneseq
  %v119 = vand.u32 %v118, 127
  %vm120 = vcmp.lt.s32.totalorder %v119, 17
  %v121 = vsel %vm120, %v117, %v27
  %122 = vrot.lane.b32.xlu0 %v121, 111
  %v123 = vpop.permute.xlu0 %122
  %s124 = scalar_lea.vmem %s1, 32
  %125 = vst [vmem:[%s124] sm:$0xff] %v123
  %s126 = scalar_lea.vmem %s0, 136
  %v127 = vld [vmem:[%s126] sm:$0xff]
  %v128 = vlaneseq
  %v129 = vand.u32 %v128, 127
  %vm130 = vcmp.lt.s32.totalorder %v129, 17
  %v131 = vsel %vm130, %v127, %v39
  %132 = vrot.lane.b32.xlu0 %v131, 111
  %v133 = vpop.permute.xlu0 %132
  %s134 = scalar_lea.vmem %s1, 128
  %135 = vst [vmem:[%s134] sm:$0xff] %v133
  %s136 = scalar_lea.vmem %s0, 64
  %v137 = vld [vmem:[%s136] sm:$0xff]
  %v138 = vlaneseq
  %v139 = vand.u32 %v138, 127
  %vm140 = vcmp.lt.s32.totalorder %v139, 17
  %v141 = vsel %vm140, %v137, %v51
  %142 = vrot.lane.b32.xlu0 %v141, 111
  %v143 = vpop.permute.xlu0 %142
  %s144 = scalar_lea.vmem %s1, 56
  %145 = vst [vmem:[%s144] sm:$0xff] %v143
  %s146 = scalar_lea.vmem %s0, 160
  %v147 = vld [vmem:[%s146] sm:$0xff]
  %v148 = vlaneseq
  %v149 = vand.u32 %v148, 127
  %vm150 = vcmp.lt.s32.totalorder %v149, 17
  %v151 = vsel %vm150, %v147, %v63
  %152 = vrot.lane.b32.xlu0 %v151, 111
  %v153 = vpop.permute.xlu0 %152
  %s154 = scalar_lea.vmem %s1, 152
  %155 = vst [vmem:[%s154] sm:$0xff] %v153
  %s156 = scalar_lea.vmem %s0, 88
  %v157 = vld [vmem:[%s156] sm:$0xff]
  %v158 = vlaneseq
  %v159 = vand.u32 %v158, 127
  %vm160 = vcmp.lt.s32.totalorder %v159, 17
  %v161 = vsel %vm160, %v157, %v75
  %162 = vrot.lane.b32.xlu0 %v161, 111
  %v163 = vpop.permute.xlu0 %162
  %s164 = scalar_lea.vmem %s1, 80
  %165 = vst [vmem:[%s164] sm:$0xff] %v163
  %s166 = scalar_lea.vmem %s0, 184
  %v167 = vld [vmem:[%s166] sm:$0xff]
  %v168 = vlaneseq
  %v169 = vand.u32 %v168, 127
  %vm170 = vcmp.lt.s32.totalorder %v169, 17
  %v171 = vsel %vm170, %v167, %v87
  %172 = vrot.lane.b32.xlu0 %v171, 111
  %v173 = vpop.permute.xlu0 %172
  %s174 = scalar_lea.vmem %s1, 176
  %175 = vst [vmem:[%s174] sm:$0xff] %v173
  %v176 = vlaneseq
  %v177 = vand.u32 %v176, 127
  %vm178 = vcmp.lt.s32.totalorder %v177, 17
  %v179 = vsel %vm178, 0, %v97
  %180 = vrot.lane.b32.xlu0 %v179, 111
  %v181 = vpop.permute.xlu0 %180
  %s182 = scalar_lea.vmem %s1, 16
  %183 = vst [vmem:[%s182] sm:$0xff] %v181
  %v184 = vlaneseq
  %v185 = vand.u32 %v184, 127
  %vm186 = vcmp.lt.s32.totalorder %v185, 17
  %v187 = vsel %vm186, 0, %v107
  %188 = vrot.lane.b32.xlu0 %v187, 111
  %v189 = vpop.permute.xlu0 %188
  %s190 = scalar_lea.vmem %s1, 112
  %191 = vst [vmem:[%s190] sm:$0xff] %v189
  %v192 = vlaneseq
  %v193 = vand.u32 %v192, 127
  %vm194 = vcmp.lt.s32.totalorder %v193, 17
  %v195 = vsel %vm194, 0, %v117
  %196 = vrot.lane.b32.xlu0 %v195, 111
  %v197 = vpop.permute.xlu0 %196
  %s198 = scalar_lea.vmem %s1, 40
  %199 = vst [vmem:[%s198] sm:$0xff] %v197
  %v200 = vlaneseq
  %v201 = vand.u32 %v200, 127
  %vm202 = vcmp.lt.s32.totalorder %v201, 17
  %v203 = vsel %vm202, 0, %v127
  %204 = vrot.lane.b32.xlu0 %v203, 111
  %v205 = vpop.permute.xlu0 %204
  %s206 = scalar_lea.vmem %s1, 136
  %207 = vst [vmem:[%s206] sm:$0xff] %v205
  %v208 = vlaneseq
  %v209 = vand.u32 %v208, 127
  %vm210 = vcmp.lt.s32.totalorder %v209, 17
  %v211 = vsel %vm210, 0, %v137
  %212 = vrot.lane.b32.xlu0 %v211, 111
  %v213 = vpop.permute.xlu0 %212
  %s214 = scalar_lea.vmem %s1, 64
  %215 = vst [vmem:[%s214] sm:$0xff] %v213
  %v216 = vlaneseq
  %v217 = vand.u32 %v216, 127
  %vm218 = vcmp.lt.s32.totalorder %v217, 17
  %v219 = vsel %vm218, 0, %v147
  %220 = vrot.lane.b32.xlu0 %v219, 111
  %v221 = vpop.permute.xlu0 %220
  %s222 = scalar_lea.vmem %s1, 160
  %223 = vst [vmem:[%s222] sm:$0xff] %v221
  %v224 = vlaneseq
  %v225 = vand.u32 %v224, 127
  %vm226 = vcmp.lt.s32.totalorder %v225, 17
  %v227 = vsel %vm226, 0, %v157
  %228 = vrot.lane.b32.xlu0 %v227, 111
  %v229 = vpop.permute.xlu0 %228
  %s230 = scalar_lea.vmem %s1, 88
  %231 = vst [vmem:[%s230] sm:$0xff] %v229
  %v232 = vlaneseq
  %v233 = vand.u32 %v232, 127
  %vm234 = vcmp.lt.s32.totalorder %v233, 17
  %v235 = vsel %vm234, 0, %v167
  %236 = vrot.lane.b32.xlu0 %v235, 111
  %v237 = vpop.permute.xlu0 %236
  %s238 = scalar_lea.vmem %s1, 184
  %239 = vst [vmem:[%s238] sm:$0xff] %v237

// kernel: split.89
$region0: #{split.89}
  #allocation0 [shape = 'u32[2048]{0}', space=vmem, size = 0x2000, scoped, tag = 'scoped memory for split.89']
  #allocation1 [shape = 'u32[2048]{0}', space=vmem, size = 0x2000, scoped, tag = 'scoped memory for split.89']
  #allocation2 [shape = 'u32[2048]{0}', space=vmem, size = 0x2000, scoped, tag = 'scoped memory for split.89']
  #allocation3 [shape = 'u32[2048]{0}', space=vmem, size = 0x2000, scoped, tag = 'scoped memory for split.89']
  #allocation4 [shape = 'u32[2048]{0}', space=vmem, size = 0x2000, scoped, tag = 'scoped memory for split.89']
  #allocation5 [shape = 's32[1]{0}', space=sflag, size = 0x4, scoped, tag = 'scoped memory for split.89']
  %s0 = inlined_call_operand.vmem [shape: f32[2,32,384], index: 0, kind: input, shape index: {}]
  %s1 = inlined_call_operand.vmem [shape: f32[2,32,1], index: 1, kind: output, shape index: {}]
  %v2 = vld [vmem:[%s0] sm:$0xff]
  %3 = vst [vmem:[%s1] sm:$0xff] %v2
  %s4 = scalar_lea.vmem %s0, 96
  %v5 = vld [vmem:[%s4] sm:$0xff]
  %s6 = scalar_lea.vmem %s1, 32
  %7 = vst [vmem:[%s6] sm:$0xff] %v5
  %s8 = scalar_lea.vmem %s0, 24
  %v9 = vld [vmem:[%s8] sm:$0xff]
  %s10 = scalar_lea.vmem %s1, 8
  %11 = vst [vmem:[%s10] sm:$0xff] %v9
  %s12 = scalar_lea.vmem %s0, 120
  %v13 = vld [vmem:[%s12] sm:$0xff]
  %s14 = scalar_lea.vmem %s1, 40
  %15 = vst [vmem:[%s14] sm:$0xff] %v13
  %s16 = scalar_lea.vmem %s0, 48
  %v17 = vld [vmem:[%s16] sm:$0xff]
  %s18 = scalar_lea.vmem %s1, 16
  %19 = vst [vmem:[%s18] sm:$0xff] %v17
  %s20 = scalar_lea.vmem %s0, 144
  %v21 = vld [vmem:[%s20] sm:$0xff]
  %s22 = scalar_lea.vmem %s1, 48
  %23 = vst [vmem:[%s22] sm:$0xff] %v21
  %s24 = scalar_lea.vmem %s0, 72
  %v25 = vld [vmem:[%s24] sm:$0xff]
  %s26 = scalar_lea.vmem %s1, 24
  %27 = vst [vmem:[%s26] sm:$0xff] %v25
  %s28 = scalar_lea.vmem %s0, 168
  %v29 = vld [vmem:[%s28] sm:$0xff]
  %s30 = scalar_lea.vmem %s1, 56
  %31 = vst [vmem:[%s30] sm:$0xff] %v29

// kernel: split.88
$region0: #{split.88}
  #allocation0 [shape = 'u32[2048]{0}', space=vmem, size = 0x2000, scoped, tag = 'scoped memory for split.88']
  #allocation1 [shape = 'u32[2048]{0}', space=vmem, size = 0x2000, scoped, tag = 'scoped memory for split.88']
  #allocation2 [shape = 'u32[2048]{0}', space=vmem, size = 0x2000, scoped, tag = 'scoped memory for split.88']
  #allocation3 [shape = 'u32[2048]{0}', space=vmem, size = 0x2000, scoped, tag = 'scoped memory for split.88']
  #allocation4 [shape = 'u32[2048]{0}', space=vmem, size = 0x2000, scoped, tag = 'scoped memory for split.88']
  #allocation5 [shape = 's32[1]{0}', space=sflag, size = 0x4, scoped, tag = 'scoped memory for split.88']
  %s0 = inlined_call_operand.vmem [shape: f32[2,32,384], index: 0, kind: input, shape index: {}]
  %s1 = inlined_call_operand.vmem [shape: f32[2,32,383], index: 1, kind: output, shape index: {}]
  %v2 = vld [vmem:[%s0] sm:$0xff]
  %s3 = scalar_lea.vmem %s0, 8
  %v4 = vld [vmem:[%s3] sm:$0xff]
  %v5 = vlaneseq
  %v6 = vand.u32 %v5, 127
  %vm7 = vcmp.lt.s32.totalorder %v6, 1
  %v8 = vsel %vm7, %v4, %v2
  %9 = vrot.lane.b32.xlu0 %v8, 127
  %v10 = vpop.permute.xlu0 %9
  %11 = vst [vmem:[%s1] sm:$0xff] %v10
  %s12 = scalar_lea.vmem %s0, 96
  %v13 = vld [vmem:[%s12] sm:$0xff]
  %s14 = scalar_lea.vmem %s0, 104
  %v15 = vld [vmem:[%s14] sm:$0xff]
  %v16 = vlaneseq
  %v17 = vand.u32 %v16, 127
  %vm18 = vcmp.lt.s32.totalorder %v17, 1
  %v19 = vsel %vm18, %v15, %v13
  %20 = vrot.lane.b32.xlu0 %v19, 127
  %v21 = vpop.permute.xlu0 %20
  %s22 = scalar_lea.vmem %s1, 96
  %23 = vst [vmem:[%s22] sm:$0xff] %v21
  %s24 = scalar_lea.vmem %s0, 24
  %v25 = vld [vmem:[%s24] sm:$0xff]
  %s26 = scalar_lea.vmem %s0, 32
  %v27 = vld [vmem:[%s26] sm:$0xff]
  %v28 = vlaneseq
  %v29 = vand.u32 %v28, 127
  %vm30 = vcmp.lt.s32.totalorder %v29, 1
  %v31 = vsel %vm30, %v27, %v25
  %32 = vrot.lane.b32.xlu0 %v31, 127
  %v33 = vpop.permute.xlu0 %32
  %s34 = scalar_lea.vmem %s1, 24
  %35 = vst [vmem:[%s34] sm:$0xff] %v33
  %s36 = scalar_lea.vmem %s0, 120
  %v37 = vld [vmem:[%s36] sm:$0xff]
  %s38 = scalar_lea.vmem %s0, 128
  %v39 = vld [vmem:[%s38] sm:$0xff]
  %v40 = vlaneseq
  %v41 = vand.u32 %v40, 127
  %vm42 = vcmp.lt.s32.totalorder %v41, 1
  %v43 = vsel %vm42, %v39, %v37
  %44 = vrot.lane.b32.xlu0 %v43, 127
  %v45 = vpop.permute.xlu0 %44
  %s46 = scalar_lea.vmem %s1, 120
  %47 = vst [vmem:[%s46] sm:$0xff] %v45
  %s48 = scalar_lea.vmem %s0, 48
  %v49 = vld [vmem:[%s48] sm:$0xff]
  %s50 = scalar_lea.vmem %s0, 56
  %v51 = vld [vmem:[%s50] sm:$0xff]
  %v52 = vlaneseq
  %v53 = vand.u32 %v52, 127
  %vm54 = vcmp.lt.s32.totalorder %v53, 1
  %v55 = vsel %vm54, %v51, %v49
  %56 = vrot.lane.b32.xlu0 %v55, 127
  %v57 = vpop.permute.xlu0 %56
  %s58 = scalar_lea.vmem %s1, 48
  %59 = vst [vmem:[%s58] sm:$0xff] %v57
  %s60 = scalar_lea.vmem %s0, 144
  %v61 = vld [vmem:[%s60] sm:$0xff]
  %s62 = scalar_lea.vmem %s0, 152
  %v63 = vld [vmem:[%s62] sm:$0xff]
  %v64 = vlaneseq
  %v65 = vand.u32 %v64, 127
  %vm66 = vcmp.lt.s32.totalorder %v65, 1
  %v67 = vsel %vm66, %v63, %v61
  %68 = vrot.lane.b32.xlu0 %v67, 127
  %v69 = vpop.permute.xlu0 %68
  %s70 = scalar_lea.vmem %s1, 144
  %71 = vst [vmem:[%s70] sm:$0xff] %v69
  %s72 = scalar_lea.vmem %s0, 72
  %v73 = vld [vmem:[%s72] sm:$0xff]
  %s74 = scalar_lea.vmem %s0, 80
  %v75 = vld [vmem:[%s74] sm:$0xff]
  %v76 = vlaneseq
  %v77 = vand.u32 %v76, 127
  %vm78 = vcmp.lt.s32.totalorder %v77, 1
  %v79 = vsel %vm78, %v75, %v73
  %80 = vrot.lane.b32.xlu0 %v79, 127
  %v81 = vpop.permute.xlu0 %80
  %s82 = scalar_lea.vmem %s1, 72
  %83 = vst [vmem:[%s82] sm:$0xff] %v81
  %s84 = scalar_lea.vmem %s0, 168
  %v85 = vld [vmem:[%s84] sm:$0xff]
  %s86 = scalar_lea.vmem %s0, 176
  %v87 = vld [vmem:[%s86] sm:$0xff]
  %v88 = vlaneseq
  %v89 = vand.u32 %v88, 127
  %vm90 = vcmp.lt.s32.totalorder %v89, 1
  %v91 = vsel %vm90, %v87, %v85
  %92 = vrot.lane.b32.xlu0 %v91, 127
  %v93 = vpop.permute.xlu0 %92
  %s94 = scalar_lea.vmem %s1, 168
  %95 = vst [vmem:[%s94] sm:$0xff] %v93
  %s96 = scalar_lea.vmem %s0, 16
  %v97 = vld [vmem:[%s96] sm:$0xff]
  %v98 = vlaneseq
  %v99 = vand.u32 %v98, 127
  %vm100 = vcmp.lt.s32.totalorder %v99, 1
  %v101 = vsel %vm100, %v97, %v4
  %102 = vrot.lane.b32.xlu0 %v101, 127
  %v103 = vpop.permute.xlu0 %102
  %s104 = scalar_lea.vmem %s1, 8
  %105 = vst [vmem:[%s104] sm:$0xff] %v103
  %s106 = scalar_lea.vmem %s0, 112
  %v107 = vld [vmem:[%s106] sm:$0xff]
  %v108 = vlaneseq
  %v109 = vand.u32 %v108, 127
  %vm110 = vcmp.lt.s32.totalorder %v109, 1
  %v111 = vsel %vm110, %v107, %v15
  %112 = vrot.lane.b32.xlu0 %v111, 127
  %v113 = vpop.permute.xlu0 %112
  %s114 = scalar_lea.vmem %s1, 104
  %115 = vst [vmem:[%s114] sm:$0xff] %v113
  %s116 = scalar_lea.vmem %s0, 40
  %v117 = vld [vmem:[%s116] sm:$0xff]
  %v118 = vlaneseq
  %v119 = vand.u32 %v118, 127
  %vm120 = vcmp.lt.s32.totalorder %v119, 1
  %v121 = vsel %vm120, %v117, %v27
  %122 = vrot.lane.b32.xlu0 %v121, 127
  %v123 = vpop.permute.xlu0 %122
  %s124 = scalar_lea.vmem %s1, 32
  %125 = vst [vmem:[%s124] sm:$0xff] %v123
  %s126 = scalar_lea.vmem %s0, 136
  %v127 = vld [vmem:[%s126] sm:$0xff]
  %v128 = vlaneseq
  %v129 = vand.u32 %v128, 127
  %vm130 = vcmp.lt.s32.totalorder %v129, 1
  %v131 = vsel %vm130, %v127, %v39
  %132 = vrot.lane.b32.xlu0 %v131, 127
  %v133 = vpop.permute.xlu0 %132
  %s134 = scalar_lea.vmem %s1, 128
  %135 = vst [vmem:[%s134] sm:$0xff] %v133
  %s136 = scalar_lea.vmem %s0, 64
  %v137 = vld [vmem:[%s136] sm:$0xff]
  %v138 = vlaneseq
  %v139 = vand.u32 %v138, 127
  %vm140 = vcmp.lt.s32.totalorder %v139, 1
  %v141 = vsel %vm140, %v137, %v51
  %142 = vrot.lane.b32.xlu0 %v141, 127
  %v143 = vpop.permute.xlu0 %142
  %s144 = scalar_lea.vmem %s1, 56
  %145 = vst [vmem:[%s144] sm:$0xff] %v143
  %s146 = scalar_lea.vmem %s0, 160
  %v147 = vld [vmem:[%s146] sm:$0xff]
  %v148 = vlaneseq
  %v149 = vand.u32 %v148, 127
  %vm150 = vcmp.lt.s32.totalorder %v149, 1
  %v151 = vsel %vm150, %v147, %v63
  %152 = vrot.lane.b32.xlu0 %v151, 127
  %v153 = vpop.permute.xlu0 %152
  %s154 = scalar_lea.vmem %s1, 152
  %155 = vst [vmem:[%s154] sm:$0xff] %v153
  %s156 = scalar_lea.vmem %s0, 88
  %v157 = vld [vmem:[%s156] sm:$0xff]
  %v158 = vlaneseq
  %v159 = vand.u32 %v158, 127
  %vm160 = vcmp.lt.s32.totalorder %v159, 1
  %v161 = vsel %vm160, %v157, %v75
  %162 = vrot.lane.b32.xlu0 %v161, 127
  %v163 = vpop.permute.xlu0 %162
  %s164 = scalar_lea.vmem %s1, 80
  %165 = vst [vmem:[%s164] sm:$0xff] %v163
  %s166 = scalar_lea.vmem %s0, 184
  %v167 = vld [vmem:[%s166] sm:$0xff]
  %v168 = vlaneseq
  %v169 = vand.u32 %v168, 127
  %vm170 = vcmp.lt.s32.totalorder %v169, 1
  %v171 = vsel %vm170, %v167, %v87
  %172 = vrot.lane.b32.xlu0 %v171, 127
  %v173 = vpop.permute.xlu0 %172
  %s174 = scalar_lea.vmem %s1, 176
  %175 = vst [vmem:[%s174] sm:$0xff] %v173
  %v176 = vlaneseq
  %v177 = vand.u32 %v176, 127
  %vm178 = vcmp.lt.s32.totalorder %v177, 1
  %v179 = vsel %vm178, 0, %v97
  %180 = vrot.lane.b32.xlu0 %v179, 127
  %v181 = vpop.permute.xlu0 %180
  %s182 = scalar_lea.vmem %s1, 16
  %183 = vst [vmem:[%s182] sm:$0xff] %v181
  %v184 = vlaneseq
  %v185 = vand.u32 %v184, 127
  %vm186 = vcmp.lt.s32.totalorder %v185, 1
  %v187 = vsel %vm186, 0, %v107
  %188 = vrot.lane.b32.xlu0 %v187, 127
  %v189 = vpop.permute.xlu0 %188
  %s190 = scalar_lea.vmem %s1, 112
  %191 = vst [vmem:[%s190] sm:$0xff] %v189
  %v192 = vlaneseq
  %v193 = vand.u32 %v192, 127
  %vm194 = vcmp.lt.s32.totalorder %v193, 1
  %v195 = vsel %vm194, 0, %v117
  %196 = vrot.lane.b32.xlu0 %v195, 127
  %v197 = vpop.permute.xlu0 %196
  %s198 = scalar_lea.vmem %s1, 40
  %199 = vst [vmem:[%s198] sm:$0xff] %v197
  %v200 = vlaneseq
  %v201 = vand.u32 %v200, 127
  %vm202 = vcmp.lt.s32.totalorder %v201, 1
  %v203 = vsel %vm202, 0, %v127
  %204 = vrot.lane.b32.xlu0 %v203, 127
  %v205 = vpop.permute.xlu0 %204
  %s206 = scalar_lea.vmem %s1, 136
  %207 = vst [vmem:[%s206] sm:$0xff] %v205
  %v208 = vlaneseq
  %v209 = vand.u32 %v208, 127
  %vm210 = vcmp.lt.s32.totalorder %v209, 1
  %v211 = vsel %vm210, 0, %v137
  %212 = vrot.lane.b32.xlu0 %v211, 127
  %v213 = vpop.permute.xlu0 %212
  %s214 = scalar_lea.vmem %s1, 64
  %215 = vst [vmem:[%s214] sm:$0xff] %v213
  %v216 = vlaneseq
  %v217 = vand.u32 %v216, 127
  %vm218 = vcmp.lt.s32.totalorder %v217, 1
  %v219 = vsel %vm218, 0, %v147
  %220 = vrot.lane.b32.xlu0 %v219, 127
  %v221 = vpop.permute.xlu0 %220
  %s222 = scalar_lea.vmem %s1, 160
  %223 = vst [vmem:[%s222] sm:$0xff] %v221
  %v224 = vlaneseq
  %v225 = vand.u32 %v224, 127
  %vm226 = vcmp.lt.s32.totalorder %v225, 1
  %v227 = vsel %vm226, 0, %v157
  %228 = vrot.lane.b32.xlu0 %v227, 127
  %v229 = vpop.permute.xlu0 %228
  %s230 = scalar_lea.vmem %s1, 88
  %231 = vst [vmem:[%s230] sm:$0xff] %v229
  %v232 = vlaneseq
  %v233 = vand.u32 %v232, 127
  %vm234 = vcmp.lt.s32.totalorder %v233, 1
  %v235 = vsel %vm234, 0, %v167
  %236 = vrot.lane.b32.xlu0 %v235, 127
  %v237 = vpop.permute.xlu0 %236
  %s238 = scalar_lea.vmem %s1, 184
  %239 = vst [vmem:[%s238] sm:$0xff] %v237

// kernel: split.86
$region0: #{split.86}
  #allocation0 [shape = 'u32[2048]{0}', space=vmem, size = 0x2000, scoped, tag = 'scoped memory for split.86']
  #allocation1 [shape = 'u32[2048]{0}', space=vmem, size = 0x2000, scoped, tag = 'scoped memory for split.86']
  #allocation2 [shape = 'u32[2048]{0}', space=vmem, size = 0x2000, scoped, tag = 'scoped memory for split.86']
  #allocation3 [shape = 'u32[2048]{0}', space=vmem, size = 0x2000, scoped, tag = 'scoped memory for split.86']
  #allocation4 [shape = 'u32[2048]{0}', space=vmem, size = 0x2000, scoped, tag = 'scoped memory for split.86']
  #allocation5 [shape = 's32[1]{0}', space=sflag, size = 0x4, scoped, tag = 'scoped memory for split.86']
  %s0 = inlined_call_operand.vmem [shape: f32[2,32,384], index: 0, kind: input, shape index: {}]
  %s1 = inlined_call_operand.vmem [shape: f32[2,32,1], index: 1, kind: output, shape index: {}]
  %s2 = scalar_lea.vmem %s0, 16
  %s3 = scalar_lea.vmem %s0, 16
  %s4 = scalar_lea.vmem %s0, 16
  %v5 = vld [vmem:[%s4] sm:$0xff]
  %v6 = vlaneseq
  %v7 = vand.u32 %v6, 127
  %vm8 = vcmp.lt.s32.totalorder %v7, 127
  %v9 = vsel %vm8, 0, %v5
  %10 = vrot.lane.b32.xlu0 %v9, 1
  %v11 = vpop.permute.xlu0 %10
  %12 = vst [vmem:[%s1] sm:$0xff] %v11
  %s13 = scalar_lea.vmem %s4, 96
  %v14 = vld [vmem:[%s13] sm:$0xff]
  %v15 = vlaneseq
  %v16 = vand.u32 %v15, 127
  %vm17 = vcmp.lt.s32.totalorder %v16, 127
  %v18 = vsel %vm17, 0, %v14
  %19 = vrot.lane.b32.xlu0 %v18, 1
  %v20 = vpop.permute.xlu0 %19
  %s21 = scalar_lea.vmem %s1, 32
  %22 = vst [vmem:[%s21] sm:$0xff] %v20
  %s23 = scalar_lea.vmem %s4, 24
  %v24 = vld [vmem:[%s23] sm:$0xff]
  %v25 = vlaneseq
  %v26 = vand.u32 %v25, 127
  %vm27 = vcmp.lt.s32.totalorder %v26, 127
  %v28 = vsel %vm27, 0, %v24
  %29 = vrot.lane.b32.xlu0 %v28, 1
  %v30 = vpop.permute.xlu0 %29
  %s31 = scalar_lea.vmem %s1, 8
  %32 = vst [vmem:[%s31] sm:$0xff] %v30
  %s33 = scalar_lea.vmem %s4, 120
  %v34 = vld [vmem:[%s33] sm:$0xff]
  %v35 = vlaneseq
  %v36 = vand.u32 %v35, 127
  %vm37 = vcmp.lt.s32.totalorder %v36, 127
  %v38 = vsel %vm37, 0, %v34
  %39 = vrot.lane.b32.xlu0 %v38, 1
  %v40 = vpop.permute.xlu0 %39
  %s41 = scalar_lea.vmem %s1, 40
  %42 = vst [vmem:[%s41] sm:$0xff] %v40
  %s43 = scalar_lea.vmem %s4, 48
  %v44 = vld [vmem:[%s43] sm:$0xff]
  %v45 = vlaneseq
  %v46 = vand.u32 %v45, 127
  %vm47 = vcmp.lt.s32.totalorder %v46, 127
  %v48 = vsel %vm47, 0, %v44
  %49 = vrot.lane.b32.xlu0 %v48, 1
  %v50 = vpop.permute.xlu0 %49
  %s51 = scalar_lea.vmem %s1, 16
  %52 = vst [vmem:[%s51] sm:$0xff] %v50
  %s53 = scalar_lea.vmem %s4, 144
  %v54 = vld [vmem:[%s53] sm:$0xff]
  %v55 = vlaneseq
  %v56 = vand.u32 %v55, 127
  %vm57 = vcmp.lt.s32.totalorder %v56, 127
  %v58 = vsel %vm57, 0, %v54
  %59 = vrot.lane.b32.xlu0 %v58, 1
  %v60 = vpop.permute.xlu0 %59
  %s61 = scalar_lea.vmem %s1, 48
  %62 = vst [vmem:[%s61] sm:$0xff] %v60
  %s63 = scalar_lea.vmem %s4, 72
  %v64 = vld [vmem:[%s63] sm:$0xff]
  %v65 = vlaneseq
  %v66 = vand.u32 %v65, 127
  %vm67 = vcmp.lt.s32.totalorder %v66, 127
  %v68 = vsel %vm67, 0, %v64
  %69 = vrot.lane.b32.xlu0 %v68, 1
  %v70 = vpop.permute.xlu0 %69
  %s71 = scalar_lea.vmem %s1, 24
  %72 = vst [vmem:[%s71] sm:$0xff] %v70
  %s73 = scalar_lea.vmem %s4, 168
  %v74 = vld [vmem:[%s73] sm:$0xff]
  %v75 = vlaneseq
  %v76 = vand.u32 %v75, 127
  %vm77 = vcmp.lt.s32.totalorder %v76, 127
  %v78 = vsel %vm77, 0, %v74
  %79 = vrot.lane.b32.xlu0 %v78, 1
  %v80 = vpop.permute.xlu0 %79
  %s81 = scalar_lea.vmem %s1, 56
  %82 = vst [vmem:[%s81] sm:$0xff] %v80

// kernel: split.84
$region0: #{split.84}
  #allocation0 [shape = 'u32[2048]{0}', space=vmem, size = 0x2000, scoped, tag = 'scoped memory for split.84']
  #allocation1 [shape = 'u32[2048]{0}', space=vmem, size = 0x2000, scoped, tag = 'scoped memory for split.84']
  #allocation2 [shape = 'u32[2048]{0}', space=vmem, size = 0x2000, scoped, tag = 'scoped memory for split.84']
  #allocation3 [shape = 'u32[2048]{0}', space=vmem, size = 0x2000, scoped, tag = 'scoped memory for split.84']
  #allocation4 [shape = 'u32[2048]{0}', space=vmem, size = 0x2000, scoped, tag = 'scoped memory for split.84']
  #allocation5 [shape = 's32[1]{0}', space=sflag, size = 0x4, scoped, tag = 'scoped memory for split.84']
  %s0 = inlined_call_operand.vmem [shape: f32[2,32,384], index: 0, kind: input, shape index: {}]
  %s1 = inlined_call_operand.vmem [shape: f32[2,32,17], index: 1, kind: output, shape index: {}]
  %s2 = scalar_lea.vmem %s0, 16
  %s3 = scalar_lea.vmem %s0, 16
  %s4 = scalar_lea.vmem %s0, 16
  %v5 = vld [vmem:[%s4] sm:$0xff]
  %v6 = vlaneseq
  %v7 = vand.u32 %v6, 127
  %vm8 = vcmp.lt.s32.totalorder %v7, 111
  %v9 = vsel %vm8, 0, %v5
  %10 = vrot.lane.b32.xlu0 %v9, 17
  %v11 = vpop.permute.xlu0 %10
  %12 = vst [vmem:[%s1] sm:$0xff] %v11
  %s13 = scalar_lea.vmem %s4, 96
  %v14 = vld [vmem:[%s13] sm:$0xff]
  %v15 = vlaneseq
  %v16 = vand.u32 %v15, 127
  %vm17 = vcmp.lt.s32.totalorder %v16, 111
  %v18 = vsel %vm17, 0, %v14
  %19 = vrot.lane.b32.xlu0 %v18, 17
  %v20 = vpop.permute.xlu0 %19
  %s21 = scalar_lea.vmem %s1, 32
  %22 = vst [vmem:[%s21] sm:$0xff] %v20
  %s23 = scalar_lea.vmem %s4, 24
  %v24 = vld [vmem:[%s23] sm:$0xff]
  %v25 = vlaneseq
  %v26 = vand.u32 %v25, 127
  %vm27 = vcmp.lt.s32.totalorder %v26, 111
  %v28 = vsel %vm27, 0, %v24
  %29 = vrot.lane.b32.xlu0 %v28, 17
  %v30 = vpop.permute.xlu0 %29
  %s31 = scalar_lea.vmem %s1, 8
  %32 = vst [vmem:[%s31] sm:$0xff] %v30
  %s33 = scalar_lea.vmem %s4, 120
  %v34 = vld [vmem:[%s33] sm:$0xff]
  %v35 = vlaneseq
  %v36 = vand.u32 %v35, 127
  %vm37 = vcmp.lt.s32.totalorder %v36, 111
  %v38 = vsel %vm37, 0, %v34
  %39 = vrot.lane.b32.xlu0 %v38, 17
  %v40 = vpop.permute.xlu0 %39
  %s41 = scalar_lea.vmem %s1, 40
  %42 = vst [vmem:[%s41] sm:$0xff] %v40
  %s43 = scalar_lea.vmem %s4, 48
  %v44 = vld [vmem:[%s43] sm:$0xff]
  %v45 = vlaneseq
  %v46 = vand.u32 %v45, 127
  %vm47 = vcmp.lt.s32.totalorder %v46, 111
  %v48 = vsel %vm47, 0, %v44
  %49 = vrot.lane.b32.xlu0 %v48, 17
  %v50 = vpop.permute.xlu0 %49
  %s51 = scalar_lea.vmem %s1, 16
  %52 = vst [vmem:[%s51] sm:$0xff] %v50
  %s53 = scalar_lea.vmem %s4, 144
  %v54 = vld [vmem:[%s53] sm:$0xff]
  %v55 = vlaneseq
  %v56 = vand.u32 %v55, 127
  %vm57 = vcmp.lt.s32.totalorder %v56, 111
  %v58 = vsel %vm57, 0, %v54
  %59 = vrot.lane.b32.xlu0 %v58, 17
  %v60 = vpop.permute.xlu0 %59
  %s61 = scalar_lea.vmem %s1, 48
  %62 = vst [vmem:[%s61] sm:$0xff] %v60
  %s63 = scalar_lea.vmem %s4, 72
  %v64 = vld [vmem:[%s63] sm:$0xff]
  %v65 = vlaneseq
  %v66 = vand.u32 %v65, 127
  %vm67 = vcmp.lt.s32.totalorder %v66, 111
  %v68 = vsel %vm67, 0, %v64
  %69 = vrot.lane.b32.xlu0 %v68, 17
  %v70 = vpop.permute.xlu0 %69
  %s71 = scalar_lea.vmem %s1, 24
  %72 = vst [vmem:[%s71] sm:$0xff] %v70
  %s73 = scalar_lea.vmem %s4, 168
  %v74 = vld [vmem:[%s73] sm:$0xff]
  %v75 = vlaneseq
  %v76 = vand.u32 %v75, 127
  %vm77 = vcmp.lt.s32.totalorder %v76, 111
  %v78 = vsel %vm77, 0, %v74
  %79 = vrot.lane.b32.xlu0 %v78, 17
  %v80 = vpop.permute.xlu0 %79
  %s81 = scalar_lea.vmem %s1, 56
  %82 = vst [vmem:[%s81] sm:$0xff] %v80

// kernel: split.82
$region0: #{split.82}
  #allocation0 [shape = 'u32[2048]{0}', space=vmem, size = 0x2000, scoped, tag = 'scoped memory for split.82']
  #allocation1 [shape = 'u32[2048]{0}', space=vmem, size = 0x2000, scoped, tag = 'scoped memory for split.82']
  #allocation2 [shape = 'u32[2048]{0}', space=vmem, size = 0x2000, scoped, tag = 'scoped memory for split.82']
  #allocation3 [shape = 'u32[2048]{0}', space=vmem, size = 0x2000, scoped, tag = 'scoped memory for split.82']
  #allocation4 [shape = 'u32[2048]{0}', space=vmem, size = 0x2000, scoped, tag = 'scoped memory for split.82']
  #allocation5 [shape = 's32[1]{0}', space=sflag, size = 0x4, scoped, tag = 'scoped memory for split.82']
  %s0 = inlined_call_operand.vmem [shape: f32[2,32,384], index: 0, kind: input, shape index: {}]
  %s1 = inlined_call_operand.vmem [shape: f32[2,32,18], index: 1, kind: output, shape index: {}]
  %s2 = scalar_lea.vmem %s0, 16
  %s3 = scalar_lea.vmem %s0, 16
  %s4 = scalar_lea.vmem %s0, 16
  %v5 = vld [vmem:[%s4] sm:$0xff]
  %v6 = vlaneseq
  %v7 = vand.u32 %v6, 127
  %vm8 = vcmp.lt.s32.totalorder %v7, 110
  %v9 = vsel %vm8, 0, %v5
  %10 = vrot.lane.b32.xlu0 %v9, 18
  %v11 = vpop.permute.xlu0 %10
  %12 = vst [vmem:[%s1] sm:$0xff] %v11
  %s13 = scalar_lea.vmem %s4, 96
  %v14 = vld [vmem:[%s13] sm:$0xff]
  %v15 = vlaneseq
  %v16 = vand.u32 %v15, 127
  %vm17 = vcmp.lt.s32.totalorder %v16, 110
  %v18 = vsel %vm17, 0, %v14
  %19 = vrot.lane.b32.xlu0 %v18, 18
  %v20 = vpop.permute.xlu0 %19
  %s21 = scalar_lea.vmem %s1, 32
  %22 = vst [vmem:[%s21] sm:$0xff] %v20
  %s23 = scalar_lea.vmem %s4, 24
  %v24 = vld [vmem:[%s23] sm:$0xff]
  %v25 = vlaneseq
  %v26 = vand.u32 %v25, 127
  %vm27 = vcmp.lt.s32.totalorder %v26, 110
  %v28 = vsel %vm27, 0, %v24
  %29 = vrot.lane.b32.xlu0 %v28, 18
  %v30 = vpop.permute.xlu0 %29
  %s31 = scalar_lea.vmem %s1, 8
  %32 = vst [vmem:[%s31] sm:$0xff] %v30
  %s33 = scalar_lea.vmem %s4, 120
  %v34 = vld [vmem:[%s33] sm:$0xff]
  %v35 = vlaneseq
  %v36 = vand.u32 %v35, 127
  %vm37 = vcmp.lt.s32.totalorder %v36, 110
  %v38 = vsel %vm37, 0, %v34
  %39 = vrot.lane.b32.xlu0 %v38, 18
  %v40 = vpop.permute.xlu0 %39
  %s41 = scalar_lea.vmem %s1, 40
  %42 = vst [vmem:[%s41] sm:$0xff] %v40
  %s43 = scalar_lea.vmem %s4, 48
  %v44 = vld [vmem:[%s43] sm:$0xff]
  %v45 = vlaneseq
  %v46 = vand.u32 %v45, 127
  %vm47 = vcmp.lt.s32.totalorder %v46, 110
  %v48 = vsel %vm47, 0, %v44
  %49 = vrot.lane.b32.xlu0 %v48, 18
  %v50 = vpop.permute.xlu0 %49
  %s51 = scalar_lea.vmem %s1, 16
  %52 = vst [vmem:[%s51] sm:$0xff] %v50
  %s53 = scalar_lea.vmem %s4, 144
  %v54 = vld [vmem:[%s53] sm:$0xff]
  %v55 = vlaneseq
  %v56 = vand.u32 %v55, 127
  %vm57 = vcmp.lt.s32.totalorder %v56, 110
  %v58 = vsel %vm57, 0, %v54
  %59 = vrot.lane.b32.xlu0 %v58, 18
  %v60 = vpop.permute.xlu0 %59
  %s61 = scalar_lea.vmem %s1, 48
  %62 = vst [vmem:[%s61] sm:$0xff] %v60
  %s63 = scalar_lea.vmem %s4, 72
  %v64 = vld [vmem:[%s63] sm:$0xff]
  %v65 = vlaneseq
  %v66 = vand.u32 %v65, 127
  %vm67 = vcmp.lt.s32.totalorder %v66, 110
  %v68 = vsel %vm67, 0, %v64
  %69 = vrot.lane.b32.xlu0 %v68, 18
  %v70 = vpop.permute.xlu0 %69
  %s71 = scalar_lea.vmem %s1, 24
  %72 = vst [vmem:[%s71] sm:$0xff] %v70
  %s73 = scalar_lea.vmem %s4, 168
  %v74 = vld [vmem:[%s73] sm:$0xff]
  %v75 = vlaneseq
  %v76 = vand.u32 %v75, 127
  %vm77 = vcmp.lt.s32.totalorder %v76, 110
  %v78 = vsel %vm77, 0, %v74
  %79 = vrot.lane.b32.xlu0 %v78, 18
  %v80 = vpop.permute.xlu0 %79
  %s81 = scalar_lea.vmem %s1, 56
  %82 = vst [vmem:[%s81] sm:$0xff] %v80

// kernel: split.80
$region0: #{split.80}
  #allocation0 [shape = 'u32[2048]{0}', space=vmem, size = 0x2000, scoped, tag = 'scoped memory for split.80']
  #allocation1 [shape = 'u32[2048]{0}', space=vmem, size = 0x2000, scoped, tag = 'scoped memory for split.80']
  #allocation2 [shape = 'u32[2048]{0}', space=vmem, size = 0x2000, scoped, tag = 'scoped memory for split.80']
  #allocation3 [shape = 'u32[2048]{0}', space=vmem, size = 0x2000, scoped, tag = 'scoped memory for split.80']
  #allocation4 [shape = 'u32[2048]{0}', space=vmem, size = 0x2000, scoped, tag = 'scoped memory for split.80']
  #allocation5 [shape = 's32[1]{0}', space=sflag, size = 0x4, scoped, tag = 'scoped memory for split.80']
  %s0 = inlined_call_operand.vmem [shape: f32[2,32,384], index: 0, kind: input, shape index: {}]
  %s1 = inlined_call_operand.vmem [shape: f32[2,32,19], index: 1, kind: output, shape index: {}]
  %s2 = scalar_lea.vmem %s0, 16
  %s3 = scalar_lea.vmem %s0, 16
  %s4 = scalar_lea.vmem %s0, 16
  %v5 = vld [vmem:[%s4] sm:$0xff]
  %v6 = vlaneseq
  %v7 = vand.u32 %v6, 127
  %vm8 = vcmp.lt.s32.totalorder %v7, 109
  %v9 = vsel %vm8, 0, %v5
  %10 = vrot.lane.b32.xlu0 %v9, 19
  %v11 = vpop.permute.xlu0 %10
  %12 = vst [vmem:[%s1] sm:$0xff] %v11
  %s13 = scalar_lea.vmem %s4, 96
  %v14 = vld [vmem:[%s13] sm:$0xff]
  %v15 = vlaneseq
  %v16 = vand.u32 %v15, 127
  %vm17 = vcmp.lt.s32.totalorder %v16, 109
  %v18 = vsel %vm17, 0, %v14
  %19 = vrot.lane.b32.xlu0 %v18, 19
  %v20 = vpop.permute.xlu0 %19
  %s21 = scalar_lea.vmem %s1, 32
  %22 = vst [vmem:[%s21] sm:$0xff] %v20
  %s23 = scalar_lea.vmem %s4, 24
  %v24 = vld [vmem:[%s23] sm:$0xff]
  %v25 = vlaneseq
  %v26 = vand.u32 %v25, 127
  %vm27 = vcmp.lt.s32.totalorder %v26, 109
  %v28 = vsel %vm27, 0, %v24
  %29 = vrot.lane.b32.xlu0 %v28, 19
  %v30 = vpop.permute.xlu0 %29
  %s31 = scalar_lea.vmem %s1, 8
  %32 = vst [vmem:[%s31] sm:$0xff] %v30
  %s33 = scalar_lea.vmem %s4, 120
  %v34 = vld [vmem:[%s33] sm:$0xff]
  %v35 = vlaneseq
  %v36 = vand.u32 %v35, 127
  %vm37 = vcmp.lt.s32.totalorder %v36, 109
  %v38 = vsel %vm37, 0, %v34
  %39 = vrot.lane.b32.xlu0 %v38, 19
  %v40 = vpop.permute.xlu0 %39
  %s41 = scalar_lea.vmem %s1, 40
  %42 = vst [vmem:[%s41] sm:$0xff] %v40
  %s43 = scalar_lea.vmem %s4, 48
  %v44 = vld [vmem:[%s43] sm:$0xff]
  %v45 = vlaneseq
  %v46 = vand.u32 %v45, 127
  %vm47 = vcmp.lt.s32.totalorder %v46, 109
  %v48 = vsel %vm47, 0, %v44
  %49 = vrot.lane.b32.xlu0 %v48, 19
  %v50 = vpop.permute.xlu0 %49
  %s51 = scalar_lea.vmem %s1, 16
  %52 = vst [vmem:[%s51] sm:$0xff] %v50
  %s53 = scalar_lea.vmem %s4, 144
  %v54 = vld [vmem:[%s53] sm:$0xff]
  %v55 = vlaneseq
  %v56 = vand.u32 %v55, 127
  %vm57 = vcmp.lt.s32.totalorder %v56, 109
  %v58 = vsel %vm57, 0, %v54
  %59 = vrot.lane.b32.xlu0 %v58, 19
  %v60 = vpop.permute.xlu0 %59
  %s61 = scalar_lea.vmem %s1, 48
  %62 = vst [vmem:[%s61] sm:$0xff] %v60
  %s63 = scalar_lea.vmem %s4, 72
  %v64 = vld [vmem:[%s63] sm:$0xff]
  %v65 = vlaneseq
  %v66 = vand.u32 %v65, 127
  %vm67 = vcmp.lt.s32.totalorder %v66, 109
  %v68 = vsel %vm67, 0, %v64
  %69 = vrot.lane.b32.xlu0 %v68, 19
  %v70 = vpop.permute.xlu0 %69
  %s71 = scalar_lea.vmem %s1, 24
  %72 = vst [vmem:[%s71] sm:$0xff] %v70
  %s73 = scalar_lea.vmem %s4, 168
  %v74 = vld [vmem:[%s73] sm:$0xff]
  %v75 = vlaneseq
  %v76 = vand.u32 %v75, 127
  %vm77 = vcmp.lt.s32.totalorder %v76, 109
  %v78 = vsel %vm77, 0, %v74
  %79 = vrot.lane.b32.xlu0 %v78, 19
  %v80 = vpop.permute.xlu0 %79
  %s81 = scalar_lea.vmem %s1, 56
  %82 = vst [vmem:[%s81] sm:$0xff] %v80

</llo_original>
